<compile_context>
chip_gen: v7x
topology: tpu7x:2x2x1
jax: 0.10.0
libtpu: 0.0.40
codegen_flags: <defaults>
</compile_context>

<pallas_src>
import math
import functools

import jax
import jax.numpy as jnp
from jax import lax
from jax.experimental import pallas as pl
from jax.experimental.pallas import tpu as pltpu


# ------------------------------ in-kernel helpers ------------------------------

def _layer_norm(y, g, b, eps):
    mu = jnp.mean(y, axis=-1, keepdims=True)
    var = jnp.mean((y - mu) ** 2, axis=-1, keepdims=True)
    return (y - mu) * lax.rsqrt(var + eps) * g + b


def _mha_transposed(qT, kT, vT, *, num_heads, scale, causal):
    """Multi-head attention on feature-major (transposed) operands.

    qT: (D, Sq), kT/vT: (D, Sk), all f32.  Heads live along the sublane-major D
    axis, so each head is a vreg-row-aligned slice (no 8-lane slicing); the
    per-head score / PV matmuls use standard MXU orientation; head outputs are
    re-assembled with a sublane concatenate + a single 2-D transpose.
    Returns (Sq, D) f32.
    """
    D, Sq = qT.shape
    Sk = kT.shape[1]
    Dh = D // num_heads
    qT = qT * scale

    if causal:
        row = lax.broadcasted_iota(jnp.int32, (Sq, Sk), 0)
        col = lax.broadcasted_iota(jnp.int32, (Sq, Sk), 1)
        neg = jnp.where(col > row, -1e30, 0.0).astype(jnp.float32)

    outs = []
    for h in range(num_heads):
        sl = slice(h * Dh, (h + 1) * Dh)
        qh = jnp.transpose(qT[sl])                                    # (Sq, Dh)
        s = jnp.dot(qh, kT[sl], preferred_element_type=jnp.float32)   # (Sq, Sk)
        if causal:
            s = s + neg
        m = jnp.max(s, axis=-1, keepdims=True)
        p = jnp.exp(s - m)
        inv = pl.reciprocal(jnp.sum(p, axis=-1, keepdims=True), approx=True)
        p = p * inv
        outs.append(jnp.dot(vT[sl], jnp.transpose(p),
                            preferred_element_type=jnp.float32))      # (Dh, Sq)
    oT = jnp.concatenate(outs, axis=0)                                # (D, Sq) sublane concat
    return jnp.transpose(oT)                                          # (Sq, D)


def _ffn(x, w1_ref, b1_ref, w2_ref, b2_ref):
    h = (jnp.dot(x.astype(jnp.bfloat16), w1_ref[...],
                 preferred_element_type=jnp.float32) + b1_ref[...])
    h = jnp.maximum(h, 0.0)
    y = (jnp.dot(h.astype(jnp.bfloat16), w2_ref[...],
                 preferred_element_type=jnp.float32) + b2_ref[...])
    return jnp.maximum(y, 0.0)        # reference PositionwiseFF applies ReLU after l2 too


# ------------------------------ fused encoder layer ------------------------------

def _encoder_layer_kernel(x_ref, wqkv_ref, bqkv_ref, wo_ref, bo_ref,
                          w1_ref, b1_ref, w2_ref, b2_ref, g_ref, beta_ref,
                          o_ref, *, num_heads, d_model, eps):
    D = d_model
    scale = 1.0 / math.sqrt(D // num_heads)
    x = x_ref[...]                                   # (S, D) f32 residual stream
    g, beta = g_ref[...], beta_ref[...]

    # self-attention sub-layer: single (D, 3D) fused projection
    qkv = (jnp.dot(x.astype(jnp.bfloat16), wqkv_ref[...],
                   preferred_element_type=jnp.float32) + bqkv_ref[...])     # (S, 3D)
    qkvT = jnp.transpose(qkv)                                               # (3D, S)
    attn = _mha_transposed(qkvT[:D], qkvT[D:2 * D], qkvT[2 * D:],
                           num_heads=num_heads, scale=scale, causal=False)
    proj = (jnp.dot(attn.astype(jnp.bfloat16), wo_ref[...],
                    preferred_element_type=jnp.float32) + bo_ref[...])
    x = _layer_norm(x + proj, g, beta, eps)

    # position-wise FFN sub-layer
    y = _ffn(x, w1_ref, b1_ref, w2_ref, b2_ref)
    o_ref[...] = _layer_norm(x + y, g, beta, eps).astype(o_ref.dtype)


def encoder_layer(x, p, gamma, beta, *, num_heads, eps=1e-5):
    B, S, D = x.shape
    F = p["ff"]["l1_w"].shape[1]
    a, f = p["attn"], p["ff"]
    kern = functools.partial(_encoder_layer_kernel, num_heads=num_heads,
                             d_model=D, eps=eps)
    w = lambda shape: pl.BlockSpec(shape, lambda b: (0, 0))   # weights stay resident
    return pl.pallas_call(
        kern,
        out_shape=jax.ShapeDtypeStruct((B, S, D), jnp.float32),
        grid=(B,),
        in_specs=[
            pl.BlockSpec((pl.Squeezed(), S, D), lambda b: (b, 0, 0)),   # x
            w((D, 3 * D)), w((1, 3 * D)),                               # fused qkv
            w((D, D)), w((1, D)),                                       # wo
            w((D, F)), w((1, F)), w((F, D)), w((1, D)),                 # ffn
            w((1, D)), w((1, D)),                                       # gamma, beta
        ],
        out_specs=pl.BlockSpec((pl.Squeezed(), S, D), lambda b: (b, 0, 0)),
        compiler_params=pltpu.CompilerParams(dimension_semantics=("parallel",)),
    )(x, a["wqkv_w"], a["wqkv_b"], a["wo_w"], a["wo_b"],
      f["l1_w"], f["l1_b"], f["l2_w"], f["l2_b"], gamma, beta)


# ------------------------------ fused decoder layer ------------------------------

def _decoder_layer_kernel(x_ref, mem_ref,
                          cwq_ref, cbq_ref, cwkv_ref, cbkv_ref, cwo_ref, cbo_ref,
                          swqkv_ref, sbqkv_ref, swo_ref, sbo_ref,
                          w1_ref, b1_ref, w2_ref, b2_ref, g_ref, beta_ref,
                          o_ref, *, num_heads, d_model, eps):
    D = d_model
    scale = 1.0 / math.sqrt(D // num_heads)
    x = x_ref[...]                                   # (St, D) f32
    mem = mem_ref[...]                               # (Ss, D) f32
    g, beta = g_ref[...], beta_ref[...]

    # cross-attention (memory) sub-layer: q from x, fused (D, 2D) k|v from memory
    q = (jnp.dot(x.astype(jnp.bfloat16), cwq_ref[...],
                 preferred_element_type=jnp.float32) + cbq_ref[...])        # (St, D)
    kv = (jnp.dot(mem.astype(jnp.bfloat16), cwkv_ref[...],
                  preferred_element_type=jnp.float32) + cbkv_ref[...])      # (Ss, 2D)
    kvT = jnp.transpose(kv)                                                 # (2D, Ss)
    attn = _mha_transposed(jnp.transpose(q), kvT[:D], kvT[D:],
                           num_heads=num_heads, scale=scale, causal=False)
    proj = (jnp.dot(attn.astype(jnp.bfloat16), cwo_ref[...],
                    preferred_element_type=jnp.float32) + cbo_ref[...])
    x = _layer_norm(x + proj, g, beta, eps)

    # causal self-attention sub-layer: fused (D, 3D) qkv projection
    qkv = (jnp.dot(x.astype(jnp.bfloat16), swqkv_ref[...],
                   preferred_element_type=jnp.float32) + sbqkv_ref[...])    # (St, 3D)
    qkvT = jnp.transpose(qkv)
    attn = _mha_transposed(qkvT[:D], qkvT[D:2 * D], qkvT[2 * D:],
                           num_heads=num_heads, scale=scale, causal=True)
    proj = (jnp.dot(attn.astype(jnp.bfloat16), swo_ref[...],
                    preferred_element_type=jnp.float32) + sbo_ref[...])
    x = _layer_norm(x + proj, g, beta, eps)

    # position-wise FFN sub-layer
    y = _ffn(x, w1_ref, b1_ref, w2_ref, b2_ref)
    o_ref[...] = _layer_norm(x + y, g, beta, eps).astype(o_ref.dtype)


def decoder_layer(x, mem, p, gamma, beta, *, num_heads, eps=1e-5):
    B, St, D = x.shape
    Ss = mem.shape[1]
    F = p["ff"]["l1_w"].shape[1]
    c, s_, f = p["cross"], p["self"], p["ff"]
    kern = functools.partial(_decoder_layer_kernel, num_heads=num_heads,
                             d_model=D, eps=eps)
    w = lambda shape: pl.BlockSpec(shape, lambda b: (0, 0))
    return pl.pallas_call(
        kern,
        out_shape=jax.ShapeDtypeStruct((B, St, D), jnp.float32),
        grid=(B,),
        in_specs=[
            pl.BlockSpec((pl.Squeezed(), St, D), lambda b: (b, 0, 0)),  # x
            pl.BlockSpec((pl.Squeezed(), Ss, D), lambda b: (b, 0, 0)),  # encoder memory
            w((D, D)), w((1, D)),                                       # cross wq
            w((D, 2 * D)), w((1, 2 * D)),                               # cross fused kv
            w((D, D)), w((1, D)),                                       # cross wo
            w((D, 3 * D)), w((1, 3 * D)),                               # self fused qkv
            w((D, D)), w((1, D)),                                       # self wo
            w((D, F)), w((1, F)), w((F, D)), w((1, D)),                 # ffn
            w((1, D)), w((1, D)),                                       # gamma, beta
        ],
        out_specs=pl.BlockSpec((pl.Squeezed(), St, D), lambda b: (b, 0, 0)),
        compiler_params=pltpu.CompilerParams(dimension_semantics=("parallel",)),
    )(x, mem,
      c["wq_w"], c["wq_b"], c["wkv_w"], c["wkv_b"], c["wo_w"], c["wo_b"],
      s_["wqkv_w"], s_["wqkv_b"], s_["wo_w"], s_["wo_b"],
      f["l1_w"], f["l1_b"], f["l2_w"], f["l2_b"], gamma, beta)


# ------------------------------ unembedding (lane-padded) ------------------------------

def _unembed_kernel(x_ref, w_ref, b_ref, o_ref):
    o_ref[...] = (jnp.dot(x_ref[...].astype(jnp.bfloat16), w_ref[...],
                          preferred_element_type=jnp.float32)
                  + b_ref[...]).astype(o_ref.dtype)


def unembed(x, w_pad, b_pad, vocab):
    """x @ W + b with the vocab dim zero-padded to a 128 multiple (unmasked stores)."""
    B, S, D = x.shape
    Vp = w_pad.shape[1]
    out = pl.pallas_call(
        _unembed_kernel,
        out_shape=jax.ShapeDtypeStruct((B, S, Vp), jnp.float32),
        grid=(B,),
        in_specs=[pl.BlockSpec((pl.Squeezed(), S, D), lambda b: (b, 0, 0)),
                  pl.BlockSpec((D, Vp), lambda b: (0, 0)),
                  pl.BlockSpec((1, Vp), lambda b: (0, 0))],
        out_specs=pl.BlockSpec((pl.Squeezed(), S, Vp), lambda b: (b, 0, 0)),
        compiler_params=pltpu.CompilerParams(dimension_semantics=("parallel",)),
    )(x, w_pad, b_pad)
    return out[:, :, :vocab]


# ------------------------------ model glue (plain JAX around the kernels) ------------------------------

def make_pos_embed(max_length, d):
    t = jnp.arange(1, max_length + 1, dtype=jnp.float32)
    omega = jnp.arange(1, d // 2 + 1, dtype=jnp.float32) / d
    wt = t[:, None] * jnp.power(10000.0, -omega)[None, :]
    pos = jnp.zeros((1, max_length, d), jnp.float32)
    pos = pos.at[0, :, 0::2].set(jnp.sin(wt))
    pos = pos.at[0, :, 1::2].set(jnp.cos(wt))
    return pos


def embed(tokens, emb):
    d = emb["table"].shape[1]
    word = emb["table"][tokens] * math.sqrt(d)     # gather stays in plain JAX (glue)
    pos = emb["pos"][:, : tokens.shape[1]]
    return word + pos                              # dropout -> eval-mode identity


def encoder_forward(params, source, num_heads):
    x = embed(source, params["src_emb"])
    g, b = params["enc_ln_g"], params["enc_ln_b"]  # one shared LN per Encoder (as in reference)
    for layer in params["enc_layers"]:
        x = encoder_layer(x, layer, g, b, num_heads=num_heads)
    return x


def decoder_forward(params, encoded, target, num_heads, tgt_vocab):
    x = embed(target, params["tgt_emb"])
    g, b = params["dec_ln_g"], params["dec_ln_b"]
    for layer in params["dec_layers"]:
        x = decoder_layer(x, encoded, layer, g, b, num_heads=num_heads)
    emb_p = params["tgt_emb"]
    return unembed(x, emb_p["unembed_w"], emb_p["unembed_b"], tgt_vocab)


def transformer_forward(params, source, target, *, num_heads, tgt_vocab):
    encoded = encoder_forward(params, source, num_heads)
    return decoder_forward(params, encoded, target, num_heads, tgt_vocab)


# ------------------------------ deterministic parameter init ------------------------------

def init_linear(key, din, dout, w_dtype=jnp.bfloat16):
    kw, kb = jax.random.split(key)
    bound = 1.0 / math.sqrt(din)
    w = jax.random.uniform(kw, (din, dout), jnp.float32, -bound, bound)
    b = jax.random.uniform(kb, (dout,), jnp.float32, -bound, bound)
    return w.astype(w_dtype), b.reshape(1, dout)


def init_self_attention(key, d):
    ks = jax.random.split(key, 4)
    wq, bq = init_linear(ks[0], d, d)
    wk, bk = init_linear(ks[1], d, d)
    wv, bv = init_linear(ks[2], d, d)
    wo, bo = init_linear(ks[3], d, d)
    return {"wqkv_w": jnp.concatenate([wq, wk, wv], axis=1),   # (D, 3D) bf16 fused q|k|v
            "wqkv_b": jnp.concatenate([bq, bk, bv], axis=1),   # (1, 3D) f32
            "wo_w": wo, "wo_b": bo}


def init_cross_attention(key, d):
    ks = jax.random.split(key, 4)
    wq, bq = init_linear(ks[0], d, d)
    wk, bk = init_linear(ks[1], d, d)
    wv, bv = init_linear(ks[2], d, d)
    wo, bo = init_linear(ks[3], d, d)
    return {"wq_w": wq, "wq_b": bq,
            "wkv_w": jnp.concatenate([wk, wv], axis=1),        # (D, 2D) bf16 fused k|v
            "wkv_b": jnp.concatenate([bk, bv], axis=1),
            "wo_w": wo, "wo_b": bo}


def init_ff(key, d, d_ff):
    k1, k2 = jax.random.split(key)
    l1_w, l1_b = init_linear(k1, d, d_ff)
    l2_w, l2_b = init_linear(k2, d_ff, d)
    return {"l1_w": l1_w, "l1_b": l1_b, "l2_w": l2_w, "l2_b": l2_b}


def init_embedding(key, max_length, vocab, pad, d):
    kt, ku = jax.random.split(key)
    table = jax.random.normal(kt, (vocab, d), jnp.float32)
    table = table.at[pad].set(0.0)                    # padding_idx row = 0
    uw, ub = init_linear(ku, d, vocab)
    vp = ((vocab + 127) // 128) * 128                 # pad vocab dim to a 128 multiple
    uw = jnp.pad(uw, ((0, 0), (0, vp - vocab)))
    ub = jnp.pad(ub, ((0, 0), (0, vp - vocab)))
    return {"table": table, "pos": make_pos_embed(max_length, d),
            "unembed_w": uw, "unembed_b": ub}


def init_transformer(key, max_length, src_vocab, tgt_vocab, pad,
                     d_model, num_heads, d_ff, num_layers):
    keys = jax.random.split(key, 2 + 2 * num_layers)
    ki = iter(keys)
    params = {
        "src_emb": init_embedding(next(ki), max_length + 1, src_vocab, pad, d_model),
        "tgt_emb": init_embedding(next(ki), max_length + 1, tgt_vocab, pad, d_model),
        "enc_ln_g": jnp.ones((1, d_model), jnp.float32),
        "enc_ln_b": jnp.zeros((1, d_model), jnp.float32),
        "dec_ln_g": jnp.ones((1, d_model), jnp.float32),
        "dec_ln_b": jnp.zeros((1, d_model), jnp.float32),
        "enc_layers": [],
        "dec_layers": [],
    }
    for _ in range(num_layers):
        k1, k2 = jax.random.split(next(ki))
        params["enc_layers"].append({"attn": init_self_attention(k1, d_model),
                                     "ff": init_ff(k2, d_model, d_ff)})
    for _ in range(num_layers):
        k1, k2, k3 = jax.random.split(next(ki), 3)
        params["dec_layers"].append({"cross": init_cross_attention(k1, d_model),
                                     "self": init_self_attention(k2, d_model),
                                     "ff": init_ff(k3, d_model, d_ff)})
    return params


# ------------------------------ main ------------------------------

if __name__ == "__main__":
    key = jax.random.PRNGKey(0)

    # small shapes consistent with the module's forward
    B, S = 2, 8
    max_length = 8
    src_vocab, tgt_vocab = 32, 32
    sos, eos, pad = 1, 2, 0
    d_model, num_heads, d_ff, num_layers = 64, 8, 128, 2

    pkey, skey, tkey = jax.random.split(key, 3)
    params = init_transformer(pkey, max_length, src_vocab, tgt_vocab, pad,
                              d_model, num_heads, d_ff, num_layers)

    source = jax.random.randint(skey, (B, S), 3, src_vocab, dtype=jnp.int32)
    target = jax.random.randint(tkey, (B, S), 3, tgt_vocab, dtype=jnp.int32)

    fwd = jax.jit(functools.partial(transformer_forward,
                                    num_heads=num_heads, tgt_vocab=tgt_vocab))
    logits = fwd(params, source, target)
    jax.block_until_ready(logits)

    assert logits.shape == (B, S, tgt_vocab)
    assert bool(jnp.all(jnp.isfinite(logits)))
    print("KERNEL_OK")
</pallas_src>

<mosaic_0001>
module attributes {stable_mosaic.version = 11 : i64} {
  func.func @_unembed_kernel(%arg0: i32, %arg1: memref<1x8x64xf32, #tpu.memory_space<vmem>>, %arg2: memref<64x128xbf16, #tpu.memory_space<vmem>>, %arg3: memref<1x128xf32, #tpu.memory_space<vmem>>, %arg4: memref<1x8x128xf32, #tpu.memory_space<vmem>>) attributes {dimension_semantics = [#tpu.dimension_semantics<parallel>], iteration_bounds = array<i64: 2>, scalar_prefetch = 0 : i64, scratch_operands = 0 : i64, tpu.core_type = #tpu.core_type<tc>, window_params = [{transform_indices = @transform_0, window_bounds = array<i64: 1, 8, 64>}, {pipeline_mode = #tpu.pipeline_mode<synchronous>, transform_indices = @transform_1, window_bounds = array<i64: 64, 128>}, {pipeline_mode = #tpu.pipeline_mode<synchronous>, transform_indices = @transform_2, window_bounds = array<i64: 1, 128>}, {transform_indices = @transform_3, window_bounds = array<i64: 1, 8, 128>}]} {
    %c0 = arith.constant 0 : index
    %c0_0 = arith.constant 0 : index
    %c0_1 = arith.constant 0 : index
    %0 = vector.load %arg1[%c0, %c0_0, %c0_1] : memref<1x8x64xf32, #tpu.memory_space<vmem>>, vector<1x8x64xf32>
    %1 = vector.shape_cast %0 : vector<1x8x64xf32> to vector<8x64xf32>
    %2 = arith.truncf %1 : vector<8x64xf32> to vector<8x64xbf16>
    %c0_2 = arith.constant 0 : index
    %c0_3 = arith.constant 0 : index
    %3 = vector.load %arg2[%c0_2, %c0_3] : memref<64x128xbf16, #tpu.memory_space<vmem>>, vector<64x128xbf16>
    %cst = arith.constant dense<0.000000e+00> : vector<8x128xf32>
    %4 = tpu.matmul %2, %3, %cst {dimension_numbers = #tpu.dot_dimension_numbers<[1], [0], [0], [1], [0, 0, 1, 1], [], []>} : vector<8x64xbf16>, vector<64x128xbf16>, vector<8x128xf32> -> vector<8x128xf32>
    %c0_4 = arith.constant 0 : index
    %c0_5 = arith.constant 0 : index
    %5 = vector.load %arg3[%c0_4, %c0_5] : memref<1x128xf32, #tpu.memory_space<vmem>>, vector<1x128xf32>
    %6 = vector.broadcast %5 : vector<1x128xf32> to vector<8x128xf32>
    %7 = arith.addf %4, %6 : vector<8x128xf32>
    %c0_6 = arith.constant 0 : index
    %c0_7 = arith.constant 0 : index
    %c0_8 = arith.constant 0 : index
    %8 = vector.load %arg4[%c0_6, %c0_7, %c0_8] : memref<1x8x128xf32, #tpu.memory_space<vmem>>, vector<1x8x128xf32>
    %9 = vector.shape_cast %8 : vector<1x8x128xf32> to vector<8x128xf32>
    %10 = vector.shape_cast %7 : vector<8x128xf32> to vector<1x8x128xf32>
    tpu.vector_store %arg4[%c0_6, %c0_7, %c0_8], %10 {strides = array<i32>} : memref<1x8x128xf32, #tpu.memory_space<vmem>>, vector<1x8x128xf32>,
    return
  }
  func.func @transform_0(%arg0: i32) -> (i32, i32, i32) {
    %c0_i32 = arith.constant 0 : i32
    %c0_i32_0 = arith.constant 0 : i32
    %c0_i32_1 = arith.constant 0 : i32
    return %arg0, %c0_i32, %c0_i32_0 : i32, i32, i32
  }
  func.func @transform_1(%arg0: i32) -> (i32, i32) {
    %c0_i32 = arith.constant 0 : i32
    %c0_i32_0 = arith.constant 0 : i32
    %c0_i32_1 = arith.constant 0 : i32
    return %c0_i32, %c0_i32_0 : i32, i32
  }
  func.func @transform_2(%arg0: i32) -> (i32, i32) {
    %c0_i32 = arith.constant 0 : i32
    %c0_i32_0 = arith.constant 0 : i32
    %c0_i32_1 = arith.constant 0 : i32
    return %c0_i32, %c0_i32_0 : i32, i32
  }
  func.func @transform_3(%arg0: i32) -> (i32, i32, i32) {
    %c0_i32 = arith.constant 0 : i32
    %c0_i32_0 = arith.constant 0 : i32
    %c0_i32_1 = arith.constant 0 : i32
    return %arg0, %c0_i32, %c0_i32_0 : i32, i32, i32
  }
}

module attributes {stable_mosaic.version = 11 : i64} {
  func.func @_encoder_layer_kernel(%arg0: i32, %arg1: memref<1x8x64xf32, #tpu.memory_space<vmem>>, %arg2: memref<64x192xbf16, #tpu.memory_space<vmem>>, %arg3: memref<1x192xf32, #tpu.memory_space<vmem>>, %arg4: memref<64x64xbf16, #tpu.memory_space<vmem>>, %arg5: memref<1x64xf32, #tpu.memory_space<vmem>>, %arg6: memref<64x128xbf16, #tpu.memory_space<vmem>>, %arg7: memref<1x128xf32, #tpu.memory_space<vmem>>, %arg8: memref<128x64xbf16, #tpu.memory_space<vmem>>, %arg9: memref<1x64xf32, #tpu.memory_space<vmem>>, %arg10: memref<1x64xf32, #tpu.memory_space<vmem>>, %arg11: memref<1x64xf32, #tpu.memory_space<vmem>>, %arg12: memref<1x8x64xf32, #tpu.memory_space<vmem>>) attributes {dimension_semantics = [#tpu.dimension_semantics<parallel>], iteration_bounds = array<i64: 2>, scalar_prefetch = 0 : i64, scratch_operands = 0 : i64, tpu.core_type = #tpu.core_type<tc>, window_params = [{transform_indices = @transform_0, window_bounds = array<i64: 1, 8, 64>}, {pipeline_mode = #tpu.pipeline_mode<synchronous>, transform_indices = @transform_1, window_bounds = array<i64: 64, 192>}, {pipeline_mode = #tpu.pipeline_mode<synchronous>, transform_indices = @transform_2, window_bounds = array<i64: 1, 192>}, {pipeline_mode = #tpu.pipeline_mode<synchronous>, transform_indices = @transform_3, window_bounds = array<i64: 64, 64>}, {pipeline_mode = #tpu.pipeline_mode<synchronous>, transform_indices = @transform_4, window_bounds = array<i64: 1, 64>}, {pipeline_mode = #tpu.pipeline_mode<synchronous>, transform_indices = @transform_5, window_bounds = array<i64: 64, 128>}, {pipeline_mode = #tpu.pipeline_mode<synchronous>, transform_indices = @transform_6, window_bounds = array<i64: 1, 128>}, {pipeline_mode = #tpu.pipeline_mode<synchronous>, transform_indices = @transform_7, window_bounds = array<i64: 128, 64>}, {pipeline_mode = #tpu.pipeline_mode<synchronous>, transform_indices = @transform_8, window_bounds = array<i64: 1, 64>}, {pipeline_mode = #tpu.pipeline_mode<synchronous>, transform_indices = @transform_9, window_bounds = array<i64: 1, 64>}, {pipeline_mode = #tpu.pipeline_mode<synchronous>, transform_indices = @transform_10, window_bounds = array<i64: 1, 64>}, {transform_indices = @transform_11, window_bounds = array<i64: 1, 8, 64>}]} {
    %c0 = arith.constant 0 : index
    %c0_0 = arith.constant 0 : index
    %c0_1 = arith.constant 0 : index
    %0 = vector.load %arg1[%c0, %c0_0, %c0_1] : memref<1x8x64xf32, #tpu.memory_space<vmem>>, vector<1x8x64xf32>
    %1 = vector.shape_cast %0 : vector<1x8x64xf32> to vector<8x64xf32>
    %c0_2 = arith.constant 0 : index
    %c0_3 = arith.constant 0 : index
    %2 = vector.load %arg10[%c0_2, %c0_3] : memref<1x64xf32, #tpu.memory_space<vmem>>, vector<1x64xf32>
    %c0_4 = arith.constant 0 : index
    %c0_5 = arith.constant 0 : index
    %3 = vector.load %arg11[%c0_4, %c0_5] : memref<1x64xf32, #tpu.memory_space<vmem>>, vector<1x64xf32>
    %4 = arith.truncf %1 : vector<8x64xf32> to vector<8x64xbf16>
    %c0_6 = arith.constant 0 : index
    %c0_7 = arith.constant 0 : index
    %5 = vector.load %arg2[%c0_6, %c0_7] : memref<64x192xbf16, #tpu.memory_space<vmem>>, vector<64x192xbf16>
    %cst = arith.constant dense<0.000000e+00> : vector<8x192xf32>
    %6 = tpu.matmul %4, %5, %cst {dimension_numbers = #tpu.dot_dimension_numbers<[1], [0], [0], [1], [0, 0, 1, 1], [], []>} : vector<8x64xbf16>, vector<64x192xbf16>, vector<8x192xf32> -> vector<8x192xf32>
    %c0_8 = arith.constant 0 : index
    %c0_9 = arith.constant 0 : index
    %7 = vector.load %arg3[%c0_8, %c0_9] : memref<1x192xf32, #tpu.memory_space<vmem>>, vector<1x192xf32>
    %8 = vector.broadcast %7 : vector<1x192xf32> to vector<8x192xf32>
    %9 = arith.addf %6, %8 : vector<8x192xf32>
    %10 = tpu.transpose %9, [1, 0] : vector<8x192xf32> -> vector<192x8xf32>
    %11 = vector.extract_strided_slice %10 {offsets = [0, 0], sizes = [64, 8], strides = [1, 1]} : vector<192x8xf32> to vector<64x8xf32>
    %12 = vector.extract_strided_slice %10 {offsets = [64, 0], sizes = [64, 8], strides = [1, 1]} : vector<192x8xf32> to vector<64x8xf32>
    %13 = vector.extract_strided_slice %10 {offsets = [128, 0], sizes = [64, 8], strides = [1, 1]} : vector<192x8xf32> to vector<64x8xf32>
    %cst_10 = arith.constant 0.353553385 : f32
    %14 = vector.broadcast %cst_10 : f32 to vector<64x8xf32>
    %15 = arith.mulf %11, %14 : vector<64x8xf32>
    %16 = vector.extract_strided_slice %15 {offsets = [0, 0], sizes = [8, 8], strides = [1, 1]} : vector<64x8xf32> to vector<8x8xf32>
    %17 = tpu.transpose %16, [1, 0] : vector<8x8xf32> -> vector<8x8xf32>
    %18 = vector.extract_strided_slice %12 {offsets = [0, 0], sizes = [8, 8], strides = [1, 1]} : vector<64x8xf32> to vector<8x8xf32>
    %cst_11 = arith.constant dense<0.000000e+00> : vector<8x8xf32>
    %19 = tpu.matmul %17, %18, %cst_11 {dimension_numbers = #tpu.dot_dimension_numbers<[1], [0], [0], [1], [0, 0, 1, 1], [], []>} : vector<8x8xf32>, vector<8x8xf32>, vector<8x8xf32> -> vector<8x8xf32>
    %cst_12 = arith.constant dense<0xFF800000> : vector<8xf32>
    %20 = vector.multi_reduction <maximumf>, %19, %cst_12 [1] : vector<8x8xf32> to vector<8xf32>
    %21 = vector.shape_cast %20 : vector<8xf32> to vector<8x1xf32>
    %22 = vector.broadcast %21 : vector<8x1xf32> to vector<8x8xf32>
    %23 = arith.subf %19, %22 : vector<8x8xf32>
    %24 = math.exp %23 : vector<8x8xf32>
    %cst_13 = arith.constant dense<0.000000e+00> : vector<8xf32>
    %25 = vector.multi_reduction <add>, %24, %cst_13 [1] : vector<8x8xf32> to vector<8xf32>
    %26 = vector.shape_cast %25 : vector<8xf32> to vector<8x1xf32>
    %27 = tpu.reciprocal %26 {approx = true} : vector<8x1xf32> -> vector<8x1xf32>
    %28 = vector.broadcast %27 : vector<8x1xf32> to vector<8x8xf32>
    %29 = arith.mulf %24, %28 : vector<8x8xf32>
    %30 = vector.extract_strided_slice %13 {offsets = [0, 0], sizes = [8, 8], strides = [1, 1]} : vector<64x8xf32> to vector<8x8xf32>
    %31 = tpu.transpose %29, [1, 0] : vector<8x8xf32> -> vector<8x8xf32>
    %cst_14 = arith.constant dense<0.000000e+00> : vector<8x8xf32>
    %32 = tpu.matmul %30, %31, %cst_14 {dimension_numbers = #tpu.dot_dimension_numbers<[1], [0], [0], [1], [0, 0, 1, 1], [], []>} : vector<8x8xf32>, vector<8x8xf32>, vector<8x8xf32> -> vector<8x8xf32>
    %33 = vector.extract_strided_slice %15 {offsets = [8, 0], sizes = [8, 8], strides = [1, 1]} : vector<64x8xf32> to vector<8x8xf32>
    %34 = tpu.transpose %33, [1, 0] : vector<8x8xf32> -> vector<8x8xf32>
    %35 = vector.extract_strided_slice %12 {offsets = [8, 0], sizes = [8, 8], strides = [1, 1]} : vector<64x8xf32> to vector<8x8xf32>
    %cst_15 = arith.constant dense<0.000000e+00> : vector<8x8xf32>
    %36 = tpu.matmul %34, %35, %cst_15 {dimension_numbers = #tpu.dot_dimension_numbers<[1], [0], [0], [1], [0, 0, 1, 1], [], []>} : vector<8x8xf32>, vector<8x8xf32>, vector<8x8xf32> -> vector<8x8xf32>
    %cst_16 = arith.constant dense<0xFF800000> : vector<8xf32>
    %37 = vector.multi_reduction <maximumf>, %36, %cst_16 [1] : vector<8x8xf32> to vector<8xf32>
    %38 = vector.shape_cast %37 : vector<8xf32> to vector<8x1xf32>
    %39 = vector.broadcast %38 : vector<8x1xf32> to vector<8x8xf32>
    %40 = arith.subf %36, %39 : vector<8x8xf32>
    %41 = math.exp %40 : vector<8x8xf32>
    %cst_17 = arith.constant dense<0.000000e+00> : vector<8xf32>
    %42 = vector.multi_reduction <add>, %41, %cst_17 [1] : vector<8x8xf32> to vector<8xf32>
    %43 = vector.shape_cast %42 : vector<8xf32> to vector<8x1xf32>
    %44 = tpu.reciprocal %43 {approx = true} : vector<8x1xf32> -> vector<8x1xf32>
    %45 = vector.broadcast %44 : vector<8x1xf32> to vector<8x8xf32>
    %46 = arith.mulf %41, %45 : vector<8x8xf32>
    %47 = vector.extract_strided_slice %13 {offsets = [8, 0], sizes = [8, 8], strides = [1, 1]} : vector<64x8xf32> to vector<8x8xf32>
    %48 = tpu.transpose %46, [1, 0] : vector<8x8xf32> -> vector<8x8xf32>
    %cst_18 = arith.constant dense<0.000000e+00> : vector<8x8xf32>
    %49 = tpu.matmul %47, %48, %cst_18 {dimension_numbers = #tpu.dot_dimension_numbers<[1], [0], [0], [1], [0, 0, 1, 1], [], []>} : vector<8x8xf32>, vector<8x8xf32>, vector<8x8xf32> -> vector<8x8xf32>
    %50 = vector.extract_strided_slice %15 {offsets = [16, 0], sizes = [8, 8], strides = [1, 1]} : vector<64x8xf32> to vector<8x8xf32>
    %51 = tpu.transpose %50, [1, 0] : vector<8x8xf32> -> vector<8x8xf32>
    %52 = vector.extract_strided_slice %12 {offsets = [16, 0], sizes = [8, 8], strides = [1, 1]} : vector<64x8xf32> to vector<8x8xf32>
    %cst_19 = arith.constant dense<0.000000e+00> : vector<8x8xf32>
    %53 = tpu.matmul %51, %52, %cst_19 {dimension_numbers = #tpu.dot_dimension_numbers<[1], [0], [0], [1], [0, 0, 1, 1], [], []>} : vector<8x8xf32>, vector<8x8xf32>, vector<8x8xf32> -> vector<8x8xf32>
    %cst_20 = arith.constant dense<0xFF800000> : vector<8xf32>
    %54 = vector.multi_reduction <maximumf>, %53, %cst_20 [1] : vector<8x8xf32> to vector<8xf32>
    %55 = vector.shape_cast %54 : vector<8xf32> to vector<8x1xf32>
    %56 = vector.broadcast %55 : vector<8x1xf32> to vector<8x8xf32>
    %57 = arith.subf %53, %56 : vector<8x8xf32>
    %58 = math.exp %57 : vector<8x8xf32>
    %cst_21 = arith.constant dense<0.000000e+00> : vector<8xf32>
    %59 = vector.multi_reduction <add>, %58, %cst_21 [1] : vector<8x8xf32> to vector<8xf32>
    %60 = vector.shape_cast %59 : vector<8xf32> to vector<8x1xf32>
    %61 = tpu.reciprocal %60 {approx = true} : vector<8x1xf32> -> vector<8x1xf32>
    %62 = vector.broadcast %61 : vector<8x1xf32> to vector<8x8xf32>
    %63 = arith.mulf %58, %62 : vector<8x8xf32>
    %64 = vector.extract_strided_slice %13 {offsets = [16, 0], sizes = [8, 8], strides = [1, 1]} : vector<64x8xf32> to vector<8x8xf32>
    %65 = tpu.transpose %63, [1, 0] : vector<8x8xf32> -> vector<8x8xf32>
    %cst_22 = arith.constant dense<0.000000e+00> : vector<8x8xf32>
    %66 = tpu.matmul %64, %65, %cst_22 {dimension_numbers = #tpu.dot_dimension_numbers<[1], [0], [0], [1], [0, 0, 1, 1], [], []>} : vector<8x8xf32>, vector<8x8xf32>, vector<8x8xf32> -> vector<8x8xf32>
    %67 = vector.extract_strided_slice %15 {offsets = [24, 0], sizes = [8, 8], strides = [1, 1]} : vector<64x8xf32> to vector<8x8xf32>
    %68 = tpu.transpose %67, [1, 0] : vector<8x8xf32> -> vector<8x8xf32>
    %69 = vector.extract_strided_slice %12 {offsets = [24, 0], sizes = [8, 8], strides = [1, 1]} : vector<64x8xf32> to vector<8x8xf32>
    %cst_23 = arith.constant dense<0.000000e+00> : vector<8x8xf32>
    %70 = tpu.matmul %68, %69, %cst_23 {dimension_numbers = #tpu.dot_dimension_numbers<[1], [0], [0], [1], [0, 0, 1, 1], [], []>} : vector<8x8xf32>, vector<8x8xf32>, vector<8x8xf32> -> vector<8x8xf32>
    %cst_24 = arith.constant dense<0xFF800000> : vector<8xf32>
    %71 = vector.multi_reduction <maximumf>, %70, %cst_24 [1] : vector<8x8xf32> to vector<8xf32>
    %72 = vector.shape_cast %71 : vector<8xf32> to vector<8x1xf32>
    %73 = vector.broadcast %72 : vector<8x1xf32> to vector<8x8xf32>
    %74 = arith.subf %70, %73 : vector<8x8xf32>
    %75 = math.exp %74 : vector<8x8xf32>
    %cst_25 = arith.constant dense<0.000000e+00> : vector<8xf32>
    %76 = vector.multi_reduction <add>, %75, %cst_25 [1] : vector<8x8xf32> to vector<8xf32>
    %77 = vector.shape_cast %76 : vector<8xf32> to vector<8x1xf32>
    %78 = tpu.reciprocal %77 {approx = true} : vector<8x1xf32> -> vector<8x1xf32>
    %79 = vector.broadcast %78 : vector<8x1xf32> to vector<8x8xf32>
    %80 = arith.mulf %75, %79 : vector<8x8xf32>
    %81 = vector.extract_strided_slice %13 {offsets = [24, 0], sizes = [8, 8], strides = [1, 1]} : vector<64x8xf32> to vector<8x8xf32>
    %82 = tpu.transpose %80, [1, 0] : vector<8x8xf32> -> vector<8x8xf32>
    %cst_26 = arith.constant dense<0.000000e+00> : vector<8x8xf32>
    %83 = tpu.matmul %81, %82, %cst_26 {dimension_numbers = #tpu.dot_dimension_numbers<[1], [0], [0], [1], [0, 0, 1, 1], [], []>} : vector<8x8xf32>, vector<8x8xf32>, vector<8x8xf32> -> vector<8x8xf32>
    %84 = vector.extract_strided_slice %15 {offsets = [32, 0], sizes = [8, 8], strides = [1, 1]} : vector<64x8xf32> to vector<8x8xf32>
    %85 = tpu.transpose %84, [1, 0] : vector<8x8xf32> -> vector<8x8xf32>
    %86 = vector.extract_strided_slice %12 {offsets = [32, 0], sizes = [8, 8], strides = [1, 1]} : vector<64x8xf32> to vector<8x8xf32>
    %cst_27 = arith.constant dense<0.000000e+00> : vector<8x8xf32>
    %87 = tpu.matmul %85, %86, %cst_27 {dimension_numbers = #tpu.dot_dimension_numbers<[1], [0], [0], [1], [0, 0, 1, 1], [], []>} : vector<8x8xf32>, vector<8x8xf32>, vector<8x8xf32> -> vector<8x8xf32>
    %cst_28 = arith.constant dense<0xFF800000> : vector<8xf32>
    %88 = vector.multi_reduction <maximumf>, %87, %cst_28 [1] : vector<8x8xf32> to vector<8xf32>
    %89 = vector.shape_cast %88 : vector<8xf32> to vector<8x1xf32>
    %90 = vector.broadcast %89 : vector<8x1xf32> to vector<8x8xf32>
    %91 = arith.subf %87, %90 : vector<8x8xf32>
    %92 = math.exp %91 : vector<8x8xf32>
    %cst_29 = arith.constant dense<0.000000e+00> : vector<8xf32>
    %93 = vector.multi_reduction <add>, %92, %cst_29 [1] : vector<8x8xf32> to vector<8xf32>
    %94 = vector.shape_cast %93 : vector<8xf32> to vector<8x1xf32>
    %95 = tpu.reciprocal %94 {approx = true} : vector<8x1xf32> -> vector<8x1xf32>
    %96 = vector.broadcast %95 : vector<8x1xf32> to vector<8x8xf32>
    %97 = arith.mulf %92, %96 : vector<8x8xf32>
    %98 = vector.extract_strided_slice %13 {offsets = [32, 0], sizes = [8, 8], strides = [1, 1]} : vector<64x8xf32> to vector<8x8xf32>
    %99 = tpu.transpose %97, [1, 0] : vector<8x8xf32> -> vector<8x8xf32>
    %cst_30 = arith.constant dense<0.000000e+00> : vector<8x8xf32>
    %100 = tpu.matmul %98, %99, %cst_30 {dimension_numbers = #tpu.dot_dimension_numbers<[1], [0], [0], [1], [0, 0, 1, 1], [], []>} : vector<8x8xf32>, vector<8x8xf32>, vector<8x8xf32> -> vector<8x8xf32>
    %101 = vector.extract_strided_slice %15 {offsets = [40, 0], sizes = [8, 8], strides = [1, 1]} : vector<64x8xf32> to vector<8x8xf32>
    %102 = tpu.transpose %101, [1, 0] : vector<8x8xf32> -> vector<8x8xf32>
    %103 = vector.extract_strided_slice %12 {offsets = [40, 0], sizes = [8, 8], strides = [1, 1]} : vector<64x8xf32> to vector<8x8xf32>
    %cst_31 = arith.constant dense<0.000000e+00> : vector<8x8xf32>
    %104 = tpu.matmul %102, %103, %cst_31 {dimension_numbers = #tpu.dot_dimension_numbers<[1], [0], [0], [1], [0, 0, 1, 1], [], []>} : vector<8x8xf32>, vector<8x8xf32>, vector<8x8xf32> -> vector<8x8xf32>
    %cst_32 = arith.constant dense<0xFF800000> : vector<8xf32>
    %105 = vector.multi_reduction <maximumf>, %104, %cst_32 [1] : vector<8x8xf32> to vector<8xf32>
    %106 = vector.shape_cast %105 : vector<8xf32> to vector<8x1xf32>
    %107 = vector.broadcast %106 : vector<8x1xf32> to vector<8x8xf32>
    %108 = arith.subf %104, %107 : vector<8x8xf32>
    %109 = math.exp %108 : vector<8x8xf32>
    %cst_33 = arith.constant dense<0.000000e+00> : vector<8xf32>
    %110 = vector.multi_reduction <add>, %109, %cst_33 [1] : vector<8x8xf32> to vector<8xf32>
    %111 = vector.shape_cast %110 : vector<8xf32> to vector<8x1xf32>
    %112 = tpu.reciprocal %111 {approx = true} : vector<8x1xf32> -> vector<8x1xf32>
    %113 = vector.broadcast %112 : vector<8x1xf32> to vector<8x8xf32>
    %114 = arith.mulf %109, %113 : vector<8x8xf32>
    %115 = vector.extract_strided_slice %13 {offsets = [40, 0], sizes = [8, 8], strides = [1, 1]} : vector<64x8xf32> to vector<8x8xf32>
    %116 = tpu.transpose %114, [1, 0] : vector<8x8xf32> -> vector<8x8xf32>
    %cst_34 = arith.constant dense<0.000000e+00> : vector<8x8xf32>
    %117 = tpu.matmul %115, %116, %cst_34 {dimension_numbers = #tpu.dot_dimension_numbers<[1], [0], [0], [1], [0, 0, 1, 1], [], []>} : vector<8x8xf32>, vector<8x8xf32>, vector<8x8xf32> -> vector<8x8xf32>
    %118 = vector.extract_strided_slice %15 {offsets = [48, 0], sizes = [8, 8], strides = [1, 1]} : vector<64x8xf32> to vector<8x8xf32>
    %119 = tpu.transpose %118, [1, 0] : vector<8x8xf32> -> vector<8x8xf32>
    %120 = vector.extract_strided_slice %12 {offsets = [48, 0], sizes = [8, 8], strides = [1, 1]} : vector<64x8xf32> to vector<8x8xf32>
    %cst_35 = arith.constant dense<0.000000e+00> : vector<8x8xf32>
    %121 = tpu.matmul %119, %120, %cst_35 {dimension_numbers = #tpu.dot_dimension_numbers<[1], [0], [0], [1], [0, 0, 1, 1], [], []>} : vector<8x8xf32>, vector<8x8xf32>, vector<8x8xf32> -> vector<8x8xf32>
    %cst_36 = arith.constant dense<0xFF800000> : vector<8xf32>
    %122 = vector.multi_reduction <maximumf>, %121, %cst_36 [1] : vector<8x8xf32> to vector<8xf32>
    %123 = vector.shape_cast %122 : vector<8xf32> to vector<8x1xf32>
    %124 = vector.broadcast %123 : vector<8x1xf32> to vector<8x8xf32>
    %125 = arith.subf %121, %124 : vector<8x8xf32>
    %126 = math.exp %125 : vector<8x8xf32>
    %cst_37 = arith.constant dense<0.000000e+00> : vector<8xf32>
    %127 = vector.multi_reduction <add>, %126, %cst_37 [1] : vector<8x8xf32> to vector<8xf32>
    %128 = vector.shape_cast %127 : vector<8xf32> to vector<8x1xf32>
    %129 = tpu.reciprocal %128 {approx = true} : vector<8x1xf32> -> vector<8x1xf32>
    %130 = vector.broadcast %129 : vector<8x1xf32> to vector<8x8xf32>
    %131 = arith.mulf %126, %130 : vector<8x8xf32>
    %132 = vector.extract_strided_slice %13 {offsets = [48, 0], sizes = [8, 8], strides = [1, 1]} : vector<64x8xf32> to vector<8x8xf32>
    %133 = tpu.transpose %131, [1, 0] : vector<8x8xf32> -> vector<8x8xf32>
    %cst_38 = arith.constant dense<0.000000e+00> : vector<8x8xf32>
    %134 = tpu.matmul %132, %133, %cst_38 {dimension_numbers = #tpu.dot_dimension_numbers<[1], [0], [0], [1], [0, 0, 1, 1], [], []>} : vector<8x8xf32>, vector<8x8xf32>, vector<8x8xf32> -> vector<8x8xf32>
    %135 = vector.extract_strided_slice %15 {offsets = [56, 0], sizes = [8, 8], strides = [1, 1]} : vector<64x8xf32> to vector<8x8xf32>
    %136 = tpu.transpose %135, [1, 0] : vector<8x8xf32> -> vector<8x8xf32>
    %137 = vector.extract_strided_slice %12 {offsets = [56, 0], sizes = [8, 8], strides = [1, 1]} : vector<64x8xf32> to vector<8x8xf32>
    %cst_39 = arith.constant dense<0.000000e+00> : vector<8x8xf32>
    %138 = tpu.matmul %136, %137, %cst_39 {dimension_numbers = #tpu.dot_dimension_numbers<[1], [0], [0], [1], [0, 0, 1, 1], [], []>} : vector<8x8xf32>, vector<8x8xf32>, vector<8x8xf32> -> vector<8x8xf32>
    %cst_40 = arith.constant dense<0xFF800000> : vector<8xf32>
    %139 = vector.multi_reduction <maximumf>, %138, %cst_40 [1] : vector<8x8xf32> to vector<8xf32>
    %140 = vector.shape_cast %139 : vector<8xf32> to vector<8x1xf32>
    %141 = vector.broadcast %140 : vector<8x1xf32> to vector<8x8xf32>
    %142 = arith.subf %138, %141 : vector<8x8xf32>
    %143 = math.exp %142 : vector<8x8xf32>
    %cst_41 = arith.constant dense<0.000000e+00> : vector<8xf32>
    %144 = vector.multi_reduction <add>, %143, %cst_41 [1] : vector<8x8xf32> to vector<8xf32>
    %145 = vector.shape_cast %144 : vector<8xf32> to vector<8x1xf32>
    %146 = tpu.reciprocal %145 {approx = true} : vector<8x1xf32> -> vector<8x1xf32>
    %147 = vector.broadcast %146 : vector<8x1xf32> to vector<8x8xf32>
    %148 = arith.mulf %143, %147 : vector<8x8xf32>
    %149 = vector.extract_strided_slice %13 {offsets = [56, 0], sizes = [8, 8], strides = [1, 1]} : vector<64x8xf32> to vector<8x8xf32>
    %150 = tpu.transpose %148, [1, 0] : vector<8x8xf32> -> vector<8x8xf32>
    %cst_42 = arith.constant dense<0.000000e+00> : vector<8x8xf32>
    %151 = tpu.matmul %149, %150, %cst_42 {dimension_numbers = #tpu.dot_dimension_numbers<[1], [0], [0], [1], [0, 0, 1, 1], [], []>} : vector<8x8xf32>, vector<8x8xf32>, vector<8x8xf32> -> vector<8x8xf32>
    %152 = tpu.concatenate %32, %49, %66, %83, %100, %117, %134, %151 in 0 : vector<8x8xf32>, vector<8x8xf32>, vector<8x8xf32>, vector<8x8xf32>, vector<8x8xf32>, vector<8x8xf32>, vector<8x8xf32>, vector<8x8xf32> -> vector<64x8xf32>
    %153 = tpu.transpose %152, [1, 0] : vector<64x8xf32> -> vector<8x64xf32>
    %154 = arith.truncf %153 : vector<8x64xf32> to vector<8x64xbf16>
    %c0_43 = arith.constant 0 : index
    %c0_44 = arith.constant 0 : index
    %155 = vector.load %arg4[%c0_43, %c0_44] : memref<64x64xbf16, #tpu.memory_space<vmem>>, vector<64x64xbf16>
    %cst_45 = arith.constant dense<0.000000e+00> : vector<8x64xf32>
    %156 = tpu.matmul %154, %155, %cst_45 {dimension_numbers = #tpu.dot_dimension_numbers<[1], [0], [0], [1], [0, 0, 1, 1], [], []>} : vector<8x64xbf16>, vector<64x64xbf16>, vector<8x64xf32> -> vector<8x64xf32>
    %c0_46 = arith.constant 0 : index
    %c0_47 = arith.constant 0 : index
    %157 = vector.load %arg5[%c0_46, %c0_47] : memref<1x64xf32, #tpu.memory_space<vmem>>, vector<1x64xf32>
    %158 = vector.broadcast %157 : vector<1x64xf32> to vector<8x64xf32>
    %159 = arith.addf %156, %158 : vector<8x64xf32>
    %160 = arith.addf %1, %159 : vector<8x64xf32>
    %cst_48 = arith.constant dense<0.000000e+00> : vector<8xf32>
    %161 = vector.multi_reduction <add>, %160, %cst_48 [1] : vector<8x64xf32> to vector<8xf32>
    %162 = vector.shape_cast %161 : vector<8xf32> to vector<8x1xf32>
    %cst_49 = arith.constant 6.400000e+01 : f32
    %163 = vector.broadcast %cst_49 : f32 to vector<8x1xf32>
    %164 = arith.divf %162, %163 : vector<8x1xf32>
    %165 = vector.broadcast %164 : vector<8x1xf32> to vector<8x64xf32>
    %166 = arith.subf %160, %165 : vector<8x64xf32>
    %167 = arith.mulf %166, %166 : vector<8x64xf32>
    %cst_50 = arith.constant dense<0.000000e+00> : vector<8xf32>
    %168 = vector.multi_reduction <add>, %167, %cst_50 [1] : vector<8x64xf32> to vector<8xf32>
    %169 = vector.shape_cast %168 : vector<8xf32> to vector<8x1xf32>
    %cst_51 = arith.constant 6.400000e+01 : f32
    %170 = vector.broadcast %cst_51 : f32 to vector<8x1xf32>
    %171 = arith.divf %169, %170 : vector<8x1xf32>
    %172 = vector.broadcast %164 : vector<8x1xf32> to vector<8x64xf32>
    %173 = arith.subf %160, %172 : vector<8x64xf32>
    %cst_52 = arith.constant 9.99999974E-6 : f32
    %174 = vector.broadcast %cst_52 : f32 to vector<8x1xf32>
    %175 = arith.addf %171, %174 : vector<8x1xf32>
    %176 = math.rsqrt %175 : vector<8x1xf32>
    %177 = vector.broadcast %176 : vector<8x1xf32> to vector<8x64xf32>
    %178 = arith.mulf %173, %177 : vector<8x64xf32>
    %179 = vector.broadcast %2 : vector<1x64xf32> to vector<8x64xf32>
    %180 = arith.mulf %178, %179 : vector<8x64xf32>
    %181 = vector.broadcast %3 : vector<1x64xf32> to vector<8x64xf32>
    %182 = arith.addf %180, %181 : vector<8x64xf32>
    %183 = arith.truncf %182 : vector<8x64xf32> to vector<8x64xbf16>
    %c0_53 = arith.constant 0 : index
    %c0_54 = arith.constant 0 : index
    %184 = vector.load %arg6[%c0_53, %c0_54] : memref<64x128xbf16, #tpu.memory_space<vmem>>, vector<64x128xbf16>
    %cst_55 = arith.constant dense<0.000000e+00> : vector<8x128xf32>
    %185 = tpu.matmul %183, %184, %cst_55 {dimension_numbers = #tpu.dot_dimension_numbers<[1], [0], [0], [1], [0, 0, 1, 1], [], []>} : vector<8x64xbf16>, vector<64x128xbf16>, vector<8x128xf32> -> vector<8x128xf32>
    %c0_56 = arith.constant 0 : index
    %c0_57 = arith.constant 0 : index
    %186 = vector.load %arg7[%c0_56, %c0_57] : memref<1x128xf32, #tpu.memory_space<vmem>>, vector<1x128xf32>
    %187 = vector.broadcast %186 : vector<1x128xf32> to vector<8x128xf32>
    %188 = arith.addf %185, %187 : vector<8x128xf32>
    %cst_58 = arith.constant 0.000000e+00 : f32
    %189 = vector.broadcast %cst_58 : f32 to vector<8x128xf32>
    %190 = arith.maximumf %188, %189 : vector<8x128xf32>
    %191 = arith.truncf %190 : vector<8x128xf32> to vector<8x128xbf16>
    %c0_59 = arith.constant 0 : index
    %c0_60 = arith.constant 0 : index
    %192 = vector.load %arg8[%c0_59, %c0_60] : memref<128x64xbf16, #tpu.memory_space<vmem>>, vector<128x64xbf16>
    %cst_61 = arith.constant dense<0.000000e+00> : vector<8x64xf32>
    %193 = tpu.matmul %191, %192, %cst_61 {dimension_numbers = #tpu.dot_dimension_numbers<[1], [0], [0], [1], [0, 0, 1, 1], [], []>} : vector<8x128xbf16>, vector<128x64xbf16>, vector<8x64xf32> -> vector<8x64xf32>
    %c0_62 = arith.constant 0 : index
    %c0_63 = arith.constant 0 : index
    %194 = vector.load %arg9[%c0_62, %c0_63] : memref<1x64xf32, #tpu.memory_space<vmem>>, vector<1x64xf32>
    %195 = vector.broadcast %194 : vector<1x64xf32> to vector<8x64xf32>
    %196 = arith.addf %193, %195 : vector<8x64xf32>
    %cst_64 = arith.constant 0.000000e+00 : f32
    %197 = vector.broadcast %cst_64 : f32 to vector<8x64xf32>
    %198 = arith.maximumf %196, %197 : vector<8x64xf32>
    %199 = arith.addf %182, %198 : vector<8x64xf32>
    %cst_65 = arith.constant dense<0.000000e+00> : vector<8xf32>
    %200 = vector.multi_reduction <add>, %199, %cst_65 [1] : vector<8x64xf32> to vector<8xf32>
    %201 = vector.shape_cast %200 : vector<8xf32> to vector<8x1xf32>
    %cst_66 = arith.constant 6.400000e+01 : f32
    %202 = vector.broadcast %cst_66 : f32 to vector<8x1xf32>
    %203 = arith.divf %201, %202 : vector<8x1xf32>
    %204 = vector.broadcast %203 : vector<8x1xf32> to vector<8x64xf32>
    %205 = arith.subf %199, %204 : vector<8x64xf32>
    %206 = arith.mulf %205, %205 : vector<8x64xf32>
    %cst_67 = arith.constant dense<0.000000e+00> : vector<8xf32>
    %207 = vector.multi_reduction <add>, %206, %cst_67 [1] : vector<8x64xf32> to vector<8xf32>
    %208 = vector.shape_cast %207 : vector<8xf32> to vector<8x1xf32>
    %cst_68 = arith.constant 6.400000e+01 : f32
    %209 = vector.broadcast %cst_68 : f32 to vector<8x1xf32>
    %210 = arith.divf %208, %209 : vector<8x1xf32>
    %211 = vector.broadcast %203 : vector<8x1xf32> to vector<8x64xf32>
    %212 = arith.subf %199, %211 : vector<8x64xf32>
    %cst_69 = arith.constant 9.99999974E-6 : f32
    %213 = vector.broadcast %cst_69 : f32 to vector<8x1xf32>
    %214 = arith.addf %210, %213 : vector<8x1xf32>
    %215 = math.rsqrt %214 : vector<8x1xf32>
    %216 = vector.broadcast %215 : vector<8x1xf32> to vector<8x64xf32>
    %217 = arith.mulf %212, %216 : vector<8x64xf32>
    %218 = vector.broadcast %2 : vector<1x64xf32> to vector<8x64xf32>
    %219 = arith.mulf %217, %218 : vector<8x64xf32>
    %220 = vector.broadcast %3 : vector<1x64xf32> to vector<8x64xf32>
    %221 = arith.addf %219, %220 : vector<8x64xf32>
    %c0_70 = arith.constant 0 : index
    %c0_71 = arith.constant 0 : index
    %c0_72 = arith.constant 0 : index
    %222 = vector.load %arg12[%c0_70, %c0_71, %c0_72] : memref<1x8x64xf32, #tpu.memory_space<vmem>>, vector<1x8x64xf32>
    %223 = vector.shape_cast %222 : vector<1x8x64xf32> to vector<8x64xf32>
    %224 = vector.shape_cast %221 : vector<8x64xf32> to vector<1x8x64xf32>
    tpu.vector_store %arg12[%c0_70, %c0_71, %c0_72], %224 {strides = array<i32>} : memref<1x8x64xf32, #tpu.memory_space<vmem>>, vector<1x8x64xf32>,
    return
  }
  func.func @transform_0(%arg0: i32) -> (i32, i32, i32) {
    %c0_i32 = arith.constant 0 : i32
    %c0_i32_0 = arith.constant 0 : i32
    %c0_i32_1 = arith.constant 0 : i32
    return %arg0, %c0_i32, %c0_i32_0 : i32, i32, i32
  }
  func.func @transform_1(%arg0: i32) -> (i32, i32) {
    %c0_i32 = arith.constant 0 : i32
    %c0_i32_0 = arith.constant 0 : i32
    %c0_i32_1 = arith.constant 0 : i32
    return %c0_i32, %c0_i32_0 : i32, i32
  }
  func.func @transform_2(%arg0: i32) -> (i32, i32) {
    %c0_i32 = arith.constant 0 : i32
    %c0_i32_0 = arith.constant 0 : i32
    %c0_i32_1 = arith.constant 0 : i32
    return %c0_i32, %c0_i32_0 : i32, i32
  }
  func.func @transform_3(%arg0: i32) -> (i32, i32) {
    %c0_i32 = arith.constant 0 : i32
    %c0_i32_0 = arith.constant 0 : i32
    %c0_i32_1 = arith.constant 0 : i32
    return %c0_i32, %c0_i32_0 : i32, i32
  }
  func.func @transform_4(%arg0: i32) -> (i32, i32) {
    %c0_i32 = arith.constant 0 : i32
    %c0_i32_0 = arith.constant 0 : i32
    %c0_i32_1 = arith.constant 0 : i32
    return %c0_i32, %c0_i32_0 : i32, i32
  }
  func.func @transform_5(%arg0: i32) -> (i32, i32) {
    %c0_i32 = arith.constant 0 : i32
    %c0_i32_0 = arith.constant 0 : i32
    %c0_i32_1 = arith.constant 0 : i32
    return %c0_i32, %c0_i32_0 : i32, i32
  }
  func.func @transform_6(%arg0: i32) -> (i32, i32) {
    %c0_i32 = arith.constant 0 : i32
    %c0_i32_0 = arith.constant 0 : i32
    %c0_i32_1 = arith.constant 0 : i32
    return %c0_i32, %c0_i32_0 : i32, i32
  }
  func.func @transform_7(%arg0: i32) -> (i32, i32) {
    %c0_i32 = arith.constant 0 : i32
    %c0_i32_0 = arith.constant 0 : i32
    %c0_i32_1 = arith.constant 0 : i32
    return %c0_i32, %c0_i32_0 : i32, i32
  }
  func.func @transform_8(%arg0: i32) -> (i32, i32) {
    %c0_i32 = arith.constant 0 : i32
    %c0_i32_0 = arith.constant 0 : i32
    %c0_i32_1 = arith.constant 0 : i32
    return %c0_i32, %c0_i32_0 : i32, i32
  }
  func.func @transform_9(%arg0: i32) -> (i32, i32) {
    %c0_i32 = arith.constant 0 : i32
    %c0_i32_0 = arith.constant 0 : i32
    %c0_i32_1 = arith.constant 0 : i32
    return %c0_i32, %c0_i32_0 : i32, i32
  }
  func.func @transform_10(%arg0: i32) -> (i32, i32) {
    %c0_i32 = arith.constant 0 : i32
    %c0_i32_0 = arith.constant 0 : i32
    %c0_i32_1 = arith.constant 0 : i32
    return %c0_i32, %c0_i32_0 : i32, i32
  }
  func.func @transform_11(%arg0: i32) -> (i32, i32, i32) {
    %c0_i32 = arith.constant 0 : i32
    %c0_i32_0 = arith.constant 0 : i32
    %c0_i32_1 = arith.constant 0 : i32
    return %arg0, %c0_i32, %c0_i32_0 : i32, i32, i32
  }
}

module attributes {stable_mosaic.version = 11 : i64} {
  func.func @_decoder_layer_kernel(%arg0: i32, %arg1: memref<1x8x64xf32, #tpu.memory_space<vmem>>, %arg2: memref<1x8x64xf32, #tpu.memory_space<vmem>>, %arg3: memref<64x64xbf16, #tpu.memory_space<vmem>>, %arg4: memref<1x64xf32, #tpu.memory_space<vmem>>, %arg5: memref<64x128xbf16, #tpu.memory_space<vmem>>, %arg6: memref<1x128xf32, #tpu.memory_space<vmem>>, %arg7: memref<64x64xbf16, #tpu.memory_space<vmem>>, %arg8: memref<1x64xf32, #tpu.memory_space<vmem>>, %arg9: memref<64x192xbf16, #tpu.memory_space<vmem>>, %arg10: memref<1x192xf32, #tpu.memory_space<vmem>>, %arg11: memref<64x64xbf16, #tpu.memory_space<vmem>>, %arg12: memref<1x64xf32, #tpu.memory_space<vmem>>, %arg13: memref<64x128xbf16, #tpu.memory_space<vmem>>, %arg14: memref<1x128xf32, #tpu.memory_space<vmem>>, %arg15: memref<128x64xbf16, #tpu.memory_space<vmem>>, %arg16: memref<1x64xf32, #tpu.memory_space<vmem>>, %arg17: memref<1x64xf32, #tpu.memory_space<vmem>>, %arg18: memref<1x64xf32, #tpu.memory_space<vmem>>, %arg19: memref<1x8x64xf32, #tpu.memory_space<vmem>>) attributes {dimension_semantics = [#tpu.dimension_semantics<parallel>], iteration_bounds = array<i64: 2>, scalar_prefetch = 0 : i64, scratch_operands = 0 : i64, tpu.core_type = #tpu.core_type<tc>, window_params = [{transform_indices = @transform_0, window_bounds = array<i64: 1, 8, 64>}, {transform_indices = @transform_1, window_bounds = array<i64: 1, 8, 64>}, {pipeline_mode = #tpu.pipeline_mode<synchronous>, transform_indices = @transform_2, window_bounds = array<i64: 64, 64>}, {pipeline_mode = #tpu.pipeline_mode<synchronous>, transform_indices = @transform_3, window_bounds = array<i64: 1, 64>}, {pipeline_mode = #tpu.pipeline_mode<synchronous>, transform_indices = @transform_4, window_bounds = array<i64: 64, 128>}, {pipeline_mode = #tpu.pipeline_mode<synchronous>, transform_indices = @transform_5, window_bounds = array<i64: 1, 128>}, {pipeline_mode = #tpu.pipeline_mode<synchronous>, transform_indices = @transform_6, window_bounds = array<i64: 64, 64>}, {pipeline_mode = #tpu.pipeline_mode<synchronous>, transform_indices = @transform_7, window_bounds = array<i64: 1, 64>}, {pipeline_mode = #tpu.pipeline_mode<synchronous>, transform_indices = @transform_8, window_bounds = array<i64: 64, 192>}, {pipeline_mode = #tpu.pipeline_mode<synchronous>, transform_indices = @transform_9, window_bounds = array<i64: 1, 192>}, {pipeline_mode = #tpu.pipeline_mode<synchronous>, transform_indices = @transform_10, window_bounds = array<i64: 64, 64>}, {pipeline_mode = #tpu.pipeline_mode<synchronous>, transform_indices = @transform_11, window_bounds = array<i64: 1, 64>}, {pipeline_mode = #tpu.pipeline_mode<synchronous>, transform_indices = @transform_12, window_bounds = array<i64: 64, 128>}, {pipeline_mode = #tpu.pipeline_mode<synchronous>, transform_indices = @transform_13, window_bounds = array<i64: 1, 128>}, {pipeline_mode = #tpu.pipeline_mode<synchronous>, transform_indices = @transform_14, window_bounds = array<i64: 128, 64>}, {pipeline_mode = #tpu.pipeline_mode<synchronous>, transform_indices = @transform_15, window_bounds = array<i64: 1, 64>}, {pipeline_mode = #tpu.pipeline_mode<synchronous>, transform_indices = @transform_16, window_bounds = array<i64: 1, 64>}, {pipeline_mode = #tpu.pipeline_mode<synchronous>, transform_indices = @transform_17, window_bounds = array<i64: 1, 64>}, {transform_indices = @transform_18, window_bounds = array<i64: 1, 8, 64>}]} {
    %c0 = arith.constant 0 : index
    %c0_0 = arith.constant 0 : index
    %c0_1 = arith.constant 0 : index
    %0 = vector.load %arg1[%c0, %c0_0, %c0_1] : memref<1x8x64xf32, #tpu.memory_space<vmem>>, vector<1x8x64xf32>
    %1 = vector.shape_cast %0 : vector<1x8x64xf32> to vector<8x64xf32>
    %c0_2 = arith.constant 0 : index
    %c0_3 = arith.constant 0 : index
    %c0_4 = arith.constant 0 : index
    %2 = vector.load %arg2[%c0_2, %c0_3, %c0_4] : memref<1x8x64xf32, #tpu.memory_space<vmem>>, vector<1x8x64xf32>
    %3 = vector.shape_cast %2 : vector<1x8x64xf32> to vector<8x64xf32>
    %c0_5 = arith.constant 0 : index
    %c0_6 = arith.constant 0 : index
    %4 = vector.load %arg17[%c0_5, %c0_6] : memref<1x64xf32, #tpu.memory_space<vmem>>, vector<1x64xf32>
    %c0_7 = arith.constant 0 : index
    %c0_8 = arith.constant 0 : index
    %5 = vector.load %arg18[%c0_7, %c0_8] : memref<1x64xf32, #tpu.memory_space<vmem>>, vector<1x64xf32>
    %6 = arith.truncf %1 : vector<8x64xf32> to vector<8x64xbf16>
    %c0_9 = arith.constant 0 : index
    %c0_10 = arith.constant 0 : index
    %7 = vector.load %arg3[%c0_9, %c0_10] : memref<64x64xbf16, #tpu.memory_space<vmem>>, vector<64x64xbf16>
    %cst = arith.constant dense<0.000000e+00> : vector<8x64xf32>
    %8 = tpu.matmul %6, %7, %cst {dimension_numbers = #tpu.dot_dimension_numbers<[1], [0], [0], [1], [0, 0, 1, 1], [], []>} : vector<8x64xbf16>, vector<64x64xbf16>, vector<8x64xf32> -> vector<8x64xf32>
    %c0_11 = arith.constant 0 : index
    %c0_12 = arith.constant 0 : index
    %9 = vector.load %arg4[%c0_11, %c0_12] : memref<1x64xf32, #tpu.memory_space<vmem>>, vector<1x64xf32>
    %10 = vector.broadcast %9 : vector<1x64xf32> to vector<8x64xf32>
    %11 = arith.addf %8, %10 : vector<8x64xf32>
    %12 = arith.truncf %3 : vector<8x64xf32> to vector<8x64xbf16>
    %c0_13 = arith.constant 0 : index
    %c0_14 = arith.constant 0 : index
    %13 = vector.load %arg5[%c0_13, %c0_14] : memref<64x128xbf16, #tpu.memory_space<vmem>>, vector<64x128xbf16>
    %cst_15 = arith.constant dense<0.000000e+00> : vector<8x128xf32>
    %14 = tpu.matmul %12, %13, %cst_15 {dimension_numbers = #tpu.dot_dimension_numbers<[1], [0], [0], [1], [0, 0, 1, 1], [], []>} : vector<8x64xbf16>, vector<64x128xbf16>, vector<8x128xf32> -> vector<8x128xf32>
    %c0_16 = arith.constant 0 : index
    %c0_17 = arith.constant 0 : index
    %15 = vector.load %arg6[%c0_16, %c0_17] : memref<1x128xf32, #tpu.memory_space<vmem>>, vector<1x128xf32>
    %16 = vector.broadcast %15 : vector<1x128xf32> to vector<8x128xf32>
    %17 = arith.addf %14, %16 : vector<8x128xf32>
    %18 = tpu.transpose %17, [1, 0] : vector<8x128xf32> -> vector<128x8xf32>
    %19 = tpu.transpose %11, [1, 0] : vector<8x64xf32> -> vector<64x8xf32>
    %20 = vector.extract_strided_slice %18 {offsets = [0, 0], sizes = [64, 8], strides = [1, 1]} : vector<128x8xf32> to vector<64x8xf32>
    %21 = vector.extract_strided_slice %18 {offsets = [64, 0], sizes = [64, 8], strides = [1, 1]} : vector<128x8xf32> to vector<64x8xf32>
    %cst_18 = arith.constant 0.353553385 : f32
    %22 = vector.broadcast %cst_18 : f32 to vector<64x8xf32>
    %23 = arith.mulf %19, %22 : vector<64x8xf32>
    %24 = vector.extract_strided_slice %23 {offsets = [0, 0], sizes = [8, 8], strides = [1, 1]} : vector<64x8xf32> to vector<8x8xf32>
    %25 = tpu.transpose %24, [1, 0] : vector<8x8xf32> -> vector<8x8xf32>
    %26 = vector.extract_strided_slice %20 {offsets = [0, 0], sizes = [8, 8], strides = [1, 1]} : vector<64x8xf32> to vector<8x8xf32>
    %cst_19 = arith.constant dense<0.000000e+00> : vector<8x8xf32>
    %27 = tpu.matmul %25, %26, %cst_19 {dimension_numbers = #tpu.dot_dimension_numbers<[1], [0], [0], [1], [0, 0, 1, 1], [], []>} : vector<8x8xf32>, vector<8x8xf32>, vector<8x8xf32> -> vector<8x8xf32>
    %cst_20 = arith.constant dense<0xFF800000> : vector<8xf32>
    %28 = vector.multi_reduction <maximumf>, %27, %cst_20 [1] : vector<8x8xf32> to vector<8xf32>
    %29 = vector.shape_cast %28 : vector<8xf32> to vector<8x1xf32>
    %30 = vector.broadcast %29 : vector<8x1xf32> to vector<8x8xf32>
    %31 = arith.subf %27, %30 : vector<8x8xf32>
    %32 = math.exp %31 : vector<8x8xf32>
    %cst_21 = arith.constant dense<0.000000e+00> : vector<8xf32>
    %33 = vector.multi_reduction <add>, %32, %cst_21 [1] : vector<8x8xf32> to vector<8xf32>
    %34 = vector.shape_cast %33 : vector<8xf32> to vector<8x1xf32>
    %35 = tpu.reciprocal %34 {approx = true} : vector<8x1xf32> -> vector<8x1xf32>
    %36 = vector.broadcast %35 : vector<8x1xf32> to vector<8x8xf32>
    %37 = arith.mulf %32, %36 : vector<8x8xf32>
    %38 = vector.extract_strided_slice %21 {offsets = [0, 0], sizes = [8, 8], strides = [1, 1]} : vector<64x8xf32> to vector<8x8xf32>
    %39 = tpu.transpose %37, [1, 0] : vector<8x8xf32> -> vector<8x8xf32>
    %cst_22 = arith.constant dense<0.000000e+00> : vector<8x8xf32>
    %40 = tpu.matmul %38, %39, %cst_22 {dimension_numbers = #tpu.dot_dimension_numbers<[1], [0], [0], [1], [0, 0, 1, 1], [], []>} : vector<8x8xf32>, vector<8x8xf32>, vector<8x8xf32> -> vector<8x8xf32>
    %41 = vector.extract_strided_slice %23 {offsets = [8, 0], sizes = [8, 8], strides = [1, 1]} : vector<64x8xf32> to vector<8x8xf32>
    %42 = tpu.transpose %41, [1, 0] : vector<8x8xf32> -> vector<8x8xf32>
    %43 = vector.extract_strided_slice %20 {offsets = [8, 0], sizes = [8, 8], strides = [1, 1]} : vector<64x8xf32> to vector<8x8xf32>
    %cst_23 = arith.constant dense<0.000000e+00> : vector<8x8xf32>
    %44 = tpu.matmul %42, %43, %cst_23 {dimension_numbers = #tpu.dot_dimension_numbers<[1], [0], [0], [1], [0, 0, 1, 1], [], []>} : vector<8x8xf32>, vector<8x8xf32>, vector<8x8xf32> -> vector<8x8xf32>
    %cst_24 = arith.constant dense<0xFF800000> : vector<8xf32>
    %45 = vector.multi_reduction <maximumf>, %44, %cst_24 [1] : vector<8x8xf32> to vector<8xf32>
    %46 = vector.shape_cast %45 : vector<8xf32> to vector<8x1xf32>
    %47 = vector.broadcast %46 : vector<8x1xf32> to vector<8x8xf32>
    %48 = arith.subf %44, %47 : vector<8x8xf32>
    %49 = math.exp %48 : vector<8x8xf32>
    %cst_25 = arith.constant dense<0.000000e+00> : vector<8xf32>
    %50 = vector.multi_reduction <add>, %49, %cst_25 [1] : vector<8x8xf32> to vector<8xf32>
    %51 = vector.shape_cast %50 : vector<8xf32> to vector<8x1xf32>
    %52 = tpu.reciprocal %51 {approx = true} : vector<8x1xf32> -> vector<8x1xf32>
    %53 = vector.broadcast %52 : vector<8x1xf32> to vector<8x8xf32>
    %54 = arith.mulf %49, %53 : vector<8x8xf32>
    %55 = vector.extract_strided_slice %21 {offsets = [8, 0], sizes = [8, 8], strides = [1, 1]} : vector<64x8xf32> to vector<8x8xf32>
    %56 = tpu.transpose %54, [1, 0] : vector<8x8xf32> -> vector<8x8xf32>
    %cst_26 = arith.constant dense<0.000000e+00> : vector<8x8xf32>
    %57 = tpu.matmul %55, %56, %cst_26 {dimension_numbers = #tpu.dot_dimension_numbers<[1], [0], [0], [1], [0, 0, 1, 1], [], []>} : vector<8x8xf32>, vector<8x8xf32>, vector<8x8xf32> -> vector<8x8xf32>
    %58 = vector.extract_strided_slice %23 {offsets = [16, 0], sizes = [8, 8], strides = [1, 1]} : vector<64x8xf32> to vector<8x8xf32>
    %59 = tpu.transpose %58, [1, 0] : vector<8x8xf32> -> vector<8x8xf32>
    %60 = vector.extract_strided_slice %20 {offsets = [16, 0], sizes = [8, 8], strides = [1, 1]} : vector<64x8xf32> to vector<8x8xf32>
    %cst_27 = arith.constant dense<0.000000e+00> : vector<8x8xf32>
    %61 = tpu.matmul %59, %60, %cst_27 {dimension_numbers = #tpu.dot_dimension_numbers<[1], [0], [0], [1], [0, 0, 1, 1], [], []>} : vector<8x8xf32>, vector<8x8xf32>, vector<8x8xf32> -> vector<8x8xf32>
    %cst_28 = arith.constant dense<0xFF800000> : vector<8xf32>
    %62 = vector.multi_reduction <maximumf>, %61, %cst_28 [1] : vector<8x8xf32> to vector<8xf32>
    %63 = vector.shape_cast %62 : vector<8xf32> to vector<8x1xf32>
    %64 = vector.broadcast %63 : vector<8x1xf32> to vector<8x8xf32>
    %65 = arith.subf %61, %64 : vector<8x8xf32>
    %66 = math.exp %65 : vector<8x8xf32>
    %cst_29 = arith.constant dense<0.000000e+00> : vector<8xf32>
    %67 = vector.multi_reduction <add>, %66, %cst_29 [1] : vector<8x8xf32> to vector<8xf32>
    %68 = vector.shape_cast %67 : vector<8xf32> to vector<8x1xf32>
    %69 = tpu.reciprocal %68 {approx = true} : vector<8x1xf32> -> vector<8x1xf32>
    %70 = vector.broadcast %69 : vector<8x1xf32> to vector<8x8xf32>
    %71 = arith.mulf %66, %70 : vector<8x8xf32>
    %72 = vector.extract_strided_slice %21 {offsets = [16, 0], sizes = [8, 8], strides = [1, 1]} : vector<64x8xf32> to vector<8x8xf32>
    %73 = tpu.transpose %71, [1, 0] : vector<8x8xf32> -> vector<8x8xf32>
    %cst_30 = arith.constant dense<0.000000e+00> : vector<8x8xf32>
    %74 = tpu.matmul %72, %73, %cst_30 {dimension_numbers = #tpu.dot_dimension_numbers<[1], [0], [0], [1], [0, 0, 1, 1], [], []>} : vector<8x8xf32>, vector<8x8xf32>, vector<8x8xf32> -> vector<8x8xf32>
    %75 = vector.extract_strided_slice %23 {offsets = [24, 0], sizes = [8, 8], strides = [1, 1]} : vector<64x8xf32> to vector<8x8xf32>
    %76 = tpu.transpose %75, [1, 0] : vector<8x8xf32> -> vector<8x8xf32>
    %77 = vector.extract_strided_slice %20 {offsets = [24, 0], sizes = [8, 8], strides = [1, 1]} : vector<64x8xf32> to vector<8x8xf32>
    %cst_31 = arith.constant dense<0.000000e+00> : vector<8x8xf32>
    %78 = tpu.matmul %76, %77, %cst_31 {dimension_numbers = #tpu.dot_dimension_numbers<[1], [0], [0], [1], [0, 0, 1, 1], [], []>} : vector<8x8xf32>, vector<8x8xf32>, vector<8x8xf32> -> vector<8x8xf32>
    %cst_32 = arith.constant dense<0xFF800000> : vector<8xf32>
    %79 = vector.multi_reduction <maximumf>, %78, %cst_32 [1] : vector<8x8xf32> to vector<8xf32>
    %80 = vector.shape_cast %79 : vector<8xf32> to vector<8x1xf32>
    %81 = vector.broadcast %80 : vector<8x1xf32> to vector<8x8xf32>
    %82 = arith.subf %78, %81 : vector<8x8xf32>
    %83 = math.exp %82 : vector<8x8xf32>
    %cst_33 = arith.constant dense<0.000000e+00> : vector<8xf32>
    %84 = vector.multi_reduction <add>, %83, %cst_33 [1] : vector<8x8xf32> to vector<8xf32>
    %85 = vector.shape_cast %84 : vector<8xf32> to vector<8x1xf32>
    %86 = tpu.reciprocal %85 {approx = true} : vector<8x1xf32> -> vector<8x1xf32>
    %87 = vector.broadcast %86 : vector<8x1xf32> to vector<8x8xf32>
    %88 = arith.mulf %83, %87 : vector<8x8xf32>
    %89 = vector.extract_strided_slice %21 {offsets = [24, 0], sizes = [8, 8], strides = [1, 1]} : vector<64x8xf32> to vector<8x8xf32>
    %90 = tpu.transpose %88, [1, 0] : vector<8x8xf32> -> vector<8x8xf32>
    %cst_34 = arith.constant dense<0.000000e+00> : vector<8x8xf32>
    %91 = tpu.matmul %89, %90, %cst_34 {dimension_numbers = #tpu.dot_dimension_numbers<[1], [0], [0], [1], [0, 0, 1, 1], [], []>} : vector<8x8xf32>, vector<8x8xf32>, vector<8x8xf32> -> vector<8x8xf32>
    %92 = vector.extract_strided_slice %23 {offsets = [32, 0], sizes = [8, 8], strides = [1, 1]} : vector<64x8xf32> to vector<8x8xf32>
    %93 = tpu.transpose %92, [1, 0] : vector<8x8xf32> -> vector<8x8xf32>
    %94 = vector.extract_strided_slice %20 {offsets = [32, 0], sizes = [8, 8], strides = [1, 1]} : vector<64x8xf32> to vector<8x8xf32>
    %cst_35 = arith.constant dense<0.000000e+00> : vector<8x8xf32>
    %95 = tpu.matmul %93, %94, %cst_35 {dimension_numbers = #tpu.dot_dimension_numbers<[1], [0], [0], [1], [0, 0, 1, 1], [], []>} : vector<8x8xf32>, vector<8x8xf32>, vector<8x8xf32> -> vector<8x8xf32>
    %cst_36 = arith.constant dense<0xFF800000> : vector<8xf32>
    %96 = vector.multi_reduction <maximumf>, %95, %cst_36 [1] : vector<8x8xf32> to vector<8xf32>
    %97 = vector.shape_cast %96 : vector<8xf32> to vector<8x1xf32>
    %98 = vector.broadcast %97 : vector<8x1xf32> to vector<8x8xf32>
    %99 = arith.subf %95, %98 : vector<8x8xf32>
    %100 = math.exp %99 : vector<8x8xf32>
    %cst_37 = arith.constant dense<0.000000e+00> : vector<8xf32>
    %101 = vector.multi_reduction <add>, %100, %cst_37 [1] : vector<8x8xf32> to vector<8xf32>
    %102 = vector.shape_cast %101 : vector<8xf32> to vector<8x1xf32>
    %103 = tpu.reciprocal %102 {approx = true} : vector<8x1xf32> -> vector<8x1xf32>
    %104 = vector.broadcast %103 : vector<8x1xf32> to vector<8x8xf32>
    %105 = arith.mulf %100, %104 : vector<8x8xf32>
    %106 = vector.extract_strided_slice %21 {offsets = [32, 0], sizes = [8, 8], strides = [1, 1]} : vector<64x8xf32> to vector<8x8xf32>
    %107 = tpu.transpose %105, [1, 0] : vector<8x8xf32> -> vector<8x8xf32>
    %cst_38 = arith.constant dense<0.000000e+00> : vector<8x8xf32>
    %108 = tpu.matmul %106, %107, %cst_38 {dimension_numbers = #tpu.dot_dimension_numbers<[1], [0], [0], [1], [0, 0, 1, 1], [], []>} : vector<8x8xf32>, vector<8x8xf32>, vector<8x8xf32> -> vector<8x8xf32>
    %109 = vector.extract_strided_slice %23 {offsets = [40, 0], sizes = [8, 8], strides = [1, 1]} : vector<64x8xf32> to vector<8x8xf32>
    %110 = tpu.transpose %109, [1, 0] : vector<8x8xf32> -> vector<8x8xf32>
    %111 = vector.extract_strided_slice %20 {offsets = [40, 0], sizes = [8, 8], strides = [1, 1]} : vector<64x8xf32> to vector<8x8xf32>
    %cst_39 = arith.constant dense<0.000000e+00> : vector<8x8xf32>
    %112 = tpu.matmul %110, %111, %cst_39 {dimension_numbers = #tpu.dot_dimension_numbers<[1], [0], [0], [1], [0, 0, 1, 1], [], []>} : vector<8x8xf32>, vector<8x8xf32>, vector<8x8xf32> -> vector<8x8xf32>
    %cst_40 = arith.constant dense<0xFF800000> : vector<8xf32>
    %113 = vector.multi_reduction <maximumf>, %112, %cst_40 [1] : vector<8x8xf32> to vector<8xf32>
    %114 = vector.shape_cast %113 : vector<8xf32> to vector<8x1xf32>
    %115 = vector.broadcast %114 : vector<8x1xf32> to vector<8x8xf32>
    %116 = arith.subf %112, %115 : vector<8x8xf32>
    %117 = math.exp %116 : vector<8x8xf32>
    %cst_41 = arith.constant dense<0.000000e+00> : vector<8xf32>
    %118 = vector.multi_reduction <add>, %117, %cst_41 [1] : vector<8x8xf32> to vector<8xf32>
    %119 = vector.shape_cast %118 : vector<8xf32> to vector<8x1xf32>
    %120 = tpu.reciprocal %119 {approx = true} : vector<8x1xf32> -> vector<8x1xf32>
    %121 = vector.broadcast %120 : vector<8x1xf32> to vector<8x8xf32>
    %122 = arith.mulf %117, %121 : vector<8x8xf32>
    %123 = vector.extract_strided_slice %21 {offsets = [40, 0], sizes = [8, 8], strides = [1, 1]} : vector<64x8xf32> to vector<8x8xf32>
    %124 = tpu.transpose %122, [1, 0] : vector<8x8xf32> -> vector<8x8xf32>
    %cst_42 = arith.constant dense<0.000000e+00> : vector<8x8xf32>
    %125 = tpu.matmul %123, %124, %cst_42 {dimension_numbers = #tpu.dot_dimension_numbers<[1], [0], [0], [1], [0, 0, 1, 1], [], []>} : vector<8x8xf32>, vector<8x8xf32>, vector<8x8xf32> -> vector<8x8xf32>
    %126 = vector.extract_strided_slice %23 {offsets = [48, 0], sizes = [8, 8], strides = [1, 1]} : vector<64x8xf32> to vector<8x8xf32>
    %127 = tpu.transpose %126, [1, 0] : vector<8x8xf32> -> vector<8x8xf32>
    %128 = vector.extract_strided_slice %20 {offsets = [48, 0], sizes = [8, 8], strides = [1, 1]} : vector<64x8xf32> to vector<8x8xf32>
    %cst_43 = arith.constant dense<0.000000e+00> : vector<8x8xf32>
    %129 = tpu.matmul %127, %128, %cst_43 {dimension_numbers = #tpu.dot_dimension_numbers<[1], [0], [0], [1], [0, 0, 1, 1], [], []>} : vector<8x8xf32>, vector<8x8xf32>, vector<8x8xf32> -> vector<8x8xf32>
    %cst_44 = arith.constant dense<0xFF800000> : vector<8xf32>
    %130 = vector.multi_reduction <maximumf>, %129, %cst_44 [1] : vector<8x8xf32> to vector<8xf32>
    %131 = vector.shape_cast %130 : vector<8xf32> to vector<8x1xf32>
    %132 = vector.broadcast %131 : vector<8x1xf32> to vector<8x8xf32>
    %133 = arith.subf %129, %132 : vector<8x8xf32>
    %134 = math.exp %133 : vector<8x8xf32>
    %cst_45 = arith.constant dense<0.000000e+00> : vector<8xf32>
    %135 = vector.multi_reduction <add>, %134, %cst_45 [1] : vector<8x8xf32> to vector<8xf32>
    %136 = vector.shape_cast %135 : vector<8xf32> to vector<8x1xf32>
    %137 = tpu.reciprocal %136 {approx = true} : vector<8x1xf32> -> vector<8x1xf32>
    %138 = vector.broadcast %137 : vector<8x1xf32> to vector<8x8xf32>
    %139 = arith.mulf %134, %138 : vector<8x8xf32>
    %140 = vector.extract_strided_slice %21 {offsets = [48, 0], sizes = [8, 8], strides = [1, 1]} : vector<64x8xf32> to vector<8x8xf32>
    %141 = tpu.transpose %139, [1, 0] : vector<8x8xf32> -> vector<8x8xf32>
    %cst_46 = arith.constant dense<0.000000e+00> : vector<8x8xf32>
    %142 = tpu.matmul %140, %141, %cst_46 {dimension_numbers = #tpu.dot_dimension_numbers<[1], [0], [0], [1], [0, 0, 1, 1], [], []>} : vector<8x8xf32>, vector<8x8xf32>, vector<8x8xf32> -> vector<8x8xf32>
    %143 = vector.extract_strided_slice %23 {offsets = [56, 0], sizes = [8, 8], strides = [1, 1]} : vector<64x8xf32> to vector<8x8xf32>
    %144 = tpu.transpose %143, [1, 0] : vector<8x8xf32> -> vector<8x8xf32>
    %145 = vector.extract_strided_slice %20 {offsets = [56, 0], sizes = [8, 8], strides = [1, 1]} : vector<64x8xf32> to vector<8x8xf32>
    %cst_47 = arith.constant dense<0.000000e+00> : vector<8x8xf32>
    %146 = tpu.matmul %144, %145, %cst_47 {dimension_numbers = #tpu.dot_dimension_numbers<[1], [0], [0], [1], [0, 0, 1, 1], [], []>} : vector<8x8xf32>, vector<8x8xf32>, vector<8x8xf32> -> vector<8x8xf32>
    %cst_48 = arith.constant dense<0xFF800000> : vector<8xf32>
    %147 = vector.multi_reduction <maximumf>, %146, %cst_48 [1] : vector<8x8xf32> to vector<8xf32>
    %148 = vector.shape_cast %147 : vector<8xf32> to vector<8x1xf32>
    %149 = vector.broadcast %148 : vector<8x1xf32> to vector<8x8xf32>
    %150 = arith.subf %146, %149 : vector<8x8xf32>
    %151 = math.exp %150 : vector<8x8xf32>
    %cst_49 = arith.constant dense<0.000000e+00> : vector<8xf32>
    %152 = vector.multi_reduction <add>, %151, %cst_49 [1] : vector<8x8xf32> to vector<8xf32>
    %153 = vector.shape_cast %152 : vector<8xf32> to vector<8x1xf32>
    %154 = tpu.reciprocal %153 {approx = true} : vector<8x1xf32> -> vector<8x1xf32>
    %155 = vector.broadcast %154 : vector<8x1xf32> to vector<8x8xf32>
    %156 = arith.mulf %151, %155 : vector<8x8xf32>
    %157 = vector.extract_strided_slice %21 {offsets = [56, 0], sizes = [8, 8], strides = [1, 1]} : vector<64x8xf32> to vector<8x8xf32>
    %158 = tpu.transpose %156, [1, 0] : vector<8x8xf32> -> vector<8x8xf32>
    %cst_50 = arith.constant dense<0.000000e+00> : vector<8x8xf32>
    %159 = tpu.matmul %157, %158, %cst_50 {dimension_numbers = #tpu.dot_dimension_numbers<[1], [0], [0], [1], [0, 0, 1, 1], [], []>} : vector<8x8xf32>, vector<8x8xf32>, vector<8x8xf32> -> vector<8x8xf32>
    %160 = tpu.concatenate %40, %57, %74, %91, %108, %125, %142, %159 in 0 : vector<8x8xf32>, vector<8x8xf32>, vector<8x8xf32>, vector<8x8xf32>, vector<8x8xf32>, vector<8x8xf32>, vector<8x8xf32>, vector<8x8xf32> -> vector<64x8xf32>
    %161 = tpu.transpose %160, [1, 0] : vector<64x8xf32> -> vector<8x64xf32>
    %162 = arith.truncf %161 : vector<8x64xf32> to vector<8x64xbf16>
    %c0_51 = arith.constant 0 : index
    %c0_52 = arith.constant 0 : index
    %163 = vector.load %arg7[%c0_51, %c0_52] : memref<64x64xbf16, #tpu.memory_space<vmem>>, vector<64x64xbf16>
    %cst_53 = arith.constant dense<0.000000e+00> : vector<8x64xf32>
    %164 = tpu.matmul %162, %163, %cst_53 {dimension_numbers = #tpu.dot_dimension_numbers<[1], [0], [0], [1], [0, 0, 1, 1], [], []>} : vector<8x64xbf16>, vector<64x64xbf16>, vector<8x64xf32> -> vector<8x64xf32>
    %c0_54 = arith.constant 0 : index
    %c0_55 = arith.constant 0 : index
    %165 = vector.load %arg8[%c0_54, %c0_55] : memref<1x64xf32, #tpu.memory_space<vmem>>, vector<1x64xf32>
    %166 = vector.broadcast %165 : vector<1x64xf32> to vector<8x64xf32>
    %167 = arith.addf %164, %166 : vector<8x64xf32>
    %168 = arith.addf %1, %167 : vector<8x64xf32>
    %cst_56 = arith.constant dense<0.000000e+00> : vector<8xf32>
    %169 = vector.multi_reduction <add>, %168, %cst_56 [1] : vector<8x64xf32> to vector<8xf32>
    %170 = vector.shape_cast %169 : vector<8xf32> to vector<8x1xf32>
    %cst_57 = arith.constant 6.400000e+01 : f32
    %171 = vector.broadcast %cst_57 : f32 to vector<8x1xf32>
    %172 = arith.divf %170, %171 : vector<8x1xf32>
    %173 = vector.broadcast %172 : vector<8x1xf32> to vector<8x64xf32>
    %174 = arith.subf %168, %173 : vector<8x64xf32>
    %175 = arith.mulf %174, %174 : vector<8x64xf32>
    %cst_58 = arith.constant dense<0.000000e+00> : vector<8xf32>
    %176 = vector.multi_reduction <add>, %175, %cst_58 [1] : vector<8x64xf32> to vector<8xf32>
    %177 = vector.shape_cast %176 : vector<8xf32> to vector<8x1xf32>
    %cst_59 = arith.constant 6.400000e+01 : f32
    %178 = vector.broadcast %cst_59 : f32 to vector<8x1xf32>
    %179 = arith.divf %177, %178 : vector<8x1xf32>
    %180 = vector.broadcast %172 : vector<8x1xf32> to vector<8x64xf32>
    %181 = arith.subf %168, %180 : vector<8x64xf32>
    %cst_60 = arith.constant 9.99999974E-6 : f32
    %182 = vector.broadcast %cst_60 : f32 to vector<8x1xf32>
    %183 = arith.addf %179, %182 : vector<8x1xf32>
    %184 = math.rsqrt %183 : vector<8x1xf32>
    %185 = vector.broadcast %184 : vector<8x1xf32> to vector<8x64xf32>
    %186 = arith.mulf %181, %185 : vector<8x64xf32>
    %187 = vector.broadcast %4 : vector<1x64xf32> to vector<8x64xf32>
    %188 = arith.mulf %186, %187 : vector<8x64xf32>
    %189 = vector.broadcast %5 : vector<1x64xf32> to vector<8x64xf32>
    %190 = arith.addf %188, %189 : vector<8x64xf32>
    %191 = arith.truncf %190 : vector<8x64xf32> to vector<8x64xbf16>
    %c0_61 = arith.constant 0 : index
    %c0_62 = arith.constant 0 : index
    %192 = vector.load %arg9[%c0_61, %c0_62] : memref<64x192xbf16, #tpu.memory_space<vmem>>, vector<64x192xbf16>
    %cst_63 = arith.constant dense<0.000000e+00> : vector<8x192xf32>
    %193 = tpu.matmul %191, %192, %cst_63 {dimension_numbers = #tpu.dot_dimension_numbers<[1], [0], [0], [1], [0, 0, 1, 1], [], []>} : vector<8x64xbf16>, vector<64x192xbf16>, vector<8x192xf32> -> vector<8x192xf32>
    %c0_64 = arith.constant 0 : index
    %c0_65 = arith.constant 0 : index
    %194 = vector.load %arg10[%c0_64, %c0_65] : memref<1x192xf32, #tpu.memory_space<vmem>>, vector<1x192xf32>
    %195 = vector.broadcast %194 : vector<1x192xf32> to vector<8x192xf32>
    %196 = arith.addf %193, %195 : vector<8x192xf32>
    %197 = tpu.transpose %196, [1, 0] : vector<8x192xf32> -> vector<192x8xf32>
    %198 = vector.extract_strided_slice %197 {offsets = [0, 0], sizes = [64, 8], strides = [1, 1]} : vector<192x8xf32> to vector<64x8xf32>
    %199 = vector.extract_strided_slice %197 {offsets = [64, 0], sizes = [64, 8], strides = [1, 1]} : vector<192x8xf32> to vector<64x8xf32>
    %200 = vector.extract_strided_slice %197 {offsets = [128, 0], sizes = [64, 8], strides = [1, 1]} : vector<192x8xf32> to vector<64x8xf32>
    %cst_66 = arith.constant 0.353553385 : f32
    %201 = vector.broadcast %cst_66 : f32 to vector<64x8xf32>
    %202 = arith.mulf %198, %201 : vector<64x8xf32>
    %203 = tpu.iota {dimensions = array<i32: 0>} : vector<8x8xi32>
    %204 = tpu.iota {dimensions = array<i32: 1>} : vector<8x8xi32>
    %205 = arith.cmpi sgt, %204, %203 : vector<8x8xi32>
    %cst_67 = arith.constant -1.000000e+30 : f32
    %cst_68 = arith.constant 0.000000e+00 : f32
    %206 = vector.broadcast %cst_67 : f32 to vector<8x8xf32>
    %207 = vector.broadcast %cst_68 : f32 to vector<8x8xf32>
    %208 = arith.select %205, %206, %207 : vector<8x8xi1>, vector<8x8xf32>
    %209 = vector.extract_strided_slice %202 {offsets = [0, 0], sizes = [8, 8], strides = [1, 1]} : vector<64x8xf32> to vector<8x8xf32>
    %210 = tpu.transpose %209, [1, 0] : vector<8x8xf32> -> vector<8x8xf32>
    %211 = vector.extract_strided_slice %199 {offsets = [0, 0], sizes = [8, 8], strides = [1, 1]} : vector<64x8xf32> to vector<8x8xf32>
    %cst_69 = arith.constant dense<0.000000e+00> : vector<8x8xf32>
    %212 = tpu.matmul %210, %211, %cst_69 {dimension_numbers = #tpu.dot_dimension_numbers<[1], [0], [0], [1], [0, 0, 1, 1], [], []>} : vector<8x8xf32>, vector<8x8xf32>, vector<8x8xf32> -> vector<8x8xf32>
    %213 = arith.addf %212, %208 : vector<8x8xf32>
    %cst_70 = arith.constant dense<0xFF800000> : vector<8xf32>
    %214 = vector.multi_reduction <maximumf>, %213, %cst_70 [1] : vector<8x8xf32> to vector<8xf32>
    %215 = vector.shape_cast %214 : vector<8xf32> to vector<8x1xf32>
    %216 = vector.broadcast %215 : vector<8x1xf32> to vector<8x8xf32>
    %217 = arith.subf %213, %216 : vector<8x8xf32>
    %218 = math.exp %217 : vector<8x8xf32>
    %cst_71 = arith.constant dense<0.000000e+00> : vector<8xf32>
    %219 = vector.multi_reduction <add>, %218, %cst_71 [1] : vector<8x8xf32> to vector<8xf32>
    %220 = vector.shape_cast %219 : vector<8xf32> to vector<8x1xf32>
    %221 = tpu.reciprocal %220 {approx = true} : vector<8x1xf32> -> vector<8x1xf32>
    %222 = vector.broadcast %221 : vector<8x1xf32> to vector<8x8xf32>
    %223 = arith.mulf %218, %222 : vector<8x8xf32>
    %224 = vector.extract_strided_slice %200 {offsets = [0, 0], sizes = [8, 8], strides = [1, 1]} : vector<64x8xf32> to vector<8x8xf32>
    %225 = tpu.transpose %223, [1, 0] : vector<8x8xf32> -> vector<8x8xf32>
    %cst_72 = arith.constant dense<0.000000e+00> : vector<8x8xf32>
    %226 = tpu.matmul %224, %225, %cst_72 {dimension_numbers = #tpu.dot_dimension_numbers<[1], [0], [0], [1], [0, 0, 1, 1], [], []>} : vector<8x8xf32>, vector<8x8xf32>, vector<8x8xf32> -> vector<8x8xf32>
    %227 = vector.extract_strided_slice %202 {offsets = [8, 0], sizes = [8, 8], strides = [1, 1]} : vector<64x8xf32> to vector<8x8xf32>
    %228 = tpu.transpose %227, [1, 0] : vector<8x8xf32> -> vector<8x8xf32>
    %229 = vector.extract_strided_slice %199 {offsets = [8, 0], sizes = [8, 8], strides = [1, 1]} : vector<64x8xf32> to vector<8x8xf32>
    %cst_73 = arith.constant dense<0.000000e+00> : vector<8x8xf32>
    %230 = tpu.matmul %228, %229, %cst_73 {dimension_numbers = #tpu.dot_dimension_numbers<[1], [0], [0], [1], [0, 0, 1, 1], [], []>} : vector<8x8xf32>, vector<8x8xf32>, vector<8x8xf32> -> vector<8x8xf32>
    %231 = arith.addf %230, %208 : vector<8x8xf32>
    %cst_74 = arith.constant dense<0xFF800000> : vector<8xf32>
    %232 = vector.multi_reduction <maximumf>, %231, %cst_74 [1] : vector<8x8xf32> to vector<8xf32>
    %233 = vector.shape_cast %232 : vector<8xf32> to vector<8x1xf32>
    %234 = vector.broadcast %233 : vector<8x1xf32> to vector<8x8xf32>
    %235 = arith.subf %231, %234 : vector<8x8xf32>
    %236 = math.exp %235 : vector<8x8xf32>
    %cst_75 = arith.constant dense<0.000000e+00> : vector<8xf32>
    %237 = vector.multi_reduction <add>, %236, %cst_75 [1] : vector<8x8xf32> to vector<8xf32>
    %238 = vector.shape_cast %237 : vector<8xf32> to vector<8x1xf32>
    %239 = tpu.reciprocal %238 {approx = true} : vector<8x1xf32> -> vector<8x1xf32>
    %240 = vector.broadcast %239 : vector<8x1xf32> to vector<8x8xf32>
    %241 = arith.mulf %236, %240 : vector<8x8xf32>
    %242 = vector.extract_strided_slice %200 {offsets = [8, 0], sizes = [8, 8], strides = [1, 1]} : vector<64x8xf32> to vector<8x8xf32>
    %243 = tpu.transpose %241, [1, 0] : vector<8x8xf32> -> vector<8x8xf32>
    %cst_76 = arith.constant dense<0.000000e+00> : vector<8x8xf32>
    %244 = tpu.matmul %242, %243, %cst_76 {dimension_numbers = #tpu.dot_dimension_numbers<[1], [0], [0], [1], [0, 0, 1, 1], [], []>} : vector<8x8xf32>, vector<8x8xf32>, vector<8x8xf32> -> vector<8x8xf32>
    %245 = vector.extract_strided_slice %202 {offsets = [16, 0], sizes = [8, 8], strides = [1, 1]} : vector<64x8xf32> to vector<8x8xf32>
    %246 = tpu.transpose %245, [1, 0] : vector<8x8xf32> -> vector<8x8xf32>
    %247 = vector.extract_strided_slice %199 {offsets = [16, 0], sizes = [8, 8], strides = [1, 1]} : vector<64x8xf32> to vector<8x8xf32>
    %cst_77 = arith.constant dense<0.000000e+00> : vector<8x8xf32>
    %248 = tpu.matmul %246, %247, %cst_77 {dimension_numbers = #tpu.dot_dimension_numbers<[1], [0], [0], [1], [0, 0, 1, 1], [], []>} : vector<8x8xf32>, vector<8x8xf32>, vector<8x8xf32> -> vector<8x8xf32>
    %249 = arith.addf %248, %208 : vector<8x8xf32>
    %cst_78 = arith.constant dense<0xFF800000> : vector<8xf32>
    %250 = vector.multi_reduction <maximumf>, %249, %cst_78 [1] : vector<8x8xf32> to vector<8xf32>
    %251 = vector.shape_cast %250 : vector<8xf32> to vector<8x1xf32>
    %252 = vector.broadcast %251 : vector<8x1xf32> to vector<8x8xf32>
    %253 = arith.subf %249, %252 : vector<8x8xf32>
    %254 = math.exp %253 : vector<8x8xf32>
    %cst_79 = arith.constant dense<0.000000e+00> : vector<8xf32>
    %255 = vector.multi_reduction <add>, %254, %cst_79 [1] : vector<8x8xf32> to vector<8xf32>
    %256 = vector.shape_cast %255 : vector<8xf32> to vector<8x1xf32>
    %257 = tpu.reciprocal %256 {approx = true} : vector<8x1xf32> -> vector<8x1xf32>
    %258 = vector.broadcast %257 : vector<8x1xf32> to vector<8x8xf32>
    %259 = arith.mulf %254, %258 : vector<8x8xf32>
    %260 = vector.extract_strided_slice %200 {offsets = [16, 0], sizes = [8, 8], strides = [1, 1]} : vector<64x8xf32> to vector<8x8xf32>
    %261 = tpu.transpose %259, [1, 0] : vector<8x8xf32> -> vector<8x8xf32>
    %cst_80 = arith.constant dense<0.000000e+00> : vector<8x8xf32>
    %262 = tpu.matmul %260, %261, %cst_80 {dimension_numbers = #tpu.dot_dimension_numbers<[1], [0], [0], [1], [0, 0, 1, 1], [], []>} : vector<8x8xf32>, vector<8x8xf32>, vector<8x8xf32> -> vector<8x8xf32>
    %263 = vector.extract_strided_slice %202 {offsets = [24, 0], sizes = [8, 8], strides = [1, 1]} : vector<64x8xf32> to vector<8x8xf32>
    %264 = tpu.transpose %263, [1, 0] : vector<8x8xf32> -> vector<8x8xf32>
    %265 = vector.extract_strided_slice %199 {offsets = [24, 0], sizes = [8, 8], strides = [1, 1]} : vector<64x8xf32> to vector<8x8xf32>
    %cst_81 = arith.constant dense<0.000000e+00> : vector<8x8xf32>
    %266 = tpu.matmul %264, %265, %cst_81 {dimension_numbers = #tpu.dot_dimension_numbers<[1], [0], [0], [1], [0, 0, 1, 1], [], []>} : vector<8x8xf32>, vector<8x8xf32>, vector<8x8xf32> -> vector<8x8xf32>
    %267 = arith.addf %266, %208 : vector<8x8xf32>
    %cst_82 = arith.constant dense<0xFF800000> : vector<8xf32>
    %268 = vector.multi_reduction <maximumf>, %267, %cst_82 [1] : vector<8x8xf32> to vector<8xf32>
    %269 = vector.shape_cast %268 : vector<8xf32> to vector<8x1xf32>
    %270 = vector.broadcast %269 : vector<8x1xf32> to vector<8x8xf32>
    %271 = arith.subf %267, %270 : vector<8x8xf32>
    %272 = math.exp %271 : vector<8x8xf32>
    %cst_83 = arith.constant dense<0.000000e+00> : vector<8xf32>
    %273 = vector.multi_reduction <add>, %272, %cst_83 [1] : vector<8x8xf32> to vector<8xf32>
    %274 = vector.shape_cast %273 : vector<8xf32> to vector<8x1xf32>
    %275 = tpu.reciprocal %274 {approx = true} : vector<8x1xf32> -> vector<8x1xf32>
    %276 = vector.broadcast %275 : vector<8x1xf32> to vector<8x8xf32>
    %277 = arith.mulf %272, %276 : vector<8x8xf32>
    %278 = vector.extract_strided_slice %200 {offsets = [24, 0], sizes = [8, 8], strides = [1, 1]} : vector<64x8xf32> to vector<8x8xf32>
    %279 = tpu.transpose %277, [1, 0] : vector<8x8xf32> -> vector<8x8xf32>
    %cst_84 = arith.constant dense<0.000000e+00> : vector<8x8xf32>
    %280 = tpu.matmul %278, %279, %cst_84 {dimension_numbers = #tpu.dot_dimension_numbers<[1], [0], [0], [1], [0, 0, 1, 1], [], []>} : vector<8x8xf32>, vector<8x8xf32>, vector<8x8xf32> -> vector<8x8xf32>
    %281 = vector.extract_strided_slice %202 {offsets = [32, 0], sizes = [8, 8], strides = [1, 1]} : vector<64x8xf32> to vector<8x8xf32>
    %282 = tpu.transpose %281, [1, 0] : vector<8x8xf32> -> vector<8x8xf32>
    %283 = vector.extract_strided_slice %199 {offsets = [32, 0], sizes = [8, 8], strides = [1, 1]} : vector<64x8xf32> to vector<8x8xf32>
    %cst_85 = arith.constant dense<0.000000e+00> : vector<8x8xf32>
    %284 = tpu.matmul %282, %283, %cst_85 {dimension_numbers = #tpu.dot_dimension_numbers<[1], [0], [0], [1], [0, 0, 1, 1], [], []>} : vector<8x8xf32>, vector<8x8xf32>, vector<8x8xf32> -> vector<8x8xf32>
    %285 = arith.addf %284, %208 : vector<8x8xf32>
    %cst_86 = arith.constant dense<0xFF800000> : vector<8xf32>
    %286 = vector.multi_reduction <maximumf>, %285, %cst_86 [1] : vector<8x8xf32> to vector<8xf32>
    %287 = vector.shape_cast %286 : vector<8xf32> to vector<8x1xf32>
    %288 = vector.broadcast %287 : vector<8x1xf32> to vector<8x8xf32>
    %289 = arith.subf %285, %288 : vector<8x8xf32>
    %290 = math.exp %289 : vector<8x8xf32>
    %cst_87 = arith.constant dense<0.000000e+00> : vector<8xf32>
    %291 = vector.multi_reduction <add>, %290, %cst_87 [1] : vector<8x8xf32> to vector<8xf32>
    %292 = vector.shape_cast %291 : vector<8xf32> to vector<8x1xf32>
    %293 = tpu.reciprocal %292 {approx = true} : vector<8x1xf32> -> vector<8x1xf32>
    %294 = vector.broadcast %293 : vector<8x1xf32> to vector<8x8xf32>
    %295 = arith.mulf %290, %294 : vector<8x8xf32>
    %296 = vector.extract_strided_slice %200 {offsets = [32, 0], sizes = [8, 8], strides = [1, 1]} : vector<64x8xf32> to vector<8x8xf32>
    %297 = tpu.transpose %295, [1, 0] : vector<8x8xf32> -> vector<8x8xf32>
    %cst_88 = arith.constant dense<0.000000e+00> : vector<8x8xf32>
    %298 = tpu.matmul %296, %297, %cst_88 {dimension_numbers = #tpu.dot_dimension_numbers<[1], [0], [0], [1], [0, 0, 1, 1], [], []>} : vector<8x8xf32>, vector<8x8xf32>, vector<8x8xf32> -> vector<8x8xf32>
    %299 = vector.extract_strided_slice %202 {offsets = [40, 0], sizes = [8, 8], strides = [1, 1]} : vector<64x8xf32> to vector<8x8xf32>
    %300 = tpu.transpose %299, [1, 0] : vector<8x8xf32> -> vector<8x8xf32>
    %301 = vector.extract_strided_slice %199 {offsets = [40, 0], sizes = [8, 8], strides = [1, 1]} : vector<64x8xf32> to vector<8x8xf32>
    %cst_89 = arith.constant dense<0.000000e+00> : vector<8x8xf32>
    %302 = tpu.matmul %300, %301, %cst_89 {dimension_numbers = #tpu.dot_dimension_numbers<[1], [0], [0], [1], [0, 0, 1, 1], [], []>} : vector<8x8xf32>, vector<8x8xf32>, vector<8x8xf32> -> vector<8x8xf32>
    %303 = arith.addf %302, %208 : vector<8x8xf32>
    %cst_90 = arith.constant dense<0xFF800000> : vector<8xf32>
    %304 = vector.multi_reduction <maximumf>, %303, %cst_90 [1] : vector<8x8xf32> to vector<8xf32>
    %305 = vector.shape_cast %304 : vector<8xf32> to vector<8x1xf32>
    %306 = vector.broadcast %305 : vector<8x1xf32> to vector<8x8xf32>
    %307 = arith.subf %303, %306 : vector<8x8xf32>
    %308 = math.exp %307 : vector<8x8xf32>
    %cst_91 = arith.constant dense<0.000000e+00> : vector<8xf32>
    %309 = vector.multi_reduction <add>, %308, %cst_91 [1] : vector<8x8xf32> to vector<8xf32>
    %310 = vector.shape_cast %309 : vector<8xf32> to vector<8x1xf32>
    %311 = tpu.reciprocal %310 {approx = true} : vector<8x1xf32> -> vector<8x1xf32>
    %312 = vector.broadcast %311 : vector<8x1xf32> to vector<8x8xf32>
    %313 = arith.mulf %308, %312 : vector<8x8xf32>
    %314 = vector.extract_strided_slice %200 {offsets = [40, 0], sizes = [8, 8], strides = [1, 1]} : vector<64x8xf32> to vector<8x8xf32>
    %315 = tpu.transpose %313, [1, 0] : vector<8x8xf32> -> vector<8x8xf32>
    %cst_92 = arith.constant dense<0.000000e+00> : vector<8x8xf32>
    %316 = tpu.matmul %314, %315, %cst_92 {dimension_numbers = #tpu.dot_dimension_numbers<[1], [0], [0], [1], [0, 0, 1, 1], [], []>} : vector<8x8xf32>, vector<8x8xf32>, vector<8x8xf32> -> vector<8x8xf32>
    %317 = vector.extract_strided_slice %202 {offsets = [48, 0], sizes = [8, 8], strides = [1, 1]} : vector<64x8xf32> to vector<8x8xf32>
    %318 = tpu.transpose %317, [1, 0] : vector<8x8xf32> -> vector<8x8xf32>
    %319 = vector.extract_strided_slice %199 {offsets = [48, 0], sizes = [8, 8], strides = [1, 1]} : vector<64x8xf32> to vector<8x8xf32>
    %cst_93 = arith.constant dense<0.000000e+00> : vector<8x8xf32>
    %320 = tpu.matmul %318, %319, %cst_93 {dimension_numbers = #tpu.dot_dimension_numbers<[1], [0], [0], [1], [0, 0, 1, 1], [], []>} : vector<8x8xf32>, vector<8x8xf32>, vector<8x8xf32> -> vector<8x8xf32>
    %321 = arith.addf %320, %208 : vector<8x8xf32>
    %cst_94 = arith.constant dense<0xFF800000> : vector<8xf32>
    %322 = vector.multi_reduction <maximumf>, %321, %cst_94 [1] : vector<8x8xf32> to vector<8xf32>
    %323 = vector.shape_cast %322 : vector<8xf32> to vector<8x1xf32>
    %324 = vector.broadcast %323 : vector<8x1xf32> to vector<8x8xf32>
    %325 = arith.subf %321, %324 : vector<8x8xf32>
    %326 = math.exp %325 : vector<8x8xf32>
    %cst_95 = arith.constant dense<0.000000e+00> : vector<8xf32>
    %327 = vector.multi_reduction <add>, %326, %cst_95 [1] : vector<8x8xf32> to vector<8xf32>
    %328 = vector.shape_cast %327 : vector<8xf32> to vector<8x1xf32>
    %329 = tpu.reciprocal %328 {approx = true} : vector<8x1xf32> -> vector<8x1xf32>
    %330 = vector.broadcast %329 : vector<8x1xf32> to vector<8x8xf32>
    %331 = arith.mulf %326, %330 : vector<8x8xf32>
    %332 = vector.extract_strided_slice %200 {offsets = [48, 0], sizes = [8, 8], strides = [1, 1]} : vector<64x8xf32> to vector<8x8xf32>
    %333 = tpu.transpose %331, [1, 0] : vector<8x8xf32> -> vector<8x8xf32>
    %cst_96 = arith.constant dense<0.000000e+00> : vector<8x8xf32>
    %334 = tpu.matmul %332, %333, %cst_96 {dimension_numbers = #tpu.dot_dimension_numbers<[1], [0], [0], [1], [0, 0, 1, 1], [], []>} : vector<8x8xf32>, vector<8x8xf32>, vector<8x8xf32> -> vector<8x8xf32>
    %335 = vector.extract_strided_slice %202 {offsets = [56, 0], sizes = [8, 8], strides = [1, 1]} : vector<64x8xf32> to vector<8x8xf32>
    %336 = tpu.transpose %335, [1, 0] : vector<8x8xf32> -> vector<8x8xf32>
    %337 = vector.extract_strided_slice %199 {offsets = [56, 0], sizes = [8, 8], strides = [1, 1]} : vector<64x8xf32> to vector<8x8xf32>
    %cst_97 = arith.constant dense<0.000000e+00> : vector<8x8xf32>
    %338 = tpu.matmul %336, %337, %cst_97 {dimension_numbers = #tpu.dot_dimension_numbers<[1], [0], [0], [1], [0, 0, 1, 1], [], []>} : vector<8x8xf32>, vector<8x8xf32>, vector<8x8xf32> -> vector<8x8xf32>
    %339 = arith.addf %338, %208 : vector<8x8xf32>
    %cst_98 = arith.constant dense<0xFF800000> : vector<8xf32>
    %340 = vector.multi_reduction <maximumf>, %339, %cst_98 [1] : vector<8x8xf32> to vector<8xf32>
    %341 = vector.shape_cast %340 : vector<8xf32> to vector<8x1xf32>
    %342 = vector.broadcast %341 : vector<8x1xf32> to vector<8x8xf32>
    %343 = arith.subf %339, %342 : vector<8x8xf32>
    %344 = math.exp %343 : vector<8x8xf32>
    %cst_99 = arith.constant dense<0.000000e+00> : vector<8xf32>
    %345 = vector.multi_reduction <add>, %344, %cst_99 [1] : vector<8x8xf32> to vector<8xf32>
    %346 = vector.shape_cast %345 : vector<8xf32> to vector<8x1xf32>
    %347 = tpu.reciprocal %346 {approx = true} : vector<8x1xf32> -> vector<8x1xf32>
    %348 = vector.broadcast %347 : vector<8x1xf32> to vector<8x8xf32>
    %349 = arith.mulf %344, %348 : vector<8x8xf32>
    %350 = vector.extract_strided_slice %200 {offsets = [56, 0], sizes = [8, 8], strides = [1, 1]} : vector<64x8xf32> to vector<8x8xf32>
    %351 = tpu.transpose %349, [1, 0] : vector<8x8xf32> -> vector<8x8xf32>
    %cst_100 = arith.constant dense<0.000000e+00> : vector<8x8xf32>
    %352 = tpu.matmul %350, %351, %cst_100 {dimension_numbers = #tpu.dot_dimension_numbers<[1], [0], [0], [1], [0, 0, 1, 1], [], []>} : vector<8x8xf32>, vector<8x8xf32>, vector<8x8xf32> -> vector<8x8xf32>
    %353 = tpu.concatenate %226, %244, %262, %280, %298, %316, %334, %352 in 0 : vector<8x8xf32>, vector<8x8xf32>, vector<8x8xf32>, vector<8x8xf32>, vector<8x8xf32>, vector<8x8xf32>, vector<8x8xf32>, vector<8x8xf32> -> vector<64x8xf32>
    %354 = tpu.transpose %353, [1, 0] : vector<64x8xf32> -> vector<8x64xf32>
    %355 = arith.truncf %354 : vector<8x64xf32> to vector<8x64xbf16>
    %c0_101 = arith.constant 0 : index
    %c0_102 = arith.constant 0 : index
    %356 = vector.load %arg11[%c0_101, %c0_102] : memref<64x64xbf16, #tpu.memory_space<vmem>>, vector<64x64xbf16>
    %cst_103 = arith.constant dense<0.000000e+00> : vector<8x64xf32>
    %357 = tpu.matmul %355, %356, %cst_103 {dimension_numbers = #tpu.dot_dimension_numbers<[1], [0], [0], [1], [0, 0, 1, 1], [], []>} : vector<8x64xbf16>, vector<64x64xbf16>, vector<8x64xf32> -> vector<8x64xf32>
    %c0_104 = arith.constant 0 : index
    %c0_105 = arith.constant 0 : index
    %358 = vector.load %arg12[%c0_104, %c0_105] : memref<1x64xf32, #tpu.memory_space<vmem>>, vector<1x64xf32>
    %359 = vector.broadcast %358 : vector<1x64xf32> to vector<8x64xf32>
    %360 = arith.addf %357, %359 : vector<8x64xf32>
    %361 = arith.addf %190, %360 : vector<8x64xf32>
    %cst_106 = arith.constant dense<0.000000e+00> : vector<8xf32>
    %362 = vector.multi_reduction <add>, %361, %cst_106 [1] : vector<8x64xf32> to vector<8xf32>
    %363 = vector.shape_cast %362 : vector<8xf32> to vector<8x1xf32>
    %cst_107 = arith.constant 6.400000e+01 : f32
    %364 = vector.broadcast %cst_107 : f32 to vector<8x1xf32>
    %365 = arith.divf %363, %364 : vector<8x1xf32>
    %366 = vector.broadcast %365 : vector<8x1xf32> to vector<8x64xf32>
    %367 = arith.subf %361, %366 : vector<8x64xf32>
    %368 = arith.mulf %367, %367 : vector<8x64xf32>
    %cst_108 = arith.constant dense<0.000000e+00> : vector<8xf32>
    %369 = vector.multi_reduction <add>, %368, %cst_108 [1] : vector<8x64xf32> to vector<8xf32>
    %370 = vector.shape_cast %369 : vector<8xf32> to vector<8x1xf32>
    %cst_109 = arith.constant 6.400000e+01 : f32
    %371 = vector.broadcast %cst_109 : f32 to vector<8x1xf32>
    %372 = arith.divf %370, %371 : vector<8x1xf32>
    %373 = vector.broadcast %365 : vector<8x1xf32> to vector<8x64xf32>
    %374 = arith.subf %361, %373 : vector<8x64xf32>
    %cst_110 = arith.constant 9.99999974E-6 : f32
    %375 = vector.broadcast %cst_110 : f32 to vector<8x1xf32>
    %376 = arith.addf %372, %375 : vector<8x1xf32>
    %377 = math.rsqrt %376 : vector<8x1xf32>
    %378 = vector.broadcast %377 : vector<8x1xf32> to vector<8x64xf32>
    %379 = arith.mulf %374, %378 : vector<8x64xf32>
    %380 = vector.broadcast %4 : vector<1x64xf32> to vector<8x64xf32>
    %381 = arith.mulf %379, %380 : vector<8x64xf32>
    %382 = vector.broadcast %5 : vector<1x64xf32> to vector<8x64xf32>
    %383 = arith.addf %381, %382 : vector<8x64xf32>
    %384 = arith.truncf %383 : vector<8x64xf32> to vector<8x64xbf16>
    %c0_111 = arith.constant 0 : index
    %c0_112 = arith.constant 0 : index
    %385 = vector.load %arg13[%c0_111, %c0_112] : memref<64x128xbf16, #tpu.memory_space<vmem>>, vector<64x128xbf16>
    %cst_113 = arith.constant dense<0.000000e+00> : vector<8x128xf32>
    %386 = tpu.matmul %384, %385, %cst_113 {dimension_numbers = #tpu.dot_dimension_numbers<[1], [0], [0], [1], [0, 0, 1, 1], [], []>} : vector<8x64xbf16>, vector<64x128xbf16>, vector<8x128xf32> -> vector<8x128xf32>
    %c0_114 = arith.constant 0 : index
    %c0_115 = arith.constant 0 : index
    %387 = vector.load %arg14[%c0_114, %c0_115] : memref<1x128xf32, #tpu.memory_space<vmem>>, vector<1x128xf32>
    %388 = vector.broadcast %387 : vector<1x128xf32> to vector<8x128xf32>
    %389 = arith.addf %386, %388 : vector<8x128xf32>
    %cst_116 = arith.constant 0.000000e+00 : f32
    %390 = vector.broadcast %cst_116 : f32 to vector<8x128xf32>
    %391 = arith.maximumf %389, %390 : vector<8x128xf32>
    %392 = arith.truncf %391 : vector<8x128xf32> to vector<8x128xbf16>
    %c0_117 = arith.constant 0 : index
    %c0_118 = arith.constant 0 : index
    %393 = vector.load %arg15[%c0_117, %c0_118] : memref<128x64xbf16, #tpu.memory_space<vmem>>, vector<128x64xbf16>
    %cst_119 = arith.constant dense<0.000000e+00> : vector<8x64xf32>
    %394 = tpu.matmul %392, %393, %cst_119 {dimension_numbers = #tpu.dot_dimension_numbers<[1], [0], [0], [1], [0, 0, 1, 1], [], []>} : vector<8x128xbf16>, vector<128x64xbf16>, vector<8x64xf32> -> vector<8x64xf32>
    %c0_120 = arith.constant 0 : index
    %c0_121 = arith.constant 0 : index
    %395 = vector.load %arg16[%c0_120, %c0_121] : memref<1x64xf32, #tpu.memory_space<vmem>>, vector<1x64xf32>
    %396 = vector.broadcast %395 : vector<1x64xf32> to vector<8x64xf32>
    %397 = arith.addf %394, %396 : vector<8x64xf32>
    %cst_122 = arith.constant 0.000000e+00 : f32
    %398 = vector.broadcast %cst_122 : f32 to vector<8x64xf32>
    %399 = arith.maximumf %397, %398 : vector<8x64xf32>
    %400 = arith.addf %383, %399 : vector<8x64xf32>
    %cst_123 = arith.constant dense<0.000000e+00> : vector<8xf32>
    %401 = vector.multi_reduction <add>, %400, %cst_123 [1] : vector<8x64xf32> to vector<8xf32>
    %402 = vector.shape_cast %401 : vector<8xf32> to vector<8x1xf32>
    %cst_124 = arith.constant 6.400000e+01 : f32
    %403 = vector.broadcast %cst_124 : f32 to vector<8x1xf32>
    %404 = arith.divf %402, %403 : vector<8x1xf32>
    %405 = vector.broadcast %404 : vector<8x1xf32> to vector<8x64xf32>
    %406 = arith.subf %400, %405 : vector<8x64xf32>
    %407 = arith.mulf %406, %406 : vector<8x64xf32>
    %cst_125 = arith.constant dense<0.000000e+00> : vector<8xf32>
    %408 = vector.multi_reduction <add>, %407, %cst_125 [1] : vector<8x64xf32> to vector<8xf32>
    %409 = vector.shape_cast %408 : vector<8xf32> to vector<8x1xf32>
    %cst_126 = arith.constant 6.400000e+01 : f32
    %410 = vector.broadcast %cst_126 : f32 to vector<8x1xf32>
    %411 = arith.divf %409, %410 : vector<8x1xf32>
    %412 = vector.broadcast %404 : vector<8x1xf32> to vector<8x64xf32>
    %413 = arith.subf %400, %412 : vector<8x64xf32>
    %cst_127 = arith.constant 9.99999974E-6 : f32
    %414 = vector.broadcast %cst_127 : f32 to vector<8x1xf32>
    %415 = arith.addf %411, %414 : vector<8x1xf32>
    %416 = math.rsqrt %415 : vector<8x1xf32>
    %417 = vector.broadcast %416 : vector<8x1xf32> to vector<8x64xf32>
    %418 = arith.mulf %413, %417 : vector<8x64xf32>
    %419 = vector.broadcast %4 : vector<1x64xf32> to vector<8x64xf32>
    %420 = arith.mulf %418, %419 : vector<8x64xf32>
    %421 = vector.broadcast %5 : vector<1x64xf32> to vector<8x64xf32>
    %422 = arith.addf %420, %421 : vector<8x64xf32>
    %c0_128 = arith.constant 0 : index
    %c0_129 = arith.constant 0 : index
    %c0_130 = arith.constant 0 : index
    %423 = vector.load %arg19[%c0_128, %c0_129, %c0_130] : memref<1x8x64xf32, #tpu.memory_space<vmem>>, vector<1x8x64xf32>
    %424 = vector.shape_cast %423 : vector<1x8x64xf32> to vector<8x64xf32>
    %425 = vector.shape_cast %422 : vector<8x64xf32> to vector<1x8x64xf32>
    tpu.vector_store %arg19[%c0_128, %c0_129, %c0_130], %425 {strides = array<i32>} : memref<1x8x64xf32, #tpu.memory_space<vmem>>, vector<1x8x64xf32>,
    return
  }
  func.func @transform_0(%arg0: i32) -> (i32, i32, i32) {
    %c0_i32 = arith.constant 0 : i32
    %c0_i32_0 = arith.constant 0 : i32
    %c0_i32_1 = arith.constant 0 : i32
    return %arg0, %c0_i32, %c0_i32_0 : i32, i32, i32
  }
  func.func @transform_1(%arg0: i32) -> (i32, i32, i32) {
    %c0_i32 = arith.constant 0 : i32
    %c0_i32_0 = arith.constant 0 : i32
    %c0_i32_1 = arith.constant 0 : i32
    return %arg0, %c0_i32, %c0_i32_0 : i32, i32, i32
  }
  func.func @transform_2(%arg0: i32) -> (i32, i32) {
    %c0_i32 = arith.constant 0 : i32
    %c0_i32_0 = arith.constant 0 : i32
    %c0_i32_1 = arith.constant 0 : i32
    return %c0_i32, %c0_i32_0 : i32, i32
  }
  func.func @transform_3(%arg0: i32) -> (i32, i32) {
    %c0_i32 = arith.constant 0 : i32
    %c0_i32_0 = arith.constant 0 : i32
    %c0_i32_1 = arith.constant 0 : i32
    return %c0_i32, %c0_i32_0 : i32, i32
  }
  func.func @transform_4(%arg0: i32) -> (i32, i32) {
    %c0_i32 = arith.constant 0 : i32
    %c0_i32_0 = arith.constant 0 : i32
    %c0_i32_1 = arith.constant 0 : i32
    return %c0_i32, %c0_i32_0 : i32, i32
  }
  func.func @transform_5(%arg0: i32) -> (i32, i32) {
    %c0_i32 = arith.constant 0 : i32
    %c0_i32_0 = arith.constant 0 : i32
    %c0_i32_1 = arith.constant 0 : i32
    return %c0_i32, %c0_i32_0 : i32, i32
  }
  func.func @transform_6(%arg0: i32) -> (i32, i32) {
    %c0_i32 = arith.constant 0 : i32
    %c0_i32_0 = arith.constant 0 : i32
    %c0_i32_1 = arith.constant 0 : i32
    return %c0_i32, %c0_i32_0 : i32, i32
  }
  func.func @transform_7(%arg0: i32) -> (i32, i32) {
    %c0_i32 = arith.constant 0 : i32
    %c0_i32_0 = arith.constant 0 : i32
    %c0_i32_1 = arith.constant 0 : i32
    return %c0_i32, %c0_i32_0 : i32, i32
  }
  func.func @transform_8(%arg0: i32) -> (i32, i32) {
    %c0_i32 = arith.constant 0 : i32
    %c0_i32_0 = arith.constant 0 : i32
    %c0_i32_1 = arith.constant 0 : i32
    return %c0_i32, %c0_i32_0 : i32, i32
  }
  func.func @transform_9(%arg0: i32) -> (i32, i32) {
    %c0_i32 = arith.constant 0 : i32
    %c0_i32_0 = arith.constant 0 : i32
    %c0_i32_1 = arith.constant 0 : i32
    return %c0_i32, %c0_i32_0 : i32, i32
  }
  func.func @transform_10(%arg0: i32) -> (i32, i32) {
    %c0_i32 = arith.constant 0 : i32
    %c0_i32_0 = arith.constant 0 : i32
    %c0_i32_1 = arith.constant 0 : i32
    return %c0_i32, %c0_i32_0 : i32, i32
  }
  func.func @transform_11(%arg0: i32) -> (i32, i32) {
    %c0_i32 = arith.constant 0 : i32
    %c0_i32_0 = arith.constant 0 : i32
    %c0_i32_1 = arith.constant 0 : i32
    return %c0_i32, %c0_i32_0 : i32, i32
  }
  func.func @transform_12(%arg0: i32) -> (i32, i32) {
    %c0_i32 = arith.constant 0 : i32
    %c0_i32_0 = arith.constant 0 : i32
    %c0_i32_1 = arith.constant 0 : i32
    return %c0_i32, %c0_i32_0 : i32, i32
  }
  func.func @transform_13(%arg0: i32) -> (i32, i32) {
    %c0_i32 = arith.constant 0 : i32
    %c0_i32_0 = arith.constant 0 : i32
    %c0_i32_1 = arith.constant 0 : i32
    return %c0_i32, %c0_i32_0 : i32, i32
  }
  func.func @transform_14(%arg0: i32) -> (i32, i32) {
    %c0_i32 = arith.constant 0 : i32
    %c0_i32_0 = arith.constant 0 : i32
    %c0_i32_1 = arith.constant 0 : i32
    return %c0_i32, %c0_i32_0 : i32, i32
  }
  func.func @transform_15(%arg0: i32) -> (i32, i32) {
    %c0_i32 = arith.constant 0 : i32
    %c0_i32_0 = arith.constant 0 : i32
    %c0_i32_1 = arith.constant 0 : i32
    return %c0_i32, %c0_i32_0 : i32, i32
  }
  func.func @transform_16(%arg0: i32) -> (i32, i32) {
    %c0_i32 = arith.constant 0 : i32
    %c0_i32_0 = arith.constant 0 : i32
    %c0_i32_1 = arith.constant 0 : i32
    return %c0_i32, %c0_i32_0 : i32, i32
  }
  func.func @transform_17(%arg0: i32) -> (i32, i32) {
    %c0_i32 = arith.constant 0 : i32
    %c0_i32_0 = arith.constant 0 : i32
    %c0_i32_1 = arith.constant 0 : i32
    return %c0_i32, %c0_i32_0 : i32, i32
  }
  func.func @transform_18(%arg0: i32) -> (i32, i32, i32) {
    %c0_i32 = arith.constant 0 : i32
    %c0_i32_0 = arith.constant 0 : i32
    %c0_i32_1 = arith.constant 0 : i32
    return %arg0, %c0_i32, %c0_i32_0 : i32, i32, i32
  }
}

</mosaic_0001>

<llo_original>
// kernel: transformer_forward.9
$region0: #{transformer_forward.9}
  #allocation0 [shape = 'u32[]', space=smem, size = 0x4, offset = 0x4, fixed_abs, tag = 'smem constant byte address 0x4 - core index']
  #allocation1 [shape = 'u32[144,128]{1,0:T(1,128)}', space=vmem, size = 0x12000, scoped, tag = 'internal scratch']
  %s0 = inlined_call_operand.vmem [shape: f32[2,8,64], index: 0, kind: input, shape index: {}]
  %s1 = inlined_call_operand.vmem [shape: bf16[64,128], index: 1, kind: input, shape index: {}]
  %s2 = inlined_call_operand.vmem [shape: f32[1,128], index: 2, kind: input, shape index: {}]
  %s3 = inlined_call_operand.hbm [shape: f32[2,8,128], index: 3, kind: output, shape index: {}]
  %s4 = sld [smem:[#allocation0]]
  $region45: #{transformer_forward.9} parent=0
    _
  %s6 = ssub.s32 1, %s4
  %s7 = scalar_select 0, %s6, %s4
  $region1: #{transformer_forward.9} parent=0
    #allocation2 [shape = 'u8[8192]{0}', space=vmem, size = 0x2000, scoped, tag = 'output window, operand 0']
    #allocation3 [shape = 's32[2]{0}', space=sflag, size = 0x8, scoped, tag = 'scoped memory for transformer_forward.9']
    %8 = vsyncpa [#allocation3], 0
    %s9 = scalar_lea.sflag [#allocation3], 1
    %10 = vsyncpa %s9, 0
    loop: start=0, step=1, limit=4
    $region2: #{transformer_forward.9} parent=1 // loop_pre_header
      _
    $region3: #{transformer_forward.9} parent=1 // loop_header
      %s12 = sphi 0, %s16
      %p13 = scmp.ge.s32.totalorder %s12, 4
      %s22 = sphi 0, %s24
      %s25 = sphi 0, %s22
      %s26 = sphi 0, %s25
      %s42 = sphi 0, %s26
      %s46 = sphi 0, %s46
      %s48 = sphi 0, %s46
      %s49 = sphi 0, %s48
      %s63 = sphi 0, %s49
      %s67 = sphi 0, %s67
      %s69 = sphi 0, %s67
      %s70 = sphi 0, %s69
      %s84 = sphi 0, %s70
      %s90 = sphi 0, %s92
      %s93 = sphi 0, %s90
      %s94 = sphi 0, %s93
      %s110 = sphi 0, %s94
    $region4: #{transformer_forward.9} parent=1 // loop_header_branch
      %15 = sbr.rel (%p13) target = $region8
    $region5: #{transformer_forward.9} parent=1 // loop_body
      %s17 = ssub.s32 %s12, 1
      %s18 = ssub.s32 %s12, 2
      %s19 = sadd.s32 %s12, 1
      %s20 = ssub.s32 %s12, %s19
      %p21 = scmp.eq.s32.totalorder %s20, 0
      %s23 = sadd.s32 %s22, 1
      %s24 = scalar_select %p21, %s22, %s23
      %p27 = pneg %p21
      %p28 = scmp.eq.s32.totalorder %s12, 1
      %p29 = por %p27, %p28
      %p30 = scmp.ne.s32.totalorder %s22, %s25
      %p31 = scmp.eq.s32.totalorder %s12, 0
      %p32 = por %p30, %p31
      %p33 = scmp.ne.s32.totalorder %s22, %s25
      %p34 = scmp.eq.s32.totalorder %s17, 1
      %p35 = por %p33, %p34
      %p36 = scmp.ne.s32.totalorder %s25, %s26
      %p37 = scmp.eq.s32.totalorder %s17, 0
      %p38 = por %p36, %p37
      %p39 = scmp.ne.s32.totalorder %s25, %s26
      %p40 = scmp.eq.s32.totalorder %s18, 1
      %p41 = por %p39, %p40
      %p43 = scmp.ne.s32.totalorder %s26, %s42
      %p44 = scmp.eq.s32.totalorder %s18, 0
      %p45 = por %p43, %p44
      %s47 = sadd.s32 %s46, 1
      %p50 = scmp.eq.s32.totalorder %s12, 1
      %p51 = scmp.ne.s32.totalorder %s46, %s48
      %p52 = scmp.eq.s32.totalorder %s12, 0
      %p53 = por %p51, %p52
      %p54 = scmp.ne.s32.totalorder %s46, %s48
      %p55 = scmp.eq.s32.totalorder %s17, 1
      %p56 = por %p54, %p55
      %p57 = scmp.ne.s32.totalorder %s48, %s49
      %p58 = scmp.eq.s32.totalorder %s17, 0
      %p59 = por %p57, %p58
      %p60 = scmp.ne.s32.totalorder %s48, %s49
      %p61 = scmp.eq.s32.totalorder %s18, 1
      %p62 = por %p60, %p61
      %p64 = scmp.ne.s32.totalorder %s49, %s63
      %p65 = scmp.eq.s32.totalorder %s18, 0
      %p66 = por %p64, %p65
      %s68 = sadd.s32 %s67, 1
      %p71 = scmp.eq.s32.totalorder %s12, 1
      %p72 = scmp.ne.s32.totalorder %s67, %s69
      %p73 = scmp.eq.s32.totalorder %s12, 0
      %p74 = por %p72, %p73
      %p75 = scmp.ne.s32.totalorder %s67, %s69
      %p76 = scmp.eq.s32.totalorder %s17, 1
      %p77 = por %p75, %p76
      %p78 = scmp.ne.s32.totalorder %s69, %s70
      %p79 = scmp.eq.s32.totalorder %s17, 0
      %p80 = por %p78, %p79
      %p81 = scmp.ne.s32.totalorder %s69, %s70
      %p82 = scmp.eq.s32.totalorder %s18, 1
      %p83 = por %p81, %p82
      %p85 = scmp.ne.s32.totalorder %s70, %s84
      %p86 = scmp.eq.s32.totalorder %s18, 0
      %p87 = por %p85, %p86
      %s88 = ssub.s32 %s12, %s19
      %p89 = scmp.eq.s32.totalorder %s88, 0
      %s91 = sadd.s32 %s90, 1
      %s92 = scalar_select %p89, %s90, %s91
      %p95 = pneg %p89
      %p96 = scmp.eq.s32.totalorder %s12, 1
      %p97 = por %p95, %p96
      %p98 = scmp.ne.s32.totalorder %s90, %s93
      %p99 = scmp.eq.s32.totalorder %s12, 0
      %p100 = por %p98, %p99
      %p101 = scmp.ne.s32.totalorder %s90, %s93
      %p102 = scmp.eq.s32.totalorder %s17, 1
      %p103 = por %p101, %p102
      %p104 = scmp.ne.s32.totalorder %s93, %s94
      %p105 = scmp.eq.s32.totalorder %s17, 0
      %p106 = por %p104, %p105
      %p107 = scmp.ne.s32.totalorder %s93, %s94
      %p108 = scmp.eq.s32.totalorder %s18, 1
      %p109 = por %p107, %p108
      %p111 = scmp.ne.s32.totalorder %s94, %s110
      %p112 = scmp.eq.s32.totalorder %s18, 0
      %p113 = por %p111, %p112
      %p114 = scmp.le.s32.totalorder 1, %s12
      %p115 = scmp.lt.s32.totalorder %s12, 3
      %p116 = pnand %p114, %p115
      %p117 = pneg %p116
      // Predicated region
      $region9: #{transformer_forward.9} parent=5 // pred_check
        _
      $region10: #{transformer_forward.9} parent=5 // pred_check_branch
        %119 = sbr.rel (%p116) target = $region12
      $region11: #{transformer_forward.9} parent=5 // pred_region
        %s120 = ssub.s32 %s12, 1
        // Predicated region
        $region13: #{transformer_forward.9} parent=11 // pred_check
          %p121 = pneg %p59
        $region14: #{transformer_forward.9} parent=11 // pred_check_branch
          %123 = sbr.rel (%p121) target = $region16
        $region15: #{transformer_forward.9} parent=11 // pred_region
          _
        $region16: #{transformer_forward.9} parent=11 // pred_fallthru
          _
        // Predicated region
        $region17: #{transformer_forward.9} parent=11 // pred_check
          %p124 = pneg %p80
        $region18: #{transformer_forward.9} parent=11 // pred_check_branch
          %126 = sbr.rel (%p124) target = $region20
        $region19: #{transformer_forward.9} parent=11 // pred_region
          _
        $region20: #{transformer_forward.9} parent=11 // pred_fallthru
          _
      $region12: #{transformer_forward.9} parent=5 // pred_fallthru
        _
      %p127 = scmp.lt.s32.totalorder %s12, 2
      // Predicated region
      $region21: #{transformer_forward.9} parent=5 // pred_check
        %p128 = pneg %p127
      $region22: #{transformer_forward.9} parent=5 // pred_check_branch
        %130 = sbr.rel (%p128) target = $region24
      $region23: #{transformer_forward.9} parent=5 // pred_region
        // Predicated region
        $region25: #{transformer_forward.9} parent=23 // pred_check
          %p131 = pneg %p32
        $region26: #{transformer_forward.9} parent=23 // pred_check_branch
          %133 = sbr.rel (%p131) target = $region28
        $region27: #{transformer_forward.9} parent=23 // pred_region
          %p134 = scmp.lt.s32.totalorder %s12, 1
          %s135 = scalar_select %p134, %s12, 1
          %s136 = smul.addr %s135, 8
          %s137 = scalar_lea.vmem %s0, %s136
        $region28: #{transformer_forward.9} parent=23 // pred_fallthru
          _
      $region24: #{transformer_forward.9} parent=5 // pred_fallthru
        _
      %p138 = scmp.le.s32.totalorder 1, %s12
      %p139 = scmp.lt.s32.totalorder %s12, 3
      %p140 = pnand %p138, %p139
      %p141 = pneg %p140
      // Predicated region
      $region29: #{transformer_forward.9} parent=5 // pred_check
        _
      $region30: #{transformer_forward.9} parent=5 // pred_check_branch
        %143 = sbr.rel (%p140) target = $region32
      $region31: #{transformer_forward.9} parent=5 // pred_region
        %s144 = ssub.s32 %s12, 1
        %p145 = scmp.lt.s32.totalorder %s17, 1
        %s146 = scalar_select %p145, %s17, 1
        %s147 = smul.addr %s146, 8
        %s148 = scalar_lea.vmem %s0, %s147
        %p149 = pneg %p38
        %p150 = pneg %p35
        %p151 = pneg %p59
        %p152 = pneg %p56
        %p153 = pneg %p80
        %p154 = pneg %p77
        %p155 = pneg %p106
        %p156 = pneg %p103
        %s157 = sand.u32 %s93, 1
        %s158 = scalar_lea.sflag [#allocation3], %s157
        %s159 = sand.u32 %s93, 1
        %s160 = smul.addr %s159, 8
        %s161 = scalar_lea.vmem [#allocation2], %s160
        %p162 = scmp.lt.s32.totalorder %s17, 1
        %s163 = scalar_select %p162, %s17, 1
        %s164 = smul.addr %s163, 8
        %s165 = scalar_lea.vmem %s0, %s164
        %v167 = vld [vmem:[%s165] sm:$0xff]
        %v168 = vpack.c.bf16 %v167, %v167
        %v169 = vld [vmem:[%s1] sm:$0xf]
        %v170 = vld [vmem:[%s1 + $0x4] sm:$0xf]
        %v171 = vld [vmem:[%s1 + $0x8] sm:$0xf]
        %v172 = vld [vmem:[%s1 + $0xc] sm:$0xf]
        %v173 = vld [vmem:[%s1 + $0x10] sm:$0xf]
        %v174 = vld [vmem:[%s1 + $0x14] sm:$0xf]
        %v175 = vld [vmem:[%s1 + $0x18] sm:$0xf]
        %v176 = vld [vmem:[%s1 + $0x1c] sm:$0xf]
        %v177 = vld [vmem:[%s2] sm:$0x1]
        %v179 = vlaneseq
        %v180 = vshrl.u32 %v179, 7
        %v181 = vsub.s32 0, %v180
        %v182 = vrot.slane %v177, %v181
        %v192 = vunpack.c.l.b16 %v169
        %v193 = vunpack.c.l.b16 %v170
        %v194 = vunpack.c.l.b16 %v171
        %v195 = vunpack.c.l.b16 %v172
        %v196 = vunpack.c.l.b16 %v173
        %v197 = vunpack.c.l.b16 %v174
        %v198 = vunpack.c.l.b16 %v175
        %v199 = vunpack.c.l.b16 %v176
        %v200 = vpack.c.b16 %v193, %v192
        %v201 = vpack.c.b16 %v195, %v194
        %v202 = vpack.c.b16 %v197, %v196
        %v203 = vpack.c.b16 %v199, %v198
        %vm208 = vcmask 523264
        %v210 = vsel %vm208, %v168, 0
        %212 = vmatprep.subr.bf16.mxu0 0
        %213 = vmatpush1.bf16.msra.mxu0 %v200
        %214 = vmatprep.subr.bf16.mxu0 0
        %215 = vmatpush1.bf16.msra.mxu0 %v201
        %216 = vmatprep.subr.bf16.mxu0 0
        %217 = vmatpush1.bf16.msra.mxu0 %v202
        %218 = vmatprep.subr.bf16.mxu0 0
        %219 = vmatpush1.bf16.msra.mxu0 %v203
        %220 = vmatprep.subr.bf16.mxu0 0
        %221 = vmatpush1.bf16.msra.mxu0 0
        %222 = vmatprep.subr.bf16.mxu0 0
        %223 = vmatpush1.bf16.msra.mxu0 0
        %224 = vmatprep.subr.bf16.mxu0 0
        %225 = vmatpush1.bf16.msra.mxu0 0
        %226 = vmatprep.subr.bf16.mxu0 0
        %227 = vmatpush1.bf16.msra.mxu0 0
        %228 = vmatprep.subr.bf16.mxu0 0
        %229 = vmatpush1.bf16.msra.mxu0 0
        %230 = vmatprep.subr.bf16.mxu0 0
        %231 = vmatpush1.bf16.msra.mxu0 0
        %232 = vmatprep.subr.bf16.mxu0 0
        %233 = vmatpush1.bf16.msra.mxu0 0
        %234 = vmatprep.subr.bf16.mxu0 0
        %235 = vmatpush1.bf16.msra.mxu0 0
        %236 = vmatprep.subr.bf16.mxu0 0
        %237 = vmatpush1.bf16.msra.mxu0 0
        %238 = vmatprep.subr.bf16.mxu0 0
        %239 = vmatpush1.bf16.msra.mxu0 0
        %240 = vmatprep.subr.bf16.mxu0 0
        %241 = vmatpush1.bf16.msra.mxu0 0
        %242 = vmatprep.subr.bf16.mxu0 0
        %243 = vmatpush1.bf16.msra.mxu0 0
        %244 = vmatprep.mubr.bf16.mxu0 0
        %245 = vmatmul.mubr.bf16.gmra.mrb[0].mxu0 %v210
        %v246 = vpop.f32.mrb[0].mxu0
        %v247 = vadd.f32 %v182, %v246
        %v248 = vpop.f32.mrb[0].mxu0
        %v249 = vpop.f32.mrb[0].mxu0
        %v250 = vpop.f32.mrb[0].mxu0
        %251 = vdwg.mxu0
        %252 = vst [vmem:[%s161] sm:$0xff] %v247
        %s253 = sand.u32 %s93, 1
        %s254 = scalar_lea.sflag [#allocation3], %s253
        %s255 = sand.u32 %s93, 1
        %s256 = smul.addr %s255, 8
        %s257 = scalar_lea.vmem [#allocation2], %s256
        // Predicated region
        $region33: #{transformer_forward.9} parent=31 // pred_check
          %p258 = pneg %p103
        $region34: #{transformer_forward.9} parent=31 // pred_check_branch
          %260 = sbr.rel (%p258) target = $region36
        $region35: #{transformer_forward.9} parent=31 // pred_region
          %s262 = ssub.s32 128, 128
          %263 = vsyncadd %s254, %s262
          %s264 = smul.addr %s17, 128
          %s265 = scalar_lea.hbm %s3, %s264
          %s267 = sshll.u32 %s257, 4
          %s268 = int_to_ptr.vmem [resolvable:$true] %s267
          %270 = dma.vmem_to_hbm [thread:$0]  %s268, 128, %s265, %s254
        $region36: #{transformer_forward.9} parent=31 // pred_fallthru
          _
      $region32: #{transformer_forward.9} parent=5 // pred_fallthru
        _
      %p271 = scmp.le.s32.totalorder 2, %s12
      // Predicated region
      $region37: #{transformer_forward.9} parent=5 // pred_check
        %p272 = pneg %p271
      $region38: #{transformer_forward.9} parent=5 // pred_check_branch
        %274 = sbr.rel (%p272) target = $region40
      $region39: #{transformer_forward.9} parent=5 // pred_region
        %s275 = ssub.s32 %s12, 2
        // Predicated region
        $region41: #{transformer_forward.9} parent=39 // pred_check
          %p276 = pneg %p109
        $region42: #{transformer_forward.9} parent=39 // pred_check_branch
          %278 = sbr.rel (%p276) target = $region44
        $region43: #{transformer_forward.9} parent=39 // pred_region
          %s279 = sand.u32 %s94, 1
          %s280 = scalar_lea.sflag [#allocation3], %s279
          %s281 = sand.u32 %s94, 1
          %s282 = smul.addr %s281, 8
          %s283 = scalar_lea.vmem [#allocation2], %s282
          %284 = dma.done %s280, 128
        $region44: #{transformer_forward.9} parent=39 // pred_fallthru
          _
      $region40: #{transformer_forward.9} parent=5 // pred_fallthru
        _
    $region6: #{transformer_forward.9} parent=1 // loop_footer
      %s16 = sadd.s32 1, %s12
    $region7: #{transformer_forward.9} parent=1 // loop_footer_branch
      %11 = sbr.rel target = $region3
    $region8: #{transformer_forward.9} parent=1 // loop_exit
      _
    %285 = vsyncpa [#allocation3], 1
    %s286 = scalar_lea.sflag [#allocation3], 1
    %287 = vsyncpa %s286, 1

// kernel: transformer_forward.5
$region0: #{transformer_forward.5}
  #allocation0 [shape = 'u32[]', space=smem, size = 0x4, offset = 0x4, fixed_abs, tag = 'smem constant byte address 0x4 - core index']
  #allocation1 [shape = 'u32[144,128]{1,0:T(1,128)}', space=vmem, size = 0x12000, scoped, tag = 'internal scratch']
  %s0 = inlined_call_operand.vmem [shape: f32[2,8,64], index: 0, kind: input, shape index: {}]
  %s1 = inlined_call_operand.vmem [shape: bf16[64,192], index: 1, kind: input, shape index: {}]
  %s2 = inlined_call_operand.vmem [shape: f32[1,192], index: 2, kind: input, shape index: {}]
  %s3 = inlined_call_operand.vmem [shape: bf16[64,64], index: 3, kind: input, shape index: {}]
  %s4 = inlined_call_operand.vmem [shape: f32[1,64], index: 4, kind: input, shape index: {}]
  %s5 = inlined_call_operand.vmem [shape: bf16[64,128], index: 5, kind: input, shape index: {}]
  %s6 = inlined_call_operand.vmem [shape: f32[1,128], index: 6, kind: input, shape index: {}]
  %s7 = inlined_call_operand.vmem [shape: bf16[128,64], index: 7, kind: input, shape index: {}]
  %s8 = inlined_call_operand.vmem [shape: f32[1,64], index: 8, kind: input, shape index: {}]
  %s9 = inlined_call_operand.vmem [shape: f32[1,64], index: 9, kind: input, shape index: {}]
  %s10 = inlined_call_operand.vmem [shape: f32[1,64], index: 10, kind: input, shape index: {}]
  %s11 = inlined_call_operand.vmem [shape: f32[2,8,64], index: 11, kind: output, shape index: {}]
  %s12 = sld [smem:[#allocation0]]
  $region77: #{transformer_forward.5} parent=0
    _
  %s14 = ssub.s32 1, %s12
  %s15 = scalar_select 0, %s14, %s12
  loop: start=0, step=1, limit=4
  $region2: #{transformer_forward.5} parent=0 // loop_pre_header
    _
  $region3: #{transformer_forward.5} parent=0 // loop_header
    %s17 = sphi 0, %s21
    %p18 = scmp.ge.s32.totalorder %s17, 4
    %s27 = sphi 0, %s29
    %s30 = sphi 0, %s27
    %s31 = sphi 0, %s30
    %s47 = sphi 0, %s31
    %s51 = sphi 0, %s51
    %s53 = sphi 0, %s51
    %s54 = sphi 0, %s53
    %s68 = sphi 0, %s54
    %s72 = sphi 0, %s72
    %s74 = sphi 0, %s72
    %s75 = sphi 0, %s74
    %s89 = sphi 0, %s75
    %s93 = sphi 0, %s93
    %s95 = sphi 0, %s93
    %s96 = sphi 0, %s95
    %s110 = sphi 0, %s96
    %s114 = sphi 0, %s114
    %s116 = sphi 0, %s114
    %s117 = sphi 0, %s116
    %s131 = sphi 0, %s117
    %s135 = sphi 0, %s135
    %s137 = sphi 0, %s135
    %s138 = sphi 0, %s137
    %s152 = sphi 0, %s138
    %s156 = sphi 0, %s156
    %s158 = sphi 0, %s156
    %s159 = sphi 0, %s158
    %s173 = sphi 0, %s159
    %s177 = sphi 0, %s177
    %s179 = sphi 0, %s177
    %s180 = sphi 0, %s179
    %s194 = sphi 0, %s180
    %s198 = sphi 0, %s198
    %s200 = sphi 0, %s198
    %s201 = sphi 0, %s200
    %s215 = sphi 0, %s201
    %s219 = sphi 0, %s219
    %s221 = sphi 0, %s219
    %s222 = sphi 0, %s221
    %s236 = sphi 0, %s222
    %s240 = sphi 0, %s240
    %s242 = sphi 0, %s240
    %s243 = sphi 0, %s242
    %s257 = sphi 0, %s243
    %s263 = sphi 0, %s265
    %s266 = sphi 0, %s263
    %s267 = sphi 0, %s266
    %s283 = sphi 0, %s267
  $region4: #{transformer_forward.5} parent=0 // loop_header_branch
    %20 = sbr.rel (%p18) target = $region8
  $region5: #{transformer_forward.5} parent=0 // loop_body
    %s22 = ssub.s32 %s17, 1
    %s23 = ssub.s32 %s17, 2
    %s24 = sadd.s32 %s17, 1
    %s25 = ssub.s32 %s17, %s24
    %p26 = scmp.eq.s32.totalorder %s25, 0
    %s28 = sadd.s32 %s27, 1
    %s29 = scalar_select %p26, %s27, %s28
    %p32 = pneg %p26
    %p33 = scmp.eq.s32.totalorder %s17, 1
    %p34 = por %p32, %p33
    %p35 = scmp.ne.s32.totalorder %s27, %s30
    %p36 = scmp.eq.s32.totalorder %s17, 0
    %p37 = por %p35, %p36
    %p38 = scmp.ne.s32.totalorder %s27, %s30
    %p39 = scmp.eq.s32.totalorder %s22, 1
    %p40 = por %p38, %p39
    %p41 = scmp.ne.s32.totalorder %s30, %s31
    %p42 = scmp.eq.s32.totalorder %s22, 0
    %p43 = por %p41, %p42
    %p44 = scmp.ne.s32.totalorder %s30, %s31
    %p45 = scmp.eq.s32.totalorder %s23, 1
    %p46 = por %p44, %p45
    %p48 = scmp.ne.s32.totalorder %s31, %s47
    %p49 = scmp.eq.s32.totalorder %s23, 0
    %p50 = por %p48, %p49
    %s52 = sadd.s32 %s51, 1
    %p55 = scmp.eq.s32.totalorder %s17, 1
    %p56 = scmp.ne.s32.totalorder %s51, %s53
    %p57 = scmp.eq.s32.totalorder %s17, 0
    %p58 = por %p56, %p57
    %p59 = scmp.ne.s32.totalorder %s51, %s53
    %p60 = scmp.eq.s32.totalorder %s22, 1
    %p61 = por %p59, %p60
    %p62 = scmp.ne.s32.totalorder %s53, %s54
    %p63 = scmp.eq.s32.totalorder %s22, 0
    %p64 = por %p62, %p63
    %p65 = scmp.ne.s32.totalorder %s53, %s54
    %p66 = scmp.eq.s32.totalorder %s23, 1
    %p67 = por %p65, %p66
    %p69 = scmp.ne.s32.totalorder %s54, %s68
    %p70 = scmp.eq.s32.totalorder %s23, 0
    %p71 = por %p69, %p70
    %s73 = sadd.s32 %s72, 1
    %p76 = scmp.eq.s32.totalorder %s17, 1
    %p77 = scmp.ne.s32.totalorder %s72, %s74
    %p78 = scmp.eq.s32.totalorder %s17, 0
    %p79 = por %p77, %p78
    %p80 = scmp.ne.s32.totalorder %s72, %s74
    %p81 = scmp.eq.s32.totalorder %s22, 1
    %p82 = por %p80, %p81
    %p83 = scmp.ne.s32.totalorder %s74, %s75
    %p84 = scmp.eq.s32.totalorder %s22, 0
    %p85 = por %p83, %p84
    %p86 = scmp.ne.s32.totalorder %s74, %s75
    %p87 = scmp.eq.s32.totalorder %s23, 1
    %p88 = por %p86, %p87
    %p90 = scmp.ne.s32.totalorder %s75, %s89
    %p91 = scmp.eq.s32.totalorder %s23, 0
    %p92 = por %p90, %p91
    %s94 = sadd.s32 %s93, 1
    %p97 = scmp.eq.s32.totalorder %s17, 1
    %p98 = scmp.ne.s32.totalorder %s93, %s95
    %p99 = scmp.eq.s32.totalorder %s17, 0
    %p100 = por %p98, %p99
    %p101 = scmp.ne.s32.totalorder %s93, %s95
    %p102 = scmp.eq.s32.totalorder %s22, 1
    %p103 = por %p101, %p102
    %p104 = scmp.ne.s32.totalorder %s95, %s96
    %p105 = scmp.eq.s32.totalorder %s22, 0
    %p106 = por %p104, %p105
    %p107 = scmp.ne.s32.totalorder %s95, %s96
    %p108 = scmp.eq.s32.totalorder %s23, 1
    %p109 = por %p107, %p108
    %p111 = scmp.ne.s32.totalorder %s96, %s110
    %p112 = scmp.eq.s32.totalorder %s23, 0
    %p113 = por %p111, %p112
    %s115 = sadd.s32 %s114, 1
    %p118 = scmp.eq.s32.totalorder %s17, 1
    %p119 = scmp.ne.s32.totalorder %s114, %s116
    %p120 = scmp.eq.s32.totalorder %s17, 0
    %p121 = por %p119, %p120
    %p122 = scmp.ne.s32.totalorder %s114, %s116
    %p123 = scmp.eq.s32.totalorder %s22, 1
    %p124 = por %p122, %p123
    %p125 = scmp.ne.s32.totalorder %s116, %s117
    %p126 = scmp.eq.s32.totalorder %s22, 0
    %p127 = por %p125, %p126
    %p128 = scmp.ne.s32.totalorder %s116, %s117
    %p129 = scmp.eq.s32.totalorder %s23, 1
    %p130 = por %p128, %p129
    %p132 = scmp.ne.s32.totalorder %s117, %s131
    %p133 = scmp.eq.s32.totalorder %s23, 0
    %p134 = por %p132, %p133
    %s136 = sadd.s32 %s135, 1
    %p139 = scmp.eq.s32.totalorder %s17, 1
    %p140 = scmp.ne.s32.totalorder %s135, %s137
    %p141 = scmp.eq.s32.totalorder %s17, 0
    %p142 = por %p140, %p141
    %p143 = scmp.ne.s32.totalorder %s135, %s137
    %p144 = scmp.eq.s32.totalorder %s22, 1
    %p145 = por %p143, %p144
    %p146 = scmp.ne.s32.totalorder %s137, %s138
    %p147 = scmp.eq.s32.totalorder %s22, 0
    %p148 = por %p146, %p147
    %p149 = scmp.ne.s32.totalorder %s137, %s138
    %p150 = scmp.eq.s32.totalorder %s23, 1
    %p151 = por %p149, %p150
    %p153 = scmp.ne.s32.totalorder %s138, %s152
    %p154 = scmp.eq.s32.totalorder %s23, 0
    %p155 = por %p153, %p154
    %s157 = sadd.s32 %s156, 1
    %p160 = scmp.eq.s32.totalorder %s17, 1
    %p161 = scmp.ne.s32.totalorder %s156, %s158
    %p162 = scmp.eq.s32.totalorder %s17, 0
    %p163 = por %p161, %p162
    %p164 = scmp.ne.s32.totalorder %s156, %s158
    %p165 = scmp.eq.s32.totalorder %s22, 1
    %p166 = por %p164, %p165
    %p167 = scmp.ne.s32.totalorder %s158, %s159
    %p168 = scmp.eq.s32.totalorder %s22, 0
    %p169 = por %p167, %p168
    %p170 = scmp.ne.s32.totalorder %s158, %s159
    %p171 = scmp.eq.s32.totalorder %s23, 1
    %p172 = por %p170, %p171
    %p174 = scmp.ne.s32.totalorder %s159, %s173
    %p175 = scmp.eq.s32.totalorder %s23, 0
    %p176 = por %p174, %p175
    %s178 = sadd.s32 %s177, 1
    %p181 = scmp.eq.s32.totalorder %s17, 1
    %p182 = scmp.ne.s32.totalorder %s177, %s179
    %p183 = scmp.eq.s32.totalorder %s17, 0
    %p184 = por %p182, %p183
    %p185 = scmp.ne.s32.totalorder %s177, %s179
    %p186 = scmp.eq.s32.totalorder %s22, 1
    %p187 = por %p185, %p186
    %p188 = scmp.ne.s32.totalorder %s179, %s180
    %p189 = scmp.eq.s32.totalorder %s22, 0
    %p190 = por %p188, %p189
    %p191 = scmp.ne.s32.totalorder %s179, %s180
    %p192 = scmp.eq.s32.totalorder %s23, 1
    %p193 = por %p191, %p192
    %p195 = scmp.ne.s32.totalorder %s180, %s194
    %p196 = scmp.eq.s32.totalorder %s23, 0
    %p197 = por %p195, %p196
    %s199 = sadd.s32 %s198, 1
    %p202 = scmp.eq.s32.totalorder %s17, 1
    %p203 = scmp.ne.s32.totalorder %s198, %s200
    %p204 = scmp.eq.s32.totalorder %s17, 0
    %p205 = por %p203, %p204
    %p206 = scmp.ne.s32.totalorder %s198, %s200
    %p207 = scmp.eq.s32.totalorder %s22, 1
    %p208 = por %p206, %p207
    %p209 = scmp.ne.s32.totalorder %s200, %s201
    %p210 = scmp.eq.s32.totalorder %s22, 0
    %p211 = por %p209, %p210
    %p212 = scmp.ne.s32.totalorder %s200, %s201
    %p213 = scmp.eq.s32.totalorder %s23, 1
    %p214 = por %p212, %p213
    %p216 = scmp.ne.s32.totalorder %s201, %s215
    %p217 = scmp.eq.s32.totalorder %s23, 0
    %p218 = por %p216, %p217
    %s220 = sadd.s32 %s219, 1
    %p223 = scmp.eq.s32.totalorder %s17, 1
    %p224 = scmp.ne.s32.totalorder %s219, %s221
    %p225 = scmp.eq.s32.totalorder %s17, 0
    %p226 = por %p224, %p225
    %p227 = scmp.ne.s32.totalorder %s219, %s221
    %p228 = scmp.eq.s32.totalorder %s22, 1
    %p229 = por %p227, %p228
    %p230 = scmp.ne.s32.totalorder %s221, %s222
    %p231 = scmp.eq.s32.totalorder %s22, 0
    %p232 = por %p230, %p231
    %p233 = scmp.ne.s32.totalorder %s221, %s222
    %p234 = scmp.eq.s32.totalorder %s23, 1
    %p235 = por %p233, %p234
    %p237 = scmp.ne.s32.totalorder %s222, %s236
    %p238 = scmp.eq.s32.totalorder %s23, 0
    %p239 = por %p237, %p238
    %s241 = sadd.s32 %s240, 1
    %p244 = scmp.eq.s32.totalorder %s17, 1
    %p245 = scmp.ne.s32.totalorder %s240, %s242
    %p246 = scmp.eq.s32.totalorder %s17, 0
    %p247 = por %p245, %p246
    %p248 = scmp.ne.s32.totalorder %s240, %s242
    %p249 = scmp.eq.s32.totalorder %s22, 1
    %p250 = por %p248, %p249
    %p251 = scmp.ne.s32.totalorder %s242, %s243
    %p252 = scmp.eq.s32.totalorder %s22, 0
    %p253 = por %p251, %p252
    %p254 = scmp.ne.s32.totalorder %s242, %s243
    %p255 = scmp.eq.s32.totalorder %s23, 1
    %p256 = por %p254, %p255
    %p258 = scmp.ne.s32.totalorder %s243, %s257
    %p259 = scmp.eq.s32.totalorder %s23, 0
    %p260 = por %p258, %p259
    %s261 = ssub.s32 %s17, %s24
    %p262 = scmp.eq.s32.totalorder %s261, 0
    %s264 = sadd.s32 %s263, 1
    %s265 = scalar_select %p262, %s263, %s264
    %p268 = pneg %p262
    %p269 = scmp.eq.s32.totalorder %s17, 1
    %p270 = por %p268, %p269
    %p271 = scmp.ne.s32.totalorder %s263, %s266
    %p272 = scmp.eq.s32.totalorder %s17, 0
    %p273 = por %p271, %p272
    %p274 = scmp.ne.s32.totalorder %s263, %s266
    %p275 = scmp.eq.s32.totalorder %s22, 1
    %p276 = por %p274, %p275
    %p277 = scmp.ne.s32.totalorder %s266, %s267
    %p278 = scmp.eq.s32.totalorder %s22, 0
    %p279 = por %p277, %p278
    %p280 = scmp.ne.s32.totalorder %s266, %s267
    %p281 = scmp.eq.s32.totalorder %s23, 1
    %p282 = por %p280, %p281
    %p284 = scmp.ne.s32.totalorder %s267, %s283
    %p285 = scmp.eq.s32.totalorder %s23, 0
    %p286 = por %p284, %p285
    %p287 = scmp.le.s32.totalorder 1, %s17
    %p288 = scmp.lt.s32.totalorder %s17, 3
    %p289 = pnand %p287, %p288
    %p290 = pneg %p289
    // Predicated region
    $region9: #{transformer_forward.5} parent=5 // pred_check
      _
    $region10: #{transformer_forward.5} parent=5 // pred_check_branch
      %292 = sbr.rel (%p289) target = $region12
    $region11: #{transformer_forward.5} parent=5 // pred_region
      %s293 = ssub.s32 %s17, 1
      // Predicated region
      $region13: #{transformer_forward.5} parent=11 // pred_check
        %p294 = pneg %p64
      $region14: #{transformer_forward.5} parent=11 // pred_check_branch
        %296 = sbr.rel (%p294) target = $region16
      $region15: #{transformer_forward.5} parent=11 // pred_region
        _
      $region16: #{transformer_forward.5} parent=11 // pred_fallthru
        _
      // Predicated region
      $region17: #{transformer_forward.5} parent=11 // pred_check
        %p297 = pneg %p85
      $region18: #{transformer_forward.5} parent=11 // pred_check_branch
        %299 = sbr.rel (%p297) target = $region20
      $region19: #{transformer_forward.5} parent=11 // pred_region
        _
      $region20: #{transformer_forward.5} parent=11 // pred_fallthru
        _
      // Predicated region
      $region21: #{transformer_forward.5} parent=11 // pred_check
        %p300 = pneg %p106
      $region22: #{transformer_forward.5} parent=11 // pred_check_branch
        %302 = sbr.rel (%p300) target = $region24
      $region23: #{transformer_forward.5} parent=11 // pred_region
        _
      $region24: #{transformer_forward.5} parent=11 // pred_fallthru
        _
      // Predicated region
      $region25: #{transformer_forward.5} parent=11 // pred_check
        %p303 = pneg %p127
      $region26: #{transformer_forward.5} parent=11 // pred_check_branch
        %305 = sbr.rel (%p303) target = $region28
      $region27: #{transformer_forward.5} parent=11 // pred_region
        _
      $region28: #{transformer_forward.5} parent=11 // pred_fallthru
        _
      // Predicated region
      $region29: #{transformer_forward.5} parent=11 // pred_check
        %p306 = pneg %p148
      $region30: #{transformer_forward.5} parent=11 // pred_check_branch
        %308 = sbr.rel (%p306) target = $region32
      $region31: #{transformer_forward.5} parent=11 // pred_region
        _
      $region32: #{transformer_forward.5} parent=11 // pred_fallthru
        _
      // Predicated region
      $region33: #{transformer_forward.5} parent=11 // pred_check
        %p309 = pneg %p169
      $region34: #{transformer_forward.5} parent=11 // pred_check_branch
        %311 = sbr.rel (%p309) target = $region36
      $region35: #{transformer_forward.5} parent=11 // pred_region
        _
      $region36: #{transformer_forward.5} parent=11 // pred_fallthru
        _
      // Predicated region
      $region37: #{transformer_forward.5} parent=11 // pred_check
        %p312 = pneg %p190
      $region38: #{transformer_forward.5} parent=11 // pred_check_branch
        %314 = sbr.rel (%p312) target = $region40
      $region39: #{transformer_forward.5} parent=11 // pred_region
        _
      $region40: #{transformer_forward.5} parent=11 // pred_fallthru
        _
      // Predicated region
      $region41: #{transformer_forward.5} parent=11 // pred_check
        %p315 = pneg %p211
      $region42: #{transformer_forward.5} parent=11 // pred_check_branch
        %317 = sbr.rel (%p315) target = $region44
      $region43: #{transformer_forward.5} parent=11 // pred_region
        _
      $region44: #{transformer_forward.5} parent=11 // pred_fallthru
        _
      // Predicated region
      $region45: #{transformer_forward.5} parent=11 // pred_check
        %p318 = pneg %p232
      $region46: #{transformer_forward.5} parent=11 // pred_check_branch
        %320 = sbr.rel (%p318) target = $region48
      $region47: #{transformer_forward.5} parent=11 // pred_region
        _
      $region48: #{transformer_forward.5} parent=11 // pred_fallthru
        _
      // Predicated region
      $region49: #{transformer_forward.5} parent=11 // pred_check
        %p321 = pneg %p253
      $region50: #{transformer_forward.5} parent=11 // pred_check_branch
        %323 = sbr.rel (%p321) target = $region52
      $region51: #{transformer_forward.5} parent=11 // pred_region
        _
      $region52: #{transformer_forward.5} parent=11 // pred_fallthru
        _
    $region12: #{transformer_forward.5} parent=5 // pred_fallthru
      _
    %p324 = scmp.lt.s32.totalorder %s17, 2
    // Predicated region
    $region53: #{transformer_forward.5} parent=5 // pred_check
      %p325 = pneg %p324
    $region54: #{transformer_forward.5} parent=5 // pred_check_branch
      %327 = sbr.rel (%p325) target = $region56
    $region55: #{transformer_forward.5} parent=5 // pred_region
      // Predicated region
      $region57: #{transformer_forward.5} parent=55 // pred_check
        %p328 = pneg %p37
      $region58: #{transformer_forward.5} parent=55 // pred_check_branch
        %330 = sbr.rel (%p328) target = $region60
      $region59: #{transformer_forward.5} parent=55 // pred_region
        %p331 = scmp.lt.s32.totalorder %s17, 1
        %s332 = scalar_select %p331, %s17, 1
        %s333 = smul.addr %s332, 8
        %s334 = scalar_lea.vmem %s0, %s333
      $region60: #{transformer_forward.5} parent=55 // pred_fallthru
        _
    $region56: #{transformer_forward.5} parent=5 // pred_fallthru
      _
    %p335 = scmp.le.s32.totalorder 1, %s17
    %p336 = scmp.lt.s32.totalorder %s17, 3
    %p337 = pnand %p335, %p336
    %p338 = pneg %p337
    // Predicated region
    $region61: #{transformer_forward.5} parent=5 // pred_check
      _
    $region62: #{transformer_forward.5} parent=5 // pred_check_branch
      %340 = sbr.rel (%p337) target = $region64
    $region63: #{transformer_forward.5} parent=5 // pred_region
      %s341 = ssub.s32 %s17, 1
      %p342 = scmp.lt.s32.totalorder %s22, 1
      %s343 = scalar_select %p342, %s22, 1
      %s344 = smul.addr %s343, 8
      %s345 = scalar_lea.vmem %s0, %s344
      %p346 = pneg %p43
      %p347 = pneg %p40
      %p348 = pneg %p64
      %p349 = pneg %p61
      %p350 = pneg %p85
      %p351 = pneg %p82
      %p352 = pneg %p106
      %p353 = pneg %p103
      %p354 = pneg %p127
      %p355 = pneg %p124
      %p356 = pneg %p148
      %p357 = pneg %p145
      %p358 = pneg %p169
      %p359 = pneg %p166
      %p360 = pneg %p190
      %p361 = pneg %p187
      %p362 = pneg %p211
      %p363 = pneg %p208
      %p364 = pneg %p232
      %p365 = pneg %p229
      %p366 = pneg %p253
      %p367 = pneg %p250
      %p368 = pneg %p279
      %p369 = pneg %p276
      %p370 = scmp.lt.s32.totalorder %s22, 1
      %s371 = scalar_select %p370, %s22, 1
      %s372 = smul.addr %s371, 8
      %s373 = scalar_lea.vmem %s11, %s372
      %p374 = scmp.lt.s32.totalorder %s22, 1
      %s375 = scalar_select %p374, %s22, 1
      %s376 = smul.addr %s375, 8
      %s377 = scalar_lea.vmem %s0, %s376
      %p378 = scmp.lt.s32.totalorder %s22, 1
      %s379 = scalar_select %p378, %s22, 1
      %s380 = smul.addr %s379, 8
      %s381 = scalar_lea.vmem %s11, %s380
      %v383 = vld [vmem:[%s377] sm:$0xff]
      %v384 = vld [vmem:[%s9] sm:$0x1]
      %v385 = vld [vmem:[%s10] sm:$0x1]
      %v386 = vpack.c.bf16 %v383, %v383
      %v387 = vld [vmem:[%s1] sm:$0xff]
      %v388 = vld [vmem:[%s1 + $0x8] sm:$0xff]
      %v389 = vld [vmem:[%s1 + $0x10] sm:$0xff]
      %v390 = vld [vmem:[%s1 + $0x18] sm:$0xff]
      %v391 = vld [vmem:[%s1 + $0x20] sm:$0xff]
      %v392 = vld [vmem:[%s1 + $0x28] sm:$0xff]
      %v393 = vld [vmem:[%s1 + $0x30] sm:$0xff]
      %v394 = vld [vmem:[%s1 + $0x38] sm:$0xff]
      %v395 = vld [vmem:[%s2] sm:$0x3]
      %v397 = vlaneseq
      %v398 = vshrl.u32 %v397, 7
      %v399 = vsub.s32 0, %v398
      %v400 = vrot.slane %v395, %v399
      %v401 = vlaneseq
      %v402 = vshrl.u32 %v401, 7
      %v403 = vsub.s32 1, %v402
      %v404 = vrot.slane %v395, %v403
      %v415 = vunpack.c.l.b16 %v387
      %v416 = vunpack.c.h.b16 %v387
      %v417 = vunpack.c.l.b16 %v388
      %v418 = vunpack.c.h.b16 %v388
      %v419 = vunpack.c.l.b16 %v389
      %v420 = vunpack.c.h.b16 %v389
      %v421 = vunpack.c.l.b16 %v390
      %v422 = vunpack.c.h.b16 %v390
      %v423 = vunpack.c.l.b16 %v391
      %v424 = vunpack.c.h.b16 %v391
      %v425 = vunpack.c.l.b16 %v392
      %v426 = vunpack.c.h.b16 %v392
      %v427 = vunpack.c.l.b16 %v393
      %v428 = vunpack.c.h.b16 %v393
      %v429 = vunpack.c.l.b16 %v394
      %v430 = vunpack.c.h.b16 %v394
      %v431 = vpack.c.b16 %v417, %v415
      %v432 = vpack.c.b16 %v418, %v416
      %v433 = vpack.c.b16 %v421, %v419
      %v434 = vpack.c.b16 %v422, %v420
      %v435 = vpack.c.b16 %v425, %v423
      %v436 = vpack.c.b16 %v426, %v424
      %v437 = vpack.c.b16 %v429, %v427
      %v438 = vpack.c.b16 %v430, %v428
      %vm447 = vcmask 523264
      %v449 = vsel %vm447, %v386, 0
      %451 = vmatprep.subr.bf16.mxu0 %v432
      %452 = vmatpush1.bf16.msra.mxu0 %v431
      %453 = vmatprep.subr.bf16.mxu0 %v434
      %454 = vmatpush1.bf16.msra.mxu0 %v433
      %455 = vmatprep.subr.bf16.mxu0 %v436
      %456 = vmatpush1.bf16.msra.mxu0 %v435
      %457 = vmatprep.subr.bf16.mxu0 %v438
      %458 = vmatpush1.bf16.msra.mxu0 %v437
      %459 = vmatprep.subr.bf16.mxu0 0
      %460 = vmatpush1.bf16.msra.mxu0 0
      %461 = vmatprep.subr.bf16.mxu0 0
      %462 = vmatpush1.bf16.msra.mxu0 0
      %463 = vmatprep.subr.bf16.mxu0 0
      %464 = vmatpush1.bf16.msra.mxu0 0
      %465 = vmatprep.subr.bf16.mxu0 0
      %466 = vmatpush1.bf16.msra.mxu0 0
      %467 = vmatprep.subr.bf16.mxu0 0
      %468 = vmatpush1.bf16.msra.mxu0 0
      %469 = vmatprep.subr.bf16.mxu0 0
      %470 = vmatpush1.bf16.msra.mxu0 0
      %471 = vmatprep.subr.bf16.mxu0 0
      %472 = vmatpush1.bf16.msra.mxu0 0
      %473 = vmatprep.subr.bf16.mxu0 0
      %474 = vmatpush1.bf16.msra.mxu0 0
      %475 = vmatprep.subr.bf16.mxu0 0
      %476 = vmatpush1.bf16.msra.mxu0 0
      %477 = vmatprep.subr.bf16.mxu0 0
      %478 = vmatpush1.bf16.msra.mxu0 0
      %479 = vmatprep.subr.bf16.mxu0 0
      %480 = vmatpush1.bf16.msra.mxu0 0
      %481 = vmatprep.subr.bf16.mxu0 0
      %482 = vmatpush1.bf16.msra.mxu0 0
      %483 = vmatprep.mubr.bf16.mxu0 0
      %484 = vmatmul.mubr.bf16.gmra.mrb[0].mxu0 %v449
      %v485 = vpop.f32.mrb[0].mxu0
      %v486 = vadd.f32 %v400, %v485
      %v487 = vpop.f32.mrb[0].mxu0
      %v488 = vadd.f32 %v404, %v487
      %v489 = vpop.f32.mrb[0].mxu0
      %v490 = vpop.f32.mrb[0].mxu0
      %491 = vdwg.mxu0
      %492 = vxpose.xlu0.b32.start [1/16] %v486, 128
      %493 = vxpose.xlu0.b32.cont [2/16] 0.0, 128
      %494 = vxpose.xlu0.b32.cont [3/16] 0.0, 128
      %495 = vxpose.xlu0.b32.cont [4/16] 0.0, 128
      %496 = vxpose.xlu0.b32.cont [5/16] 0.0, 128
      %497 = vxpose.xlu0.b32.cont [6/16] 0.0, 128
      %498 = vxpose.xlu0.b32.cont [7/16] 0.0, 128
      %499 = vxpose.xlu0.b32.cont [8/16] 0.0, 128
      %500 = vxpose.xlu0.b32.cont [9/16] 0.0, 128
      %501 = vxpose.xlu0.b32.cont [10/16] 0.0, 128
      %502 = vxpose.xlu0.b32.cont [11/16] 0.0, 128
      %503 = vxpose.xlu0.b32.cont [12/16] 0.0, 128
      %504 = vxpose.xlu0.b32.cont [13/16] 0.0, 128
      %505 = vxpose.xlu0.b32.cont [14/16] 0.0, 128
      %506 = vxpose.xlu0.b32.cont [15/16] 0.0, 128
      %507 = vxpose.xlu0.b32.end [16/16] 0.0, 128
      %v508 = vpop.trf.xlu0
      %v509 = vpop.trf.xlu0
      %v510 = vpop.trf.xlu0
      %v511 = vpop.trf.xlu0
      %v512 = vpop.trf.xlu0
      %v513 = vpop.trf.xlu0
      %v514 = vpop.trf.xlu0
      %v515 = vpop.trf.xlu0
      %v516 = vpop.trf.xlu0
      %v517 = vpop.trf.xlu0
      %v518 = vpop.trf.xlu0
      %v519 = vpop.trf.xlu0
      %v520 = vpop.trf.xlu0
      %v521 = vpop.trf.xlu0
      %v522 = vpop.trf.xlu0
      %v523 = vpop.trf.xlu0
      %524 = vxpose.xlu0.b32.start [1/16] %v488, 128
      %525 = vxpose.xlu0.b32.cont [2/16] 0.0, 128
      %526 = vxpose.xlu0.b32.cont [3/16] 0.0, 128
      %527 = vxpose.xlu0.b32.cont [4/16] 0.0, 128
      %528 = vxpose.xlu0.b32.cont [5/16] 0.0, 128
      %529 = vxpose.xlu0.b32.cont [6/16] 0.0, 128
      %530 = vxpose.xlu0.b32.cont [7/16] 0.0, 128
      %531 = vxpose.xlu0.b32.cont [8/16] 0.0, 128
      %532 = vxpose.xlu0.b32.cont [9/16] 0.0, 128
      %533 = vxpose.xlu0.b32.cont [10/16] 0.0, 128
      %534 = vxpose.xlu0.b32.cont [11/16] 0.0, 128
      %535 = vxpose.xlu0.b32.cont [12/16] 0.0, 128
      %536 = vxpose.xlu0.b32.cont [13/16] 0.0, 128
      %537 = vxpose.xlu0.b32.cont [14/16] 0.0, 128
      %538 = vxpose.xlu0.b32.cont [15/16] 0.0, 128
      %539 = vxpose.xlu0.b32.end [16/16] 0.0, 128
      %v540 = vpop.trf.xlu0
      %v541 = vpop.trf.xlu0
      %v542 = vpop.trf.xlu0
      %v543 = vpop.trf.xlu0
      %v544 = vpop.trf.xlu0
      %v545 = vpop.trf.xlu0
      %v546 = vpop.trf.xlu0
      %v547 = vpop.trf.xlu0
      %v548 = vpop.trf.xlu0
      %v549 = vpop.trf.xlu0
      %v550 = vpop.trf.xlu0
      %v551 = vpop.trf.xlu0
      %v552 = vpop.trf.xlu0
      %v553 = vpop.trf.xlu0
      %v554 = vpop.trf.xlu0
      %v555 = vpop.trf.xlu0
      %v556 = vmul.f32 %v508, 0.35355338
      %v557 = vmul.f32 %v509, 0.35355338
      %v558 = vmul.f32 %v510, 0.35355338
      %v559 = vmul.f32 %v511, 0.35355338
      %v560 = vmul.f32 %v512, 0.35355338
      %v561 = vmul.f32 %v513, 0.35355338
      %v562 = vmul.f32 %v514, 0.35355338
      %v563 = vmul.f32 %v515, 0.35355338
      %564 = vxpose.xlu0.b32.start [1/16] %v556, 128
      %565 = vxpose.xlu0.b32.cont [2/16] 0.0, 128
      %566 = vxpose.xlu0.b32.cont [3/16] 0.0, 128
      %567 = vxpose.xlu0.b32.cont [4/16] 0.0, 128
      %568 = vxpose.xlu0.b32.cont [5/16] 0.0, 128
      %569 = vxpose.xlu0.b32.cont [6/16] 0.0, 128
      %570 = vxpose.xlu0.b32.cont [7/16] 0.0, 128
      %571 = vxpose.xlu0.b32.cont [8/16] 0.0, 128
      %572 = vxpose.xlu0.b32.cont [9/16] 0.0, 128
      %573 = vxpose.xlu0.b32.cont [10/16] 0.0, 128
      %574 = vxpose.xlu0.b32.cont [11/16] 0.0, 128
      %575 = vxpose.xlu0.b32.cont [12/16] 0.0, 128
      %576 = vxpose.xlu0.b32.cont [13/16] 0.0, 128
      %577 = vxpose.xlu0.b32.cont [14/16] 0.0, 128
      %578 = vxpose.xlu0.b32.cont [15/16] 0.0, 128
      %579 = vxpose.xlu0.b32.end [16/16] 0.0, 128
      %v580 = vpop.trf.xlu0
      %v581 = vpop.trf.xlu0
      %v582 = vpop.trf.xlu0
      %v583 = vpop.trf.xlu0
      %v584 = vpop.trf.xlu0
      %v585 = vpop.trf.xlu0
      %v586 = vpop.trf.xlu0
      %v587 = vpop.trf.xlu0
      %v588 = vpop.trf.xlu0
      %v589 = vpop.trf.xlu0
      %v590 = vpop.trf.xlu0
      %v591 = vpop.trf.xlu0
      %v592 = vpop.trf.xlu0
      %v593 = vpop.trf.xlu0
      %v594 = vpop.trf.xlu0
      %v595 = vpop.trf.xlu0
      %vm596 = vcmask 64512
      %v598 = vsel %vm596, %v580, 0
      %600 = vmatprep.subr.mxu0 0.0
      %601 = vmatpush1.msra.mxu0 %v516
      %602 = vmatprep.subr.mxu0 0.0
      %603 = vmatpush1.msra.mxu0 0.0
      %604 = vmatprep.subr.mxu0 0.0
      %605 = vmatpush1.msra.mxu0 0.0
      %606 = vmatprep.subr.mxu0 0.0
      %607 = vmatpush1.msra.mxu0 0.0
      %608 = vmatprep.subr.mxu0 0.0
      %609 = vmatpush1.msra.mxu0 0.0
      %610 = vmatprep.subr.mxu0 0.0
      %611 = vmatpush1.msra.mxu0 0.0
      %612 = vmatprep.subr.mxu0 0.0
      %613 = vmatpush1.msra.mxu0 0.0
      %614 = vmatprep.subr.mxu0 0.0
      %615 = vmatpush1.msra.mxu0 0.0
      %616 = vmatprep.subr.mxu0 0.0
      %617 = vmatpush1.msra.mxu0 0.0
      %618 = vmatprep.subr.mxu0 0.0
      %619 = vmatpush1.msra.mxu0 0.0
      %620 = vmatprep.subr.mxu0 0.0
      %621 = vmatpush1.msra.mxu0 0.0
      %622 = vmatprep.subr.mxu0 0.0
      %623 = vmatpush1.msra.mxu0 0.0
      %624 = vmatprep.subr.mxu0 0.0
      %625 = vmatpush1.msra.mxu0 0.0
      %626 = vmatprep.subr.mxu0 0.0
      %627 = vmatpush1.msra.mxu0 0.0
      %628 = vmatprep.subr.mxu0 0.0
      %629 = vmatpush1.msra.mxu0 0.0
      %630 = vmatprep.subr.mxu0 0.0
      %631 = vmatpush1.msra.mxu0 0.0
      %632 = vmatprep.subr.mxu0 0.0
      %633 = vmatpush1.msra.mxu0 0.0
      %634 = vmatprep.subr.mxu0 0.0
      %635 = vmatpush1.msra.mxu0 0.0
      %636 = vmatprep.subr.mxu0 0.0
      %637 = vmatpush1.msra.mxu0 0.0
      %638 = vmatprep.subr.mxu0 0.0
      %639 = vmatpush1.msra.mxu0 0.0
      %640 = vmatprep.subr.mxu0 0.0
      %641 = vmatpush1.msra.mxu0 0.0
      %642 = vmatprep.subr.mxu0 0.0
      %643 = vmatpush1.msra.mxu0 0.0
      %644 = vmatprep.subr.mxu0 0.0
      %645 = vmatpush1.msra.mxu0 0.0
      %646 = vmatprep.subr.mxu0 0.0
      %647 = vmatpush1.msra.mxu0 0.0
      %648 = vmatprep.subr.mxu0 0.0
      %649 = vmatpush1.msra.mxu0 0.0
      %650 = vmatprep.subr.mxu0 0.0
      %651 = vmatpush1.msra.mxu0 0.0
      %652 = vmatprep.subr.mxu0 0.0
      %653 = vmatpush1.msra.mxu0 0.0
      %654 = vmatprep.subr.mxu0 0.0
      %655 = vmatpush1.msra.mxu0 0.0
      %656 = vmatprep.subr.mxu0 0.0
      %657 = vmatpush1.msra.mxu0 0.0
      %658 = vmatprep.subr.mxu0 0.0
      %659 = vmatpush1.msra.mxu0 0.0
      %660 = vmatprep.subr.mxu0 0.0
      %661 = vmatpush1.msra.mxu0 0.0
      %662 = vmatprep.subr.mxu0 0.0
      %663 = vmatpush1.msra.mxu0 0.0
      %664 = vmatprep.mubr.f32.mxu0 0.0
      %665 = vmatmul.mubr.f32.gmra.mrb[0].mxu0 %v598
      %v666 = vpop.f32.mrb[0].mxu0
      %v667 = vadd.f32 0.0, %v666
      %v668 = vpop.f32.mrb[0].mxu0
      %669 = vdwg.mxu0
      %v670 = vsel %vm596, %v667, -inf
      %671 = vmax.xlane.f32.xlu0 %v670
      %v672 = vpop.xlane.xlu0 %671
      %v673 = vsub.f32 %v667, %v672
      %v674 = vmul.f32 %v673, 1.442695
      %v675 = vpow.pop %v674
      %v676 = vsel %vm596, %v675, 0.0
      %677 = vadd.xlane.f32.xlu0 %v676
      %v678 = vpop.xlane.xlu0 %677
      %v679 = vrcp.pop %v678
      %v680 = vmul.f32 %v675, %v679
      %v682 = vsel %vm596, %v540, 0
      %v685 = vsel %vm596, %v680, 0
      %687 = vmatprep.subr.mxu0 0.0
      %688 = vmatpush1.xpose.msra.mxu0 %v685
      %689 = vmatprep.subr.mxu0 0.0
      %690 = vmatpush1.xpose.msra.mxu0 0.0
      %691 = vmatprep.subr.mxu0 0.0
      %692 = vmatpush1.xpose.msra.mxu0 0.0
      %693 = vmatprep.subr.mxu0 0.0
      %694 = vmatpush1.xpose.msra.mxu0 0.0
      %695 = vmatprep.subr.mxu0 0.0
      %696 = vmatpush1.xpose.msra.mxu0 0.0
      %697 = vmatprep.subr.mxu0 0.0
      %698 = vmatpush1.xpose.msra.mxu0 0.0
      %699 = vmatprep.subr.mxu0 0.0
      %700 = vmatpush1.xpose.msra.mxu0 0.0
      %701 = vmatprep.subr.mxu0 0.0
      %702 = vmatpush1.xpose.msra.mxu0 0.0
      %703 = vmatprep.subr.mxu0 0.0
      %704 = vmatpush1.xpose.msra.mxu0 0.0
      %705 = vmatprep.subr.mxu0 0.0
      %706 = vmatpush1.xpose.msra.mxu0 0.0
      %707 = vmatprep.subr.mxu0 0.0
      %708 = vmatpush1.xpose.msra.mxu0 0.0
      %709 = vmatprep.subr.mxu0 0.0
      %710 = vmatpush1.xpose.msra.mxu0 0.0
      %711 = vmatprep.subr.mxu0 0.0
      %712 = vmatpush1.xpose.msra.mxu0 0.0
      %713 = vmatprep.subr.mxu0 0.0
      %714 = vmatpush1.xpose.msra.mxu0 0.0
      %715 = vmatprep.subr.mxu0 0.0
      %716 = vmatpush1.xpose.msra.mxu0 0.0
      %717 = vmatprep.subr.mxu0 0.0
      %718 = vmatpush1.xpose.msra.mxu0 0.0
      %719 = vmatprep.subr.mxu0 0.0
      %720 = vmatpush1.xpose.msra.mxu0 0.0
      %721 = vmatprep.subr.mxu0 0.0
      %722 = vmatpush1.xpose.msra.mxu0 0.0
      %723 = vmatprep.subr.mxu0 0.0
      %724 = vmatpush1.xpose.msra.mxu0 0.0
      %725 = vmatprep.subr.mxu0 0.0
      %726 = vmatpush1.xpose.msra.mxu0 0.0
      %727 = vmatprep.subr.mxu0 0.0
      %728 = vmatpush1.xpose.msra.mxu0 0.0
      %729 = vmatprep.subr.mxu0 0.0
      %730 = vmatpush1.xpose.msra.mxu0 0.0
      %731 = vmatprep.subr.mxu0 0.0
      %732 = vmatpush1.xpose.msra.mxu0 0.0
      %733 = vmatprep.subr.mxu0 0.0
      %734 = vmatpush1.xpose.msra.mxu0 0.0
      %735 = vmatprep.subr.mxu0 0.0
      %736 = vmatpush1.xpose.msra.mxu0 0.0
      %737 = vmatprep.subr.mxu0 0.0
      %738 = vmatpush1.xpose.msra.mxu0 0.0
      %739 = vmatprep.subr.mxu0 0.0
      %740 = vmatpush1.xpose.msra.mxu0 0.0
      %741 = vmatprep.subr.mxu0 0.0
      %742 = vmatpush1.xpose.msra.mxu0 0.0
      %743 = vmatprep.subr.mxu0 0.0
      %744 = vmatpush1.xpose.msra.mxu0 0.0
      %745 = vmatprep.subr.mxu0 0.0
      %746 = vmatpush1.xpose.msra.mxu0 0.0
      %747 = vmatprep.subr.mxu0 0.0
      %748 = vmatpush1.xpose.msra.mxu0 0.0
      %749 = vmatprep.subr.mxu0 0.0
      %750 = vmatpush1.xpose.msra.mxu0 0.0
      %751 = vmatprep.mubr.f32.mxu0 0.0
      %752 = vmatmul.mubr.f32.gmra.mrb[0].mxu0 %v682
      %v753 = vpop.f32.mrb[0].mxu0
      %v754 = vadd.f32 0.0, %v753
      %v755 = vpop.f32.mrb[0].mxu0
      %756 = vdwg.mxu0
      %757 = vxpose.xlu0.b32.start [1/16] %v557, 128
      %758 = vxpose.xlu0.b32.cont [2/16] 0.0, 128
      %759 = vxpose.xlu0.b32.cont [3/16] 0.0, 128
      %760 = vxpose.xlu0.b32.cont [4/16] 0.0, 128
      %761 = vxpose.xlu0.b32.cont [5/16] 0.0, 128
      %762 = vxpose.xlu0.b32.cont [6/16] 0.0, 128
      %763 = vxpose.xlu0.b32.cont [7/16] 0.0, 128
      %764 = vxpose.xlu0.b32.cont [8/16] 0.0, 128
      %765 = vxpose.xlu0.b32.cont [9/16] 0.0, 128
      %766 = vxpose.xlu0.b32.cont [10/16] 0.0, 128
      %767 = vxpose.xlu0.b32.cont [11/16] 0.0, 128
      %768 = vxpose.xlu0.b32.cont [12/16] 0.0, 128
      %769 = vxpose.xlu0.b32.cont [13/16] 0.0, 128
      %770 = vxpose.xlu0.b32.cont [14/16] 0.0, 128
      %771 = vxpose.xlu0.b32.cont [15/16] 0.0, 128
      %772 = vxpose.xlu0.b32.end [16/16] 0.0, 128
      %v773 = vpop.trf.xlu0
      %v774 = vpop.trf.xlu0
      %v775 = vpop.trf.xlu0
      %v776 = vpop.trf.xlu0
      %v777 = vpop.trf.xlu0
      %v778 = vpop.trf.xlu0
      %v779 = vpop.trf.xlu0
      %v780 = vpop.trf.xlu0
      %v781 = vpop.trf.xlu0
      %v782 = vpop.trf.xlu0
      %v783 = vpop.trf.xlu0
      %v784 = vpop.trf.xlu0
      %v785 = vpop.trf.xlu0
      %v786 = vpop.trf.xlu0
      %v787 = vpop.trf.xlu0
      %v788 = vpop.trf.xlu0
      %v790 = vsel %vm596, %v773, 0
      %792 = vmatprep.subr.mxu0 0.0
      %793 = vmatpush1.msra.mxu0 %v517
      %794 = vmatprep.subr.mxu0 0.0
      %795 = vmatpush1.msra.mxu0 0.0
      %796 = vmatprep.subr.mxu0 0.0
      %797 = vmatpush1.msra.mxu0 0.0
      %798 = vmatprep.subr.mxu0 0.0
      %799 = vmatpush1.msra.mxu0 0.0
      %800 = vmatprep.subr.mxu0 0.0
      %801 = vmatpush1.msra.mxu0 0.0
      %802 = vmatprep.subr.mxu0 0.0
      %803 = vmatpush1.msra.mxu0 0.0
      %804 = vmatprep.subr.mxu0 0.0
      %805 = vmatpush1.msra.mxu0 0.0
      %806 = vmatprep.subr.mxu0 0.0
      %807 = vmatpush1.msra.mxu0 0.0
      %808 = vmatprep.subr.mxu0 0.0
      %809 = vmatpush1.msra.mxu0 0.0
      %810 = vmatprep.subr.mxu0 0.0
      %811 = vmatpush1.msra.mxu0 0.0
      %812 = vmatprep.subr.mxu0 0.0
      %813 = vmatpush1.msra.mxu0 0.0
      %814 = vmatprep.subr.mxu0 0.0
      %815 = vmatpush1.msra.mxu0 0.0
      %816 = vmatprep.subr.mxu0 0.0
      %817 = vmatpush1.msra.mxu0 0.0
      %818 = vmatprep.subr.mxu0 0.0
      %819 = vmatpush1.msra.mxu0 0.0
      %820 = vmatprep.subr.mxu0 0.0
      %821 = vmatpush1.msra.mxu0 0.0
      %822 = vmatprep.subr.mxu0 0.0
      %823 = vmatpush1.msra.mxu0 0.0
      %824 = vmatprep.subr.mxu0 0.0
      %825 = vmatpush1.msra.mxu0 0.0
      %826 = vmatprep.subr.mxu0 0.0
      %827 = vmatpush1.msra.mxu0 0.0
      %828 = vmatprep.subr.mxu0 0.0
      %829 = vmatpush1.msra.mxu0 0.0
      %830 = vmatprep.subr.mxu0 0.0
      %831 = vmatpush1.msra.mxu0 0.0
      %832 = vmatprep.subr.mxu0 0.0
      %833 = vmatpush1.msra.mxu0 0.0
      %834 = vmatprep.subr.mxu0 0.0
      %835 = vmatpush1.msra.mxu0 0.0
      %836 = vmatprep.subr.mxu0 0.0
      %837 = vmatpush1.msra.mxu0 0.0
      %838 = vmatprep.subr.mxu0 0.0
      %839 = vmatpush1.msra.mxu0 0.0
      %840 = vmatprep.subr.mxu0 0.0
      %841 = vmatpush1.msra.mxu0 0.0
      %842 = vmatprep.subr.mxu0 0.0
      %843 = vmatpush1.msra.mxu0 0.0
      %844 = vmatprep.subr.mxu0 0.0
      %845 = vmatpush1.msra.mxu0 0.0
      %846 = vmatprep.subr.mxu0 0.0
      %847 = vmatpush1.msra.mxu0 0.0
      %848 = vmatprep.subr.mxu0 0.0
      %849 = vmatpush1.msra.mxu0 0.0
      %850 = vmatprep.subr.mxu0 0.0
      %851 = vmatpush1.msra.mxu0 0.0
      %852 = vmatprep.subr.mxu0 0.0
      %853 = vmatpush1.msra.mxu0 0.0
      %854 = vmatprep.subr.mxu0 0.0
      %855 = vmatpush1.msra.mxu0 0.0
      %856 = vmatprep.mubr.f32.mxu0 0.0
      %857 = vmatmul.mubr.f32.gmra.mrb[0].mxu0 %v790
      %v858 = vpop.f32.mrb[0].mxu0
      %v859 = vadd.f32 0.0, %v858
      %v860 = vpop.f32.mrb[0].mxu0
      %861 = vdwg.mxu0
      %v862 = vsel %vm596, %v859, -inf
      %863 = vmax.xlane.f32.xlu0 %v862
      %v864 = vpop.xlane.xlu0 %863
      %v865 = vsub.f32 %v859, %v864
      %v866 = vmul.f32 %v865, 1.442695
      %v867 = vpow.pop %v866
      %v868 = vsel %vm596, %v867, 0.0
      %869 = vadd.xlane.f32.xlu0 %v868
      %v870 = vpop.xlane.xlu0 %869
      %v871 = vrcp.pop %v870
      %v872 = vmul.f32 %v867, %v871
      %v874 = vsel %vm596, %v541, 0
      %v877 = vsel %vm596, %v872, 0
      %879 = vmatprep.subr.mxu0 0.0
      %880 = vmatpush1.xpose.msra.mxu0 %v877
      %881 = vmatprep.subr.mxu0 0.0
      %882 = vmatpush1.xpose.msra.mxu0 0.0
      %883 = vmatprep.subr.mxu0 0.0
      %884 = vmatpush1.xpose.msra.mxu0 0.0
      %885 = vmatprep.subr.mxu0 0.0
      %886 = vmatpush1.xpose.msra.mxu0 0.0
      %887 = vmatprep.subr.mxu0 0.0
      %888 = vmatpush1.xpose.msra.mxu0 0.0
      %889 = vmatprep.subr.mxu0 0.0
      %890 = vmatpush1.xpose.msra.mxu0 0.0
      %891 = vmatprep.subr.mxu0 0.0
      %892 = vmatpush1.xpose.msra.mxu0 0.0
      %893 = vmatprep.subr.mxu0 0.0
      %894 = vmatpush1.xpose.msra.mxu0 0.0
      %895 = vmatprep.subr.mxu0 0.0
      %896 = vmatpush1.xpose.msra.mxu0 0.0
      %897 = vmatprep.subr.mxu0 0.0
      %898 = vmatpush1.xpose.msra.mxu0 0.0
      %899 = vmatprep.subr.mxu0 0.0
      %900 = vmatpush1.xpose.msra.mxu0 0.0
      %901 = vmatprep.subr.mxu0 0.0
      %902 = vmatpush1.xpose.msra.mxu0 0.0
      %903 = vmatprep.subr.mxu0 0.0
      %904 = vmatpush1.xpose.msra.mxu0 0.0
      %905 = vmatprep.subr.mxu0 0.0
      %906 = vmatpush1.xpose.msra.mxu0 0.0
      %907 = vmatprep.subr.mxu0 0.0
      %908 = vmatpush1.xpose.msra.mxu0 0.0
      %909 = vmatprep.subr.mxu0 0.0
      %910 = vmatpush1.xpose.msra.mxu0 0.0
      %911 = vmatprep.subr.mxu0 0.0
      %912 = vmatpush1.xpose.msra.mxu0 0.0
      %913 = vmatprep.subr.mxu0 0.0
      %914 = vmatpush1.xpose.msra.mxu0 0.0
      %915 = vmatprep.subr.mxu0 0.0
      %916 = vmatpush1.xpose.msra.mxu0 0.0
      %917 = vmatprep.subr.mxu0 0.0
      %918 = vmatpush1.xpose.msra.mxu0 0.0
      %919 = vmatprep.subr.mxu0 0.0
      %920 = vmatpush1.xpose.msra.mxu0 0.0
      %921 = vmatprep.subr.mxu0 0.0
      %922 = vmatpush1.xpose.msra.mxu0 0.0
      %923 = vmatprep.subr.mxu0 0.0
      %924 = vmatpush1.xpose.msra.mxu0 0.0
      %925 = vmatprep.subr.mxu0 0.0
      %926 = vmatpush1.xpose.msra.mxu0 0.0
      %927 = vmatprep.subr.mxu0 0.0
      %928 = vmatpush1.xpose.msra.mxu0 0.0
      %929 = vmatprep.subr.mxu0 0.0
      %930 = vmatpush1.xpose.msra.mxu0 0.0
      %931 = vmatprep.subr.mxu0 0.0
      %932 = vmatpush1.xpose.msra.mxu0 0.0
      %933 = vmatprep.subr.mxu0 0.0
      %934 = vmatpush1.xpose.msra.mxu0 0.0
      %935 = vmatprep.subr.mxu0 0.0
      %936 = vmatpush1.xpose.msra.mxu0 0.0
      %937 = vmatprep.subr.mxu0 0.0
      %938 = vmatpush1.xpose.msra.mxu0 0.0
      %939 = vmatprep.subr.mxu0 0.0
      %940 = vmatpush1.xpose.msra.mxu0 0.0
      %941 = vmatprep.subr.mxu0 0.0
      %942 = vmatpush1.xpose.msra.mxu0 0.0
      %943 = vmatprep.mubr.f32.mxu0 0.0
      %944 = vmatmul.mubr.f32.gmra.mrb[0].mxu0 %v874
      %v945 = vpop.f32.mrb[0].mxu0
      %v946 = vadd.f32 0.0, %v945
      %v947 = vpop.f32.mrb[0].mxu0
      %948 = vdwg.mxu0
      %949 = vxpose.xlu0.b32.start [1/16] %v558, 128
      %950 = vxpose.xlu0.b32.cont [2/16] 0.0, 128
      %951 = vxpose.xlu0.b32.cont [3/16] 0.0, 128
      %952 = vxpose.xlu0.b32.cont [4/16] 0.0, 128
      %953 = vxpose.xlu0.b32.cont [5/16] 0.0, 128
      %954 = vxpose.xlu0.b32.cont [6/16] 0.0, 128
      %955 = vxpose.xlu0.b32.cont [7/16] 0.0, 128
      %956 = vxpose.xlu0.b32.cont [8/16] 0.0, 128
      %957 = vxpose.xlu0.b32.cont [9/16] 0.0, 128
      %958 = vxpose.xlu0.b32.cont [10/16] 0.0, 128
      %959 = vxpose.xlu0.b32.cont [11/16] 0.0, 128
      %960 = vxpose.xlu0.b32.cont [12/16] 0.0, 128
      %961 = vxpose.xlu0.b32.cont [13/16] 0.0, 128
      %962 = vxpose.xlu0.b32.cont [14/16] 0.0, 128
      %963 = vxpose.xlu0.b32.cont [15/16] 0.0, 128
      %964 = vxpose.xlu0.b32.end [16/16] 0.0, 128
      %v965 = vpop.trf.xlu0
      %v966 = vpop.trf.xlu0
      %v967 = vpop.trf.xlu0
      %v968 = vpop.trf.xlu0
      %v969 = vpop.trf.xlu0
      %v970 = vpop.trf.xlu0
      %v971 = vpop.trf.xlu0
      %v972 = vpop.trf.xlu0
      %v973 = vpop.trf.xlu0
      %v974 = vpop.trf.xlu0
      %v975 = vpop.trf.xlu0
      %v976 = vpop.trf.xlu0
      %v977 = vpop.trf.xlu0
      %v978 = vpop.trf.xlu0
      %v979 = vpop.trf.xlu0
      %v980 = vpop.trf.xlu0
      %v982 = vsel %vm596, %v965, 0
      %984 = vmatprep.subr.mxu0 0.0
      %985 = vmatpush1.msra.mxu0 %v518
      %986 = vmatprep.subr.mxu0 0.0
      %987 = vmatpush1.msra.mxu0 0.0
      %988 = vmatprep.subr.mxu0 0.0
      %989 = vmatpush1.msra.mxu0 0.0
      %990 = vmatprep.subr.mxu0 0.0
      %991 = vmatpush1.msra.mxu0 0.0
      %992 = vmatprep.subr.mxu0 0.0
      %993 = vmatpush1.msra.mxu0 0.0
      %994 = vmatprep.subr.mxu0 0.0
      %995 = vmatpush1.msra.mxu0 0.0
      %996 = vmatprep.subr.mxu0 0.0
      %997 = vmatpush1.msra.mxu0 0.0
      %998 = vmatprep.subr.mxu0 0.0
      %999 = vmatpush1.msra.mxu0 0.0
      %1000 = vmatprep.subr.mxu0 0.0
      %1001 = vmatpush1.msra.mxu0 0.0
      %1002 = vmatprep.subr.mxu0 0.0
      %1003 = vmatpush1.msra.mxu0 0.0
      %1004 = vmatprep.subr.mxu0 0.0
      %1005 = vmatpush1.msra.mxu0 0.0
      %1006 = vmatprep.subr.mxu0 0.0
      %1007 = vmatpush1.msra.mxu0 0.0
      %1008 = vmatprep.subr.mxu0 0.0
      %1009 = vmatpush1.msra.mxu0 0.0
      %1010 = vmatprep.subr.mxu0 0.0
      %1011 = vmatpush1.msra.mxu0 0.0
      %1012 = vmatprep.subr.mxu0 0.0
      %1013 = vmatpush1.msra.mxu0 0.0
      %1014 = vmatprep.subr.mxu0 0.0
      %1015 = vmatpush1.msra.mxu0 0.0
      %1016 = vmatprep.subr.mxu0 0.0
      %1017 = vmatpush1.msra.mxu0 0.0
      %1018 = vmatprep.subr.mxu0 0.0
      %1019 = vmatpush1.msra.mxu0 0.0
      %1020 = vmatprep.subr.mxu0 0.0
      %1021 = vmatpush1.msra.mxu0 0.0
      %1022 = vmatprep.subr.mxu0 0.0
      %1023 = vmatpush1.msra.mxu0 0.0
      %1024 = vmatprep.subr.mxu0 0.0
      %1025 = vmatpush1.msra.mxu0 0.0
      %1026 = vmatprep.subr.mxu0 0.0
      %1027 = vmatpush1.msra.mxu0 0.0
      %1028 = vmatprep.subr.mxu0 0.0
      %1029 = vmatpush1.msra.mxu0 0.0
      %1030 = vmatprep.subr.mxu0 0.0
      %1031 = vmatpush1.msra.mxu0 0.0
      %1032 = vmatprep.subr.mxu0 0.0
      %1033 = vmatpush1.msra.mxu0 0.0
      %1034 = vmatprep.subr.mxu0 0.0
      %1035 = vmatpush1.msra.mxu0 0.0
      %1036 = vmatprep.subr.mxu0 0.0
      %1037 = vmatpush1.msra.mxu0 0.0
      %1038 = vmatprep.subr.mxu0 0.0
      %1039 = vmatpush1.msra.mxu0 0.0
      %1040 = vmatprep.subr.mxu0 0.0
      %1041 = vmatpush1.msra.mxu0 0.0
      %1042 = vmatprep.subr.mxu0 0.0
      %1043 = vmatpush1.msra.mxu0 0.0
      %1044 = vmatprep.subr.mxu0 0.0
      %1045 = vmatpush1.msra.mxu0 0.0
      %1046 = vmatprep.subr.mxu0 0.0
      %1047 = vmatpush1.msra.mxu0 0.0
      %1048 = vmatprep.mubr.f32.mxu0 0.0
      %1049 = vmatmul.mubr.f32.gmra.mrb[0].mxu0 %v982
      %v1050 = vpop.f32.mrb[0].mxu0
      %v1051 = vadd.f32 0.0, %v1050
      %v1052 = vpop.f32.mrb[0].mxu0
      %1053 = vdwg.mxu0
      %v1054 = vsel %vm596, %v1051, -inf
      %1055 = vmax.xlane.f32.xlu0 %v1054
      %v1056 = vpop.xlane.xlu0 %1055
      %v1057 = vsub.f32 %v1051, %v1056
      %v1058 = vmul.f32 %v1057, 1.442695
      %v1059 = vpow.pop %v1058
      %v1060 = vsel %vm596, %v1059, 0.0
      %1061 = vadd.xlane.f32.xlu0 %v1060
      %v1062 = vpop.xlane.xlu0 %1061
      %v1063 = vrcp.pop %v1062
      %v1064 = vmul.f32 %v1059, %v1063
      %v1066 = vsel %vm596, %v542, 0
      %v1069 = vsel %vm596, %v1064, 0
      %1071 = vmatprep.subr.mxu0 0.0
      %1072 = vmatpush1.xpose.msra.mxu0 %v1069
      %1073 = vmatprep.subr.mxu0 0.0
      %1074 = vmatpush1.xpose.msra.mxu0 0.0
      %1075 = vmatprep.subr.mxu0 0.0
      %1076 = vmatpush1.xpose.msra.mxu0 0.0
      %1077 = vmatprep.subr.mxu0 0.0
      %1078 = vmatpush1.xpose.msra.mxu0 0.0
      %1079 = vmatprep.subr.mxu0 0.0
      %1080 = vmatpush1.xpose.msra.mxu0 0.0
      %1081 = vmatprep.subr.mxu0 0.0
      %1082 = vmatpush1.xpose.msra.mxu0 0.0
      %1083 = vmatprep.subr.mxu0 0.0
      %1084 = vmatpush1.xpose.msra.mxu0 0.0
      %1085 = vmatprep.subr.mxu0 0.0
      %1086 = vmatpush1.xpose.msra.mxu0 0.0
      %1087 = vmatprep.subr.mxu0 0.0
      %1088 = vmatpush1.xpose.msra.mxu0 0.0
      %1089 = vmatprep.subr.mxu0 0.0
      %1090 = vmatpush1.xpose.msra.mxu0 0.0
      %1091 = vmatprep.subr.mxu0 0.0
      %1092 = vmatpush1.xpose.msra.mxu0 0.0
      %1093 = vmatprep.subr.mxu0 0.0
      %1094 = vmatpush1.xpose.msra.mxu0 0.0
      %1095 = vmatprep.subr.mxu0 0.0
      %1096 = vmatpush1.xpose.msra.mxu0 0.0
      %1097 = vmatprep.subr.mxu0 0.0
      %1098 = vmatpush1.xpose.msra.mxu0 0.0
      %1099 = vmatprep.subr.mxu0 0.0
      %1100 = vmatpush1.xpose.msra.mxu0 0.0
      %1101 = vmatprep.subr.mxu0 0.0
      %1102 = vmatpush1.xpose.msra.mxu0 0.0
      %1103 = vmatprep.subr.mxu0 0.0
      %1104 = vmatpush1.xpose.msra.mxu0 0.0
      %1105 = vmatprep.subr.mxu0 0.0
      %1106 = vmatpush1.xpose.msra.mxu0 0.0
      %1107 = vmatprep.subr.mxu0 0.0
      %1108 = vmatpush1.xpose.msra.mxu0 0.0
      %1109 = vmatprep.subr.mxu0 0.0
      %1110 = vmatpush1.xpose.msra.mxu0 0.0
      %1111 = vmatprep.subr.mxu0 0.0
      %1112 = vmatpush1.xpose.msra.mxu0 0.0
      %1113 = vmatprep.subr.mxu0 0.0
      %1114 = vmatpush1.xpose.msra.mxu0 0.0
      %1115 = vmatprep.subr.mxu0 0.0
      %1116 = vmatpush1.xpose.msra.mxu0 0.0
      %1117 = vmatprep.subr.mxu0 0.0
      %1118 = vmatpush1.xpose.msra.mxu0 0.0
      %1119 = vmatprep.subr.mxu0 0.0
      %1120 = vmatpush1.xpose.msra.mxu0 0.0
      %1121 = vmatprep.subr.mxu0 0.0
      %1122 = vmatpush1.xpose.msra.mxu0 0.0
      %1123 = vmatprep.subr.mxu0 0.0
      %1124 = vmatpush1.xpose.msra.mxu0 0.0
      %1125 = vmatprep.subr.mxu0 0.0
      %1126 = vmatpush1.xpose.msra.mxu0 0.0
      %1127 = vmatprep.subr.mxu0 0.0
      %1128 = vmatpush1.xpose.msra.mxu0 0.0
      %1129 = vmatprep.subr.mxu0 0.0
      %1130 = vmatpush1.xpose.msra.mxu0 0.0
      %1131 = vmatprep.subr.mxu0 0.0
      %1132 = vmatpush1.xpose.msra.mxu0 0.0
      %1133 = vmatprep.subr.mxu0 0.0
      %1134 = vmatpush1.xpose.msra.mxu0 0.0
      %1135 = vmatprep.mubr.f32.mxu0 0.0
      %1136 = vmatmul.mubr.f32.gmra.mrb[0].mxu0 %v1066
      %v1137 = vpop.f32.mrb[0].mxu0
      %v1138 = vadd.f32 0.0, %v1137
      %v1139 = vpop.f32.mrb[0].mxu0
      %1140 = vdwg.mxu0
      %1141 = vxpose.xlu0.b32.start [1/16] %v559, 128
      %1142 = vxpose.xlu0.b32.cont [2/16] 0.0, 128
      %1143 = vxpose.xlu0.b32.cont [3/16] 0.0, 128
      %1144 = vxpose.xlu0.b32.cont [4/16] 0.0, 128
      %1145 = vxpose.xlu0.b32.cont [5/16] 0.0, 128
      %1146 = vxpose.xlu0.b32.cont [6/16] 0.0, 128
      %1147 = vxpose.xlu0.b32.cont [7/16] 0.0, 128
      %1148 = vxpose.xlu0.b32.cont [8/16] 0.0, 128
      %1149 = vxpose.xlu0.b32.cont [9/16] 0.0, 128
      %1150 = vxpose.xlu0.b32.cont [10/16] 0.0, 128
      %1151 = vxpose.xlu0.b32.cont [11/16] 0.0, 128
      %1152 = vxpose.xlu0.b32.cont [12/16] 0.0, 128
      %1153 = vxpose.xlu0.b32.cont [13/16] 0.0, 128
      %1154 = vxpose.xlu0.b32.cont [14/16] 0.0, 128
      %1155 = vxpose.xlu0.b32.cont [15/16] 0.0, 128
      %1156 = vxpose.xlu0.b32.end [16/16] 0.0, 128
      %v1157 = vpop.trf.xlu0
      %v1158 = vpop.trf.xlu0
      %v1159 = vpop.trf.xlu0
      %v1160 = vpop.trf.xlu0
      %v1161 = vpop.trf.xlu0
      %v1162 = vpop.trf.xlu0
      %v1163 = vpop.trf.xlu0
      %v1164 = vpop.trf.xlu0
      %v1165 = vpop.trf.xlu0
      %v1166 = vpop.trf.xlu0
      %v1167 = vpop.trf.xlu0
      %v1168 = vpop.trf.xlu0
      %v1169 = vpop.trf.xlu0
      %v1170 = vpop.trf.xlu0
      %v1171 = vpop.trf.xlu0
      %v1172 = vpop.trf.xlu0
      %v1174 = vsel %vm596, %v1157, 0
      %1176 = vmatprep.subr.mxu0 0.0
      %1177 = vmatpush1.msra.mxu0 %v519
      %1178 = vmatprep.subr.mxu0 0.0
      %1179 = vmatpush1.msra.mxu0 0.0
      %1180 = vmatprep.subr.mxu0 0.0
      %1181 = vmatpush1.msra.mxu0 0.0
      %1182 = vmatprep.subr.mxu0 0.0
      %1183 = vmatpush1.msra.mxu0 0.0
      %1184 = vmatprep.subr.mxu0 0.0
      %1185 = vmatpush1.msra.mxu0 0.0
      %1186 = vmatprep.subr.mxu0 0.0
      %1187 = vmatpush1.msra.mxu0 0.0
      %1188 = vmatprep.subr.mxu0 0.0
      %1189 = vmatpush1.msra.mxu0 0.0
      %1190 = vmatprep.subr.mxu0 0.0
      %1191 = vmatpush1.msra.mxu0 0.0
      %1192 = vmatprep.subr.mxu0 0.0
      %1193 = vmatpush1.msra.mxu0 0.0
      %1194 = vmatprep.subr.mxu0 0.0
      %1195 = vmatpush1.msra.mxu0 0.0
      %1196 = vmatprep.subr.mxu0 0.0
      %1197 = vmatpush1.msra.mxu0 0.0
      %1198 = vmatprep.subr.mxu0 0.0
      %1199 = vmatpush1.msra.mxu0 0.0
      %1200 = vmatprep.subr.mxu0 0.0
      %1201 = vmatpush1.msra.mxu0 0.0
      %1202 = vmatprep.subr.mxu0 0.0
      %1203 = vmatpush1.msra.mxu0 0.0
      %1204 = vmatprep.subr.mxu0 0.0
      %1205 = vmatpush1.msra.mxu0 0.0
      %1206 = vmatprep.subr.mxu0 0.0
      %1207 = vmatpush1.msra.mxu0 0.0
      %1208 = vmatprep.subr.mxu0 0.0
      %1209 = vmatpush1.msra.mxu0 0.0
      %1210 = vmatprep.subr.mxu0 0.0
      %1211 = vmatpush1.msra.mxu0 0.0
      %1212 = vmatprep.subr.mxu0 0.0
      %1213 = vmatpush1.msra.mxu0 0.0
      %1214 = vmatprep.subr.mxu0 0.0
      %1215 = vmatpush1.msra.mxu0 0.0
      %1216 = vmatprep.subr.mxu0 0.0
      %1217 = vmatpush1.msra.mxu0 0.0
      %1218 = vmatprep.subr.mxu0 0.0
      %1219 = vmatpush1.msra.mxu0 0.0
      %1220 = vmatprep.subr.mxu0 0.0
      %1221 = vmatpush1.msra.mxu0 0.0
      %1222 = vmatprep.subr.mxu0 0.0
      %1223 = vmatpush1.msra.mxu0 0.0
      %1224 = vmatprep.subr.mxu0 0.0
      %1225 = vmatpush1.msra.mxu0 0.0
      %1226 = vmatprep.subr.mxu0 0.0
      %1227 = vmatpush1.msra.mxu0 0.0
      %1228 = vmatprep.subr.mxu0 0.0
      %1229 = vmatpush1.msra.mxu0 0.0
      %1230 = vmatprep.subr.mxu0 0.0
      %1231 = vmatpush1.msra.mxu0 0.0
      %1232 = vmatprep.subr.mxu0 0.0
      %1233 = vmatpush1.msra.mxu0 0.0
      %1234 = vmatprep.subr.mxu0 0.0
      %1235 = vmatpush1.msra.mxu0 0.0
      %1236 = vmatprep.subr.mxu0 0.0
      %1237 = vmatpush1.msra.mxu0 0.0
      %1238 = vmatprep.subr.mxu0 0.0
      %1239 = vmatpush1.msra.mxu0 0.0
      %1240 = vmatprep.mubr.f32.mxu0 0.0
      %1241 = vmatmul.mubr.f32.gmra.mrb[0].mxu0 %v1174
      %v1242 = vpop.f32.mrb[0].mxu0
      %v1243 = vadd.f32 0.0, %v1242
      %v1244 = vpop.f32.mrb[0].mxu0
      %1245 = vdwg.mxu0
      %v1246 = vsel %vm596, %v1243, -inf
      %1247 = vmax.xlane.f32.xlu0 %v1246
      %v1248 = vpop.xlane.xlu0 %1247
      %v1249 = vsub.f32 %v1243, %v1248
      %v1250 = vmul.f32 %v1249, 1.442695
      %v1251 = vpow.pop %v1250
      %v1252 = vsel %vm596, %v1251, 0.0
      %1253 = vadd.xlane.f32.xlu0 %v1252
      %v1254 = vpop.xlane.xlu0 %1253
      %v1255 = vrcp.pop %v1254
      %v1256 = vmul.f32 %v1251, %v1255
      %v1258 = vsel %vm596, %v543, 0
      %v1261 = vsel %vm596, %v1256, 0
      %1263 = vmatprep.subr.mxu0 0.0
      %1264 = vmatpush1.xpose.msra.mxu0 %v1261
      %1265 = vmatprep.subr.mxu0 0.0
      %1266 = vmatpush1.xpose.msra.mxu0 0.0
      %1267 = vmatprep.subr.mxu0 0.0
      %1268 = vmatpush1.xpose.msra.mxu0 0.0
      %1269 = vmatprep.subr.mxu0 0.0
      %1270 = vmatpush1.xpose.msra.mxu0 0.0
      %1271 = vmatprep.subr.mxu0 0.0
      %1272 = vmatpush1.xpose.msra.mxu0 0.0
      %1273 = vmatprep.subr.mxu0 0.0
      %1274 = vmatpush1.xpose.msra.mxu0 0.0
      %1275 = vmatprep.subr.mxu0 0.0
      %1276 = vmatpush1.xpose.msra.mxu0 0.0
      %1277 = vmatprep.subr.mxu0 0.0
      %1278 = vmatpush1.xpose.msra.mxu0 0.0
      %1279 = vmatprep.subr.mxu0 0.0
      %1280 = vmatpush1.xpose.msra.mxu0 0.0
      %1281 = vmatprep.subr.mxu0 0.0
      %1282 = vmatpush1.xpose.msra.mxu0 0.0
      %1283 = vmatprep.subr.mxu0 0.0
      %1284 = vmatpush1.xpose.msra.mxu0 0.0
      %1285 = vmatprep.subr.mxu0 0.0
      %1286 = vmatpush1.xpose.msra.mxu0 0.0
      %1287 = vmatprep.subr.mxu0 0.0
      %1288 = vmatpush1.xpose.msra.mxu0 0.0
      %1289 = vmatprep.subr.mxu0 0.0
      %1290 = vmatpush1.xpose.msra.mxu0 0.0
      %1291 = vmatprep.subr.mxu0 0.0
      %1292 = vmatpush1.xpose.msra.mxu0 0.0
      %1293 = vmatprep.subr.mxu0 0.0
      %1294 = vmatpush1.xpose.msra.mxu0 0.0
      %1295 = vmatprep.subr.mxu0 0.0
      %1296 = vmatpush1.xpose.msra.mxu0 0.0
      %1297 = vmatprep.subr.mxu0 0.0
      %1298 = vmatpush1.xpose.msra.mxu0 0.0
      %1299 = vmatprep.subr.mxu0 0.0
      %1300 = vmatpush1.xpose.msra.mxu0 0.0
      %1301 = vmatprep.subr.mxu0 0.0
      %1302 = vmatpush1.xpose.msra.mxu0 0.0
      %1303 = vmatprep.subr.mxu0 0.0
      %1304 = vmatpush1.xpose.msra.mxu0 0.0
      %1305 = vmatprep.subr.mxu0 0.0
      %1306 = vmatpush1.xpose.msra.mxu0 0.0
      %1307 = vmatprep.subr.mxu0 0.0
      %1308 = vmatpush1.xpose.msra.mxu0 0.0
      %1309 = vmatprep.subr.mxu0 0.0
      %1310 = vmatpush1.xpose.msra.mxu0 0.0
      %1311 = vmatprep.subr.mxu0 0.0
      %1312 = vmatpush1.xpose.msra.mxu0 0.0
      %1313 = vmatprep.subr.mxu0 0.0
      %1314 = vmatpush1.xpose.msra.mxu0 0.0
      %1315 = vmatprep.subr.mxu0 0.0
      %1316 = vmatpush1.xpose.msra.mxu0 0.0
      %1317 = vmatprep.subr.mxu0 0.0
      %1318 = vmatpush1.xpose.msra.mxu0 0.0
      %1319 = vmatprep.subr.mxu0 0.0
      %1320 = vmatpush1.xpose.msra.mxu0 0.0
      %1321 = vmatprep.subr.mxu0 0.0
      %1322 = vmatpush1.xpose.msra.mxu0 0.0
      %1323 = vmatprep.subr.mxu0 0.0
      %1324 = vmatpush1.xpose.msra.mxu0 0.0
      %1325 = vmatprep.subr.mxu0 0.0
      %1326 = vmatpush1.xpose.msra.mxu0 0.0
      %1327 = vmatprep.mubr.f32.mxu0 0.0
      %1328 = vmatmul.mubr.f32.gmra.mrb[0].mxu0 %v1258
      %v1329 = vpop.f32.mrb[0].mxu0
      %v1330 = vadd.f32 0.0, %v1329
      %v1331 = vpop.f32.mrb[0].mxu0
      %1332 = vdwg.mxu0
      %1333 = vxpose.xlu0.b32.start [1/16] %v560, 128
      %1334 = vxpose.xlu0.b32.cont [2/16] 0.0, 128
      %1335 = vxpose.xlu0.b32.cont [3/16] 0.0, 128
      %1336 = vxpose.xlu0.b32.cont [4/16] 0.0, 128
      %1337 = vxpose.xlu0.b32.cont [5/16] 0.0, 128
      %1338 = vxpose.xlu0.b32.cont [6/16] 0.0, 128
      %1339 = vxpose.xlu0.b32.cont [7/16] 0.0, 128
      %1340 = vxpose.xlu0.b32.cont [8/16] 0.0, 128
      %1341 = vxpose.xlu0.b32.cont [9/16] 0.0, 128
      %1342 = vxpose.xlu0.b32.cont [10/16] 0.0, 128
      %1343 = vxpose.xlu0.b32.cont [11/16] 0.0, 128
      %1344 = vxpose.xlu0.b32.cont [12/16] 0.0, 128
      %1345 = vxpose.xlu0.b32.cont [13/16] 0.0, 128
      %1346 = vxpose.xlu0.b32.cont [14/16] 0.0, 128
      %1347 = vxpose.xlu0.b32.cont [15/16] 0.0, 128
      %1348 = vxpose.xlu0.b32.end [16/16] 0.0, 128
      %v1349 = vpop.trf.xlu0
      %v1350 = vpop.trf.xlu0
      %v1351 = vpop.trf.xlu0
      %v1352 = vpop.trf.xlu0
      %v1353 = vpop.trf.xlu0
      %v1354 = vpop.trf.xlu0
      %v1355 = vpop.trf.xlu0
      %v1356 = vpop.trf.xlu0
      %v1357 = vpop.trf.xlu0
      %v1358 = vpop.trf.xlu0
      %v1359 = vpop.trf.xlu0
      %v1360 = vpop.trf.xlu0
      %v1361 = vpop.trf.xlu0
      %v1362 = vpop.trf.xlu0
      %v1363 = vpop.trf.xlu0
      %v1364 = vpop.trf.xlu0
      %v1366 = vsel %vm596, %v1349, 0
      %1368 = vmatprep.subr.mxu0 0.0
      %1369 = vmatpush1.msra.mxu0 %v520
      %1370 = vmatprep.subr.mxu0 0.0
      %1371 = vmatpush1.msra.mxu0 0.0
      %1372 = vmatprep.subr.mxu0 0.0
      %1373 = vmatpush1.msra.mxu0 0.0
      %1374 = vmatprep.subr.mxu0 0.0
      %1375 = vmatpush1.msra.mxu0 0.0
      %1376 = vmatprep.subr.mxu0 0.0
      %1377 = vmatpush1.msra.mxu0 0.0
      %1378 = vmatprep.subr.mxu0 0.0
      %1379 = vmatpush1.msra.mxu0 0.0
      %1380 = vmatprep.subr.mxu0 0.0
      %1381 = vmatpush1.msra.mxu0 0.0
      %1382 = vmatprep.subr.mxu0 0.0
      %1383 = vmatpush1.msra.mxu0 0.0
      %1384 = vmatprep.subr.mxu0 0.0
      %1385 = vmatpush1.msra.mxu0 0.0
      %1386 = vmatprep.subr.mxu0 0.0
      %1387 = vmatpush1.msra.mxu0 0.0
      %1388 = vmatprep.subr.mxu0 0.0
      %1389 = vmatpush1.msra.mxu0 0.0
      %1390 = vmatprep.subr.mxu0 0.0
      %1391 = vmatpush1.msra.mxu0 0.0
      %1392 = vmatprep.subr.mxu0 0.0
      %1393 = vmatpush1.msra.mxu0 0.0
      %1394 = vmatprep.subr.mxu0 0.0
      %1395 = vmatpush1.msra.mxu0 0.0
      %1396 = vmatprep.subr.mxu0 0.0
      %1397 = vmatpush1.msra.mxu0 0.0
      %1398 = vmatprep.subr.mxu0 0.0
      %1399 = vmatpush1.msra.mxu0 0.0
      %1400 = vmatprep.subr.mxu0 0.0
      %1401 = vmatpush1.msra.mxu0 0.0
      %1402 = vmatprep.subr.mxu0 0.0
      %1403 = vmatpush1.msra.mxu0 0.0
      %1404 = vmatprep.subr.mxu0 0.0
      %1405 = vmatpush1.msra.mxu0 0.0
      %1406 = vmatprep.subr.mxu0 0.0
      %1407 = vmatpush1.msra.mxu0 0.0
      %1408 = vmatprep.subr.mxu0 0.0
      %1409 = vmatpush1.msra.mxu0 0.0
      %1410 = vmatprep.subr.mxu0 0.0
      %1411 = vmatpush1.msra.mxu0 0.0
      %1412 = vmatprep.subr.mxu0 0.0
      %1413 = vmatpush1.msra.mxu0 0.0
      %1414 = vmatprep.subr.mxu0 0.0
      %1415 = vmatpush1.msra.mxu0 0.0
      %1416 = vmatprep.subr.mxu0 0.0
      %1417 = vmatpush1.msra.mxu0 0.0
      %1418 = vmatprep.subr.mxu0 0.0
      %1419 = vmatpush1.msra.mxu0 0.0
      %1420 = vmatprep.subr.mxu0 0.0
      %1421 = vmatpush1.msra.mxu0 0.0
      %1422 = vmatprep.subr.mxu0 0.0
      %1423 = vmatpush1.msra.mxu0 0.0
      %1424 = vmatprep.subr.mxu0 0.0
      %1425 = vmatpush1.msra.mxu0 0.0
      %1426 = vmatprep.subr.mxu0 0.0
      %1427 = vmatpush1.msra.mxu0 0.0
      %1428 = vmatprep.subr.mxu0 0.0
      %1429 = vmatpush1.msra.mxu0 0.0
      %1430 = vmatprep.subr.mxu0 0.0
      %1431 = vmatpush1.msra.mxu0 0.0
      %1432 = vmatprep.mubr.f32.mxu0 0.0
      %1433 = vmatmul.mubr.f32.gmra.mrb[0].mxu0 %v1366
      %v1434 = vpop.f32.mrb[0].mxu0
      %v1435 = vadd.f32 0.0, %v1434
      %v1436 = vpop.f32.mrb[0].mxu0
      %1437 = vdwg.mxu0
      %v1438 = vsel %vm596, %v1435, -inf
      %1439 = vmax.xlane.f32.xlu0 %v1438
      %v1440 = vpop.xlane.xlu0 %1439
      %v1441 = vsub.f32 %v1435, %v1440
      %v1442 = vmul.f32 %v1441, 1.442695
      %v1443 = vpow.pop %v1442
      %v1444 = vsel %vm596, %v1443, 0.0
      %1445 = vadd.xlane.f32.xlu0 %v1444
      %v1446 = vpop.xlane.xlu0 %1445
      %v1447 = vrcp.pop %v1446
      %v1448 = vmul.f32 %v1443, %v1447
      %v1450 = vsel %vm596, %v544, 0
      %v1453 = vsel %vm596, %v1448, 0
      %1455 = vmatprep.subr.mxu0 0.0
      %1456 = vmatpush1.xpose.msra.mxu0 %v1453
      %1457 = vmatprep.subr.mxu0 0.0
      %1458 = vmatpush1.xpose.msra.mxu0 0.0
      %1459 = vmatprep.subr.mxu0 0.0
      %1460 = vmatpush1.xpose.msra.mxu0 0.0
      %1461 = vmatprep.subr.mxu0 0.0
      %1462 = vmatpush1.xpose.msra.mxu0 0.0
      %1463 = vmatprep.subr.mxu0 0.0
      %1464 = vmatpush1.xpose.msra.mxu0 0.0
      %1465 = vmatprep.subr.mxu0 0.0
      %1466 = vmatpush1.xpose.msra.mxu0 0.0
      %1467 = vmatprep.subr.mxu0 0.0
      %1468 = vmatpush1.xpose.msra.mxu0 0.0
      %1469 = vmatprep.subr.mxu0 0.0
      %1470 = vmatpush1.xpose.msra.mxu0 0.0
      %1471 = vmatprep.subr.mxu0 0.0
      %1472 = vmatpush1.xpose.msra.mxu0 0.0
      %1473 = vmatprep.subr.mxu0 0.0
      %1474 = vmatpush1.xpose.msra.mxu0 0.0
      %1475 = vmatprep.subr.mxu0 0.0
      %1476 = vmatpush1.xpose.msra.mxu0 0.0
      %1477 = vmatprep.subr.mxu0 0.0
      %1478 = vmatpush1.xpose.msra.mxu0 0.0
      %1479 = vmatprep.subr.mxu0 0.0
      %1480 = vmatpush1.xpose.msra.mxu0 0.0
      %1481 = vmatprep.subr.mxu0 0.0
      %1482 = vmatpush1.xpose.msra.mxu0 0.0
      %1483 = vmatprep.subr.mxu0 0.0
      %1484 = vmatpush1.xpose.msra.mxu0 0.0
      %1485 = vmatprep.subr.mxu0 0.0
      %1486 = vmatpush1.xpose.msra.mxu0 0.0
      %1487 = vmatprep.subr.mxu0 0.0
      %1488 = vmatpush1.xpose.msra.mxu0 0.0
      %1489 = vmatprep.subr.mxu0 0.0
      %1490 = vmatpush1.xpose.msra.mxu0 0.0
      %1491 = vmatprep.subr.mxu0 0.0
      %1492 = vmatpush1.xpose.msra.mxu0 0.0
      %1493 = vmatprep.subr.mxu0 0.0
      %1494 = vmatpush1.xpose.msra.mxu0 0.0
      %1495 = vmatprep.subr.mxu0 0.0
      %1496 = vmatpush1.xpose.msra.mxu0 0.0
      %1497 = vmatprep.subr.mxu0 0.0
      %1498 = vmatpush1.xpose.msra.mxu0 0.0
      %1499 = vmatprep.subr.mxu0 0.0
      %1500 = vmatpush1.xpose.msra.mxu0 0.0
      %1501 = vmatprep.subr.mxu0 0.0
      %1502 = vmatpush1.xpose.msra.mxu0 0.0
      %1503 = vmatprep.subr.mxu0 0.0
      %1504 = vmatpush1.xpose.msra.mxu0 0.0
      %1505 = vmatprep.subr.mxu0 0.0
      %1506 = vmatpush1.xpose.msra.mxu0 0.0
      %1507 = vmatprep.subr.mxu0 0.0
      %1508 = vmatpush1.xpose.msra.mxu0 0.0
      %1509 = vmatprep.subr.mxu0 0.0
      %1510 = vmatpush1.xpose.msra.mxu0 0.0
      %1511 = vmatprep.subr.mxu0 0.0
      %1512 = vmatpush1.xpose.msra.mxu0 0.0
      %1513 = vmatprep.subr.mxu0 0.0
      %1514 = vmatpush1.xpose.msra.mxu0 0.0
      %1515 = vmatprep.subr.mxu0 0.0
      %1516 = vmatpush1.xpose.msra.mxu0 0.0
      %1517 = vmatprep.subr.mxu0 0.0
      %1518 = vmatpush1.xpose.msra.mxu0 0.0
      %1519 = vmatprep.mubr.f32.mxu0 0.0
      %1520 = vmatmul.mubr.f32.gmra.mrb[0].mxu0 %v1450
      %v1521 = vpop.f32.mrb[0].mxu0
      %v1522 = vadd.f32 0.0, %v1521
      %v1523 = vpop.f32.mrb[0].mxu0
      %1524 = vdwg.mxu0
      %1525 = vxpose.xlu0.b32.start [1/16] %v561, 128
      %1526 = vxpose.xlu0.b32.cont [2/16] 0.0, 128
      %1527 = vxpose.xlu0.b32.cont [3/16] 0.0, 128
      %1528 = vxpose.xlu0.b32.cont [4/16] 0.0, 128
      %1529 = vxpose.xlu0.b32.cont [5/16] 0.0, 128
      %1530 = vxpose.xlu0.b32.cont [6/16] 0.0, 128
      %1531 = vxpose.xlu0.b32.cont [7/16] 0.0, 128
      %1532 = vxpose.xlu0.b32.cont [8/16] 0.0, 128
      %1533 = vxpose.xlu0.b32.cont [9/16] 0.0, 128
      %1534 = vxpose.xlu0.b32.cont [10/16] 0.0, 128
      %1535 = vxpose.xlu0.b32.cont [11/16] 0.0, 128
      %1536 = vxpose.xlu0.b32.cont [12/16] 0.0, 128
      %1537 = vxpose.xlu0.b32.cont [13/16] 0.0, 128
      %1538 = vxpose.xlu0.b32.cont [14/16] 0.0, 128
      %1539 = vxpose.xlu0.b32.cont [15/16] 0.0, 128
      %1540 = vxpose.xlu0.b32.end [16/16] 0.0, 128
      %v1541 = vpop.trf.xlu0
      %v1542 = vpop.trf.xlu0
      %v1543 = vpop.trf.xlu0
      %v1544 = vpop.trf.xlu0
      %v1545 = vpop.trf.xlu0
      %v1546 = vpop.trf.xlu0
      %v1547 = vpop.trf.xlu0
      %v1548 = vpop.trf.xlu0
      %v1549 = vpop.trf.xlu0
      %v1550 = vpop.trf.xlu0
      %v1551 = vpop.trf.xlu0
      %v1552 = vpop.trf.xlu0
      %v1553 = vpop.trf.xlu0
      %v1554 = vpop.trf.xlu0
      %v1555 = vpop.trf.xlu0
      %v1556 = vpop.trf.xlu0
      %v1558 = vsel %vm596, %v1541, 0
      %1560 = vmatprep.subr.mxu0 0.0
      %1561 = vmatpush1.msra.mxu0 %v521
      %1562 = vmatprep.subr.mxu0 0.0
      %1563 = vmatpush1.msra.mxu0 0.0
      %1564 = vmatprep.subr.mxu0 0.0
      %1565 = vmatpush1.msra.mxu0 0.0
      %1566 = vmatprep.subr.mxu0 0.0
      %1567 = vmatpush1.msra.mxu0 0.0
      %1568 = vmatprep.subr.mxu0 0.0
      %1569 = vmatpush1.msra.mxu0 0.0
      %1570 = vmatprep.subr.mxu0 0.0
      %1571 = vmatpush1.msra.mxu0 0.0
      %1572 = vmatprep.subr.mxu0 0.0
      %1573 = vmatpush1.msra.mxu0 0.0
      %1574 = vmatprep.subr.mxu0 0.0
      %1575 = vmatpush1.msra.mxu0 0.0
      %1576 = vmatprep.subr.mxu0 0.0
      %1577 = vmatpush1.msra.mxu0 0.0
      %1578 = vmatprep.subr.mxu0 0.0
      %1579 = vmatpush1.msra.mxu0 0.0
      %1580 = vmatprep.subr.mxu0 0.0
      %1581 = vmatpush1.msra.mxu0 0.0
      %1582 = vmatprep.subr.mxu0 0.0
      %1583 = vmatpush1.msra.mxu0 0.0
      %1584 = vmatprep.subr.mxu0 0.0
      %1585 = vmatpush1.msra.mxu0 0.0
      %1586 = vmatprep.subr.mxu0 0.0
      %1587 = vmatpush1.msra.mxu0 0.0
      %1588 = vmatprep.subr.mxu0 0.0
      %1589 = vmatpush1.msra.mxu0 0.0
      %1590 = vmatprep.subr.mxu0 0.0
      %1591 = vmatpush1.msra.mxu0 0.0
      %1592 = vmatprep.subr.mxu0 0.0
      %1593 = vmatpush1.msra.mxu0 0.0
      %1594 = vmatprep.subr.mxu0 0.0
      %1595 = vmatpush1.msra.mxu0 0.0
      %1596 = vmatprep.subr.mxu0 0.0
      %1597 = vmatpush1.msra.mxu0 0.0
      %1598 = vmatprep.subr.mxu0 0.0
      %1599 = vmatpush1.msra.mxu0 0.0
      %1600 = vmatprep.subr.mxu0 0.0
      %1601 = vmatpush1.msra.mxu0 0.0
      %1602 = vmatprep.subr.mxu0 0.0
      %1603 = vmatpush1.msra.mxu0 0.0
      %1604 = vmatprep.subr.mxu0 0.0
      %1605 = vmatpush1.msra.mxu0 0.0
      %1606 = vmatprep.subr.mxu0 0.0
      %1607 = vmatpush1.msra.mxu0 0.0
      %1608 = vmatprep.subr.mxu0 0.0
      %1609 = vmatpush1.msra.mxu0 0.0
      %1610 = vmatprep.subr.mxu0 0.0
      %1611 = vmatpush1.msra.mxu0 0.0
      %1612 = vmatprep.subr.mxu0 0.0
      %1613 = vmatpush1.msra.mxu0 0.0
      %1614 = vmatprep.subr.mxu0 0.0
      %1615 = vmatpush1.msra.mxu0 0.0
      %1616 = vmatprep.subr.mxu0 0.0
      %1617 = vmatpush1.msra.mxu0 0.0
      %1618 = vmatprep.subr.mxu0 0.0
      %1619 = vmatpush1.msra.mxu0 0.0
      %1620 = vmatprep.subr.mxu0 0.0
      %1621 = vmatpush1.msra.mxu0 0.0
      %1622 = vmatprep.subr.mxu0 0.0
      %1623 = vmatpush1.msra.mxu0 0.0
      %1624 = vmatprep.mubr.f32.mxu0 0.0
      %1625 = vmatmul.mubr.f32.gmra.mrb[0].mxu0 %v1558
      %v1626 = vpop.f32.mrb[0].mxu0
      %v1627 = vadd.f32 0.0, %v1626
      %v1628 = vpop.f32.mrb[0].mxu0
      %1629 = vdwg.mxu0
      %v1630 = vsel %vm596, %v1627, -inf
      %1631 = vmax.xlane.f32.xlu0 %v1630
      %v1632 = vpop.xlane.xlu0 %1631
      %v1633 = vsub.f32 %v1627, %v1632
      %v1634 = vmul.f32 %v1633, 1.442695
      %v1635 = vpow.pop %v1634
      %v1636 = vsel %vm596, %v1635, 0.0
      %1637 = vadd.xlane.f32.xlu0 %v1636
      %v1638 = vpop.xlane.xlu0 %1637
      %v1639 = vrcp.pop %v1638
      %v1640 = vmul.f32 %v1635, %v1639
      %v1642 = vsel %vm596, %v545, 0
      %v1645 = vsel %vm596, %v1640, 0
      %1647 = vmatprep.subr.mxu0 0.0
      %1648 = vmatpush1.xpose.msra.mxu0 %v1645
      %1649 = vmatprep.subr.mxu0 0.0
      %1650 = vmatpush1.xpose.msra.mxu0 0.0
      %1651 = vmatprep.subr.mxu0 0.0
      %1652 = vmatpush1.xpose.msra.mxu0 0.0
      %1653 = vmatprep.subr.mxu0 0.0
      %1654 = vmatpush1.xpose.msra.mxu0 0.0
      %1655 = vmatprep.subr.mxu0 0.0
      %1656 = vmatpush1.xpose.msra.mxu0 0.0
      %1657 = vmatprep.subr.mxu0 0.0
      %1658 = vmatpush1.xpose.msra.mxu0 0.0
      %1659 = vmatprep.subr.mxu0 0.0
      %1660 = vmatpush1.xpose.msra.mxu0 0.0
      %1661 = vmatprep.subr.mxu0 0.0
      %1662 = vmatpush1.xpose.msra.mxu0 0.0
      %1663 = vmatprep.subr.mxu0 0.0
      %1664 = vmatpush1.xpose.msra.mxu0 0.0
      %1665 = vmatprep.subr.mxu0 0.0
      %1666 = vmatpush1.xpose.msra.mxu0 0.0
      %1667 = vmatprep.subr.mxu0 0.0
      %1668 = vmatpush1.xpose.msra.mxu0 0.0
      %1669 = vmatprep.subr.mxu0 0.0
      %1670 = vmatpush1.xpose.msra.mxu0 0.0
      %1671 = vmatprep.subr.mxu0 0.0
      %1672 = vmatpush1.xpose.msra.mxu0 0.0
      %1673 = vmatprep.subr.mxu0 0.0
      %1674 = vmatpush1.xpose.msra.mxu0 0.0
      %1675 = vmatprep.subr.mxu0 0.0
      %1676 = vmatpush1.xpose.msra.mxu0 0.0
      %1677 = vmatprep.subr.mxu0 0.0
      %1678 = vmatpush1.xpose.msra.mxu0 0.0
      %1679 = vmatprep.subr.mxu0 0.0
      %1680 = vmatpush1.xpose.msra.mxu0 0.0
      %1681 = vmatprep.subr.mxu0 0.0
      %1682 = vmatpush1.xpose.msra.mxu0 0.0
      %1683 = vmatprep.subr.mxu0 0.0
      %1684 = vmatpush1.xpose.msra.mxu0 0.0
      %1685 = vmatprep.subr.mxu0 0.0
      %1686 = vmatpush1.xpose.msra.mxu0 0.0
      %1687 = vmatprep.subr.mxu0 0.0
      %1688 = vmatpush1.xpose.msra.mxu0 0.0
      %1689 = vmatprep.subr.mxu0 0.0
      %1690 = vmatpush1.xpose.msra.mxu0 0.0
      %1691 = vmatprep.subr.mxu0 0.0
      %1692 = vmatpush1.xpose.msra.mxu0 0.0
      %1693 = vmatprep.subr.mxu0 0.0
      %1694 = vmatpush1.xpose.msra.mxu0 0.0
      %1695 = vmatprep.subr.mxu0 0.0
      %1696 = vmatpush1.xpose.msra.mxu0 0.0
      %1697 = vmatprep.subr.mxu0 0.0
      %1698 = vmatpush1.xpose.msra.mxu0 0.0
      %1699 = vmatprep.subr.mxu0 0.0
      %1700 = vmatpush1.xpose.msra.mxu0 0.0
      %1701 = vmatprep.subr.mxu0 0.0
      %1702 = vmatpush1.xpose.msra.mxu0 0.0
      %1703 = vmatprep.subr.mxu0 0.0
      %1704 = vmatpush1.xpose.msra.mxu0 0.0
      %1705 = vmatprep.subr.mxu0 0.0
      %1706 = vmatpush1.xpose.msra.mxu0 0.0
      %1707 = vmatprep.subr.mxu0 0.0
      %1708 = vmatpush1.xpose.msra.mxu0 0.0
      %1709 = vmatprep.subr.mxu0 0.0
      %1710 = vmatpush1.xpose.msra.mxu0 0.0
      %1711 = vmatprep.mubr.f32.mxu0 0.0
      %1712 = vmatmul.mubr.f32.gmra.mrb[0].mxu0 %v1642
      %v1713 = vpop.f32.mrb[0].mxu0
      %v1714 = vadd.f32 0.0, %v1713
      %v1715 = vpop.f32.mrb[0].mxu0
      %1716 = vdwg.mxu0
      %1717 = vxpose.xlu0.b32.start [1/16] %v562, 128
      %1718 = vxpose.xlu0.b32.cont [2/16] 0.0, 128
      %1719 = vxpose.xlu0.b32.cont [3/16] 0.0, 128
      %1720 = vxpose.xlu0.b32.cont [4/16] 0.0, 128
      %1721 = vxpose.xlu0.b32.cont [5/16] 0.0, 128
      %1722 = vxpose.xlu0.b32.cont [6/16] 0.0, 128
      %1723 = vxpose.xlu0.b32.cont [7/16] 0.0, 128
      %1724 = vxpose.xlu0.b32.cont [8/16] 0.0, 128
      %1725 = vxpose.xlu0.b32.cont [9/16] 0.0, 128
      %1726 = vxpose.xlu0.b32.cont [10/16] 0.0, 128
      %1727 = vxpose.xlu0.b32.cont [11/16] 0.0, 128
      %1728 = vxpose.xlu0.b32.cont [12/16] 0.0, 128
      %1729 = vxpose.xlu0.b32.cont [13/16] 0.0, 128
      %1730 = vxpose.xlu0.b32.cont [14/16] 0.0, 128
      %1731 = vxpose.xlu0.b32.cont [15/16] 0.0, 128
      %1732 = vxpose.xlu0.b32.end [16/16] 0.0, 128
      %v1733 = vpop.trf.xlu0
      %v1734 = vpop.trf.xlu0
      %v1735 = vpop.trf.xlu0
      %v1736 = vpop.trf.xlu0
      %v1737 = vpop.trf.xlu0
      %v1738 = vpop.trf.xlu0
      %v1739 = vpop.trf.xlu0
      %v1740 = vpop.trf.xlu0
      %v1741 = vpop.trf.xlu0
      %v1742 = vpop.trf.xlu0
      %v1743 = vpop.trf.xlu0
      %v1744 = vpop.trf.xlu0
      %v1745 = vpop.trf.xlu0
      %v1746 = vpop.trf.xlu0
      %v1747 = vpop.trf.xlu0
      %v1748 = vpop.trf.xlu0
      %v1750 = vsel %vm596, %v1733, 0
      %1752 = vmatprep.subr.mxu0 0.0
      %1753 = vmatpush1.msra.mxu0 %v522
      %1754 = vmatprep.subr.mxu0 0.0
      %1755 = vmatpush1.msra.mxu0 0.0
      %1756 = vmatprep.subr.mxu0 0.0
      %1757 = vmatpush1.msra.mxu0 0.0
      %1758 = vmatprep.subr.mxu0 0.0
      %1759 = vmatpush1.msra.mxu0 0.0
      %1760 = vmatprep.subr.mxu0 0.0
      %1761 = vmatpush1.msra.mxu0 0.0
      %1762 = vmatprep.subr.mxu0 0.0
      %1763 = vmatpush1.msra.mxu0 0.0
      %1764 = vmatprep.subr.mxu0 0.0
      %1765 = vmatpush1.msra.mxu0 0.0
      %1766 = vmatprep.subr.mxu0 0.0
      %1767 = vmatpush1.msra.mxu0 0.0
      %1768 = vmatprep.subr.mxu0 0.0
      %1769 = vmatpush1.msra.mxu0 0.0
      %1770 = vmatprep.subr.mxu0 0.0
      %1771 = vmatpush1.msra.mxu0 0.0
      %1772 = vmatprep.subr.mxu0 0.0
      %1773 = vmatpush1.msra.mxu0 0.0
      %1774 = vmatprep.subr.mxu0 0.0
      %1775 = vmatpush1.msra.mxu0 0.0
      %1776 = vmatprep.subr.mxu0 0.0
      %1777 = vmatpush1.msra.mxu0 0.0
      %1778 = vmatprep.subr.mxu0 0.0
      %1779 = vmatpush1.msra.mxu0 0.0
      %1780 = vmatprep.subr.mxu0 0.0
      %1781 = vmatpush1.msra.mxu0 0.0
      %1782 = vmatprep.subr.mxu0 0.0
      %1783 = vmatpush1.msra.mxu0 0.0
      %1784 = vmatprep.subr.mxu0 0.0
      %1785 = vmatpush1.msra.mxu0 0.0
      %1786 = vmatprep.subr.mxu0 0.0
      %1787 = vmatpush1.msra.mxu0 0.0
      %1788 = vmatprep.subr.mxu0 0.0
      %1789 = vmatpush1.msra.mxu0 0.0
      %1790 = vmatprep.subr.mxu0 0.0
      %1791 = vmatpush1.msra.mxu0 0.0
      %1792 = vmatprep.subr.mxu0 0.0
      %1793 = vmatpush1.msra.mxu0 0.0
      %1794 = vmatprep.subr.mxu0 0.0
      %1795 = vmatpush1.msra.mxu0 0.0
      %1796 = vmatprep.subr.mxu0 0.0
      %1797 = vmatpush1.msra.mxu0 0.0
      %1798 = vmatprep.subr.mxu0 0.0
      %1799 = vmatpush1.msra.mxu0 0.0
      %1800 = vmatprep.subr.mxu0 0.0
      %1801 = vmatpush1.msra.mxu0 0.0
      %1802 = vmatprep.subr.mxu0 0.0
      %1803 = vmatpush1.msra.mxu0 0.0
      %1804 = vmatprep.subr.mxu0 0.0
      %1805 = vmatpush1.msra.mxu0 0.0
      %1806 = vmatprep.subr.mxu0 0.0
      %1807 = vmatpush1.msra.mxu0 0.0
      %1808 = vmatprep.subr.mxu0 0.0
      %1809 = vmatpush1.msra.mxu0 0.0
      %1810 = vmatprep.subr.mxu0 0.0
      %1811 = vmatpush1.msra.mxu0 0.0
      %1812 = vmatprep.subr.mxu0 0.0
      %1813 = vmatpush1.msra.mxu0 0.0
      %1814 = vmatprep.subr.mxu0 0.0
      %1815 = vmatpush1.msra.mxu0 0.0
      %1816 = vmatprep.mubr.f32.mxu0 0.0
      %1817 = vmatmul.mubr.f32.gmra.mrb[0].mxu0 %v1750
      %v1818 = vpop.f32.mrb[0].mxu0
      %v1819 = vadd.f32 0.0, %v1818
      %v1820 = vpop.f32.mrb[0].mxu0
      %1821 = vdwg.mxu0
      %v1822 = vsel %vm596, %v1819, -inf
      %1823 = vmax.xlane.f32.xlu0 %v1822
      %v1824 = vpop.xlane.xlu0 %1823
      %v1825 = vsub.f32 %v1819, %v1824
      %v1826 = vmul.f32 %v1825, 1.442695
      %v1827 = vpow.pop %v1826
      %v1828 = vsel %vm596, %v1827, 0.0
      %1829 = vadd.xlane.f32.xlu0 %v1828
      %v1830 = vpop.xlane.xlu0 %1829
      %v1831 = vrcp.pop %v1830
      %v1832 = vmul.f32 %v1827, %v1831
      %v1834 = vsel %vm596, %v546, 0
      %v1837 = vsel %vm596, %v1832, 0
      %1839 = vmatprep.subr.mxu0 0.0
      %1840 = vmatpush1.xpose.msra.mxu0 %v1837
      %1841 = vmatprep.subr.mxu0 0.0
      %1842 = vmatpush1.xpose.msra.mxu0 0.0
      %1843 = vmatprep.subr.mxu0 0.0
      %1844 = vmatpush1.xpose.msra.mxu0 0.0
      %1845 = vmatprep.subr.mxu0 0.0
      %1846 = vmatpush1.xpose.msra.mxu0 0.0
      %1847 = vmatprep.subr.mxu0 0.0
      %1848 = vmatpush1.xpose.msra.mxu0 0.0
      %1849 = vmatprep.subr.mxu0 0.0
      %1850 = vmatpush1.xpose.msra.mxu0 0.0
      %1851 = vmatprep.subr.mxu0 0.0
      %1852 = vmatpush1.xpose.msra.mxu0 0.0
      %1853 = vmatprep.subr.mxu0 0.0
      %1854 = vmatpush1.xpose.msra.mxu0 0.0
      %1855 = vmatprep.subr.mxu0 0.0
      %1856 = vmatpush1.xpose.msra.mxu0 0.0
      %1857 = vmatprep.subr.mxu0 0.0
      %1858 = vmatpush1.xpose.msra.mxu0 0.0
      %1859 = vmatprep.subr.mxu0 0.0
      %1860 = vmatpush1.xpose.msra.mxu0 0.0
      %1861 = vmatprep.subr.mxu0 0.0
      %1862 = vmatpush1.xpose.msra.mxu0 0.0
      %1863 = vmatprep.subr.mxu0 0.0
      %1864 = vmatpush1.xpose.msra.mxu0 0.0
      %1865 = vmatprep.subr.mxu0 0.0
      %1866 = vmatpush1.xpose.msra.mxu0 0.0
      %1867 = vmatprep.subr.mxu0 0.0
      %1868 = vmatpush1.xpose.msra.mxu0 0.0
      %1869 = vmatprep.subr.mxu0 0.0
      %1870 = vmatpush1.xpose.msra.mxu0 0.0
      %1871 = vmatprep.subr.mxu0 0.0
      %1872 = vmatpush1.xpose.msra.mxu0 0.0
      %1873 = vmatprep.subr.mxu0 0.0
      %1874 = vmatpush1.xpose.msra.mxu0 0.0
      %1875 = vmatprep.subr.mxu0 0.0
      %1876 = vmatpush1.xpose.msra.mxu0 0.0
      %1877 = vmatprep.subr.mxu0 0.0
      %1878 = vmatpush1.xpose.msra.mxu0 0.0
      %1879 = vmatprep.subr.mxu0 0.0
      %1880 = vmatpush1.xpose.msra.mxu0 0.0
      %1881 = vmatprep.subr.mxu0 0.0
      %1882 = vmatpush1.xpose.msra.mxu0 0.0
      %1883 = vmatprep.subr.mxu0 0.0
      %1884 = vmatpush1.xpose.msra.mxu0 0.0
      %1885 = vmatprep.subr.mxu0 0.0
      %1886 = vmatpush1.xpose.msra.mxu0 0.0
      %1887 = vmatprep.subr.mxu0 0.0
      %1888 = vmatpush1.xpose.msra.mxu0 0.0
      %1889 = vmatprep.subr.mxu0 0.0
      %1890 = vmatpush1.xpose.msra.mxu0 0.0
      %1891 = vmatprep.subr.mxu0 0.0
      %1892 = vmatpush1.xpose.msra.mxu0 0.0
      %1893 = vmatprep.subr.mxu0 0.0
      %1894 = vmatpush1.xpose.msra.mxu0 0.0
      %1895 = vmatprep.subr.mxu0 0.0
      %1896 = vmatpush1.xpose.msra.mxu0 0.0
      %1897 = vmatprep.subr.mxu0 0.0
      %1898 = vmatpush1.xpose.msra.mxu0 0.0
      %1899 = vmatprep.subr.mxu0 0.0
      %1900 = vmatpush1.xpose.msra.mxu0 0.0
      %1901 = vmatprep.subr.mxu0 0.0
      %1902 = vmatpush1.xpose.msra.mxu0 0.0
      %1903 = vmatprep.mubr.f32.mxu0 0.0
      %1904 = vmatmul.mubr.f32.gmra.mrb[0].mxu0 %v1834
      %v1905 = vpop.f32.mrb[0].mxu0
      %v1906 = vadd.f32 0.0, %v1905
      %v1907 = vpop.f32.mrb[0].mxu0
      %1908 = vdwg.mxu0
      %1909 = vxpose.xlu0.b32.start [1/16] %v563, 128
      %1910 = vxpose.xlu0.b32.cont [2/16] 0.0, 128
      %1911 = vxpose.xlu0.b32.cont [3/16] 0.0, 128
      %1912 = vxpose.xlu0.b32.cont [4/16] 0.0, 128
      %1913 = vxpose.xlu0.b32.cont [5/16] 0.0, 128
      %1914 = vxpose.xlu0.b32.cont [6/16] 0.0, 128
      %1915 = vxpose.xlu0.b32.cont [7/16] 0.0, 128
      %1916 = vxpose.xlu0.b32.cont [8/16] 0.0, 128
      %1917 = vxpose.xlu0.b32.cont [9/16] 0.0, 128
      %1918 = vxpose.xlu0.b32.cont [10/16] 0.0, 128
      %1919 = vxpose.xlu0.b32.cont [11/16] 0.0, 128
      %1920 = vxpose.xlu0.b32.cont [12/16] 0.0, 128
      %1921 = vxpose.xlu0.b32.cont [13/16] 0.0, 128
      %1922 = vxpose.xlu0.b32.cont [14/16] 0.0, 128
      %1923 = vxpose.xlu0.b32.cont [15/16] 0.0, 128
      %1924 = vxpose.xlu0.b32.end [16/16] 0.0, 128
      %v1925 = vpop.trf.xlu0
      %v1926 = vpop.trf.xlu0
      %v1927 = vpop.trf.xlu0
      %v1928 = vpop.trf.xlu0
      %v1929 = vpop.trf.xlu0
      %v1930 = vpop.trf.xlu0
      %v1931 = vpop.trf.xlu0
      %v1932 = vpop.trf.xlu0
      %v1933 = vpop.trf.xlu0
      %v1934 = vpop.trf.xlu0
      %v1935 = vpop.trf.xlu0
      %v1936 = vpop.trf.xlu0
      %v1937 = vpop.trf.xlu0
      %v1938 = vpop.trf.xlu0
      %v1939 = vpop.trf.xlu0
      %v1940 = vpop.trf.xlu0
      %v1942 = vsel %vm596, %v1925, 0
      %1944 = vmatprep.subr.mxu0 0.0
      %1945 = vmatpush1.msra.mxu0 %v523
      %1946 = vmatprep.subr.mxu0 0.0
      %1947 = vmatpush1.msra.mxu0 0.0
      %1948 = vmatprep.subr.mxu0 0.0
      %1949 = vmatpush1.msra.mxu0 0.0
      %1950 = vmatprep.subr.mxu0 0.0
      %1951 = vmatpush1.msra.mxu0 0.0
      %1952 = vmatprep.subr.mxu0 0.0
      %1953 = vmatpush1.msra.mxu0 0.0
      %1954 = vmatprep.subr.mxu0 0.0
      %1955 = vmatpush1.msra.mxu0 0.0
      %1956 = vmatprep.subr.mxu0 0.0
      %1957 = vmatpush1.msra.mxu0 0.0
      %1958 = vmatprep.subr.mxu0 0.0
      %1959 = vmatpush1.msra.mxu0 0.0
      %1960 = vmatprep.subr.mxu0 0.0
      %1961 = vmatpush1.msra.mxu0 0.0
      %1962 = vmatprep.subr.mxu0 0.0
      %1963 = vmatpush1.msra.mxu0 0.0
      %1964 = vmatprep.subr.mxu0 0.0
      %1965 = vmatpush1.msra.mxu0 0.0
      %1966 = vmatprep.subr.mxu0 0.0
      %1967 = vmatpush1.msra.mxu0 0.0
      %1968 = vmatprep.subr.mxu0 0.0
      %1969 = vmatpush1.msra.mxu0 0.0
      %1970 = vmatprep.subr.mxu0 0.0
      %1971 = vmatpush1.msra.mxu0 0.0
      %1972 = vmatprep.subr.mxu0 0.0
      %1973 = vmatpush1.msra.mxu0 0.0
      %1974 = vmatprep.subr.mxu0 0.0
      %1975 = vmatpush1.msra.mxu0 0.0
      %1976 = vmatprep.subr.mxu0 0.0
      %1977 = vmatpush1.msra.mxu0 0.0
      %1978 = vmatprep.subr.mxu0 0.0
      %1979 = vmatpush1.msra.mxu0 0.0
      %1980 = vmatprep.subr.mxu0 0.0
      %1981 = vmatpush1.msra.mxu0 0.0
      %1982 = vmatprep.subr.mxu0 0.0
      %1983 = vmatpush1.msra.mxu0 0.0
      %1984 = vmatprep.subr.mxu0 0.0
      %1985 = vmatpush1.msra.mxu0 0.0
      %1986 = vmatprep.subr.mxu0 0.0
      %1987 = vmatpush1.msra.mxu0 0.0
      %1988 = vmatprep.subr.mxu0 0.0
      %1989 = vmatpush1.msra.mxu0 0.0
      %1990 = vmatprep.subr.mxu0 0.0
      %1991 = vmatpush1.msra.mxu0 0.0
      %1992 = vmatprep.subr.mxu0 0.0
      %1993 = vmatpush1.msra.mxu0 0.0
      %1994 = vmatprep.subr.mxu0 0.0
      %1995 = vmatpush1.msra.mxu0 0.0
      %1996 = vmatprep.subr.mxu0 0.0
      %1997 = vmatpush1.msra.mxu0 0.0
      %1998 = vmatprep.subr.mxu0 0.0
      %1999 = vmatpush1.msra.mxu0 0.0
      %2000 = vmatprep.subr.mxu0 0.0
      %2001 = vmatpush1.msra.mxu0 0.0
      %2002 = vmatprep.subr.mxu0 0.0
      %2003 = vmatpush1.msra.mxu0 0.0
      %2004 = vmatprep.subr.mxu0 0.0
      %2005 = vmatpush1.msra.mxu0 0.0
      %2006 = vmatprep.subr.mxu0 0.0
      %2007 = vmatpush1.msra.mxu0 0.0
      %2008 = vmatprep.mubr.f32.mxu0 0.0
      %2009 = vmatmul.mubr.f32.gmra.mrb[0].mxu0 %v1942
      %v2010 = vpop.f32.mrb[0].mxu0
      %v2011 = vadd.f32 0.0, %v2010
      %v2012 = vpop.f32.mrb[0].mxu0
      %2013 = vdwg.mxu0
      %v2014 = vsel %vm596, %v2011, -inf
      %2015 = vmax.xlane.f32.xlu0 %v2014
      %v2016 = vpop.xlane.xlu0 %2015
      %v2017 = vsub.f32 %v2011, %v2016
      %v2018 = vmul.f32 %v2017, 1.442695
      %v2019 = vpow.pop %v2018
      %v2020 = vsel %vm596, %v2019, 0.0
      %2021 = vadd.xlane.f32.xlu0 %v2020
      %v2022 = vpop.xlane.xlu0 %2021
      %v2023 = vrcp.pop %v2022
      %v2024 = vmul.f32 %v2019, %v2023
      %v2026 = vsel %vm596, %v547, 0
      %v2029 = vsel %vm596, %v2024, 0
      %2031 = vmatprep.subr.mxu0 0.0
      %2032 = vmatpush1.xpose.msra.mxu0 %v2029
      %2033 = vmatprep.subr.mxu0 0.0
      %2034 = vmatpush1.xpose.msra.mxu0 0.0
      %2035 = vmatprep.subr.mxu0 0.0
      %2036 = vmatpush1.xpose.msra.mxu0 0.0
      %2037 = vmatprep.subr.mxu0 0.0
      %2038 = vmatpush1.xpose.msra.mxu0 0.0
      %2039 = vmatprep.subr.mxu0 0.0
      %2040 = vmatpush1.xpose.msra.mxu0 0.0
      %2041 = vmatprep.subr.mxu0 0.0
      %2042 = vmatpush1.xpose.msra.mxu0 0.0
      %2043 = vmatprep.subr.mxu0 0.0
      %2044 = vmatpush1.xpose.msra.mxu0 0.0
      %2045 = vmatprep.subr.mxu0 0.0
      %2046 = vmatpush1.xpose.msra.mxu0 0.0
      %2047 = vmatprep.subr.mxu0 0.0
      %2048 = vmatpush1.xpose.msra.mxu0 0.0
      %2049 = vmatprep.subr.mxu0 0.0
      %2050 = vmatpush1.xpose.msra.mxu0 0.0
      %2051 = vmatprep.subr.mxu0 0.0
      %2052 = vmatpush1.xpose.msra.mxu0 0.0
      %2053 = vmatprep.subr.mxu0 0.0
      %2054 = vmatpush1.xpose.msra.mxu0 0.0
      %2055 = vmatprep.subr.mxu0 0.0
      %2056 = vmatpush1.xpose.msra.mxu0 0.0
      %2057 = vmatprep.subr.mxu0 0.0
      %2058 = vmatpush1.xpose.msra.mxu0 0.0
      %2059 = vmatprep.subr.mxu0 0.0
      %2060 = vmatpush1.xpose.msra.mxu0 0.0
      %2061 = vmatprep.subr.mxu0 0.0
      %2062 = vmatpush1.xpose.msra.mxu0 0.0
      %2063 = vmatprep.subr.mxu0 0.0
      %2064 = vmatpush1.xpose.msra.mxu0 0.0
      %2065 = vmatprep.subr.mxu0 0.0
      %2066 = vmatpush1.xpose.msra.mxu0 0.0
      %2067 = vmatprep.subr.mxu0 0.0
      %2068 = vmatpush1.xpose.msra.mxu0 0.0
      %2069 = vmatprep.subr.mxu0 0.0
      %2070 = vmatpush1.xpose.msra.mxu0 0.0
      %2071 = vmatprep.subr.mxu0 0.0
      %2072 = vmatpush1.xpose.msra.mxu0 0.0
      %2073 = vmatprep.subr.mxu0 0.0
      %2074 = vmatpush1.xpose.msra.mxu0 0.0
      %2075 = vmatprep.subr.mxu0 0.0
      %2076 = vmatpush1.xpose.msra.mxu0 0.0
      %2077 = vmatprep.subr.mxu0 0.0
      %2078 = vmatpush1.xpose.msra.mxu0 0.0
      %2079 = vmatprep.subr.mxu0 0.0
      %2080 = vmatpush1.xpose.msra.mxu0 0.0
      %2081 = vmatprep.subr.mxu0 0.0
      %2082 = vmatpush1.xpose.msra.mxu0 0.0
      %2083 = vmatprep.subr.mxu0 0.0
      %2084 = vmatpush1.xpose.msra.mxu0 0.0
      %2085 = vmatprep.subr.mxu0 0.0
      %2086 = vmatpush1.xpose.msra.mxu0 0.0
      %2087 = vmatprep.subr.mxu0 0.0
      %2088 = vmatpush1.xpose.msra.mxu0 0.0
      %2089 = vmatprep.subr.mxu0 0.0
      %2090 = vmatpush1.xpose.msra.mxu0 0.0
      %2091 = vmatprep.subr.mxu0 0.0
      %2092 = vmatpush1.xpose.msra.mxu0 0.0
      %2093 = vmatprep.subr.mxu0 0.0
      %2094 = vmatpush1.xpose.msra.mxu0 0.0
      %2095 = vmatprep.mubr.f32.mxu0 0.0
      %2096 = vmatmul.mubr.f32.gmra.mrb[0].mxu0 %v2026
      %v2097 = vpop.f32.mrb[0].mxu0
      %v2098 = vadd.f32 0.0, %v2097
      %v2099 = vpop.f32.mrb[0].mxu0
      %2100 = vdwg.mxu0
      %2101 = vxpose.xlu0.b32.start [1/16] %v754, 128
      %2102 = vxpose.xlu0.b32.cont [2/16] %v946, 128
      %2103 = vxpose.xlu0.b32.cont [3/16] %v1138, 128
      %2104 = vxpose.xlu0.b32.cont [4/16] %v1330, 128
      %2105 = vxpose.xlu0.b32.cont [5/16] %v1522, 128
      %2106 = vxpose.xlu0.b32.cont [6/16] %v1714, 128
      %2107 = vxpose.xlu0.b32.cont [7/16] %v1906, 128
      %2108 = vxpose.xlu0.b32.cont [8/16] %v2098, 128
      %2109 = vxpose.xlu0.b32.cont [9/16] 0.0, 128
      %2110 = vxpose.xlu0.b32.cont [10/16] 0.0, 128
      %2111 = vxpose.xlu0.b32.cont [11/16] 0.0, 128
      %2112 = vxpose.xlu0.b32.cont [12/16] 0.0, 128
      %2113 = vxpose.xlu0.b32.cont [13/16] 0.0, 128
      %2114 = vxpose.xlu0.b32.cont [14/16] 0.0, 128
      %2115 = vxpose.xlu0.b32.cont [15/16] 0.0, 128
      %2116 = vxpose.xlu0.b32.end [16/16] 0.0, 128
      %v2117 = vpop.trf.xlu0
      %v2118 = vpop.trf.xlu0
      %v2119 = vpop.trf.xlu0
      %v2120 = vpop.trf.xlu0
      %v2121 = vpop.trf.xlu0
      %v2122 = vpop.trf.xlu0
      %v2123 = vpop.trf.xlu0
      %v2124 = vpop.trf.xlu0
      %v2125 = vpop.trf.xlu0
      %v2126 = vpop.trf.xlu0
      %v2127 = vpop.trf.xlu0
      %v2128 = vpop.trf.xlu0
      %v2129 = vpop.trf.xlu0
      %v2130 = vpop.trf.xlu0
      %v2131 = vpop.trf.xlu0
      %v2132 = vpop.trf.xlu0
      %v2133 = vpack.c.bf16 %v2117, %v2117
      %v2134 = vld [vmem:[%s3] sm:$0xf]
      %v2135 = vld [vmem:[%s3 + $0x4] sm:$0xf]
      %v2136 = vld [vmem:[%s3 + $0x8] sm:$0xf]
      %v2137 = vld [vmem:[%s3 + $0xc] sm:$0xf]
      %v2138 = vld [vmem:[%s3 + $0x10] sm:$0xf]
      %v2139 = vld [vmem:[%s3 + $0x14] sm:$0xf]
      %v2140 = vld [vmem:[%s3 + $0x18] sm:$0xf]
      %v2141 = vld [vmem:[%s3 + $0x1c] sm:$0xf]
      %v2142 = vld [vmem:[%s4] sm:$0x1]
      %v2144 = vlaneseq
      %v2145 = vshrl.u32 %v2144, 7
      %v2146 = vsub.s32 0, %v2145
      %v2147 = vrot.slane %v2142, %v2146
      %v2157 = vunpack.c.l.b16 %v2134
      %v2158 = vunpack.c.l.b16 %v2135
      %v2159 = vunpack.c.l.b16 %v2136
      %v2160 = vunpack.c.l.b16 %v2137
      %v2161 = vunpack.c.l.b16 %v2138
      %v2162 = vunpack.c.l.b16 %v2139
      %v2163 = vunpack.c.l.b16 %v2140
      %v2164 = vunpack.c.l.b16 %v2141
      %v2165 = vpack.c.b16 %v2158, %v2157
      %v2166 = vpack.c.b16 %v2160, %v2159
      %v2167 = vpack.c.b16 %v2162, %v2161
      %v2168 = vpack.c.b16 %v2164, %v2163
      %v2174 = vsel %vm447, %v2133, 0
      %2176 = vmatprep.subr.bf16.mxu0 0
      %2177 = vmatpush1.bf16.msra.mxu0 %v2165
      %2178 = vmatprep.subr.bf16.mxu0 0
      %2179 = vmatpush1.bf16.msra.mxu0 %v2166
      %2180 = vmatprep.subr.bf16.mxu0 0
      %2181 = vmatpush1.bf16.msra.mxu0 %v2167
      %2182 = vmatprep.subr.bf16.mxu0 0
      %2183 = vmatpush1.bf16.msra.mxu0 %v2168
      %2184 = vmatprep.subr.bf16.mxu0 0
      %2185 = vmatpush1.bf16.msra.mxu0 0
      %2186 = vmatprep.subr.bf16.mxu0 0
      %2187 = vmatpush1.bf16.msra.mxu0 0
      %2188 = vmatprep.subr.bf16.mxu0 0
      %2189 = vmatpush1.bf16.msra.mxu0 0
      %2190 = vmatprep.subr.bf16.mxu0 0
      %2191 = vmatpush1.bf16.msra.mxu0 0
      %2192 = vmatprep.subr.bf16.mxu0 0
      %2193 = vmatpush1.bf16.msra.mxu0 0
      %2194 = vmatprep.subr.bf16.mxu0 0
      %2195 = vmatpush1.bf16.msra.mxu0 0
      %2196 = vmatprep.subr.bf16.mxu0 0
      %2197 = vmatpush1.bf16.msra.mxu0 0
      %2198 = vmatprep.subr.bf16.mxu0 0
      %2199 = vmatpush1.bf16.msra.mxu0 0
      %2200 = vmatprep.subr.bf16.mxu0 0
      %2201 = vmatpush1.bf16.msra.mxu0 0
      %2202 = vmatprep.subr.bf16.mxu0 0
      %2203 = vmatpush1.bf16.msra.mxu0 0
      %2204 = vmatprep.subr.bf16.mxu0 0
      %2205 = vmatpush1.bf16.msra.mxu0 0
      %2206 = vmatprep.subr.bf16.mxu0 0
      %2207 = vmatpush1.bf16.msra.mxu0 0
      %2208 = vmatprep.mubr.bf16.mxu0 0
      %2209 = vmatmul.mubr.bf16.gmra.mrb[0].mxu0 %v2174
      %v2210 = vpop.f32.mrb[0].mxu0
      %v2211 = vadd.f32 %v2147, %v2210
      %v2212 = vpop.f32.mrb[0].mxu0
      %v2213 = vpop.f32.mrb[0].mxu0
      %v2214 = vpop.f32.mrb[0].mxu0
      %2215 = vdwg.mxu0
      %v2216 = vadd.f32 %v383, %v2211
      %v2217 = vsel %vm447, %v2216, 0.0
      %2218 = vadd.xlane.f32.xlu0 %v2217
      %v2219 = vpop.xlane.xlu0 %2218
      %v2220 = vrcp.pop 64.0
      %v2221 = vmul.f32 %v2219, %v2220
      %v2222 = vsub.f32 %v2216, %v2221
      %v2223 = vmul.f32 %v2222, %v2222
      %v2224 = vsel %vm447, %v2223, 0.0
      %2225 = vadd.xlane.f32.xlu0 %v2224
      %v2226 = vpop.xlane.xlu0 %2225
      %v2227 = vmul.f32 %v2226, %v2220
      %v2228 = vadd.f32 %v2227, 1e-05
      %v2229 = vrsqrt.pop %v2228
      %v2230 = vmul.f32 %v2222, %v2229
      %v2232 = vlaneseq
      %v2233 = vshrl.u32 %v2232, 7
      %v2234 = vsub.s32 0, %v2233
      %v2235 = vrot.slane %v384, %v2234
      %v2237 = vmul.f32 %v2230, %v2235
      %v2239 = vlaneseq
      %v2240 = vshrl.u32 %v2239, 7
      %v2241 = vsub.s32 0, %v2240
      %v2242 = vrot.slane %v385, %v2241
      %v2244 = vadd.f32 %v2237, %v2242
      %v2245 = vpack.c.bf16 %v2244, %v2244
      %v2246 = vld [vmem:[%s5] sm:$0xf]
      %v2247 = vld [vmem:[%s5 + $0x4] sm:$0xf]
      %v2248 = vld [vmem:[%s5 + $0x8] sm:$0xf]
      %v2249 = vld [vmem:[%s5 + $0xc] sm:$0xf]
      %v2250 = vld [vmem:[%s5 + $0x10] sm:$0xf]
      %v2251 = vld [vmem:[%s5 + $0x14] sm:$0xf]
      %v2252 = vld [vmem:[%s5 + $0x18] sm:$0xf]
      %v2253 = vld [vmem:[%s5 + $0x1c] sm:$0xf]
      %v2254 = vld [vmem:[%s6] sm:$0x1]
      %v2256 = vlaneseq
      %v2257 = vshrl.u32 %v2256, 7
      %v2258 = vsub.s32 0, %v2257
      %v2259 = vrot.slane %v2254, %v2258
      %v2269 = vunpack.c.l.b16 %v2246
      %v2270 = vunpack.c.l.b16 %v2247
      %v2271 = vunpack.c.l.b16 %v2248
      %v2272 = vunpack.c.l.b16 %v2249
      %v2273 = vunpack.c.l.b16 %v2250
      %v2274 = vunpack.c.l.b16 %v2251
      %v2275 = vunpack.c.l.b16 %v2252
      %v2276 = vunpack.c.l.b16 %v2253
      %v2277 = vpack.c.b16 %v2270, %v2269
      %v2278 = vpack.c.b16 %v2272, %v2271
      %v2279 = vpack.c.b16 %v2274, %v2273
      %v2280 = vpack.c.b16 %v2276, %v2275
      %v2286 = vsel %vm447, %v2245, 0
      %2288 = vmatprep.subr.bf16.mxu0 0
      %2289 = vmatpush1.bf16.msra.mxu0 %v2277
      %2290 = vmatprep.subr.bf16.mxu0 0
      %2291 = vmatpush1.bf16.msra.mxu0 %v2278
      %2292 = vmatprep.subr.bf16.mxu0 0
      %2293 = vmatpush1.bf16.msra.mxu0 %v2279
      %2294 = vmatprep.subr.bf16.mxu0 0
      %2295 = vmatpush1.bf16.msra.mxu0 %v2280
      %2296 = vmatprep.subr.bf16.mxu0 0
      %2297 = vmatpush1.bf16.msra.mxu0 0
      %2298 = vmatprep.subr.bf16.mxu0 0
      %2299 = vmatpush1.bf16.msra.mxu0 0
      %2300 = vmatprep.subr.bf16.mxu0 0
      %2301 = vmatpush1.bf16.msra.mxu0 0
      %2302 = vmatprep.subr.bf16.mxu0 0
      %2303 = vmatpush1.bf16.msra.mxu0 0
      %2304 = vmatprep.subr.bf16.mxu0 0
      %2305 = vmatpush1.bf16.msra.mxu0 0
      %2306 = vmatprep.subr.bf16.mxu0 0
      %2307 = vmatpush1.bf16.msra.mxu0 0
      %2308 = vmatprep.subr.bf16.mxu0 0
      %2309 = vmatpush1.bf16.msra.mxu0 0
      %2310 = vmatprep.subr.bf16.mxu0 0
      %2311 = vmatpush1.bf16.msra.mxu0 0
      %2312 = vmatprep.subr.bf16.mxu0 0
      %2313 = vmatpush1.bf16.msra.mxu0 0
      %2314 = vmatprep.subr.bf16.mxu0 0
      %2315 = vmatpush1.bf16.msra.mxu0 0
      %2316 = vmatprep.subr.bf16.mxu0 0
      %2317 = vmatpush1.bf16.msra.mxu0 0
      %2318 = vmatprep.subr.bf16.mxu0 0
      %2319 = vmatpush1.bf16.msra.mxu0 0
      %2320 = vmatprep.mubr.bf16.mxu0 0
      %2321 = vmatmul.mubr.bf16.gmra.mrb[0].mxu0 %v2286
      %v2322 = vpop.f32.mrb[0].mxu0
      %v2323 = vadd.f32 %v2259, %v2322
      %v2324 = vpop.f32.mrb[0].mxu0
      %v2325 = vpop.f32.mrb[0].mxu0
      %v2326 = vpop.f32.mrb[0].mxu0
      %2327 = vdwg.mxu0
      %v2328 = vmax.f32 %v2323, 0.0
      %v2329 = vpack.c.bf16 %v2328, %v2328
      %v2330 = vld [vmem:[%s7] sm:$0xf]
      %v2331 = vld [vmem:[%s7 + $0x4] sm:$0xf]
      %v2332 = vld [vmem:[%s7 + $0x8] sm:$0xf]
      %v2333 = vld [vmem:[%s7 + $0xc] sm:$0xf]
      %v2334 = vld [vmem:[%s7 + $0x10] sm:$0xf]
      %v2335 = vld [vmem:[%s7 + $0x14] sm:$0xf]
      %v2336 = vld [vmem:[%s7 + $0x18] sm:$0xf]
      %v2337 = vld [vmem:[%s7 + $0x1c] sm:$0xf]
      %v2338 = vld [vmem:[%s7 + $0x20] sm:$0xf]
      %v2339 = vld [vmem:[%s7 + $0x24] sm:$0xf]
      %v2340 = vld [vmem:[%s7 + $0x28] sm:$0xf]
      %v2341 = vld [vmem:[%s7 + $0x2c] sm:$0xf]
      %v2342 = vld [vmem:[%s7 + $0x30] sm:$0xf]
      %v2343 = vld [vmem:[%s7 + $0x34] sm:$0xf]
      %v2344 = vld [vmem:[%s7 + $0x38] sm:$0xf]
      %v2345 = vld [vmem:[%s7 + $0x3c] sm:$0xf]
      %v2346 = vld [vmem:[%s8] sm:$0x1]
      %v2348 = vlaneseq
      %v2349 = vshrl.u32 %v2348, 7
      %v2350 = vsub.s32 0, %v2349
      %v2351 = vrot.slane %v2346, %v2350
      %v2369 = vunpack.c.l.b16 %v2330
      %v2370 = vunpack.c.l.b16 %v2331
      %v2371 = vunpack.c.l.b16 %v2332
      %v2372 = vunpack.c.l.b16 %v2333
      %v2373 = vunpack.c.l.b16 %v2334
      %v2374 = vunpack.c.l.b16 %v2335
      %v2375 = vunpack.c.l.b16 %v2336
      %v2376 = vunpack.c.l.b16 %v2337
      %v2377 = vunpack.c.l.b16 %v2338
      %v2378 = vunpack.c.l.b16 %v2339
      %v2379 = vunpack.c.l.b16 %v2340
      %v2380 = vunpack.c.l.b16 %v2341
      %v2381 = vunpack.c.l.b16 %v2342
      %v2382 = vunpack.c.l.b16 %v2343
      %v2383 = vunpack.c.l.b16 %v2344
      %v2384 = vunpack.c.l.b16 %v2345
      %v2385 = vpack.c.b16 %v2370, %v2369
      %v2386 = vpack.c.b16 %v2372, %v2371
      %v2387 = vpack.c.b16 %v2374, %v2373
      %v2388 = vpack.c.b16 %v2376, %v2375
      %v2389 = vpack.c.b16 %v2378, %v2377
      %v2390 = vpack.c.b16 %v2380, %v2379
      %v2391 = vpack.c.b16 %v2382, %v2381
      %v2392 = vpack.c.b16 %v2384, %v2383
      %2401 = vmatprep.subr.bf16.mxu0 0
      %2402 = vmatpush1.bf16.msra.mxu0 %v2385
      %2403 = vmatprep.subr.bf16.mxu0 0
      %2404 = vmatpush1.bf16.msra.mxu0 %v2386
      %2405 = vmatprep.subr.bf16.mxu0 0
      %2406 = vmatpush1.bf16.msra.mxu0 %v2387
      %2407 = vmatprep.subr.bf16.mxu0 0
      %2408 = vmatpush1.bf16.msra.mxu0 %v2388
      %2409 = vmatprep.subr.bf16.mxu0 0
      %2410 = vmatpush1.bf16.msra.mxu0 %v2389
      %2411 = vmatprep.subr.bf16.mxu0 0
      %2412 = vmatpush1.bf16.msra.mxu0 %v2390
      %2413 = vmatprep.subr.bf16.mxu0 0
      %2414 = vmatpush1.bf16.msra.mxu0 %v2391
      %2415 = vmatprep.subr.bf16.mxu0 0
      %2416 = vmatpush1.bf16.msra.mxu0 %v2392
      %2417 = vmatprep.subr.bf16.mxu0 0
      %2418 = vmatpush1.bf16.msra.mxu0 0
      %2419 = vmatprep.subr.bf16.mxu0 0
      %2420 = vmatpush1.bf16.msra.mxu0 0
      %2421 = vmatprep.subr.bf16.mxu0 0
      %2422 = vmatpush1.bf16.msra.mxu0 0
      %2423 = vmatprep.subr.bf16.mxu0 0
      %2424 = vmatpush1.bf16.msra.mxu0 0
      %2425 = vmatprep.subr.bf16.mxu0 0
      %2426 = vmatpush1.bf16.msra.mxu0 0
      %2427 = vmatprep.subr.bf16.mxu0 0
      %2428 = vmatpush1.bf16.msra.mxu0 0
      %2429 = vmatprep.subr.bf16.mxu0 0
      %2430 = vmatpush1.bf16.msra.mxu0 0
      %2431 = vmatprep.subr.bf16.mxu0 0
      %2432 = vmatpush1.bf16.msra.mxu0 0
      %2433 = vmatprep.mubr.bf16.mxu0 0
      %2434 = vmatmul.mubr.bf16.gmra.mrb[0].mxu0 %v2329
      %v2435 = vpop.f32.mrb[0].mxu0
      %v2436 = vadd.f32 %v2351, %v2435
      %v2437 = vpop.f32.mrb[0].mxu0
      %v2438 = vpop.f32.mrb[0].mxu0
      %v2439 = vpop.f32.mrb[0].mxu0
      %2440 = vdwg.mxu0
      %v2441 = vmax.f32 %v2436, 0.0
      %v2442 = vadd.f32 %v2244, %v2441
      %v2443 = vsel %vm447, %v2442, 0.0
      %2444 = vadd.xlane.f32.xlu0 %v2443
      %v2445 = vpop.xlane.xlu0 %2444
      %v2446 = vmul.f32 %v2445, %v2220
      %v2447 = vsub.f32 %v2442, %v2446
      %v2448 = vmul.f32 %v2447, %v2447
      %v2449 = vsel %vm447, %v2448, 0.0
      %2450 = vadd.xlane.f32.xlu0 %v2449
      %v2451 = vpop.xlane.xlu0 %2450
      %v2452 = vmul.f32 %v2451, %v2220
      %v2453 = vadd.f32 %v2452, 1e-05
      %v2454 = vrsqrt.pop %v2453
      %v2455 = vmul.f32 %v2447, %v2454
      %v2456 = vmul.f32 %v2455, %v2235
      %v2457 = vadd.f32 %v2456, %v2242
      %2458 = vst.msk [vmem:[%s381] sm:$0xff] %vm447, %v2457
      %p2459 = scmp.lt.s32.totalorder %s22, 1
      %s2460 = scalar_select %p2459, %s22, 1
      %s2461 = smul.addr %s2460, 8
      %s2462 = scalar_lea.vmem %s11, %s2461
      // Predicated region
      $region65: #{transformer_forward.5} parent=63 // pred_check
        %p2463 = pneg %p276
      $region66: #{transformer_forward.5} parent=63 // pred_check_branch
        %2465 = sbr.rel (%p2463) target = $region68
      $region67: #{transformer_forward.5} parent=63 // pred_region
        _
      $region68: #{transformer_forward.5} parent=63 // pred_fallthru
        _
    $region64: #{transformer_forward.5} parent=5 // pred_fallthru
      _
    %p2466 = scmp.le.s32.totalorder 2, %s17
    // Predicated region
    $region69: #{transformer_forward.5} parent=5 // pred_check
      %p2467 = pneg %p2466
    $region70: #{transformer_forward.5} parent=5 // pred_check_branch
      %2469 = sbr.rel (%p2467) target = $region72
    $region71: #{transformer_forward.5} parent=5 // pred_region
      %s2470 = ssub.s32 %s17, 2
      // Predicated region
      $region73: #{transformer_forward.5} parent=71 // pred_check
        %p2471 = pneg %p282
      $region74: #{transformer_forward.5} parent=71 // pred_check_branch
        %2473 = sbr.rel (%p2471) target = $region76
      $region75: #{transformer_forward.5} parent=71 // pred_region
        %p2474 = scmp.lt.s32.totalorder %s23, 1
        %s2475 = scalar_select %p2474, %s23, 1
        %s2476 = smul.addr %s2475, 8
        %s2477 = scalar_lea.vmem %s11, %s2476
      $region76: #{transformer_forward.5} parent=71 // pred_fallthru
        _
    $region72: #{transformer_forward.5} parent=5 // pred_fallthru
      _
  $region6: #{transformer_forward.5} parent=0 // loop_footer
    %s21 = sadd.s32 1, %s17
  $region7: #{transformer_forward.5} parent=0 // loop_footer_branch
    %16 = sbr.rel target = $region3
  $region8: #{transformer_forward.5} parent=0 // loop_exit
    _

// kernel: transformer_forward.7
$region0: #{transformer_forward.7}
  #allocation0 [shape = 'u32[]', space=smem, size = 0x4, offset = 0x4, fixed_abs, tag = 'smem constant byte address 0x4 - core index']
  #allocation1 [shape = 'u32[144,128]{1,0:T(1,128)}', space=vmem, size = 0x12000, scoped, tag = 'internal scratch']
  %s0 = inlined_call_operand.vmem [shape: f32[2,8,64], index: 0, kind: input, shape index: {}]
  %s1 = inlined_call_operand.vmem [shape: f32[2,8,64], index: 1, kind: input, shape index: {}]
  %s2 = inlined_call_operand.vmem [shape: bf16[64,64], index: 2, kind: input, shape index: {}]
  %s3 = inlined_call_operand.vmem [shape: f32[1,64], index: 3, kind: input, shape index: {}]
  %s4 = inlined_call_operand.vmem [shape: bf16[64,128], index: 4, kind: input, shape index: {}]
  %s5 = inlined_call_operand.vmem [shape: f32[1,128], index: 5, kind: input, shape index: {}]
  %s6 = inlined_call_operand.vmem [shape: bf16[64,64], index: 6, kind: input, shape index: {}]
  %s7 = inlined_call_operand.vmem [shape: f32[1,64], index: 7, kind: input, shape index: {}]
  %s8 = inlined_call_operand.vmem [shape: bf16[64,192], index: 8, kind: input, shape index: {}]
  %s9 = inlined_call_operand.vmem [shape: f32[1,192], index: 9, kind: input, shape index: {}]
  %s10 = inlined_call_operand.vmem [shape: bf16[64,64], index: 10, kind: input, shape index: {}]
  %s11 = inlined_call_operand.vmem [shape: f32[1,64], index: 11, kind: input, shape index: {}]
  %s12 = inlined_call_operand.vmem [shape: bf16[64,128], index: 12, kind: input, shape index: {}]
  %s13 = inlined_call_operand.vmem [shape: f32[1,128], index: 13, kind: input, shape index: {}]
  %s14 = inlined_call_operand.vmem [shape: bf16[128,64], index: 14, kind: input, shape index: {}]
  %s15 = inlined_call_operand.vmem [shape: f32[1,64], index: 15, kind: input, shape index: {}]
  %s16 = inlined_call_operand.vmem [shape: f32[1,64], index: 16, kind: input, shape index: {}]
  %s17 = inlined_call_operand.vmem [shape: f32[1,64], index: 17, kind: input, shape index: {}]
  %s18 = inlined_call_operand.vmem [shape: f32[2,8,64], index: 18, kind: output, shape index: {}]
  %s19 = sld [smem:[#allocation0]]
  $region105: #{transformer_forward.7} parent=0
    _
  %s21 = ssub.s32 1, %s19
  %s22 = scalar_select 0, %s21, %s19
  loop: start=0, step=1, limit=4
  $region2: #{transformer_forward.7} parent=0 // loop_pre_header
    _
  $region3: #{transformer_forward.7} parent=0 // loop_header
    %s24 = sphi 0, %s28
    %p25 = scmp.ge.s32.totalorder %s24, 4
    %s34 = sphi 0, %s36
    %s37 = sphi 0, %s34
    %s38 = sphi 0, %s37
    %s54 = sphi 0, %s38
    %s60 = sphi 0, %s62
    %s63 = sphi 0, %s60
    %s64 = sphi 0, %s63
    %s80 = sphi 0, %s64
    %s84 = sphi 0, %s84
    %s86 = sphi 0, %s84
    %s87 = sphi 0, %s86
    %s101 = sphi 0, %s87
    %s105 = sphi 0, %s105
    %s107 = sphi 0, %s105
    %s108 = sphi 0, %s107
    %s122 = sphi 0, %s108
    %s126 = sphi 0, %s126
    %s128 = sphi 0, %s126
    %s129 = sphi 0, %s128
    %s143 = sphi 0, %s129
    %s147 = sphi 0, %s147
    %s149 = sphi 0, %s147
    %s150 = sphi 0, %s149
    %s164 = sphi 0, %s150
    %s168 = sphi 0, %s168
    %s170 = sphi 0, %s168
    %s171 = sphi 0, %s170
    %s185 = sphi 0, %s171
    %s189 = sphi 0, %s189
    %s191 = sphi 0, %s189
    %s192 = sphi 0, %s191
    %s206 = sphi 0, %s192
    %s210 = sphi 0, %s210
    %s212 = sphi 0, %s210
    %s213 = sphi 0, %s212
    %s227 = sphi 0, %s213
    %s231 = sphi 0, %s231
    %s233 = sphi 0, %s231
    %s234 = sphi 0, %s233
    %s248 = sphi 0, %s234
    %s252 = sphi 0, %s252
    %s254 = sphi 0, %s252
    %s255 = sphi 0, %s254
    %s269 = sphi 0, %s255
    %s273 = sphi 0, %s273
    %s275 = sphi 0, %s273
    %s276 = sphi 0, %s275
    %s290 = sphi 0, %s276
    %s294 = sphi 0, %s294
    %s296 = sphi 0, %s294
    %s297 = sphi 0, %s296
    %s311 = sphi 0, %s297
    %s315 = sphi 0, %s315
    %s317 = sphi 0, %s315
    %s318 = sphi 0, %s317
    %s332 = sphi 0, %s318
    %s336 = sphi 0, %s336
    %s338 = sphi 0, %s336
    %s339 = sphi 0, %s338
    %s353 = sphi 0, %s339
    %s357 = sphi 0, %s357
    %s359 = sphi 0, %s357
    %s360 = sphi 0, %s359
    %s374 = sphi 0, %s360
    %s378 = sphi 0, %s378
    %s380 = sphi 0, %s378
    %s381 = sphi 0, %s380
    %s395 = sphi 0, %s381
    %s399 = sphi 0, %s399
    %s401 = sphi 0, %s399
    %s402 = sphi 0, %s401
    %s416 = sphi 0, %s402
    %s422 = sphi 0, %s424
    %s425 = sphi 0, %s422
    %s426 = sphi 0, %s425
    %s442 = sphi 0, %s426
  $region4: #{transformer_forward.7} parent=0 // loop_header_branch
    %27 = sbr.rel (%p25) target = $region8
  $region5: #{transformer_forward.7} parent=0 // loop_body
    %s29 = ssub.s32 %s24, 1
    %s30 = ssub.s32 %s24, 2
    %s31 = sadd.s32 %s24, 1
    %s32 = ssub.s32 %s24, %s31
    %p33 = scmp.eq.s32.totalorder %s32, 0
    %s35 = sadd.s32 %s34, 1
    %s36 = scalar_select %p33, %s34, %s35
    %p39 = pneg %p33
    %p40 = scmp.eq.s32.totalorder %s24, 1
    %p41 = por %p39, %p40
    %p42 = scmp.ne.s32.totalorder %s34, %s37
    %p43 = scmp.eq.s32.totalorder %s24, 0
    %p44 = por %p42, %p43
    %p45 = scmp.ne.s32.totalorder %s34, %s37
    %p46 = scmp.eq.s32.totalorder %s29, 1
    %p47 = por %p45, %p46
    %p48 = scmp.ne.s32.totalorder %s37, %s38
    %p49 = scmp.eq.s32.totalorder %s29, 0
    %p50 = por %p48, %p49
    %p51 = scmp.ne.s32.totalorder %s37, %s38
    %p52 = scmp.eq.s32.totalorder %s30, 1
    %p53 = por %p51, %p52
    %p55 = scmp.ne.s32.totalorder %s38, %s54
    %p56 = scmp.eq.s32.totalorder %s30, 0
    %p57 = por %p55, %p56
    %s58 = ssub.s32 %s24, %s31
    %p59 = scmp.eq.s32.totalorder %s58, 0
    %s61 = sadd.s32 %s60, 1
    %s62 = scalar_select %p59, %s60, %s61
    %p65 = pneg %p59
    %p66 = scmp.eq.s32.totalorder %s24, 1
    %p67 = por %p65, %p66
    %p68 = scmp.ne.s32.totalorder %s60, %s63
    %p69 = scmp.eq.s32.totalorder %s24, 0
    %p70 = por %p68, %p69
    %p71 = scmp.ne.s32.totalorder %s60, %s63
    %p72 = scmp.eq.s32.totalorder %s29, 1
    %p73 = por %p71, %p72
    %p74 = scmp.ne.s32.totalorder %s63, %s64
    %p75 = scmp.eq.s32.totalorder %s29, 0
    %p76 = por %p74, %p75
    %p77 = scmp.ne.s32.totalorder %s63, %s64
    %p78 = scmp.eq.s32.totalorder %s30, 1
    %p79 = por %p77, %p78
    %p81 = scmp.ne.s32.totalorder %s64, %s80
    %p82 = scmp.eq.s32.totalorder %s30, 0
    %p83 = por %p81, %p82
    %s85 = sadd.s32 %s84, 1
    %p88 = scmp.eq.s32.totalorder %s24, 1
    %p89 = scmp.ne.s32.totalorder %s84, %s86
    %p90 = scmp.eq.s32.totalorder %s24, 0
    %p91 = por %p89, %p90
    %p92 = scmp.ne.s32.totalorder %s84, %s86
    %p93 = scmp.eq.s32.totalorder %s29, 1
    %p94 = por %p92, %p93
    %p95 = scmp.ne.s32.totalorder %s86, %s87
    %p96 = scmp.eq.s32.totalorder %s29, 0
    %p97 = por %p95, %p96
    %p98 = scmp.ne.s32.totalorder %s86, %s87
    %p99 = scmp.eq.s32.totalorder %s30, 1
    %p100 = por %p98, %p99
    %p102 = scmp.ne.s32.totalorder %s87, %s101
    %p103 = scmp.eq.s32.totalorder %s30, 0
    %p104 = por %p102, %p103
    %s106 = sadd.s32 %s105, 1
    %p109 = scmp.eq.s32.totalorder %s24, 1
    %p110 = scmp.ne.s32.totalorder %s105, %s107
    %p111 = scmp.eq.s32.totalorder %s24, 0
    %p112 = por %p110, %p111
    %p113 = scmp.ne.s32.totalorder %s105, %s107
    %p114 = scmp.eq.s32.totalorder %s29, 1
    %p115 = por %p113, %p114
    %p116 = scmp.ne.s32.totalorder %s107, %s108
    %p117 = scmp.eq.s32.totalorder %s29, 0
    %p118 = por %p116, %p117
    %p119 = scmp.ne.s32.totalorder %s107, %s108
    %p120 = scmp.eq.s32.totalorder %s30, 1
    %p121 = por %p119, %p120
    %p123 = scmp.ne.s32.totalorder %s108, %s122
    %p124 = scmp.eq.s32.totalorder %s30, 0
    %p125 = por %p123, %p124
    %s127 = sadd.s32 %s126, 1
    %p130 = scmp.eq.s32.totalorder %s24, 1
    %p131 = scmp.ne.s32.totalorder %s126, %s128
    %p132 = scmp.eq.s32.totalorder %s24, 0
    %p133 = por %p131, %p132
    %p134 = scmp.ne.s32.totalorder %s126, %s128
    %p135 = scmp.eq.s32.totalorder %s29, 1
    %p136 = por %p134, %p135
    %p137 = scmp.ne.s32.totalorder %s128, %s129
    %p138 = scmp.eq.s32.totalorder %s29, 0
    %p139 = por %p137, %p138
    %p140 = scmp.ne.s32.totalorder %s128, %s129
    %p141 = scmp.eq.s32.totalorder %s30, 1
    %p142 = por %p140, %p141
    %p144 = scmp.ne.s32.totalorder %s129, %s143
    %p145 = scmp.eq.s32.totalorder %s30, 0
    %p146 = por %p144, %p145
    %s148 = sadd.s32 %s147, 1
    %p151 = scmp.eq.s32.totalorder %s24, 1
    %p152 = scmp.ne.s32.totalorder %s147, %s149
    %p153 = scmp.eq.s32.totalorder %s24, 0
    %p154 = por %p152, %p153
    %p155 = scmp.ne.s32.totalorder %s147, %s149
    %p156 = scmp.eq.s32.totalorder %s29, 1
    %p157 = por %p155, %p156
    %p158 = scmp.ne.s32.totalorder %s149, %s150
    %p159 = scmp.eq.s32.totalorder %s29, 0
    %p160 = por %p158, %p159
    %p161 = scmp.ne.s32.totalorder %s149, %s150
    %p162 = scmp.eq.s32.totalorder %s30, 1
    %p163 = por %p161, %p162
    %p165 = scmp.ne.s32.totalorder %s150, %s164
    %p166 = scmp.eq.s32.totalorder %s30, 0
    %p167 = por %p165, %p166
    %s169 = sadd.s32 %s168, 1
    %p172 = scmp.eq.s32.totalorder %s24, 1
    %p173 = scmp.ne.s32.totalorder %s168, %s170
    %p174 = scmp.eq.s32.totalorder %s24, 0
    %p175 = por %p173, %p174
    %p176 = scmp.ne.s32.totalorder %s168, %s170
    %p177 = scmp.eq.s32.totalorder %s29, 1
    %p178 = por %p176, %p177
    %p179 = scmp.ne.s32.totalorder %s170, %s171
    %p180 = scmp.eq.s32.totalorder %s29, 0
    %p181 = por %p179, %p180
    %p182 = scmp.ne.s32.totalorder %s170, %s171
    %p183 = scmp.eq.s32.totalorder %s30, 1
    %p184 = por %p182, %p183
    %p186 = scmp.ne.s32.totalorder %s171, %s185
    %p187 = scmp.eq.s32.totalorder %s30, 0
    %p188 = por %p186, %p187
    %s190 = sadd.s32 %s189, 1
    %p193 = scmp.eq.s32.totalorder %s24, 1
    %p194 = scmp.ne.s32.totalorder %s189, %s191
    %p195 = scmp.eq.s32.totalorder %s24, 0
    %p196 = por %p194, %p195
    %p197 = scmp.ne.s32.totalorder %s189, %s191
    %p198 = scmp.eq.s32.totalorder %s29, 1
    %p199 = por %p197, %p198
    %p200 = scmp.ne.s32.totalorder %s191, %s192
    %p201 = scmp.eq.s32.totalorder %s29, 0
    %p202 = por %p200, %p201
    %p203 = scmp.ne.s32.totalorder %s191, %s192
    %p204 = scmp.eq.s32.totalorder %s30, 1
    %p205 = por %p203, %p204
    %p207 = scmp.ne.s32.totalorder %s192, %s206
    %p208 = scmp.eq.s32.totalorder %s30, 0
    %p209 = por %p207, %p208
    %s211 = sadd.s32 %s210, 1
    %p214 = scmp.eq.s32.totalorder %s24, 1
    %p215 = scmp.ne.s32.totalorder %s210, %s212
    %p216 = scmp.eq.s32.totalorder %s24, 0
    %p217 = por %p215, %p216
    %p218 = scmp.ne.s32.totalorder %s210, %s212
    %p219 = scmp.eq.s32.totalorder %s29, 1
    %p220 = por %p218, %p219
    %p221 = scmp.ne.s32.totalorder %s212, %s213
    %p222 = scmp.eq.s32.totalorder %s29, 0
    %p223 = por %p221, %p222
    %p224 = scmp.ne.s32.totalorder %s212, %s213
    %p225 = scmp.eq.s32.totalorder %s30, 1
    %p226 = por %p224, %p225
    %p228 = scmp.ne.s32.totalorder %s213, %s227
    %p229 = scmp.eq.s32.totalorder %s30, 0
    %p230 = por %p228, %p229
    %s232 = sadd.s32 %s231, 1
    %p235 = scmp.eq.s32.totalorder %s24, 1
    %p236 = scmp.ne.s32.totalorder %s231, %s233
    %p237 = scmp.eq.s32.totalorder %s24, 0
    %p238 = por %p236, %p237
    %p239 = scmp.ne.s32.totalorder %s231, %s233
    %p240 = scmp.eq.s32.totalorder %s29, 1
    %p241 = por %p239, %p240
    %p242 = scmp.ne.s32.totalorder %s233, %s234
    %p243 = scmp.eq.s32.totalorder %s29, 0
    %p244 = por %p242, %p243
    %p245 = scmp.ne.s32.totalorder %s233, %s234
    %p246 = scmp.eq.s32.totalorder %s30, 1
    %p247 = por %p245, %p246
    %p249 = scmp.ne.s32.totalorder %s234, %s248
    %p250 = scmp.eq.s32.totalorder %s30, 0
    %p251 = por %p249, %p250
    %s253 = sadd.s32 %s252, 1
    %p256 = scmp.eq.s32.totalorder %s24, 1
    %p257 = scmp.ne.s32.totalorder %s252, %s254
    %p258 = scmp.eq.s32.totalorder %s24, 0
    %p259 = por %p257, %p258
    %p260 = scmp.ne.s32.totalorder %s252, %s254
    %p261 = scmp.eq.s32.totalorder %s29, 1
    %p262 = por %p260, %p261
    %p263 = scmp.ne.s32.totalorder %s254, %s255
    %p264 = scmp.eq.s32.totalorder %s29, 0
    %p265 = por %p263, %p264
    %p266 = scmp.ne.s32.totalorder %s254, %s255
    %p267 = scmp.eq.s32.totalorder %s30, 1
    %p268 = por %p266, %p267
    %p270 = scmp.ne.s32.totalorder %s255, %s269
    %p271 = scmp.eq.s32.totalorder %s30, 0
    %p272 = por %p270, %p271
    %s274 = sadd.s32 %s273, 1
    %p277 = scmp.eq.s32.totalorder %s24, 1
    %p278 = scmp.ne.s32.totalorder %s273, %s275
    %p279 = scmp.eq.s32.totalorder %s24, 0
    %p280 = por %p278, %p279
    %p281 = scmp.ne.s32.totalorder %s273, %s275
    %p282 = scmp.eq.s32.totalorder %s29, 1
    %p283 = por %p281, %p282
    %p284 = scmp.ne.s32.totalorder %s275, %s276
    %p285 = scmp.eq.s32.totalorder %s29, 0
    %p286 = por %p284, %p285
    %p287 = scmp.ne.s32.totalorder %s275, %s276
    %p288 = scmp.eq.s32.totalorder %s30, 1
    %p289 = por %p287, %p288
    %p291 = scmp.ne.s32.totalorder %s276, %s290
    %p292 = scmp.eq.s32.totalorder %s30, 0
    %p293 = por %p291, %p292
    %s295 = sadd.s32 %s294, 1
    %p298 = scmp.eq.s32.totalorder %s24, 1
    %p299 = scmp.ne.s32.totalorder %s294, %s296
    %p300 = scmp.eq.s32.totalorder %s24, 0
    %p301 = por %p299, %p300
    %p302 = scmp.ne.s32.totalorder %s294, %s296
    %p303 = scmp.eq.s32.totalorder %s29, 1
    %p304 = por %p302, %p303
    %p305 = scmp.ne.s32.totalorder %s296, %s297
    %p306 = scmp.eq.s32.totalorder %s29, 0
    %p307 = por %p305, %p306
    %p308 = scmp.ne.s32.totalorder %s296, %s297
    %p309 = scmp.eq.s32.totalorder %s30, 1
    %p310 = por %p308, %p309
    %p312 = scmp.ne.s32.totalorder %s297, %s311
    %p313 = scmp.eq.s32.totalorder %s30, 0
    %p314 = por %p312, %p313
    %s316 = sadd.s32 %s315, 1
    %p319 = scmp.eq.s32.totalorder %s24, 1
    %p320 = scmp.ne.s32.totalorder %s315, %s317
    %p321 = scmp.eq.s32.totalorder %s24, 0
    %p322 = por %p320, %p321
    %p323 = scmp.ne.s32.totalorder %s315, %s317
    %p324 = scmp.eq.s32.totalorder %s29, 1
    %p325 = por %p323, %p324
    %p326 = scmp.ne.s32.totalorder %s317, %s318
    %p327 = scmp.eq.s32.totalorder %s29, 0
    %p328 = por %p326, %p327
    %p329 = scmp.ne.s32.totalorder %s317, %s318
    %p330 = scmp.eq.s32.totalorder %s30, 1
    %p331 = por %p329, %p330
    %p333 = scmp.ne.s32.totalorder %s318, %s332
    %p334 = scmp.eq.s32.totalorder %s30, 0
    %p335 = por %p333, %p334
    %s337 = sadd.s32 %s336, 1
    %p340 = scmp.eq.s32.totalorder %s24, 1
    %p341 = scmp.ne.s32.totalorder %s336, %s338
    %p342 = scmp.eq.s32.totalorder %s24, 0
    %p343 = por %p341, %p342
    %p344 = scmp.ne.s32.totalorder %s336, %s338
    %p345 = scmp.eq.s32.totalorder %s29, 1
    %p346 = por %p344, %p345
    %p347 = scmp.ne.s32.totalorder %s338, %s339
    %p348 = scmp.eq.s32.totalorder %s29, 0
    %p349 = por %p347, %p348
    %p350 = scmp.ne.s32.totalorder %s338, %s339
    %p351 = scmp.eq.s32.totalorder %s30, 1
    %p352 = por %p350, %p351
    %p354 = scmp.ne.s32.totalorder %s339, %s353
    %p355 = scmp.eq.s32.totalorder %s30, 0
    %p356 = por %p354, %p355
    %s358 = sadd.s32 %s357, 1
    %p361 = scmp.eq.s32.totalorder %s24, 1
    %p362 = scmp.ne.s32.totalorder %s357, %s359
    %p363 = scmp.eq.s32.totalorder %s24, 0
    %p364 = por %p362, %p363
    %p365 = scmp.ne.s32.totalorder %s357, %s359
    %p366 = scmp.eq.s32.totalorder %s29, 1
    %p367 = por %p365, %p366
    %p368 = scmp.ne.s32.totalorder %s359, %s360
    %p369 = scmp.eq.s32.totalorder %s29, 0
    %p370 = por %p368, %p369
    %p371 = scmp.ne.s32.totalorder %s359, %s360
    %p372 = scmp.eq.s32.totalorder %s30, 1
    %p373 = por %p371, %p372
    %p375 = scmp.ne.s32.totalorder %s360, %s374
    %p376 = scmp.eq.s32.totalorder %s30, 0
    %p377 = por %p375, %p376
    %s379 = sadd.s32 %s378, 1
    %p382 = scmp.eq.s32.totalorder %s24, 1
    %p383 = scmp.ne.s32.totalorder %s378, %s380
    %p384 = scmp.eq.s32.totalorder %s24, 0
    %p385 = por %p383, %p384
    %p386 = scmp.ne.s32.totalorder %s378, %s380
    %p387 = scmp.eq.s32.totalorder %s29, 1
    %p388 = por %p386, %p387
    %p389 = scmp.ne.s32.totalorder %s380, %s381
    %p390 = scmp.eq.s32.totalorder %s29, 0
    %p391 = por %p389, %p390
    %p392 = scmp.ne.s32.totalorder %s380, %s381
    %p393 = scmp.eq.s32.totalorder %s30, 1
    %p394 = por %p392, %p393
    %p396 = scmp.ne.s32.totalorder %s381, %s395
    %p397 = scmp.eq.s32.totalorder %s30, 0
    %p398 = por %p396, %p397
    %s400 = sadd.s32 %s399, 1
    %p403 = scmp.eq.s32.totalorder %s24, 1
    %p404 = scmp.ne.s32.totalorder %s399, %s401
    %p405 = scmp.eq.s32.totalorder %s24, 0
    %p406 = por %p404, %p405
    %p407 = scmp.ne.s32.totalorder %s399, %s401
    %p408 = scmp.eq.s32.totalorder %s29, 1
    %p409 = por %p407, %p408
    %p410 = scmp.ne.s32.totalorder %s401, %s402
    %p411 = scmp.eq.s32.totalorder %s29, 0
    %p412 = por %p410, %p411
    %p413 = scmp.ne.s32.totalorder %s401, %s402
    %p414 = scmp.eq.s32.totalorder %s30, 1
    %p415 = por %p413, %p414
    %p417 = scmp.ne.s32.totalorder %s402, %s416
    %p418 = scmp.eq.s32.totalorder %s30, 0
    %p419 = por %p417, %p418
    %s420 = ssub.s32 %s24, %s31
    %p421 = scmp.eq.s32.totalorder %s420, 0
    %s423 = sadd.s32 %s422, 1
    %s424 = scalar_select %p421, %s422, %s423
    %p427 = pneg %p421
    %p428 = scmp.eq.s32.totalorder %s24, 1
    %p429 = por %p427, %p428
    %p430 = scmp.ne.s32.totalorder %s422, %s425
    %p431 = scmp.eq.s32.totalorder %s24, 0
    %p432 = por %p430, %p431
    %p433 = scmp.ne.s32.totalorder %s422, %s425
    %p434 = scmp.eq.s32.totalorder %s29, 1
    %p435 = por %p433, %p434
    %p436 = scmp.ne.s32.totalorder %s425, %s426
    %p437 = scmp.eq.s32.totalorder %s29, 0
    %p438 = por %p436, %p437
    %p439 = scmp.ne.s32.totalorder %s425, %s426
    %p440 = scmp.eq.s32.totalorder %s30, 1
    %p441 = por %p439, %p440
    %p443 = scmp.ne.s32.totalorder %s426, %s442
    %p444 = scmp.eq.s32.totalorder %s30, 0
    %p445 = por %p443, %p444
    %p446 = scmp.le.s32.totalorder 1, %s24
    %p447 = scmp.lt.s32.totalorder %s24, 3
    %p448 = pnand %p446, %p447
    %p449 = pneg %p448
    // Predicated region
    $region9: #{transformer_forward.7} parent=5 // pred_check
      _
    $region10: #{transformer_forward.7} parent=5 // pred_check_branch
      %451 = sbr.rel (%p448) target = $region12
    $region11: #{transformer_forward.7} parent=5 // pred_region
      %s452 = ssub.s32 %s24, 1
      // Predicated region
      $region13: #{transformer_forward.7} parent=11 // pred_check
        %p453 = pneg %p97
      $region14: #{transformer_forward.7} parent=11 // pred_check_branch
        %455 = sbr.rel (%p453) target = $region16
      $region15: #{transformer_forward.7} parent=11 // pred_region
        _
      $region16: #{transformer_forward.7} parent=11 // pred_fallthru
        _
      // Predicated region
      $region17: #{transformer_forward.7} parent=11 // pred_check
        %p456 = pneg %p118
      $region18: #{transformer_forward.7} parent=11 // pred_check_branch
        %458 = sbr.rel (%p456) target = $region20
      $region19: #{transformer_forward.7} parent=11 // pred_region
        _
      $region20: #{transformer_forward.7} parent=11 // pred_fallthru
        _
      // Predicated region
      $region21: #{transformer_forward.7} parent=11 // pred_check
        %p459 = pneg %p139
      $region22: #{transformer_forward.7} parent=11 // pred_check_branch
        %461 = sbr.rel (%p459) target = $region24
      $region23: #{transformer_forward.7} parent=11 // pred_region
        _
      $region24: #{transformer_forward.7} parent=11 // pred_fallthru
        _
      // Predicated region
      $region25: #{transformer_forward.7} parent=11 // pred_check
        %p462 = pneg %p160
      $region26: #{transformer_forward.7} parent=11 // pred_check_branch
        %464 = sbr.rel (%p462) target = $region28
      $region27: #{transformer_forward.7} parent=11 // pred_region
        _
      $region28: #{transformer_forward.7} parent=11 // pred_fallthru
        _
      // Predicated region
      $region29: #{transformer_forward.7} parent=11 // pred_check
        %p465 = pneg %p181
      $region30: #{transformer_forward.7} parent=11 // pred_check_branch
        %467 = sbr.rel (%p465) target = $region32
      $region31: #{transformer_forward.7} parent=11 // pred_region
        _
      $region32: #{transformer_forward.7} parent=11 // pred_fallthru
        _
      // Predicated region
      $region33: #{transformer_forward.7} parent=11 // pred_check
        %p468 = pneg %p202
      $region34: #{transformer_forward.7} parent=11 // pred_check_branch
        %470 = sbr.rel (%p468) target = $region36
      $region35: #{transformer_forward.7} parent=11 // pred_region
        _
      $region36: #{transformer_forward.7} parent=11 // pred_fallthru
        _
      // Predicated region
      $region37: #{transformer_forward.7} parent=11 // pred_check
        %p471 = pneg %p223
      $region38: #{transformer_forward.7} parent=11 // pred_check_branch
        %473 = sbr.rel (%p471) target = $region40
      $region39: #{transformer_forward.7} parent=11 // pred_region
        _
      $region40: #{transformer_forward.7} parent=11 // pred_fallthru
        _
      // Predicated region
      $region41: #{transformer_forward.7} parent=11 // pred_check
        %p474 = pneg %p244
      $region42: #{transformer_forward.7} parent=11 // pred_check_branch
        %476 = sbr.rel (%p474) target = $region44
      $region43: #{transformer_forward.7} parent=11 // pred_region
        _
      $region44: #{transformer_forward.7} parent=11 // pred_fallthru
        _
      // Predicated region
      $region45: #{transformer_forward.7} parent=11 // pred_check
        %p477 = pneg %p265
      $region46: #{transformer_forward.7} parent=11 // pred_check_branch
        %479 = sbr.rel (%p477) target = $region48
      $region47: #{transformer_forward.7} parent=11 // pred_region
        _
      $region48: #{transformer_forward.7} parent=11 // pred_fallthru
        _
      // Predicated region
      $region49: #{transformer_forward.7} parent=11 // pred_check
        %p480 = pneg %p286
      $region50: #{transformer_forward.7} parent=11 // pred_check_branch
        %482 = sbr.rel (%p480) target = $region52
      $region51: #{transformer_forward.7} parent=11 // pred_region
        _
      $region52: #{transformer_forward.7} parent=11 // pred_fallthru
        _
      // Predicated region
      $region53: #{transformer_forward.7} parent=11 // pred_check
        %p483 = pneg %p307
      $region54: #{transformer_forward.7} parent=11 // pred_check_branch
        %485 = sbr.rel (%p483) target = $region56
      $region55: #{transformer_forward.7} parent=11 // pred_region
        _
      $region56: #{transformer_forward.7} parent=11 // pred_fallthru
        _
      // Predicated region
      $region57: #{transformer_forward.7} parent=11 // pred_check
        %p486 = pneg %p328
      $region58: #{transformer_forward.7} parent=11 // pred_check_branch
        %488 = sbr.rel (%p486) target = $region60
      $region59: #{transformer_forward.7} parent=11 // pred_region
        _
      $region60: #{transformer_forward.7} parent=11 // pred_fallthru
        _
      // Predicated region
      $region61: #{transformer_forward.7} parent=11 // pred_check
        %p489 = pneg %p349
      $region62: #{transformer_forward.7} parent=11 // pred_check_branch
        %491 = sbr.rel (%p489) target = $region64
      $region63: #{transformer_forward.7} parent=11 // pred_region
        _
      $region64: #{transformer_forward.7} parent=11 // pred_fallthru
        _
      // Predicated region
      $region65: #{transformer_forward.7} parent=11 // pred_check
        %p492 = pneg %p370
      $region66: #{transformer_forward.7} parent=11 // pred_check_branch
        %494 = sbr.rel (%p492) target = $region68
      $region67: #{transformer_forward.7} parent=11 // pred_region
        _
      $region68: #{transformer_forward.7} parent=11 // pred_fallthru
        _
      // Predicated region
      $region69: #{transformer_forward.7} parent=11 // pred_check
        %p495 = pneg %p391
      $region70: #{transformer_forward.7} parent=11 // pred_check_branch
        %497 = sbr.rel (%p495) target = $region72
      $region71: #{transformer_forward.7} parent=11 // pred_region
        _
      $region72: #{transformer_forward.7} parent=11 // pred_fallthru
        _
      // Predicated region
      $region73: #{transformer_forward.7} parent=11 // pred_check
        %p498 = pneg %p412
      $region74: #{transformer_forward.7} parent=11 // pred_check_branch
        %500 = sbr.rel (%p498) target = $region76
      $region75: #{transformer_forward.7} parent=11 // pred_region
        _
      $region76: #{transformer_forward.7} parent=11 // pred_fallthru
        _
    $region12: #{transformer_forward.7} parent=5 // pred_fallthru
      _
    %p501 = scmp.lt.s32.totalorder %s24, 2
    // Predicated region
    $region77: #{transformer_forward.7} parent=5 // pred_check
      %p502 = pneg %p501
    $region78: #{transformer_forward.7} parent=5 // pred_check_branch
      %504 = sbr.rel (%p502) target = $region80
    $region79: #{transformer_forward.7} parent=5 // pred_region
      // Predicated region
      $region81: #{transformer_forward.7} parent=79 // pred_check
        %p505 = pneg %p44
      $region82: #{transformer_forward.7} parent=79 // pred_check_branch
        %507 = sbr.rel (%p505) target = $region84
      $region83: #{transformer_forward.7} parent=79 // pred_region
        %p508 = scmp.lt.s32.totalorder %s24, 1
        %s509 = scalar_select %p508, %s24, 1
        %s510 = smul.addr %s509, 8
        %s511 = scalar_lea.vmem %s0, %s510
      $region84: #{transformer_forward.7} parent=79 // pred_fallthru
        _
      // Predicated region
      $region85: #{transformer_forward.7} parent=79 // pred_check
        %p512 = pneg %p70
      $region86: #{transformer_forward.7} parent=79 // pred_check_branch
        %514 = sbr.rel (%p512) target = $region88
      $region87: #{transformer_forward.7} parent=79 // pred_region
        %p515 = scmp.lt.s32.totalorder %s24, 1
        %s516 = scalar_select %p515, %s24, 1
        %s517 = smul.addr %s516, 8
        %s518 = scalar_lea.vmem %s1, %s517
      $region88: #{transformer_forward.7} parent=79 // pred_fallthru
        _
    $region80: #{transformer_forward.7} parent=5 // pred_fallthru
      _
    %p519 = scmp.le.s32.totalorder 1, %s24
    %p520 = scmp.lt.s32.totalorder %s24, 3
    %p521 = pnand %p519, %p520
    %p522 = pneg %p521
    // Predicated region
    $region89: #{transformer_forward.7} parent=5 // pred_check
      _
    $region90: #{transformer_forward.7} parent=5 // pred_check_branch
      %524 = sbr.rel (%p521) target = $region92
    $region91: #{transformer_forward.7} parent=5 // pred_region
      %s525 = ssub.s32 %s24, 1
      %p526 = scmp.lt.s32.totalorder %s29, 1
      %s527 = scalar_select %p526, %s29, 1
      %s528 = smul.addr %s527, 8
      %s529 = scalar_lea.vmem %s0, %s528
      %p530 = pneg %p50
      %p531 = pneg %p47
      %p532 = scmp.lt.s32.totalorder %s29, 1
      %s533 = scalar_select %p532, %s29, 1
      %s534 = smul.addr %s533, 8
      %s535 = scalar_lea.vmem %s1, %s534
      %p536 = pneg %p76
      %p537 = pneg %p73
      %p538 = pneg %p97
      %p539 = pneg %p94
      %p540 = pneg %p118
      %p541 = pneg %p115
      %p542 = pneg %p139
      %p543 = pneg %p136
      %p544 = pneg %p160
      %p545 = pneg %p157
      %p546 = pneg %p181
      %p547 = pneg %p178
      %p548 = pneg %p202
      %p549 = pneg %p199
      %p550 = pneg %p223
      %p551 = pneg %p220
      %p552 = pneg %p244
      %p553 = pneg %p241
      %p554 = pneg %p265
      %p555 = pneg %p262
      %p556 = pneg %p286
      %p557 = pneg %p283
      %p558 = pneg %p307
      %p559 = pneg %p304
      %p560 = pneg %p328
      %p561 = pneg %p325
      %p562 = pneg %p349
      %p563 = pneg %p346
      %p564 = pneg %p370
      %p565 = pneg %p367
      %p566 = pneg %p391
      %p567 = pneg %p388
      %p568 = pneg %p412
      %p569 = pneg %p409
      %p570 = pneg %p438
      %p571 = pneg %p435
      %p572 = scmp.lt.s32.totalorder %s29, 1
      %s573 = scalar_select %p572, %s29, 1
      %s574 = smul.addr %s573, 8
      %s575 = scalar_lea.vmem %s18, %s574
      %p576 = scmp.lt.s32.totalorder %s29, 1
      %s577 = scalar_select %p576, %s29, 1
      %s578 = smul.addr %s577, 8
      %s579 = scalar_lea.vmem %s0, %s578
      %p580 = scmp.lt.s32.totalorder %s29, 1
      %s581 = scalar_select %p580, %s29, 1
      %s582 = smul.addr %s581, 8
      %s583 = scalar_lea.vmem %s1, %s582
      %p584 = scmp.lt.s32.totalorder %s29, 1
      %s585 = scalar_select %p584, %s29, 1
      %s586 = smul.addr %s585, 8
      %s587 = scalar_lea.vmem %s18, %s586
      %v589 = vld [vmem:[%s579] sm:$0xff]
      %v590 = vld [vmem:[%s583] sm:$0xff]
      %v591 = vld [vmem:[%s16] sm:$0x1]
      %v592 = vld [vmem:[%s17] sm:$0x1]
      %v593 = vpack.c.bf16 %v589, %v589
      %v594 = vld [vmem:[%s2] sm:$0xf]
      %v595 = vld [vmem:[%s2 + $0x4] sm:$0xf]
      %v596 = vld [vmem:[%s2 + $0x8] sm:$0xf]
      %v597 = vld [vmem:[%s2 + $0xc] sm:$0xf]
      %v598 = vld [vmem:[%s2 + $0x10] sm:$0xf]
      %v599 = vld [vmem:[%s2 + $0x14] sm:$0xf]
      %v600 = vld [vmem:[%s2 + $0x18] sm:$0xf]
      %v601 = vld [vmem:[%s2 + $0x1c] sm:$0xf]
      %v602 = vld [vmem:[%s3] sm:$0x1]
      %v604 = vlaneseq
      %v605 = vshrl.u32 %v604, 7
      %v606 = vsub.s32 0, %v605
      %v607 = vrot.slane %v602, %v606
      %v617 = vunpack.c.l.b16 %v594
      %v618 = vunpack.c.l.b16 %v595
      %v619 = vunpack.c.l.b16 %v596
      %v620 = vunpack.c.l.b16 %v597
      %v621 = vunpack.c.l.b16 %v598
      %v622 = vunpack.c.l.b16 %v599
      %v623 = vunpack.c.l.b16 %v600
      %v624 = vunpack.c.l.b16 %v601
      %v625 = vpack.c.b16 %v618, %v617
      %v626 = vpack.c.b16 %v620, %v619
      %v627 = vpack.c.b16 %v622, %v621
      %v628 = vpack.c.b16 %v624, %v623
      %vm633 = vcmask 523264
      %v635 = vsel %vm633, %v593, 0
      %637 = vmatprep.subr.bf16.mxu0 0
      %638 = vmatpush1.bf16.msra.mxu0 %v625
      %639 = vmatprep.subr.bf16.mxu0 0
      %640 = vmatpush1.bf16.msra.mxu0 %v626
      %641 = vmatprep.subr.bf16.mxu0 0
      %642 = vmatpush1.bf16.msra.mxu0 %v627
      %643 = vmatprep.subr.bf16.mxu0 0
      %644 = vmatpush1.bf16.msra.mxu0 %v628
      %645 = vmatprep.subr.bf16.mxu0 0
      %646 = vmatpush1.bf16.msra.mxu0 0
      %647 = vmatprep.subr.bf16.mxu0 0
      %648 = vmatpush1.bf16.msra.mxu0 0
      %649 = vmatprep.subr.bf16.mxu0 0
      %650 = vmatpush1.bf16.msra.mxu0 0
      %651 = vmatprep.subr.bf16.mxu0 0
      %652 = vmatpush1.bf16.msra.mxu0 0
      %653 = vmatprep.subr.bf16.mxu0 0
      %654 = vmatpush1.bf16.msra.mxu0 0
      %655 = vmatprep.subr.bf16.mxu0 0
      %656 = vmatpush1.bf16.msra.mxu0 0
      %657 = vmatprep.subr.bf16.mxu0 0
      %658 = vmatpush1.bf16.msra.mxu0 0
      %659 = vmatprep.subr.bf16.mxu0 0
      %660 = vmatpush1.bf16.msra.mxu0 0
      %661 = vmatprep.subr.bf16.mxu0 0
      %662 = vmatpush1.bf16.msra.mxu0 0
      %663 = vmatprep.subr.bf16.mxu0 0
      %664 = vmatpush1.bf16.msra.mxu0 0
      %665 = vmatprep.subr.bf16.mxu0 0
      %666 = vmatpush1.bf16.msra.mxu0 0
      %667 = vmatprep.subr.bf16.mxu0 0
      %668 = vmatpush1.bf16.msra.mxu0 0
      %669 = vmatprep.mubr.bf16.mxu0 0
      %670 = vmatmul.mubr.bf16.gmra.mrb[0].mxu0 %v635
      %v671 = vpop.f32.mrb[0].mxu0
      %v672 = vadd.f32 %v607, %v671
      %v673 = vpop.f32.mrb[0].mxu0
      %v674 = vpop.f32.mrb[0].mxu0
      %v675 = vpop.f32.mrb[0].mxu0
      %676 = vdwg.mxu0
      %v677 = vpack.c.bf16 %v590, %v590
      %v678 = vld [vmem:[%s4] sm:$0xf]
      %v679 = vld [vmem:[%s4 + $0x4] sm:$0xf]
      %v680 = vld [vmem:[%s4 + $0x8] sm:$0xf]
      %v681 = vld [vmem:[%s4 + $0xc] sm:$0xf]
      %v682 = vld [vmem:[%s4 + $0x10] sm:$0xf]
      %v683 = vld [vmem:[%s4 + $0x14] sm:$0xf]
      %v684 = vld [vmem:[%s4 + $0x18] sm:$0xf]
      %v685 = vld [vmem:[%s4 + $0x1c] sm:$0xf]
      %v686 = vld [vmem:[%s5] sm:$0x1]
      %v688 = vlaneseq
      %v689 = vshrl.u32 %v688, 7
      %v690 = vsub.s32 0, %v689
      %v691 = vrot.slane %v686, %v690
      %v701 = vunpack.c.l.b16 %v678
      %v702 = vunpack.c.l.b16 %v679
      %v703 = vunpack.c.l.b16 %v680
      %v704 = vunpack.c.l.b16 %v681
      %v705 = vunpack.c.l.b16 %v682
      %v706 = vunpack.c.l.b16 %v683
      %v707 = vunpack.c.l.b16 %v684
      %v708 = vunpack.c.l.b16 %v685
      %v709 = vpack.c.b16 %v702, %v701
      %v710 = vpack.c.b16 %v704, %v703
      %v711 = vpack.c.b16 %v706, %v705
      %v712 = vpack.c.b16 %v708, %v707
      %v718 = vsel %vm633, %v677, 0
      %720 = vmatprep.subr.bf16.mxu0 0
      %721 = vmatpush1.bf16.msra.mxu0 %v709
      %722 = vmatprep.subr.bf16.mxu0 0
      %723 = vmatpush1.bf16.msra.mxu0 %v710
      %724 = vmatprep.subr.bf16.mxu0 0
      %725 = vmatpush1.bf16.msra.mxu0 %v711
      %726 = vmatprep.subr.bf16.mxu0 0
      %727 = vmatpush1.bf16.msra.mxu0 %v712
      %728 = vmatprep.subr.bf16.mxu0 0
      %729 = vmatpush1.bf16.msra.mxu0 0
      %730 = vmatprep.subr.bf16.mxu0 0
      %731 = vmatpush1.bf16.msra.mxu0 0
      %732 = vmatprep.subr.bf16.mxu0 0
      %733 = vmatpush1.bf16.msra.mxu0 0
      %734 = vmatprep.subr.bf16.mxu0 0
      %735 = vmatpush1.bf16.msra.mxu0 0
      %736 = vmatprep.subr.bf16.mxu0 0
      %737 = vmatpush1.bf16.msra.mxu0 0
      %738 = vmatprep.subr.bf16.mxu0 0
      %739 = vmatpush1.bf16.msra.mxu0 0
      %740 = vmatprep.subr.bf16.mxu0 0
      %741 = vmatpush1.bf16.msra.mxu0 0
      %742 = vmatprep.subr.bf16.mxu0 0
      %743 = vmatpush1.bf16.msra.mxu0 0
      %744 = vmatprep.subr.bf16.mxu0 0
      %745 = vmatpush1.bf16.msra.mxu0 0
      %746 = vmatprep.subr.bf16.mxu0 0
      %747 = vmatpush1.bf16.msra.mxu0 0
      %748 = vmatprep.subr.bf16.mxu0 0
      %749 = vmatpush1.bf16.msra.mxu0 0
      %750 = vmatprep.subr.bf16.mxu0 0
      %751 = vmatpush1.bf16.msra.mxu0 0
      %752 = vmatprep.mubr.bf16.mxu0 0
      %753 = vmatmul.mubr.bf16.gmra.mrb[0].mxu0 %v718
      %v754 = vpop.f32.mrb[0].mxu0
      %v755 = vadd.f32 %v691, %v754
      %v756 = vpop.f32.mrb[0].mxu0
      %v757 = vpop.f32.mrb[0].mxu0
      %v758 = vpop.f32.mrb[0].mxu0
      %759 = vdwg.mxu0
      %760 = vxpose.xlu0.b32.start [1/16] %v755, 128
      %761 = vxpose.xlu0.b32.cont [2/16] 0.0, 128
      %762 = vxpose.xlu0.b32.cont [3/16] 0.0, 128
      %763 = vxpose.xlu0.b32.cont [4/16] 0.0, 128
      %764 = vxpose.xlu0.b32.cont [5/16] 0.0, 128
      %765 = vxpose.xlu0.b32.cont [6/16] 0.0, 128
      %766 = vxpose.xlu0.b32.cont [7/16] 0.0, 128
      %767 = vxpose.xlu0.b32.cont [8/16] 0.0, 128
      %768 = vxpose.xlu0.b32.cont [9/16] 0.0, 128
      %769 = vxpose.xlu0.b32.cont [10/16] 0.0, 128
      %770 = vxpose.xlu0.b32.cont [11/16] 0.0, 128
      %771 = vxpose.xlu0.b32.cont [12/16] 0.0, 128
      %772 = vxpose.xlu0.b32.cont [13/16] 0.0, 128
      %773 = vxpose.xlu0.b32.cont [14/16] 0.0, 128
      %774 = vxpose.xlu0.b32.cont [15/16] 0.0, 128
      %775 = vxpose.xlu0.b32.end [16/16] 0.0, 128
      %v776 = vpop.trf.xlu0
      %v777 = vpop.trf.xlu0
      %v778 = vpop.trf.xlu0
      %v779 = vpop.trf.xlu0
      %v780 = vpop.trf.xlu0
      %v781 = vpop.trf.xlu0
      %v782 = vpop.trf.xlu0
      %v783 = vpop.trf.xlu0
      %v784 = vpop.trf.xlu0
      %v785 = vpop.trf.xlu0
      %v786 = vpop.trf.xlu0
      %v787 = vpop.trf.xlu0
      %v788 = vpop.trf.xlu0
      %v789 = vpop.trf.xlu0
      %v790 = vpop.trf.xlu0
      %v791 = vpop.trf.xlu0
      %792 = vxpose.xlu0.b32.start [1/16] %v672, 128
      %793 = vxpose.xlu0.b32.cont [2/16] 0.0, 128
      %794 = vxpose.xlu0.b32.cont [3/16] 0.0, 128
      %795 = vxpose.xlu0.b32.cont [4/16] 0.0, 128
      %796 = vxpose.xlu0.b32.cont [5/16] 0.0, 128
      %797 = vxpose.xlu0.b32.cont [6/16] 0.0, 128
      %798 = vxpose.xlu0.b32.cont [7/16] 0.0, 128
      %799 = vxpose.xlu0.b32.cont [8/16] 0.0, 128
      %800 = vxpose.xlu0.b32.cont [9/16] 0.0, 128
      %801 = vxpose.xlu0.b32.cont [10/16] 0.0, 128
      %802 = vxpose.xlu0.b32.cont [11/16] 0.0, 128
      %803 = vxpose.xlu0.b32.cont [12/16] 0.0, 128
      %804 = vxpose.xlu0.b32.cont [13/16] 0.0, 128
      %805 = vxpose.xlu0.b32.cont [14/16] 0.0, 128
      %806 = vxpose.xlu0.b32.cont [15/16] 0.0, 128
      %807 = vxpose.xlu0.b32.end [16/16] 0.0, 128
      %v808 = vpop.trf.xlu0
      %v809 = vpop.trf.xlu0
      %v810 = vpop.trf.xlu0
      %v811 = vpop.trf.xlu0
      %v812 = vpop.trf.xlu0
      %v813 = vpop.trf.xlu0
      %v814 = vpop.trf.xlu0
      %v815 = vpop.trf.xlu0
      %v816 = vpop.trf.xlu0
      %v817 = vpop.trf.xlu0
      %v818 = vpop.trf.xlu0
      %v819 = vpop.trf.xlu0
      %v820 = vpop.trf.xlu0
      %v821 = vpop.trf.xlu0
      %v822 = vpop.trf.xlu0
      %v823 = vpop.trf.xlu0
      %v824 = vmul.f32 %v808, 0.35355338
      %v825 = vmul.f32 %v809, 0.35355338
      %v826 = vmul.f32 %v810, 0.35355338
      %v827 = vmul.f32 %v811, 0.35355338
      %v828 = vmul.f32 %v812, 0.35355338
      %v829 = vmul.f32 %v813, 0.35355338
      %v830 = vmul.f32 %v814, 0.35355338
      %v831 = vmul.f32 %v815, 0.35355338
      %832 = vxpose.xlu0.b32.start [1/16] %v824, 128
      %833 = vxpose.xlu0.b32.cont [2/16] 0.0, 128
      %834 = vxpose.xlu0.b32.cont [3/16] 0.0, 128
      %835 = vxpose.xlu0.b32.cont [4/16] 0.0, 128
      %836 = vxpose.xlu0.b32.cont [5/16] 0.0, 128
      %837 = vxpose.xlu0.b32.cont [6/16] 0.0, 128
      %838 = vxpose.xlu0.b32.cont [7/16] 0.0, 128
      %839 = vxpose.xlu0.b32.cont [8/16] 0.0, 128
      %840 = vxpose.xlu0.b32.cont [9/16] 0.0, 128
      %841 = vxpose.xlu0.b32.cont [10/16] 0.0, 128
      %842 = vxpose.xlu0.b32.cont [11/16] 0.0, 128
      %843 = vxpose.xlu0.b32.cont [12/16] 0.0, 128
      %844 = vxpose.xlu0.b32.cont [13/16] 0.0, 128
      %845 = vxpose.xlu0.b32.cont [14/16] 0.0, 128
      %846 = vxpose.xlu0.b32.cont [15/16] 0.0, 128
      %847 = vxpose.xlu0.b32.end [16/16] 0.0, 128
      %v848 = vpop.trf.xlu0
      %v849 = vpop.trf.xlu0
      %v850 = vpop.trf.xlu0
      %v851 = vpop.trf.xlu0
      %v852 = vpop.trf.xlu0
      %v853 = vpop.trf.xlu0
      %v854 = vpop.trf.xlu0
      %v855 = vpop.trf.xlu0
      %v856 = vpop.trf.xlu0
      %v857 = vpop.trf.xlu0
      %v858 = vpop.trf.xlu0
      %v859 = vpop.trf.xlu0
      %v860 = vpop.trf.xlu0
      %v861 = vpop.trf.xlu0
      %v862 = vpop.trf.xlu0
      %v863 = vpop.trf.xlu0
      %vm864 = vcmask 64512
      %v866 = vsel %vm864, %v848, 0
      %868 = vmatprep.subr.mxu0 0.0
      %869 = vmatpush1.msra.mxu0 %v776
      %870 = vmatprep.subr.mxu0 0.0
      %871 = vmatpush1.msra.mxu0 0.0
      %872 = vmatprep.subr.mxu0 0.0
      %873 = vmatpush1.msra.mxu0 0.0
      %874 = vmatprep.subr.mxu0 0.0
      %875 = vmatpush1.msra.mxu0 0.0
      %876 = vmatprep.subr.mxu0 0.0
      %877 = vmatpush1.msra.mxu0 0.0
      %878 = vmatprep.subr.mxu0 0.0
      %879 = vmatpush1.msra.mxu0 0.0
      %880 = vmatprep.subr.mxu0 0.0
      %881 = vmatpush1.msra.mxu0 0.0
      %882 = vmatprep.subr.mxu0 0.0
      %883 = vmatpush1.msra.mxu0 0.0
      %884 = vmatprep.subr.mxu0 0.0
      %885 = vmatpush1.msra.mxu0 0.0
      %886 = vmatprep.subr.mxu0 0.0
      %887 = vmatpush1.msra.mxu0 0.0
      %888 = vmatprep.subr.mxu0 0.0
      %889 = vmatpush1.msra.mxu0 0.0
      %890 = vmatprep.subr.mxu0 0.0
      %891 = vmatpush1.msra.mxu0 0.0
      %892 = vmatprep.subr.mxu0 0.0
      %893 = vmatpush1.msra.mxu0 0.0
      %894 = vmatprep.subr.mxu0 0.0
      %895 = vmatpush1.msra.mxu0 0.0
      %896 = vmatprep.subr.mxu0 0.0
      %897 = vmatpush1.msra.mxu0 0.0
      %898 = vmatprep.subr.mxu0 0.0
      %899 = vmatpush1.msra.mxu0 0.0
      %900 = vmatprep.subr.mxu0 0.0
      %901 = vmatpush1.msra.mxu0 0.0
      %902 = vmatprep.subr.mxu0 0.0
      %903 = vmatpush1.msra.mxu0 0.0
      %904 = vmatprep.subr.mxu0 0.0
      %905 = vmatpush1.msra.mxu0 0.0
      %906 = vmatprep.subr.mxu0 0.0
      %907 = vmatpush1.msra.mxu0 0.0
      %908 = vmatprep.subr.mxu0 0.0
      %909 = vmatpush1.msra.mxu0 0.0
      %910 = vmatprep.subr.mxu0 0.0
      %911 = vmatpush1.msra.mxu0 0.0
      %912 = vmatprep.subr.mxu0 0.0
      %913 = vmatpush1.msra.mxu0 0.0
      %914 = vmatprep.subr.mxu0 0.0
      %915 = vmatpush1.msra.mxu0 0.0
      %916 = vmatprep.subr.mxu0 0.0
      %917 = vmatpush1.msra.mxu0 0.0
      %918 = vmatprep.subr.mxu0 0.0
      %919 = vmatpush1.msra.mxu0 0.0
      %920 = vmatprep.subr.mxu0 0.0
      %921 = vmatpush1.msra.mxu0 0.0
      %922 = vmatprep.subr.mxu0 0.0
      %923 = vmatpush1.msra.mxu0 0.0
      %924 = vmatprep.subr.mxu0 0.0
      %925 = vmatpush1.msra.mxu0 0.0
      %926 = vmatprep.subr.mxu0 0.0
      %927 = vmatpush1.msra.mxu0 0.0
      %928 = vmatprep.subr.mxu0 0.0
      %929 = vmatpush1.msra.mxu0 0.0
      %930 = vmatprep.subr.mxu0 0.0
      %931 = vmatpush1.msra.mxu0 0.0
      %932 = vmatprep.mubr.f32.mxu0 0.0
      %933 = vmatmul.mubr.f32.gmra.mrb[0].mxu0 %v866
      %v934 = vpop.f32.mrb[0].mxu0
      %v935 = vadd.f32 0.0, %v934
      %v936 = vpop.f32.mrb[0].mxu0
      %937 = vdwg.mxu0
      %v938 = vsel %vm864, %v935, -inf
      %939 = vmax.xlane.f32.xlu0 %v938
      %v940 = vpop.xlane.xlu0 %939
      %v941 = vsub.f32 %v935, %v940
      %v942 = vmul.f32 %v941, 1.442695
      %v943 = vpow.pop %v942
      %v944 = vsel %vm864, %v943, 0.0
      %945 = vadd.xlane.f32.xlu0 %v944
      %v946 = vpop.xlane.xlu0 %945
      %v947 = vrcp.pop %v946
      %v948 = vmul.f32 %v943, %v947
      %v950 = vsel %vm864, %v784, 0
      %v953 = vsel %vm864, %v948, 0
      %955 = vmatprep.subr.mxu0 0.0
      %956 = vmatpush1.xpose.msra.mxu0 %v953
      %957 = vmatprep.subr.mxu0 0.0
      %958 = vmatpush1.xpose.msra.mxu0 0.0
      %959 = vmatprep.subr.mxu0 0.0
      %960 = vmatpush1.xpose.msra.mxu0 0.0
      %961 = vmatprep.subr.mxu0 0.0
      %962 = vmatpush1.xpose.msra.mxu0 0.0
      %963 = vmatprep.subr.mxu0 0.0
      %964 = vmatpush1.xpose.msra.mxu0 0.0
      %965 = vmatprep.subr.mxu0 0.0
      %966 = vmatpush1.xpose.msra.mxu0 0.0
      %967 = vmatprep.subr.mxu0 0.0
      %968 = vmatpush1.xpose.msra.mxu0 0.0
      %969 = vmatprep.subr.mxu0 0.0
      %970 = vmatpush1.xpose.msra.mxu0 0.0
      %971 = vmatprep.subr.mxu0 0.0
      %972 = vmatpush1.xpose.msra.mxu0 0.0
      %973 = vmatprep.subr.mxu0 0.0
      %974 = vmatpush1.xpose.msra.mxu0 0.0
      %975 = vmatprep.subr.mxu0 0.0
      %976 = vmatpush1.xpose.msra.mxu0 0.0
      %977 = vmatprep.subr.mxu0 0.0
      %978 = vmatpush1.xpose.msra.mxu0 0.0
      %979 = vmatprep.subr.mxu0 0.0
      %980 = vmatpush1.xpose.msra.mxu0 0.0
      %981 = vmatprep.subr.mxu0 0.0
      %982 = vmatpush1.xpose.msra.mxu0 0.0
      %983 = vmatprep.subr.mxu0 0.0
      %984 = vmatpush1.xpose.msra.mxu0 0.0
      %985 = vmatprep.subr.mxu0 0.0
      %986 = vmatpush1.xpose.msra.mxu0 0.0
      %987 = vmatprep.subr.mxu0 0.0
      %988 = vmatpush1.xpose.msra.mxu0 0.0
      %989 = vmatprep.subr.mxu0 0.0
      %990 = vmatpush1.xpose.msra.mxu0 0.0
      %991 = vmatprep.subr.mxu0 0.0
      %992 = vmatpush1.xpose.msra.mxu0 0.0
      %993 = vmatprep.subr.mxu0 0.0
      %994 = vmatpush1.xpose.msra.mxu0 0.0
      %995 = vmatprep.subr.mxu0 0.0
      %996 = vmatpush1.xpose.msra.mxu0 0.0
      %997 = vmatprep.subr.mxu0 0.0
      %998 = vmatpush1.xpose.msra.mxu0 0.0
      %999 = vmatprep.subr.mxu0 0.0
      %1000 = vmatpush1.xpose.msra.mxu0 0.0
      %1001 = vmatprep.subr.mxu0 0.0
      %1002 = vmatpush1.xpose.msra.mxu0 0.0
      %1003 = vmatprep.subr.mxu0 0.0
      %1004 = vmatpush1.xpose.msra.mxu0 0.0
      %1005 = vmatprep.subr.mxu0 0.0
      %1006 = vmatpush1.xpose.msra.mxu0 0.0
      %1007 = vmatprep.subr.mxu0 0.0
      %1008 = vmatpush1.xpose.msra.mxu0 0.0
      %1009 = vmatprep.subr.mxu0 0.0
      %1010 = vmatpush1.xpose.msra.mxu0 0.0
      %1011 = vmatprep.subr.mxu0 0.0
      %1012 = vmatpush1.xpose.msra.mxu0 0.0
      %1013 = vmatprep.subr.mxu0 0.0
      %1014 = vmatpush1.xpose.msra.mxu0 0.0
      %1015 = vmatprep.subr.mxu0 0.0
      %1016 = vmatpush1.xpose.msra.mxu0 0.0
      %1017 = vmatprep.subr.mxu0 0.0
      %1018 = vmatpush1.xpose.msra.mxu0 0.0
      %1019 = vmatprep.mubr.f32.mxu0 0.0
      %1020 = vmatmul.mubr.f32.gmra.mrb[0].mxu0 %v950
      %v1021 = vpop.f32.mrb[0].mxu0
      %v1022 = vadd.f32 0.0, %v1021
      %v1023 = vpop.f32.mrb[0].mxu0
      %1024 = vdwg.mxu0
      %1025 = vxpose.xlu0.b32.start [1/16] %v825, 128
      %1026 = vxpose.xlu0.b32.cont [2/16] 0.0, 128
      %1027 = vxpose.xlu0.b32.cont [3/16] 0.0, 128
      %1028 = vxpose.xlu0.b32.cont [4/16] 0.0, 128
      %1029 = vxpose.xlu0.b32.cont [5/16] 0.0, 128
      %1030 = vxpose.xlu0.b32.cont [6/16] 0.0, 128
      %1031 = vxpose.xlu0.b32.cont [7/16] 0.0, 128
      %1032 = vxpose.xlu0.b32.cont [8/16] 0.0, 128
      %1033 = vxpose.xlu0.b32.cont [9/16] 0.0, 128
      %1034 = vxpose.xlu0.b32.cont [10/16] 0.0, 128
      %1035 = vxpose.xlu0.b32.cont [11/16] 0.0, 128
      %1036 = vxpose.xlu0.b32.cont [12/16] 0.0, 128
      %1037 = vxpose.xlu0.b32.cont [13/16] 0.0, 128
      %1038 = vxpose.xlu0.b32.cont [14/16] 0.0, 128
      %1039 = vxpose.xlu0.b32.cont [15/16] 0.0, 128
      %1040 = vxpose.xlu0.b32.end [16/16] 0.0, 128
      %v1041 = vpop.trf.xlu0
      %v1042 = vpop.trf.xlu0
      %v1043 = vpop.trf.xlu0
      %v1044 = vpop.trf.xlu0
      %v1045 = vpop.trf.xlu0
      %v1046 = vpop.trf.xlu0
      %v1047 = vpop.trf.xlu0
      %v1048 = vpop.trf.xlu0
      %v1049 = vpop.trf.xlu0
      %v1050 = vpop.trf.xlu0
      %v1051 = vpop.trf.xlu0
      %v1052 = vpop.trf.xlu0
      %v1053 = vpop.trf.xlu0
      %v1054 = vpop.trf.xlu0
      %v1055 = vpop.trf.xlu0
      %v1056 = vpop.trf.xlu0
      %v1058 = vsel %vm864, %v1041, 0
      %1060 = vmatprep.subr.mxu0 0.0
      %1061 = vmatpush1.msra.mxu0 %v777
      %1062 = vmatprep.subr.mxu0 0.0
      %1063 = vmatpush1.msra.mxu0 0.0
      %1064 = vmatprep.subr.mxu0 0.0
      %1065 = vmatpush1.msra.mxu0 0.0
      %1066 = vmatprep.subr.mxu0 0.0
      %1067 = vmatpush1.msra.mxu0 0.0
      %1068 = vmatprep.subr.mxu0 0.0
      %1069 = vmatpush1.msra.mxu0 0.0
      %1070 = vmatprep.subr.mxu0 0.0
      %1071 = vmatpush1.msra.mxu0 0.0
      %1072 = vmatprep.subr.mxu0 0.0
      %1073 = vmatpush1.msra.mxu0 0.0
      %1074 = vmatprep.subr.mxu0 0.0
      %1075 = vmatpush1.msra.mxu0 0.0
      %1076 = vmatprep.subr.mxu0 0.0
      %1077 = vmatpush1.msra.mxu0 0.0
      %1078 = vmatprep.subr.mxu0 0.0
      %1079 = vmatpush1.msra.mxu0 0.0
      %1080 = vmatprep.subr.mxu0 0.0
      %1081 = vmatpush1.msra.mxu0 0.0
      %1082 = vmatprep.subr.mxu0 0.0
      %1083 = vmatpush1.msra.mxu0 0.0
      %1084 = vmatprep.subr.mxu0 0.0
      %1085 = vmatpush1.msra.mxu0 0.0
      %1086 = vmatprep.subr.mxu0 0.0
      %1087 = vmatpush1.msra.mxu0 0.0
      %1088 = vmatprep.subr.mxu0 0.0
      %1089 = vmatpush1.msra.mxu0 0.0
      %1090 = vmatprep.subr.mxu0 0.0
      %1091 = vmatpush1.msra.mxu0 0.0
      %1092 = vmatprep.subr.mxu0 0.0
      %1093 = vmatpush1.msra.mxu0 0.0
      %1094 = vmatprep.subr.mxu0 0.0
      %1095 = vmatpush1.msra.mxu0 0.0
      %1096 = vmatprep.subr.mxu0 0.0
      %1097 = vmatpush1.msra.mxu0 0.0
      %1098 = vmatprep.subr.mxu0 0.0
      %1099 = vmatpush1.msra.mxu0 0.0
      %1100 = vmatprep.subr.mxu0 0.0
      %1101 = vmatpush1.msra.mxu0 0.0
      %1102 = vmatprep.subr.mxu0 0.0
      %1103 = vmatpush1.msra.mxu0 0.0
      %1104 = vmatprep.subr.mxu0 0.0
      %1105 = vmatpush1.msra.mxu0 0.0
      %1106 = vmatprep.subr.mxu0 0.0
      %1107 = vmatpush1.msra.mxu0 0.0
      %1108 = vmatprep.subr.mxu0 0.0
      %1109 = vmatpush1.msra.mxu0 0.0
      %1110 = vmatprep.subr.mxu0 0.0
      %1111 = vmatpush1.msra.mxu0 0.0
      %1112 = vmatprep.subr.mxu0 0.0
      %1113 = vmatpush1.msra.mxu0 0.0
      %1114 = vmatprep.subr.mxu0 0.0
      %1115 = vmatpush1.msra.mxu0 0.0
      %1116 = vmatprep.subr.mxu0 0.0
      %1117 = vmatpush1.msra.mxu0 0.0
      %1118 = vmatprep.subr.mxu0 0.0
      %1119 = vmatpush1.msra.mxu0 0.0
      %1120 = vmatprep.subr.mxu0 0.0
      %1121 = vmatpush1.msra.mxu0 0.0
      %1122 = vmatprep.subr.mxu0 0.0
      %1123 = vmatpush1.msra.mxu0 0.0
      %1124 = vmatprep.mubr.f32.mxu0 0.0
      %1125 = vmatmul.mubr.f32.gmra.mrb[0].mxu0 %v1058
      %v1126 = vpop.f32.mrb[0].mxu0
      %v1127 = vadd.f32 0.0, %v1126
      %v1128 = vpop.f32.mrb[0].mxu0
      %1129 = vdwg.mxu0
      %v1130 = vsel %vm864, %v1127, -inf
      %1131 = vmax.xlane.f32.xlu0 %v1130
      %v1132 = vpop.xlane.xlu0 %1131
      %v1133 = vsub.f32 %v1127, %v1132
      %v1134 = vmul.f32 %v1133, 1.442695
      %v1135 = vpow.pop %v1134
      %v1136 = vsel %vm864, %v1135, 0.0
      %1137 = vadd.xlane.f32.xlu0 %v1136
      %v1138 = vpop.xlane.xlu0 %1137
      %v1139 = vrcp.pop %v1138
      %v1140 = vmul.f32 %v1135, %v1139
      %v1142 = vsel %vm864, %v785, 0
      %v1145 = vsel %vm864, %v1140, 0
      %1147 = vmatprep.subr.mxu0 0.0
      %1148 = vmatpush1.xpose.msra.mxu0 %v1145
      %1149 = vmatprep.subr.mxu0 0.0
      %1150 = vmatpush1.xpose.msra.mxu0 0.0
      %1151 = vmatprep.subr.mxu0 0.0
      %1152 = vmatpush1.xpose.msra.mxu0 0.0
      %1153 = vmatprep.subr.mxu0 0.0
      %1154 = vmatpush1.xpose.msra.mxu0 0.0
      %1155 = vmatprep.subr.mxu0 0.0
      %1156 = vmatpush1.xpose.msra.mxu0 0.0
      %1157 = vmatprep.subr.mxu0 0.0
      %1158 = vmatpush1.xpose.msra.mxu0 0.0
      %1159 = vmatprep.subr.mxu0 0.0
      %1160 = vmatpush1.xpose.msra.mxu0 0.0
      %1161 = vmatprep.subr.mxu0 0.0
      %1162 = vmatpush1.xpose.msra.mxu0 0.0
      %1163 = vmatprep.subr.mxu0 0.0
      %1164 = vmatpush1.xpose.msra.mxu0 0.0
      %1165 = vmatprep.subr.mxu0 0.0
      %1166 = vmatpush1.xpose.msra.mxu0 0.0
      %1167 = vmatprep.subr.mxu0 0.0
      %1168 = vmatpush1.xpose.msra.mxu0 0.0
      %1169 = vmatprep.subr.mxu0 0.0
      %1170 = vmatpush1.xpose.msra.mxu0 0.0
      %1171 = vmatprep.subr.mxu0 0.0
      %1172 = vmatpush1.xpose.msra.mxu0 0.0
      %1173 = vmatprep.subr.mxu0 0.0
      %1174 = vmatpush1.xpose.msra.mxu0 0.0
      %1175 = vmatprep.subr.mxu0 0.0
      %1176 = vmatpush1.xpose.msra.mxu0 0.0
      %1177 = vmatprep.subr.mxu0 0.0
      %1178 = vmatpush1.xpose.msra.mxu0 0.0
      %1179 = vmatprep.subr.mxu0 0.0
      %1180 = vmatpush1.xpose.msra.mxu0 0.0
      %1181 = vmatprep.subr.mxu0 0.0
      %1182 = vmatpush1.xpose.msra.mxu0 0.0
      %1183 = vmatprep.subr.mxu0 0.0
      %1184 = vmatpush1.xpose.msra.mxu0 0.0
      %1185 = vmatprep.subr.mxu0 0.0
      %1186 = vmatpush1.xpose.msra.mxu0 0.0
      %1187 = vmatprep.subr.mxu0 0.0
      %1188 = vmatpush1.xpose.msra.mxu0 0.0
      %1189 = vmatprep.subr.mxu0 0.0
      %1190 = vmatpush1.xpose.msra.mxu0 0.0
      %1191 = vmatprep.subr.mxu0 0.0
      %1192 = vmatpush1.xpose.msra.mxu0 0.0
      %1193 = vmatprep.subr.mxu0 0.0
      %1194 = vmatpush1.xpose.msra.mxu0 0.0
      %1195 = vmatprep.subr.mxu0 0.0
      %1196 = vmatpush1.xpose.msra.mxu0 0.0
      %1197 = vmatprep.subr.mxu0 0.0
      %1198 = vmatpush1.xpose.msra.mxu0 0.0
      %1199 = vmatprep.subr.mxu0 0.0
      %1200 = vmatpush1.xpose.msra.mxu0 0.0
      %1201 = vmatprep.subr.mxu0 0.0
      %1202 = vmatpush1.xpose.msra.mxu0 0.0
      %1203 = vmatprep.subr.mxu0 0.0
      %1204 = vmatpush1.xpose.msra.mxu0 0.0
      %1205 = vmatprep.subr.mxu0 0.0
      %1206 = vmatpush1.xpose.msra.mxu0 0.0
      %1207 = vmatprep.subr.mxu0 0.0
      %1208 = vmatpush1.xpose.msra.mxu0 0.0
      %1209 = vmatprep.subr.mxu0 0.0
      %1210 = vmatpush1.xpose.msra.mxu0 0.0
      %1211 = vmatprep.mubr.f32.mxu0 0.0
      %1212 = vmatmul.mubr.f32.gmra.mrb[0].mxu0 %v1142
      %v1213 = vpop.f32.mrb[0].mxu0
      %v1214 = vadd.f32 0.0, %v1213
      %v1215 = vpop.f32.mrb[0].mxu0
      %1216 = vdwg.mxu0
      %1217 = vxpose.xlu0.b32.start [1/16] %v826, 128
      %1218 = vxpose.xlu0.b32.cont [2/16] 0.0, 128
      %1219 = vxpose.xlu0.b32.cont [3/16] 0.0, 128
      %1220 = vxpose.xlu0.b32.cont [4/16] 0.0, 128
      %1221 = vxpose.xlu0.b32.cont [5/16] 0.0, 128
      %1222 = vxpose.xlu0.b32.cont [6/16] 0.0, 128
      %1223 = vxpose.xlu0.b32.cont [7/16] 0.0, 128
      %1224 = vxpose.xlu0.b32.cont [8/16] 0.0, 128
      %1225 = vxpose.xlu0.b32.cont [9/16] 0.0, 128
      %1226 = vxpose.xlu0.b32.cont [10/16] 0.0, 128
      %1227 = vxpose.xlu0.b32.cont [11/16] 0.0, 128
      %1228 = vxpose.xlu0.b32.cont [12/16] 0.0, 128
      %1229 = vxpose.xlu0.b32.cont [13/16] 0.0, 128
      %1230 = vxpose.xlu0.b32.cont [14/16] 0.0, 128
      %1231 = vxpose.xlu0.b32.cont [15/16] 0.0, 128
      %1232 = vxpose.xlu0.b32.end [16/16] 0.0, 128
      %v1233 = vpop.trf.xlu0
      %v1234 = vpop.trf.xlu0
      %v1235 = vpop.trf.xlu0
      %v1236 = vpop.trf.xlu0
      %v1237 = vpop.trf.xlu0
      %v1238 = vpop.trf.xlu0
      %v1239 = vpop.trf.xlu0
      %v1240 = vpop.trf.xlu0
      %v1241 = vpop.trf.xlu0
      %v1242 = vpop.trf.xlu0
      %v1243 = vpop.trf.xlu0
      %v1244 = vpop.trf.xlu0
      %v1245 = vpop.trf.xlu0
      %v1246 = vpop.trf.xlu0
      %v1247 = vpop.trf.xlu0
      %v1248 = vpop.trf.xlu0
      %v1250 = vsel %vm864, %v1233, 0
      %1252 = vmatprep.subr.mxu0 0.0
      %1253 = vmatpush1.msra.mxu0 %v778
      %1254 = vmatprep.subr.mxu0 0.0
      %1255 = vmatpush1.msra.mxu0 0.0
      %1256 = vmatprep.subr.mxu0 0.0
      %1257 = vmatpush1.msra.mxu0 0.0
      %1258 = vmatprep.subr.mxu0 0.0
      %1259 = vmatpush1.msra.mxu0 0.0
      %1260 = vmatprep.subr.mxu0 0.0
      %1261 = vmatpush1.msra.mxu0 0.0
      %1262 = vmatprep.subr.mxu0 0.0
      %1263 = vmatpush1.msra.mxu0 0.0
      %1264 = vmatprep.subr.mxu0 0.0
      %1265 = vmatpush1.msra.mxu0 0.0
      %1266 = vmatprep.subr.mxu0 0.0
      %1267 = vmatpush1.msra.mxu0 0.0
      %1268 = vmatprep.subr.mxu0 0.0
      %1269 = vmatpush1.msra.mxu0 0.0
      %1270 = vmatprep.subr.mxu0 0.0
      %1271 = vmatpush1.msra.mxu0 0.0
      %1272 = vmatprep.subr.mxu0 0.0
      %1273 = vmatpush1.msra.mxu0 0.0
      %1274 = vmatprep.subr.mxu0 0.0
      %1275 = vmatpush1.msra.mxu0 0.0
      %1276 = vmatprep.subr.mxu0 0.0
      %1277 = vmatpush1.msra.mxu0 0.0
      %1278 = vmatprep.subr.mxu0 0.0
      %1279 = vmatpush1.msra.mxu0 0.0
      %1280 = vmatprep.subr.mxu0 0.0
      %1281 = vmatpush1.msra.mxu0 0.0
      %1282 = vmatprep.subr.mxu0 0.0
      %1283 = vmatpush1.msra.mxu0 0.0
      %1284 = vmatprep.subr.mxu0 0.0
      %1285 = vmatpush1.msra.mxu0 0.0
      %1286 = vmatprep.subr.mxu0 0.0
      %1287 = vmatpush1.msra.mxu0 0.0
      %1288 = vmatprep.subr.mxu0 0.0
      %1289 = vmatpush1.msra.mxu0 0.0
      %1290 = vmatprep.subr.mxu0 0.0
      %1291 = vmatpush1.msra.mxu0 0.0
      %1292 = vmatprep.subr.mxu0 0.0
      %1293 = vmatpush1.msra.mxu0 0.0
      %1294 = vmatprep.subr.mxu0 0.0
      %1295 = vmatpush1.msra.mxu0 0.0
      %1296 = vmatprep.subr.mxu0 0.0
      %1297 = vmatpush1.msra.mxu0 0.0
      %1298 = vmatprep.subr.mxu0 0.0
      %1299 = vmatpush1.msra.mxu0 0.0
      %1300 = vmatprep.subr.mxu0 0.0
      %1301 = vmatpush1.msra.mxu0 0.0
      %1302 = vmatprep.subr.mxu0 0.0
      %1303 = vmatpush1.msra.mxu0 0.0
      %1304 = vmatprep.subr.mxu0 0.0
      %1305 = vmatpush1.msra.mxu0 0.0
      %1306 = vmatprep.subr.mxu0 0.0
      %1307 = vmatpush1.msra.mxu0 0.0
      %1308 = vmatprep.subr.mxu0 0.0
      %1309 = vmatpush1.msra.mxu0 0.0
      %1310 = vmatprep.subr.mxu0 0.0
      %1311 = vmatpush1.msra.mxu0 0.0
      %1312 = vmatprep.subr.mxu0 0.0
      %1313 = vmatpush1.msra.mxu0 0.0
      %1314 = vmatprep.subr.mxu0 0.0
      %1315 = vmatpush1.msra.mxu0 0.0
      %1316 = vmatprep.mubr.f32.mxu0 0.0
      %1317 = vmatmul.mubr.f32.gmra.mrb[0].mxu0 %v1250
      %v1318 = vpop.f32.mrb[0].mxu0
      %v1319 = vadd.f32 0.0, %v1318
      %v1320 = vpop.f32.mrb[0].mxu0
      %1321 = vdwg.mxu0
      %v1322 = vsel %vm864, %v1319, -inf
      %1323 = vmax.xlane.f32.xlu0 %v1322
      %v1324 = vpop.xlane.xlu0 %1323
      %v1325 = vsub.f32 %v1319, %v1324
      %v1326 = vmul.f32 %v1325, 1.442695
      %v1327 = vpow.pop %v1326
      %v1328 = vsel %vm864, %v1327, 0.0
      %1329 = vadd.xlane.f32.xlu0 %v1328
      %v1330 = vpop.xlane.xlu0 %1329
      %v1331 = vrcp.pop %v1330
      %v1332 = vmul.f32 %v1327, %v1331
      %v1334 = vsel %vm864, %v786, 0
      %v1337 = vsel %vm864, %v1332, 0
      %1339 = vmatprep.subr.mxu0 0.0
      %1340 = vmatpush1.xpose.msra.mxu0 %v1337
      %1341 = vmatprep.subr.mxu0 0.0
      %1342 = vmatpush1.xpose.msra.mxu0 0.0
      %1343 = vmatprep.subr.mxu0 0.0
      %1344 = vmatpush1.xpose.msra.mxu0 0.0
      %1345 = vmatprep.subr.mxu0 0.0
      %1346 = vmatpush1.xpose.msra.mxu0 0.0
      %1347 = vmatprep.subr.mxu0 0.0
      %1348 = vmatpush1.xpose.msra.mxu0 0.0
      %1349 = vmatprep.subr.mxu0 0.0
      %1350 = vmatpush1.xpose.msra.mxu0 0.0
      %1351 = vmatprep.subr.mxu0 0.0
      %1352 = vmatpush1.xpose.msra.mxu0 0.0
      %1353 = vmatprep.subr.mxu0 0.0
      %1354 = vmatpush1.xpose.msra.mxu0 0.0
      %1355 = vmatprep.subr.mxu0 0.0
      %1356 = vmatpush1.xpose.msra.mxu0 0.0
      %1357 = vmatprep.subr.mxu0 0.0
      %1358 = vmatpush1.xpose.msra.mxu0 0.0
      %1359 = vmatprep.subr.mxu0 0.0
      %1360 = vmatpush1.xpose.msra.mxu0 0.0
      %1361 = vmatprep.subr.mxu0 0.0
      %1362 = vmatpush1.xpose.msra.mxu0 0.0
      %1363 = vmatprep.subr.mxu0 0.0
      %1364 = vmatpush1.xpose.msra.mxu0 0.0
      %1365 = vmatprep.subr.mxu0 0.0
      %1366 = vmatpush1.xpose.msra.mxu0 0.0
      %1367 = vmatprep.subr.mxu0 0.0
      %1368 = vmatpush1.xpose.msra.mxu0 0.0
      %1369 = vmatprep.subr.mxu0 0.0
      %1370 = vmatpush1.xpose.msra.mxu0 0.0
      %1371 = vmatprep.subr.mxu0 0.0
      %1372 = vmatpush1.xpose.msra.mxu0 0.0
      %1373 = vmatprep.subr.mxu0 0.0
      %1374 = vmatpush1.xpose.msra.mxu0 0.0
      %1375 = vmatprep.subr.mxu0 0.0
      %1376 = vmatpush1.xpose.msra.mxu0 0.0
      %1377 = vmatprep.subr.mxu0 0.0
      %1378 = vmatpush1.xpose.msra.mxu0 0.0
      %1379 = vmatprep.subr.mxu0 0.0
      %1380 = vmatpush1.xpose.msra.mxu0 0.0
      %1381 = vmatprep.subr.mxu0 0.0
      %1382 = vmatpush1.xpose.msra.mxu0 0.0
      %1383 = vmatprep.subr.mxu0 0.0
      %1384 = vmatpush1.xpose.msra.mxu0 0.0
      %1385 = vmatprep.subr.mxu0 0.0
      %1386 = vmatpush1.xpose.msra.mxu0 0.0
      %1387 = vmatprep.subr.mxu0 0.0
      %1388 = vmatpush1.xpose.msra.mxu0 0.0
      %1389 = vmatprep.subr.mxu0 0.0
      %1390 = vmatpush1.xpose.msra.mxu0 0.0
      %1391 = vmatprep.subr.mxu0 0.0
      %1392 = vmatpush1.xpose.msra.mxu0 0.0
      %1393 = vmatprep.subr.mxu0 0.0
      %1394 = vmatpush1.xpose.msra.mxu0 0.0
      %1395 = vmatprep.subr.mxu0 0.0
      %1396 = vmatpush1.xpose.msra.mxu0 0.0
      %1397 = vmatprep.subr.mxu0 0.0
      %1398 = vmatpush1.xpose.msra.mxu0 0.0
      %1399 = vmatprep.subr.mxu0 0.0
      %1400 = vmatpush1.xpose.msra.mxu0 0.0
      %1401 = vmatprep.subr.mxu0 0.0
      %1402 = vmatpush1.xpose.msra.mxu0 0.0
      %1403 = vmatprep.mubr.f32.mxu0 0.0
      %1404 = vmatmul.mubr.f32.gmra.mrb[0].mxu0 %v1334
      %v1405 = vpop.f32.mrb[0].mxu0
      %v1406 = vadd.f32 0.0, %v1405
      %v1407 = vpop.f32.mrb[0].mxu0
      %1408 = vdwg.mxu0
      %1409 = vxpose.xlu0.b32.start [1/16] %v827, 128
      %1410 = vxpose.xlu0.b32.cont [2/16] 0.0, 128
      %1411 = vxpose.xlu0.b32.cont [3/16] 0.0, 128
      %1412 = vxpose.xlu0.b32.cont [4/16] 0.0, 128
      %1413 = vxpose.xlu0.b32.cont [5/16] 0.0, 128
      %1414 = vxpose.xlu0.b32.cont [6/16] 0.0, 128
      %1415 = vxpose.xlu0.b32.cont [7/16] 0.0, 128
      %1416 = vxpose.xlu0.b32.cont [8/16] 0.0, 128
      %1417 = vxpose.xlu0.b32.cont [9/16] 0.0, 128
      %1418 = vxpose.xlu0.b32.cont [10/16] 0.0, 128
      %1419 = vxpose.xlu0.b32.cont [11/16] 0.0, 128
      %1420 = vxpose.xlu0.b32.cont [12/16] 0.0, 128
      %1421 = vxpose.xlu0.b32.cont [13/16] 0.0, 128
      %1422 = vxpose.xlu0.b32.cont [14/16] 0.0, 128
      %1423 = vxpose.xlu0.b32.cont [15/16] 0.0, 128
      %1424 = vxpose.xlu0.b32.end [16/16] 0.0, 128
      %v1425 = vpop.trf.xlu0
      %v1426 = vpop.trf.xlu0
      %v1427 = vpop.trf.xlu0
      %v1428 = vpop.trf.xlu0
      %v1429 = vpop.trf.xlu0
      %v1430 = vpop.trf.xlu0
      %v1431 = vpop.trf.xlu0
      %v1432 = vpop.trf.xlu0
      %v1433 = vpop.trf.xlu0
      %v1434 = vpop.trf.xlu0
      %v1435 = vpop.trf.xlu0
      %v1436 = vpop.trf.xlu0
      %v1437 = vpop.trf.xlu0
      %v1438 = vpop.trf.xlu0
      %v1439 = vpop.trf.xlu0
      %v1440 = vpop.trf.xlu0
      %v1442 = vsel %vm864, %v1425, 0
      %1444 = vmatprep.subr.mxu0 0.0
      %1445 = vmatpush1.msra.mxu0 %v779
      %1446 = vmatprep.subr.mxu0 0.0
      %1447 = vmatpush1.msra.mxu0 0.0
      %1448 = vmatprep.subr.mxu0 0.0
      %1449 = vmatpush1.msra.mxu0 0.0
      %1450 = vmatprep.subr.mxu0 0.0
      %1451 = vmatpush1.msra.mxu0 0.0
      %1452 = vmatprep.subr.mxu0 0.0
      %1453 = vmatpush1.msra.mxu0 0.0
      %1454 = vmatprep.subr.mxu0 0.0
      %1455 = vmatpush1.msra.mxu0 0.0
      %1456 = vmatprep.subr.mxu0 0.0
      %1457 = vmatpush1.msra.mxu0 0.0
      %1458 = vmatprep.subr.mxu0 0.0
      %1459 = vmatpush1.msra.mxu0 0.0
      %1460 = vmatprep.subr.mxu0 0.0
      %1461 = vmatpush1.msra.mxu0 0.0
      %1462 = vmatprep.subr.mxu0 0.0
      %1463 = vmatpush1.msra.mxu0 0.0
      %1464 = vmatprep.subr.mxu0 0.0
      %1465 = vmatpush1.msra.mxu0 0.0
      %1466 = vmatprep.subr.mxu0 0.0
      %1467 = vmatpush1.msra.mxu0 0.0
      %1468 = vmatprep.subr.mxu0 0.0
      %1469 = vmatpush1.msra.mxu0 0.0
      %1470 = vmatprep.subr.mxu0 0.0
      %1471 = vmatpush1.msra.mxu0 0.0
      %1472 = vmatprep.subr.mxu0 0.0
      %1473 = vmatpush1.msra.mxu0 0.0
      %1474 = vmatprep.subr.mxu0 0.0
      %1475 = vmatpush1.msra.mxu0 0.0
      %1476 = vmatprep.subr.mxu0 0.0
      %1477 = vmatpush1.msra.mxu0 0.0
      %1478 = vmatprep.subr.mxu0 0.0
      %1479 = vmatpush1.msra.mxu0 0.0
      %1480 = vmatprep.subr.mxu0 0.0
      %1481 = vmatpush1.msra.mxu0 0.0
      %1482 = vmatprep.subr.mxu0 0.0
      %1483 = vmatpush1.msra.mxu0 0.0
      %1484 = vmatprep.subr.mxu0 0.0
      %1485 = vmatpush1.msra.mxu0 0.0
      %1486 = vmatprep.subr.mxu0 0.0
      %1487 = vmatpush1.msra.mxu0 0.0
      %1488 = vmatprep.subr.mxu0 0.0
      %1489 = vmatpush1.msra.mxu0 0.0
      %1490 = vmatprep.subr.mxu0 0.0
      %1491 = vmatpush1.msra.mxu0 0.0
      %1492 = vmatprep.subr.mxu0 0.0
      %1493 = vmatpush1.msra.mxu0 0.0
      %1494 = vmatprep.subr.mxu0 0.0
      %1495 = vmatpush1.msra.mxu0 0.0
      %1496 = vmatprep.subr.mxu0 0.0
      %1497 = vmatpush1.msra.mxu0 0.0
      %1498 = vmatprep.subr.mxu0 0.0
      %1499 = vmatpush1.msra.mxu0 0.0
      %1500 = vmatprep.subr.mxu0 0.0
      %1501 = vmatpush1.msra.mxu0 0.0
      %1502 = vmatprep.subr.mxu0 0.0
      %1503 = vmatpush1.msra.mxu0 0.0
      %1504 = vmatprep.subr.mxu0 0.0
      %1505 = vmatpush1.msra.mxu0 0.0
      %1506 = vmatprep.subr.mxu0 0.0
      %1507 = vmatpush1.msra.mxu0 0.0
      %1508 = vmatprep.mubr.f32.mxu0 0.0
      %1509 = vmatmul.mubr.f32.gmra.mrb[0].mxu0 %v1442
      %v1510 = vpop.f32.mrb[0].mxu0
      %v1511 = vadd.f32 0.0, %v1510
      %v1512 = vpop.f32.mrb[0].mxu0
      %1513 = vdwg.mxu0
      %v1514 = vsel %vm864, %v1511, -inf
      %1515 = vmax.xlane.f32.xlu0 %v1514
      %v1516 = vpop.xlane.xlu0 %1515
      %v1517 = vsub.f32 %v1511, %v1516
      %v1518 = vmul.f32 %v1517, 1.442695
      %v1519 = vpow.pop %v1518
      %v1520 = vsel %vm864, %v1519, 0.0
      %1521 = vadd.xlane.f32.xlu0 %v1520
      %v1522 = vpop.xlane.xlu0 %1521
      %v1523 = vrcp.pop %v1522
      %v1524 = vmul.f32 %v1519, %v1523
      %v1526 = vsel %vm864, %v787, 0
      %v1529 = vsel %vm864, %v1524, 0
      %1531 = vmatprep.subr.mxu0 0.0
      %1532 = vmatpush1.xpose.msra.mxu0 %v1529
      %1533 = vmatprep.subr.mxu0 0.0
      %1534 = vmatpush1.xpose.msra.mxu0 0.0
      %1535 = vmatprep.subr.mxu0 0.0
      %1536 = vmatpush1.xpose.msra.mxu0 0.0
      %1537 = vmatprep.subr.mxu0 0.0
      %1538 = vmatpush1.xpose.msra.mxu0 0.0
      %1539 = vmatprep.subr.mxu0 0.0
      %1540 = vmatpush1.xpose.msra.mxu0 0.0
      %1541 = vmatprep.subr.mxu0 0.0
      %1542 = vmatpush1.xpose.msra.mxu0 0.0
      %1543 = vmatprep.subr.mxu0 0.0
      %1544 = vmatpush1.xpose.msra.mxu0 0.0
      %1545 = vmatprep.subr.mxu0 0.0
      %1546 = vmatpush1.xpose.msra.mxu0 0.0
      %1547 = vmatprep.subr.mxu0 0.0
      %1548 = vmatpush1.xpose.msra.mxu0 0.0
      %1549 = vmatprep.subr.mxu0 0.0
      %1550 = vmatpush1.xpose.msra.mxu0 0.0
      %1551 = vmatprep.subr.mxu0 0.0
      %1552 = vmatpush1.xpose.msra.mxu0 0.0
      %1553 = vmatprep.subr.mxu0 0.0
      %1554 = vmatpush1.xpose.msra.mxu0 0.0
      %1555 = vmatprep.subr.mxu0 0.0
      %1556 = vmatpush1.xpose.msra.mxu0 0.0
      %1557 = vmatprep.subr.mxu0 0.0
      %1558 = vmatpush1.xpose.msra.mxu0 0.0
      %1559 = vmatprep.subr.mxu0 0.0
      %1560 = vmatpush1.xpose.msra.mxu0 0.0
      %1561 = vmatprep.subr.mxu0 0.0
      %1562 = vmatpush1.xpose.msra.mxu0 0.0
      %1563 = vmatprep.subr.mxu0 0.0
      %1564 = vmatpush1.xpose.msra.mxu0 0.0
      %1565 = vmatprep.subr.mxu0 0.0
      %1566 = vmatpush1.xpose.msra.mxu0 0.0
      %1567 = vmatprep.subr.mxu0 0.0
      %1568 = vmatpush1.xpose.msra.mxu0 0.0
      %1569 = vmatprep.subr.mxu0 0.0
      %1570 = vmatpush1.xpose.msra.mxu0 0.0
      %1571 = vmatprep.subr.mxu0 0.0
      %1572 = vmatpush1.xpose.msra.mxu0 0.0
      %1573 = vmatprep.subr.mxu0 0.0
      %1574 = vmatpush1.xpose.msra.mxu0 0.0
      %1575 = vmatprep.subr.mxu0 0.0
      %1576 = vmatpush1.xpose.msra.mxu0 0.0
      %1577 = vmatprep.subr.mxu0 0.0
      %1578 = vmatpush1.xpose.msra.mxu0 0.0
      %1579 = vmatprep.subr.mxu0 0.0
      %1580 = vmatpush1.xpose.msra.mxu0 0.0
      %1581 = vmatprep.subr.mxu0 0.0
      %1582 = vmatpush1.xpose.msra.mxu0 0.0
      %1583 = vmatprep.subr.mxu0 0.0
      %1584 = vmatpush1.xpose.msra.mxu0 0.0
      %1585 = vmatprep.subr.mxu0 0.0
      %1586 = vmatpush1.xpose.msra.mxu0 0.0
      %1587 = vmatprep.subr.mxu0 0.0
      %1588 = vmatpush1.xpose.msra.mxu0 0.0
      %1589 = vmatprep.subr.mxu0 0.0
      %1590 = vmatpush1.xpose.msra.mxu0 0.0
      %1591 = vmatprep.subr.mxu0 0.0
      %1592 = vmatpush1.xpose.msra.mxu0 0.0
      %1593 = vmatprep.subr.mxu0 0.0
      %1594 = vmatpush1.xpose.msra.mxu0 0.0
      %1595 = vmatprep.mubr.f32.mxu0 0.0
      %1596 = vmatmul.mubr.f32.gmra.mrb[0].mxu0 %v1526
      %v1597 = vpop.f32.mrb[0].mxu0
      %v1598 = vadd.f32 0.0, %v1597
      %v1599 = vpop.f32.mrb[0].mxu0
      %1600 = vdwg.mxu0
      %1601 = vxpose.xlu0.b32.start [1/16] %v828, 128
      %1602 = vxpose.xlu0.b32.cont [2/16] 0.0, 128
      %1603 = vxpose.xlu0.b32.cont [3/16] 0.0, 128
      %1604 = vxpose.xlu0.b32.cont [4/16] 0.0, 128
      %1605 = vxpose.xlu0.b32.cont [5/16] 0.0, 128
      %1606 = vxpose.xlu0.b32.cont [6/16] 0.0, 128
      %1607 = vxpose.xlu0.b32.cont [7/16] 0.0, 128
      %1608 = vxpose.xlu0.b32.cont [8/16] 0.0, 128
      %1609 = vxpose.xlu0.b32.cont [9/16] 0.0, 128
      %1610 = vxpose.xlu0.b32.cont [10/16] 0.0, 128
      %1611 = vxpose.xlu0.b32.cont [11/16] 0.0, 128
      %1612 = vxpose.xlu0.b32.cont [12/16] 0.0, 128
      %1613 = vxpose.xlu0.b32.cont [13/16] 0.0, 128
      %1614 = vxpose.xlu0.b32.cont [14/16] 0.0, 128
      %1615 = vxpose.xlu0.b32.cont [15/16] 0.0, 128
      %1616 = vxpose.xlu0.b32.end [16/16] 0.0, 128
      %v1617 = vpop.trf.xlu0
      %v1618 = vpop.trf.xlu0
      %v1619 = vpop.trf.xlu0
      %v1620 = vpop.trf.xlu0
      %v1621 = vpop.trf.xlu0
      %v1622 = vpop.trf.xlu0
      %v1623 = vpop.trf.xlu0
      %v1624 = vpop.trf.xlu0
      %v1625 = vpop.trf.xlu0
      %v1626 = vpop.trf.xlu0
      %v1627 = vpop.trf.xlu0
      %v1628 = vpop.trf.xlu0
      %v1629 = vpop.trf.xlu0
      %v1630 = vpop.trf.xlu0
      %v1631 = vpop.trf.xlu0
      %v1632 = vpop.trf.xlu0
      %v1634 = vsel %vm864, %v1617, 0
      %1636 = vmatprep.subr.mxu0 0.0
      %1637 = vmatpush1.msra.mxu0 %v780
      %1638 = vmatprep.subr.mxu0 0.0
      %1639 = vmatpush1.msra.mxu0 0.0
      %1640 = vmatprep.subr.mxu0 0.0
      %1641 = vmatpush1.msra.mxu0 0.0
      %1642 = vmatprep.subr.mxu0 0.0
      %1643 = vmatpush1.msra.mxu0 0.0
      %1644 = vmatprep.subr.mxu0 0.0
      %1645 = vmatpush1.msra.mxu0 0.0
      %1646 = vmatprep.subr.mxu0 0.0
      %1647 = vmatpush1.msra.mxu0 0.0
      %1648 = vmatprep.subr.mxu0 0.0
      %1649 = vmatpush1.msra.mxu0 0.0
      %1650 = vmatprep.subr.mxu0 0.0
      %1651 = vmatpush1.msra.mxu0 0.0
      %1652 = vmatprep.subr.mxu0 0.0
      %1653 = vmatpush1.msra.mxu0 0.0
      %1654 = vmatprep.subr.mxu0 0.0
      %1655 = vmatpush1.msra.mxu0 0.0
      %1656 = vmatprep.subr.mxu0 0.0
      %1657 = vmatpush1.msra.mxu0 0.0
      %1658 = vmatprep.subr.mxu0 0.0
      %1659 = vmatpush1.msra.mxu0 0.0
      %1660 = vmatprep.subr.mxu0 0.0
      %1661 = vmatpush1.msra.mxu0 0.0
      %1662 = vmatprep.subr.mxu0 0.0
      %1663 = vmatpush1.msra.mxu0 0.0
      %1664 = vmatprep.subr.mxu0 0.0
      %1665 = vmatpush1.msra.mxu0 0.0
      %1666 = vmatprep.subr.mxu0 0.0
      %1667 = vmatpush1.msra.mxu0 0.0
      %1668 = vmatprep.subr.mxu0 0.0
      %1669 = vmatpush1.msra.mxu0 0.0
      %1670 = vmatprep.subr.mxu0 0.0
      %1671 = vmatpush1.msra.mxu0 0.0
      %1672 = vmatprep.subr.mxu0 0.0
      %1673 = vmatpush1.msra.mxu0 0.0
      %1674 = vmatprep.subr.mxu0 0.0
      %1675 = vmatpush1.msra.mxu0 0.0
      %1676 = vmatprep.subr.mxu0 0.0
      %1677 = vmatpush1.msra.mxu0 0.0
      %1678 = vmatprep.subr.mxu0 0.0
      %1679 = vmatpush1.msra.mxu0 0.0
      %1680 = vmatprep.subr.mxu0 0.0
      %1681 = vmatpush1.msra.mxu0 0.0
      %1682 = vmatprep.subr.mxu0 0.0
      %1683 = vmatpush1.msra.mxu0 0.0
      %1684 = vmatprep.subr.mxu0 0.0
      %1685 = vmatpush1.msra.mxu0 0.0
      %1686 = vmatprep.subr.mxu0 0.0
      %1687 = vmatpush1.msra.mxu0 0.0
      %1688 = vmatprep.subr.mxu0 0.0
      %1689 = vmatpush1.msra.mxu0 0.0
      %1690 = vmatprep.subr.mxu0 0.0
      %1691 = vmatpush1.msra.mxu0 0.0
      %1692 = vmatprep.subr.mxu0 0.0
      %1693 = vmatpush1.msra.mxu0 0.0
      %1694 = vmatprep.subr.mxu0 0.0
      %1695 = vmatpush1.msra.mxu0 0.0
      %1696 = vmatprep.subr.mxu0 0.0
      %1697 = vmatpush1.msra.mxu0 0.0
      %1698 = vmatprep.subr.mxu0 0.0
      %1699 = vmatpush1.msra.mxu0 0.0
      %1700 = vmatprep.mubr.f32.mxu0 0.0
      %1701 = vmatmul.mubr.f32.gmra.mrb[0].mxu0 %v1634
      %v1702 = vpop.f32.mrb[0].mxu0
      %v1703 = vadd.f32 0.0, %v1702
      %v1704 = vpop.f32.mrb[0].mxu0
      %1705 = vdwg.mxu0
      %v1706 = vsel %vm864, %v1703, -inf
      %1707 = vmax.xlane.f32.xlu0 %v1706
      %v1708 = vpop.xlane.xlu0 %1707
      %v1709 = vsub.f32 %v1703, %v1708
      %v1710 = vmul.f32 %v1709, 1.442695
      %v1711 = vpow.pop %v1710
      %v1712 = vsel %vm864, %v1711, 0.0
      %1713 = vadd.xlane.f32.xlu0 %v1712
      %v1714 = vpop.xlane.xlu0 %1713
      %v1715 = vrcp.pop %v1714
      %v1716 = vmul.f32 %v1711, %v1715
      %v1718 = vsel %vm864, %v788, 0
      %v1721 = vsel %vm864, %v1716, 0
      %1723 = vmatprep.subr.mxu0 0.0
      %1724 = vmatpush1.xpose.msra.mxu0 %v1721
      %1725 = vmatprep.subr.mxu0 0.0
      %1726 = vmatpush1.xpose.msra.mxu0 0.0
      %1727 = vmatprep.subr.mxu0 0.0
      %1728 = vmatpush1.xpose.msra.mxu0 0.0
      %1729 = vmatprep.subr.mxu0 0.0
      %1730 = vmatpush1.xpose.msra.mxu0 0.0
      %1731 = vmatprep.subr.mxu0 0.0
      %1732 = vmatpush1.xpose.msra.mxu0 0.0
      %1733 = vmatprep.subr.mxu0 0.0
      %1734 = vmatpush1.xpose.msra.mxu0 0.0
      %1735 = vmatprep.subr.mxu0 0.0
      %1736 = vmatpush1.xpose.msra.mxu0 0.0
      %1737 = vmatprep.subr.mxu0 0.0
      %1738 = vmatpush1.xpose.msra.mxu0 0.0
      %1739 = vmatprep.subr.mxu0 0.0
      %1740 = vmatpush1.xpose.msra.mxu0 0.0
      %1741 = vmatprep.subr.mxu0 0.0
      %1742 = vmatpush1.xpose.msra.mxu0 0.0
      %1743 = vmatprep.subr.mxu0 0.0
      %1744 = vmatpush1.xpose.msra.mxu0 0.0
      %1745 = vmatprep.subr.mxu0 0.0
      %1746 = vmatpush1.xpose.msra.mxu0 0.0
      %1747 = vmatprep.subr.mxu0 0.0
      %1748 = vmatpush1.xpose.msra.mxu0 0.0
      %1749 = vmatprep.subr.mxu0 0.0
      %1750 = vmatpush1.xpose.msra.mxu0 0.0
      %1751 = vmatprep.subr.mxu0 0.0
      %1752 = vmatpush1.xpose.msra.mxu0 0.0
      %1753 = vmatprep.subr.mxu0 0.0
      %1754 = vmatpush1.xpose.msra.mxu0 0.0
      %1755 = vmatprep.subr.mxu0 0.0
      %1756 = vmatpush1.xpose.msra.mxu0 0.0
      %1757 = vmatprep.subr.mxu0 0.0
      %1758 = vmatpush1.xpose.msra.mxu0 0.0
      %1759 = vmatprep.subr.mxu0 0.0
      %1760 = vmatpush1.xpose.msra.mxu0 0.0
      %1761 = vmatprep.subr.mxu0 0.0
      %1762 = vmatpush1.xpose.msra.mxu0 0.0
      %1763 = vmatprep.subr.mxu0 0.0
      %1764 = vmatpush1.xpose.msra.mxu0 0.0
      %1765 = vmatprep.subr.mxu0 0.0
      %1766 = vmatpush1.xpose.msra.mxu0 0.0
      %1767 = vmatprep.subr.mxu0 0.0
      %1768 = vmatpush1.xpose.msra.mxu0 0.0
      %1769 = vmatprep.subr.mxu0 0.0
      %1770 = vmatpush1.xpose.msra.mxu0 0.0
      %1771 = vmatprep.subr.mxu0 0.0
      %1772 = vmatpush1.xpose.msra.mxu0 0.0
      %1773 = vmatprep.subr.mxu0 0.0
      %1774 = vmatpush1.xpose.msra.mxu0 0.0
      %1775 = vmatprep.subr.mxu0 0.0
      %1776 = vmatpush1.xpose.msra.mxu0 0.0
      %1777 = vmatprep.subr.mxu0 0.0
      %1778 = vmatpush1.xpose.msra.mxu0 0.0
      %1779 = vmatprep.subr.mxu0 0.0
      %1780 = vmatpush1.xpose.msra.mxu0 0.0
      %1781 = vmatprep.subr.mxu0 0.0
      %1782 = vmatpush1.xpose.msra.mxu0 0.0
      %1783 = vmatprep.subr.mxu0 0.0
      %1784 = vmatpush1.xpose.msra.mxu0 0.0
      %1785 = vmatprep.subr.mxu0 0.0
      %1786 = vmatpush1.xpose.msra.mxu0 0.0
      %1787 = vmatprep.mubr.f32.mxu0 0.0
      %1788 = vmatmul.mubr.f32.gmra.mrb[0].mxu0 %v1718
      %v1789 = vpop.f32.mrb[0].mxu0
      %v1790 = vadd.f32 0.0, %v1789
      %v1791 = vpop.f32.mrb[0].mxu0
      %1792 = vdwg.mxu0
      %1793 = vxpose.xlu0.b32.start [1/16] %v829, 128
      %1794 = vxpose.xlu0.b32.cont [2/16] 0.0, 128
      %1795 = vxpose.xlu0.b32.cont [3/16] 0.0, 128
      %1796 = vxpose.xlu0.b32.cont [4/16] 0.0, 128
      %1797 = vxpose.xlu0.b32.cont [5/16] 0.0, 128
      %1798 = vxpose.xlu0.b32.cont [6/16] 0.0, 128
      %1799 = vxpose.xlu0.b32.cont [7/16] 0.0, 128
      %1800 = vxpose.xlu0.b32.cont [8/16] 0.0, 128
      %1801 = vxpose.xlu0.b32.cont [9/16] 0.0, 128
      %1802 = vxpose.xlu0.b32.cont [10/16] 0.0, 128
      %1803 = vxpose.xlu0.b32.cont [11/16] 0.0, 128
      %1804 = vxpose.xlu0.b32.cont [12/16] 0.0, 128
      %1805 = vxpose.xlu0.b32.cont [13/16] 0.0, 128
      %1806 = vxpose.xlu0.b32.cont [14/16] 0.0, 128
      %1807 = vxpose.xlu0.b32.cont [15/16] 0.0, 128
      %1808 = vxpose.xlu0.b32.end [16/16] 0.0, 128
      %v1809 = vpop.trf.xlu0
      %v1810 = vpop.trf.xlu0
      %v1811 = vpop.trf.xlu0
      %v1812 = vpop.trf.xlu0
      %v1813 = vpop.trf.xlu0
      %v1814 = vpop.trf.xlu0
      %v1815 = vpop.trf.xlu0
      %v1816 = vpop.trf.xlu0
      %v1817 = vpop.trf.xlu0
      %v1818 = vpop.trf.xlu0
      %v1819 = vpop.trf.xlu0
      %v1820 = vpop.trf.xlu0
      %v1821 = vpop.trf.xlu0
      %v1822 = vpop.trf.xlu0
      %v1823 = vpop.trf.xlu0
      %v1824 = vpop.trf.xlu0
      %v1826 = vsel %vm864, %v1809, 0
      %1828 = vmatprep.subr.mxu0 0.0
      %1829 = vmatpush1.msra.mxu0 %v781
      %1830 = vmatprep.subr.mxu0 0.0
      %1831 = vmatpush1.msra.mxu0 0.0
      %1832 = vmatprep.subr.mxu0 0.0
      %1833 = vmatpush1.msra.mxu0 0.0
      %1834 = vmatprep.subr.mxu0 0.0
      %1835 = vmatpush1.msra.mxu0 0.0
      %1836 = vmatprep.subr.mxu0 0.0
      %1837 = vmatpush1.msra.mxu0 0.0
      %1838 = vmatprep.subr.mxu0 0.0
      %1839 = vmatpush1.msra.mxu0 0.0
      %1840 = vmatprep.subr.mxu0 0.0
      %1841 = vmatpush1.msra.mxu0 0.0
      %1842 = vmatprep.subr.mxu0 0.0
      %1843 = vmatpush1.msra.mxu0 0.0
      %1844 = vmatprep.subr.mxu0 0.0
      %1845 = vmatpush1.msra.mxu0 0.0
      %1846 = vmatprep.subr.mxu0 0.0
      %1847 = vmatpush1.msra.mxu0 0.0
      %1848 = vmatprep.subr.mxu0 0.0
      %1849 = vmatpush1.msra.mxu0 0.0
      %1850 = vmatprep.subr.mxu0 0.0
      %1851 = vmatpush1.msra.mxu0 0.0
      %1852 = vmatprep.subr.mxu0 0.0
      %1853 = vmatpush1.msra.mxu0 0.0
      %1854 = vmatprep.subr.mxu0 0.0
      %1855 = vmatpush1.msra.mxu0 0.0
      %1856 = vmatprep.subr.mxu0 0.0
      %1857 = vmatpush1.msra.mxu0 0.0
      %1858 = vmatprep.subr.mxu0 0.0
      %1859 = vmatpush1.msra.mxu0 0.0
      %1860 = vmatprep.subr.mxu0 0.0
      %1861 = vmatpush1.msra.mxu0 0.0
      %1862 = vmatprep.subr.mxu0 0.0
      %1863 = vmatpush1.msra.mxu0 0.0
      %1864 = vmatprep.subr.mxu0 0.0
      %1865 = vmatpush1.msra.mxu0 0.0
      %1866 = vmatprep.subr.mxu0 0.0
      %1867 = vmatpush1.msra.mxu0 0.0
      %1868 = vmatprep.subr.mxu0 0.0
      %1869 = vmatpush1.msra.mxu0 0.0
      %1870 = vmatprep.subr.mxu0 0.0
      %1871 = vmatpush1.msra.mxu0 0.0
      %1872 = vmatprep.subr.mxu0 0.0
      %1873 = vmatpush1.msra.mxu0 0.0
      %1874 = vmatprep.subr.mxu0 0.0
      %1875 = vmatpush1.msra.mxu0 0.0
      %1876 = vmatprep.subr.mxu0 0.0
      %1877 = vmatpush1.msra.mxu0 0.0
      %1878 = vmatprep.subr.mxu0 0.0
      %1879 = vmatpush1.msra.mxu0 0.0
      %1880 = vmatprep.subr.mxu0 0.0
      %1881 = vmatpush1.msra.mxu0 0.0
      %1882 = vmatprep.subr.mxu0 0.0
      %1883 = vmatpush1.msra.mxu0 0.0
      %1884 = vmatprep.subr.mxu0 0.0
      %1885 = vmatpush1.msra.mxu0 0.0
      %1886 = vmatprep.subr.mxu0 0.0
      %1887 = vmatpush1.msra.mxu0 0.0
      %1888 = vmatprep.subr.mxu0 0.0
      %1889 = vmatpush1.msra.mxu0 0.0
      %1890 = vmatprep.subr.mxu0 0.0
      %1891 = vmatpush1.msra.mxu0 0.0
      %1892 = vmatprep.mubr.f32.mxu0 0.0
      %1893 = vmatmul.mubr.f32.gmra.mrb[0].mxu0 %v1826
      %v1894 = vpop.f32.mrb[0].mxu0
      %v1895 = vadd.f32 0.0, %v1894
      %v1896 = vpop.f32.mrb[0].mxu0
      %1897 = vdwg.mxu0
      %v1898 = vsel %vm864, %v1895, -inf
      %1899 = vmax.xlane.f32.xlu0 %v1898
      %v1900 = vpop.xlane.xlu0 %1899
      %v1901 = vsub.f32 %v1895, %v1900
      %v1902 = vmul.f32 %v1901, 1.442695
      %v1903 = vpow.pop %v1902
      %v1904 = vsel %vm864, %v1903, 0.0
      %1905 = vadd.xlane.f32.xlu0 %v1904
      %v1906 = vpop.xlane.xlu0 %1905
      %v1907 = vrcp.pop %v1906
      %v1908 = vmul.f32 %v1903, %v1907
      %v1910 = vsel %vm864, %v789, 0
      %v1913 = vsel %vm864, %v1908, 0
      %1915 = vmatprep.subr.mxu0 0.0
      %1916 = vmatpush1.xpose.msra.mxu0 %v1913
      %1917 = vmatprep.subr.mxu0 0.0
      %1918 = vmatpush1.xpose.msra.mxu0 0.0
      %1919 = vmatprep.subr.mxu0 0.0
      %1920 = vmatpush1.xpose.msra.mxu0 0.0
      %1921 = vmatprep.subr.mxu0 0.0
      %1922 = vmatpush1.xpose.msra.mxu0 0.0
      %1923 = vmatprep.subr.mxu0 0.0
      %1924 = vmatpush1.xpose.msra.mxu0 0.0
      %1925 = vmatprep.subr.mxu0 0.0
      %1926 = vmatpush1.xpose.msra.mxu0 0.0
      %1927 = vmatprep.subr.mxu0 0.0
      %1928 = vmatpush1.xpose.msra.mxu0 0.0
      %1929 = vmatprep.subr.mxu0 0.0
      %1930 = vmatpush1.xpose.msra.mxu0 0.0
      %1931 = vmatprep.subr.mxu0 0.0
      %1932 = vmatpush1.xpose.msra.mxu0 0.0
      %1933 = vmatprep.subr.mxu0 0.0
      %1934 = vmatpush1.xpose.msra.mxu0 0.0
      %1935 = vmatprep.subr.mxu0 0.0
      %1936 = vmatpush1.xpose.msra.mxu0 0.0
      %1937 = vmatprep.subr.mxu0 0.0
      %1938 = vmatpush1.xpose.msra.mxu0 0.0
      %1939 = vmatprep.subr.mxu0 0.0
      %1940 = vmatpush1.xpose.msra.mxu0 0.0
      %1941 = vmatprep.subr.mxu0 0.0
      %1942 = vmatpush1.xpose.msra.mxu0 0.0
      %1943 = vmatprep.subr.mxu0 0.0
      %1944 = vmatpush1.xpose.msra.mxu0 0.0
      %1945 = vmatprep.subr.mxu0 0.0
      %1946 = vmatpush1.xpose.msra.mxu0 0.0
      %1947 = vmatprep.subr.mxu0 0.0
      %1948 = vmatpush1.xpose.msra.mxu0 0.0
      %1949 = vmatprep.subr.mxu0 0.0
      %1950 = vmatpush1.xpose.msra.mxu0 0.0
      %1951 = vmatprep.subr.mxu0 0.0
      %1952 = vmatpush1.xpose.msra.mxu0 0.0
      %1953 = vmatprep.subr.mxu0 0.0
      %1954 = vmatpush1.xpose.msra.mxu0 0.0
      %1955 = vmatprep.subr.mxu0 0.0
      %1956 = vmatpush1.xpose.msra.mxu0 0.0
      %1957 = vmatprep.subr.mxu0 0.0
      %1958 = vmatpush1.xpose.msra.mxu0 0.0
      %1959 = vmatprep.subr.mxu0 0.0
      %1960 = vmatpush1.xpose.msra.mxu0 0.0
      %1961 = vmatprep.subr.mxu0 0.0
      %1962 = vmatpush1.xpose.msra.mxu0 0.0
      %1963 = vmatprep.subr.mxu0 0.0
      %1964 = vmatpush1.xpose.msra.mxu0 0.0
      %1965 = vmatprep.subr.mxu0 0.0
      %1966 = vmatpush1.xpose.msra.mxu0 0.0
      %1967 = vmatprep.subr.mxu0 0.0
      %1968 = vmatpush1.xpose.msra.mxu0 0.0
      %1969 = vmatprep.subr.mxu0 0.0
      %1970 = vmatpush1.xpose.msra.mxu0 0.0
      %1971 = vmatprep.subr.mxu0 0.0
      %1972 = vmatpush1.xpose.msra.mxu0 0.0
      %1973 = vmatprep.subr.mxu0 0.0
      %1974 = vmatpush1.xpose.msra.mxu0 0.0
      %1975 = vmatprep.subr.mxu0 0.0
      %1976 = vmatpush1.xpose.msra.mxu0 0.0
      %1977 = vmatprep.subr.mxu0 0.0
      %1978 = vmatpush1.xpose.msra.mxu0 0.0
      %1979 = vmatprep.mubr.f32.mxu0 0.0
      %1980 = vmatmul.mubr.f32.gmra.mrb[0].mxu0 %v1910
      %v1981 = vpop.f32.mrb[0].mxu0
      %v1982 = vadd.f32 0.0, %v1981
      %v1983 = vpop.f32.mrb[0].mxu0
      %1984 = vdwg.mxu0
      %1985 = vxpose.xlu0.b32.start [1/16] %v830, 128
      %1986 = vxpose.xlu0.b32.cont [2/16] 0.0, 128
      %1987 = vxpose.xlu0.b32.cont [3/16] 0.0, 128
      %1988 = vxpose.xlu0.b32.cont [4/16] 0.0, 128
      %1989 = vxpose.xlu0.b32.cont [5/16] 0.0, 128
      %1990 = vxpose.xlu0.b32.cont [6/16] 0.0, 128
      %1991 = vxpose.xlu0.b32.cont [7/16] 0.0, 128
      %1992 = vxpose.xlu0.b32.cont [8/16] 0.0, 128
      %1993 = vxpose.xlu0.b32.cont [9/16] 0.0, 128
      %1994 = vxpose.xlu0.b32.cont [10/16] 0.0, 128
      %1995 = vxpose.xlu0.b32.cont [11/16] 0.0, 128
      %1996 = vxpose.xlu0.b32.cont [12/16] 0.0, 128
      %1997 = vxpose.xlu0.b32.cont [13/16] 0.0, 128
      %1998 = vxpose.xlu0.b32.cont [14/16] 0.0, 128
      %1999 = vxpose.xlu0.b32.cont [15/16] 0.0, 128
      %2000 = vxpose.xlu0.b32.end [16/16] 0.0, 128
      %v2001 = vpop.trf.xlu0
      %v2002 = vpop.trf.xlu0
      %v2003 = vpop.trf.xlu0
      %v2004 = vpop.trf.xlu0
      %v2005 = vpop.trf.xlu0
      %v2006 = vpop.trf.xlu0
      %v2007 = vpop.trf.xlu0
      %v2008 = vpop.trf.xlu0
      %v2009 = vpop.trf.xlu0
      %v2010 = vpop.trf.xlu0
      %v2011 = vpop.trf.xlu0
      %v2012 = vpop.trf.xlu0
      %v2013 = vpop.trf.xlu0
      %v2014 = vpop.trf.xlu0
      %v2015 = vpop.trf.xlu0
      %v2016 = vpop.trf.xlu0
      %v2018 = vsel %vm864, %v2001, 0
      %2020 = vmatprep.subr.mxu0 0.0
      %2021 = vmatpush1.msra.mxu0 %v782
      %2022 = vmatprep.subr.mxu0 0.0
      %2023 = vmatpush1.msra.mxu0 0.0
      %2024 = vmatprep.subr.mxu0 0.0
      %2025 = vmatpush1.msra.mxu0 0.0
      %2026 = vmatprep.subr.mxu0 0.0
      %2027 = vmatpush1.msra.mxu0 0.0
      %2028 = vmatprep.subr.mxu0 0.0
      %2029 = vmatpush1.msra.mxu0 0.0
      %2030 = vmatprep.subr.mxu0 0.0
      %2031 = vmatpush1.msra.mxu0 0.0
      %2032 = vmatprep.subr.mxu0 0.0
      %2033 = vmatpush1.msra.mxu0 0.0
      %2034 = vmatprep.subr.mxu0 0.0
      %2035 = vmatpush1.msra.mxu0 0.0
      %2036 = vmatprep.subr.mxu0 0.0
      %2037 = vmatpush1.msra.mxu0 0.0
      %2038 = vmatprep.subr.mxu0 0.0
      %2039 = vmatpush1.msra.mxu0 0.0
      %2040 = vmatprep.subr.mxu0 0.0
      %2041 = vmatpush1.msra.mxu0 0.0
      %2042 = vmatprep.subr.mxu0 0.0
      %2043 = vmatpush1.msra.mxu0 0.0
      %2044 = vmatprep.subr.mxu0 0.0
      %2045 = vmatpush1.msra.mxu0 0.0
      %2046 = vmatprep.subr.mxu0 0.0
      %2047 = vmatpush1.msra.mxu0 0.0
      %2048 = vmatprep.subr.mxu0 0.0
      %2049 = vmatpush1.msra.mxu0 0.0
      %2050 = vmatprep.subr.mxu0 0.0
      %2051 = vmatpush1.msra.mxu0 0.0
      %2052 = vmatprep.subr.mxu0 0.0
      %2053 = vmatpush1.msra.mxu0 0.0
      %2054 = vmatprep.subr.mxu0 0.0
      %2055 = vmatpush1.msra.mxu0 0.0
      %2056 = vmatprep.subr.mxu0 0.0
      %2057 = vmatpush1.msra.mxu0 0.0
      %2058 = vmatprep.subr.mxu0 0.0
      %2059 = vmatpush1.msra.mxu0 0.0
      %2060 = vmatprep.subr.mxu0 0.0
      %2061 = vmatpush1.msra.mxu0 0.0
      %2062 = vmatprep.subr.mxu0 0.0
      %2063 = vmatpush1.msra.mxu0 0.0
      %2064 = vmatprep.subr.mxu0 0.0
      %2065 = vmatpush1.msra.mxu0 0.0
      %2066 = vmatprep.subr.mxu0 0.0
      %2067 = vmatpush1.msra.mxu0 0.0
      %2068 = vmatprep.subr.mxu0 0.0
      %2069 = vmatpush1.msra.mxu0 0.0
      %2070 = vmatprep.subr.mxu0 0.0
      %2071 = vmatpush1.msra.mxu0 0.0
      %2072 = vmatprep.subr.mxu0 0.0
      %2073 = vmatpush1.msra.mxu0 0.0
      %2074 = vmatprep.subr.mxu0 0.0
      %2075 = vmatpush1.msra.mxu0 0.0
      %2076 = vmatprep.subr.mxu0 0.0
      %2077 = vmatpush1.msra.mxu0 0.0
      %2078 = vmatprep.subr.mxu0 0.0
      %2079 = vmatpush1.msra.mxu0 0.0
      %2080 = vmatprep.subr.mxu0 0.0
      %2081 = vmatpush1.msra.mxu0 0.0
      %2082 = vmatprep.subr.mxu0 0.0
      %2083 = vmatpush1.msra.mxu0 0.0
      %2084 = vmatprep.mubr.f32.mxu0 0.0
      %2085 = vmatmul.mubr.f32.gmra.mrb[0].mxu0 %v2018
      %v2086 = vpop.f32.mrb[0].mxu0
      %v2087 = vadd.f32 0.0, %v2086
      %v2088 = vpop.f32.mrb[0].mxu0
      %2089 = vdwg.mxu0
      %v2090 = vsel %vm864, %v2087, -inf
      %2091 = vmax.xlane.f32.xlu0 %v2090
      %v2092 = vpop.xlane.xlu0 %2091
      %v2093 = vsub.f32 %v2087, %v2092
      %v2094 = vmul.f32 %v2093, 1.442695
      %v2095 = vpow.pop %v2094
      %v2096 = vsel %vm864, %v2095, 0.0
      %2097 = vadd.xlane.f32.xlu0 %v2096
      %v2098 = vpop.xlane.xlu0 %2097
      %v2099 = vrcp.pop %v2098
      %v2100 = vmul.f32 %v2095, %v2099
      %v2102 = vsel %vm864, %v790, 0
      %v2105 = vsel %vm864, %v2100, 0
      %2107 = vmatprep.subr.mxu0 0.0
      %2108 = vmatpush1.xpose.msra.mxu0 %v2105
      %2109 = vmatprep.subr.mxu0 0.0
      %2110 = vmatpush1.xpose.msra.mxu0 0.0
      %2111 = vmatprep.subr.mxu0 0.0
      %2112 = vmatpush1.xpose.msra.mxu0 0.0
      %2113 = vmatprep.subr.mxu0 0.0
      %2114 = vmatpush1.xpose.msra.mxu0 0.0
      %2115 = vmatprep.subr.mxu0 0.0
      %2116 = vmatpush1.xpose.msra.mxu0 0.0
      %2117 = vmatprep.subr.mxu0 0.0
      %2118 = vmatpush1.xpose.msra.mxu0 0.0
      %2119 = vmatprep.subr.mxu0 0.0
      %2120 = vmatpush1.xpose.msra.mxu0 0.0
      %2121 = vmatprep.subr.mxu0 0.0
      %2122 = vmatpush1.xpose.msra.mxu0 0.0
      %2123 = vmatprep.subr.mxu0 0.0
      %2124 = vmatpush1.xpose.msra.mxu0 0.0
      %2125 = vmatprep.subr.mxu0 0.0
      %2126 = vmatpush1.xpose.msra.mxu0 0.0
      %2127 = vmatprep.subr.mxu0 0.0
      %2128 = vmatpush1.xpose.msra.mxu0 0.0
      %2129 = vmatprep.subr.mxu0 0.0
      %2130 = vmatpush1.xpose.msra.mxu0 0.0
      %2131 = vmatprep.subr.mxu0 0.0
      %2132 = vmatpush1.xpose.msra.mxu0 0.0
      %2133 = vmatprep.subr.mxu0 0.0
      %2134 = vmatpush1.xpose.msra.mxu0 0.0
      %2135 = vmatprep.subr.mxu0 0.0
      %2136 = vmatpush1.xpose.msra.mxu0 0.0
      %2137 = vmatprep.subr.mxu0 0.0
      %2138 = vmatpush1.xpose.msra.mxu0 0.0
      %2139 = vmatprep.subr.mxu0 0.0
      %2140 = vmatpush1.xpose.msra.mxu0 0.0
      %2141 = vmatprep.subr.mxu0 0.0
      %2142 = vmatpush1.xpose.msra.mxu0 0.0
      %2143 = vmatprep.subr.mxu0 0.0
      %2144 = vmatpush1.xpose.msra.mxu0 0.0
      %2145 = vmatprep.subr.mxu0 0.0
      %2146 = vmatpush1.xpose.msra.mxu0 0.0
      %2147 = vmatprep.subr.mxu0 0.0
      %2148 = vmatpush1.xpose.msra.mxu0 0.0
      %2149 = vmatprep.subr.mxu0 0.0
      %2150 = vmatpush1.xpose.msra.mxu0 0.0
      %2151 = vmatprep.subr.mxu0 0.0
      %2152 = vmatpush1.xpose.msra.mxu0 0.0
      %2153 = vmatprep.subr.mxu0 0.0
      %2154 = vmatpush1.xpose.msra.mxu0 0.0
      %2155 = vmatprep.subr.mxu0 0.0
      %2156 = vmatpush1.xpose.msra.mxu0 0.0
      %2157 = vmatprep.subr.mxu0 0.0
      %2158 = vmatpush1.xpose.msra.mxu0 0.0
      %2159 = vmatprep.subr.mxu0 0.0
      %2160 = vmatpush1.xpose.msra.mxu0 0.0
      %2161 = vmatprep.subr.mxu0 0.0
      %2162 = vmatpush1.xpose.msra.mxu0 0.0
      %2163 = vmatprep.subr.mxu0 0.0
      %2164 = vmatpush1.xpose.msra.mxu0 0.0
      %2165 = vmatprep.subr.mxu0 0.0
      %2166 = vmatpush1.xpose.msra.mxu0 0.0
      %2167 = vmatprep.subr.mxu0 0.0
      %2168 = vmatpush1.xpose.msra.mxu0 0.0
      %2169 = vmatprep.subr.mxu0 0.0
      %2170 = vmatpush1.xpose.msra.mxu0 0.0
      %2171 = vmatprep.mubr.f32.mxu0 0.0
      %2172 = vmatmul.mubr.f32.gmra.mrb[0].mxu0 %v2102
      %v2173 = vpop.f32.mrb[0].mxu0
      %v2174 = vadd.f32 0.0, %v2173
      %v2175 = vpop.f32.mrb[0].mxu0
      %2176 = vdwg.mxu0
      %2177 = vxpose.xlu0.b32.start [1/16] %v831, 128
      %2178 = vxpose.xlu0.b32.cont [2/16] 0.0, 128
      %2179 = vxpose.xlu0.b32.cont [3/16] 0.0, 128
      %2180 = vxpose.xlu0.b32.cont [4/16] 0.0, 128
      %2181 = vxpose.xlu0.b32.cont [5/16] 0.0, 128
      %2182 = vxpose.xlu0.b32.cont [6/16] 0.0, 128
      %2183 = vxpose.xlu0.b32.cont [7/16] 0.0, 128
      %2184 = vxpose.xlu0.b32.cont [8/16] 0.0, 128
      %2185 = vxpose.xlu0.b32.cont [9/16] 0.0, 128
      %2186 = vxpose.xlu0.b32.cont [10/16] 0.0, 128
      %2187 = vxpose.xlu0.b32.cont [11/16] 0.0, 128
      %2188 = vxpose.xlu0.b32.cont [12/16] 0.0, 128
      %2189 = vxpose.xlu0.b32.cont [13/16] 0.0, 128
      %2190 = vxpose.xlu0.b32.cont [14/16] 0.0, 128
      %2191 = vxpose.xlu0.b32.cont [15/16] 0.0, 128
      %2192 = vxpose.xlu0.b32.end [16/16] 0.0, 128
      %v2193 = vpop.trf.xlu0
      %v2194 = vpop.trf.xlu0
      %v2195 = vpop.trf.xlu0
      %v2196 = vpop.trf.xlu0
      %v2197 = vpop.trf.xlu0
      %v2198 = vpop.trf.xlu0
      %v2199 = vpop.trf.xlu0
      %v2200 = vpop.trf.xlu0
      %v2201 = vpop.trf.xlu0
      %v2202 = vpop.trf.xlu0
      %v2203 = vpop.trf.xlu0
      %v2204 = vpop.trf.xlu0
      %v2205 = vpop.trf.xlu0
      %v2206 = vpop.trf.xlu0
      %v2207 = vpop.trf.xlu0
      %v2208 = vpop.trf.xlu0
      %v2210 = vsel %vm864, %v2193, 0
      %2212 = vmatprep.subr.mxu0 0.0
      %2213 = vmatpush1.msra.mxu0 %v783
      %2214 = vmatprep.subr.mxu0 0.0
      %2215 = vmatpush1.msra.mxu0 0.0
      %2216 = vmatprep.subr.mxu0 0.0
      %2217 = vmatpush1.msra.mxu0 0.0
      %2218 = vmatprep.subr.mxu0 0.0
      %2219 = vmatpush1.msra.mxu0 0.0
      %2220 = vmatprep.subr.mxu0 0.0
      %2221 = vmatpush1.msra.mxu0 0.0
      %2222 = vmatprep.subr.mxu0 0.0
      %2223 = vmatpush1.msra.mxu0 0.0
      %2224 = vmatprep.subr.mxu0 0.0
      %2225 = vmatpush1.msra.mxu0 0.0
      %2226 = vmatprep.subr.mxu0 0.0
      %2227 = vmatpush1.msra.mxu0 0.0
      %2228 = vmatprep.subr.mxu0 0.0
      %2229 = vmatpush1.msra.mxu0 0.0
      %2230 = vmatprep.subr.mxu0 0.0
      %2231 = vmatpush1.msra.mxu0 0.0
      %2232 = vmatprep.subr.mxu0 0.0
      %2233 = vmatpush1.msra.mxu0 0.0
      %2234 = vmatprep.subr.mxu0 0.0
      %2235 = vmatpush1.msra.mxu0 0.0
      %2236 = vmatprep.subr.mxu0 0.0
      %2237 = vmatpush1.msra.mxu0 0.0
      %2238 = vmatprep.subr.mxu0 0.0
      %2239 = vmatpush1.msra.mxu0 0.0
      %2240 = vmatprep.subr.mxu0 0.0
      %2241 = vmatpush1.msra.mxu0 0.0
      %2242 = vmatprep.subr.mxu0 0.0
      %2243 = vmatpush1.msra.mxu0 0.0
      %2244 = vmatprep.subr.mxu0 0.0
      %2245 = vmatpush1.msra.mxu0 0.0
      %2246 = vmatprep.subr.mxu0 0.0
      %2247 = vmatpush1.msra.mxu0 0.0
      %2248 = vmatprep.subr.mxu0 0.0
      %2249 = vmatpush1.msra.mxu0 0.0
      %2250 = vmatprep.subr.mxu0 0.0
      %2251 = vmatpush1.msra.mxu0 0.0
      %2252 = vmatprep.subr.mxu0 0.0
      %2253 = vmatpush1.msra.mxu0 0.0
      %2254 = vmatprep.subr.mxu0 0.0
      %2255 = vmatpush1.msra.mxu0 0.0
      %2256 = vmatprep.subr.mxu0 0.0
      %2257 = vmatpush1.msra.mxu0 0.0
      %2258 = vmatprep.subr.mxu0 0.0
      %2259 = vmatpush1.msra.mxu0 0.0
      %2260 = vmatprep.subr.mxu0 0.0
      %2261 = vmatpush1.msra.mxu0 0.0
      %2262 = vmatprep.subr.mxu0 0.0
      %2263 = vmatpush1.msra.mxu0 0.0
      %2264 = vmatprep.subr.mxu0 0.0
      %2265 = vmatpush1.msra.mxu0 0.0
      %2266 = vmatprep.subr.mxu0 0.0
      %2267 = vmatpush1.msra.mxu0 0.0
      %2268 = vmatprep.subr.mxu0 0.0
      %2269 = vmatpush1.msra.mxu0 0.0
      %2270 = vmatprep.subr.mxu0 0.0
      %2271 = vmatpush1.msra.mxu0 0.0
      %2272 = vmatprep.subr.mxu0 0.0
      %2273 = vmatpush1.msra.mxu0 0.0
      %2274 = vmatprep.subr.mxu0 0.0
      %2275 = vmatpush1.msra.mxu0 0.0
      %2276 = vmatprep.mubr.f32.mxu0 0.0
      %2277 = vmatmul.mubr.f32.gmra.mrb[0].mxu0 %v2210
      %v2278 = vpop.f32.mrb[0].mxu0
      %v2279 = vadd.f32 0.0, %v2278
      %v2280 = vpop.f32.mrb[0].mxu0
      %2281 = vdwg.mxu0
      %v2282 = vsel %vm864, %v2279, -inf
      %2283 = vmax.xlane.f32.xlu0 %v2282
      %v2284 = vpop.xlane.xlu0 %2283
      %v2285 = vsub.f32 %v2279, %v2284
      %v2286 = vmul.f32 %v2285, 1.442695
      %v2287 = vpow.pop %v2286
      %v2288 = vsel %vm864, %v2287, 0.0
      %2289 = vadd.xlane.f32.xlu0 %v2288
      %v2290 = vpop.xlane.xlu0 %2289
      %v2291 = vrcp.pop %v2290
      %v2292 = vmul.f32 %v2287, %v2291
      %v2294 = vsel %vm864, %v791, 0
      %v2297 = vsel %vm864, %v2292, 0
      %2299 = vmatprep.subr.mxu0 0.0
      %2300 = vmatpush1.xpose.msra.mxu0 %v2297
      %2301 = vmatprep.subr.mxu0 0.0
      %2302 = vmatpush1.xpose.msra.mxu0 0.0
      %2303 = vmatprep.subr.mxu0 0.0
      %2304 = vmatpush1.xpose.msra.mxu0 0.0
      %2305 = vmatprep.subr.mxu0 0.0
      %2306 = vmatpush1.xpose.msra.mxu0 0.0
      %2307 = vmatprep.subr.mxu0 0.0
      %2308 = vmatpush1.xpose.msra.mxu0 0.0
      %2309 = vmatprep.subr.mxu0 0.0
      %2310 = vmatpush1.xpose.msra.mxu0 0.0
      %2311 = vmatprep.subr.mxu0 0.0
      %2312 = vmatpush1.xpose.msra.mxu0 0.0
      %2313 = vmatprep.subr.mxu0 0.0
      %2314 = vmatpush1.xpose.msra.mxu0 0.0
      %2315 = vmatprep.subr.mxu0 0.0
      %2316 = vmatpush1.xpose.msra.mxu0 0.0
      %2317 = vmatprep.subr.mxu0 0.0
      %2318 = vmatpush1.xpose.msra.mxu0 0.0
      %2319 = vmatprep.subr.mxu0 0.0
      %2320 = vmatpush1.xpose.msra.mxu0 0.0
      %2321 = vmatprep.subr.mxu0 0.0
      %2322 = vmatpush1.xpose.msra.mxu0 0.0
      %2323 = vmatprep.subr.mxu0 0.0
      %2324 = vmatpush1.xpose.msra.mxu0 0.0
      %2325 = vmatprep.subr.mxu0 0.0
      %2326 = vmatpush1.xpose.msra.mxu0 0.0
      %2327 = vmatprep.subr.mxu0 0.0
      %2328 = vmatpush1.xpose.msra.mxu0 0.0
      %2329 = vmatprep.subr.mxu0 0.0
      %2330 = vmatpush1.xpose.msra.mxu0 0.0
      %2331 = vmatprep.subr.mxu0 0.0
      %2332 = vmatpush1.xpose.msra.mxu0 0.0
      %2333 = vmatprep.subr.mxu0 0.0
      %2334 = vmatpush1.xpose.msra.mxu0 0.0
      %2335 = vmatprep.subr.mxu0 0.0
      %2336 = vmatpush1.xpose.msra.mxu0 0.0
      %2337 = vmatprep.subr.mxu0 0.0
      %2338 = vmatpush1.xpose.msra.mxu0 0.0
      %2339 = vmatprep.subr.mxu0 0.0
      %2340 = vmatpush1.xpose.msra.mxu0 0.0
      %2341 = vmatprep.subr.mxu0 0.0
      %2342 = vmatpush1.xpose.msra.mxu0 0.0
      %2343 = vmatprep.subr.mxu0 0.0
      %2344 = vmatpush1.xpose.msra.mxu0 0.0
      %2345 = vmatprep.subr.mxu0 0.0
      %2346 = vmatpush1.xpose.msra.mxu0 0.0
      %2347 = vmatprep.subr.mxu0 0.0
      %2348 = vmatpush1.xpose.msra.mxu0 0.0
      %2349 = vmatprep.subr.mxu0 0.0
      %2350 = vmatpush1.xpose.msra.mxu0 0.0
      %2351 = vmatprep.subr.mxu0 0.0
      %2352 = vmatpush1.xpose.msra.mxu0 0.0
      %2353 = vmatprep.subr.mxu0 0.0
      %2354 = vmatpush1.xpose.msra.mxu0 0.0
      %2355 = vmatprep.subr.mxu0 0.0
      %2356 = vmatpush1.xpose.msra.mxu0 0.0
      %2357 = vmatprep.subr.mxu0 0.0
      %2358 = vmatpush1.xpose.msra.mxu0 0.0
      %2359 = vmatprep.subr.mxu0 0.0
      %2360 = vmatpush1.xpose.msra.mxu0 0.0
      %2361 = vmatprep.subr.mxu0 0.0
      %2362 = vmatpush1.xpose.msra.mxu0 0.0
      %2363 = vmatprep.mubr.f32.mxu0 0.0
      %2364 = vmatmul.mubr.f32.gmra.mrb[0].mxu0 %v2294
      %v2365 = vpop.f32.mrb[0].mxu0
      %v2366 = vadd.f32 0.0, %v2365
      %v2367 = vpop.f32.mrb[0].mxu0
      %2368 = vdwg.mxu0
      %2369 = vxpose.xlu0.b32.start [1/16] %v1022, 128
      %2370 = vxpose.xlu0.b32.cont [2/16] %v1214, 128
      %2371 = vxpose.xlu0.b32.cont [3/16] %v1406, 128
      %2372 = vxpose.xlu0.b32.cont [4/16] %v1598, 128
      %2373 = vxpose.xlu0.b32.cont [5/16] %v1790, 128
      %2374 = vxpose.xlu0.b32.cont [6/16] %v1982, 128
      %2375 = vxpose.xlu0.b32.cont [7/16] %v2174, 128
      %2376 = vxpose.xlu0.b32.cont [8/16] %v2366, 128
      %2377 = vxpose.xlu0.b32.cont [9/16] 0.0, 128
      %2378 = vxpose.xlu0.b32.cont [10/16] 0.0, 128
      %2379 = vxpose.xlu0.b32.cont [11/16] 0.0, 128
      %2380 = vxpose.xlu0.b32.cont [12/16] 0.0, 128
      %2381 = vxpose.xlu0.b32.cont [13/16] 0.0, 128
      %2382 = vxpose.xlu0.b32.cont [14/16] 0.0, 128
      %2383 = vxpose.xlu0.b32.cont [15/16] 0.0, 128
      %2384 = vxpose.xlu0.b32.end [16/16] 0.0, 128
      %v2385 = vpop.trf.xlu0
      %v2386 = vpop.trf.xlu0
      %v2387 = vpop.trf.xlu0
      %v2388 = vpop.trf.xlu0
      %v2389 = vpop.trf.xlu0
      %v2390 = vpop.trf.xlu0
      %v2391 = vpop.trf.xlu0
      %v2392 = vpop.trf.xlu0
      %v2393 = vpop.trf.xlu0
      %v2394 = vpop.trf.xlu0
      %v2395 = vpop.trf.xlu0
      %v2396 = vpop.trf.xlu0
      %v2397 = vpop.trf.xlu0
      %v2398 = vpop.trf.xlu0
      %v2399 = vpop.trf.xlu0
      %v2400 = vpop.trf.xlu0
      %v2401 = vpack.c.bf16 %v2385, %v2385
      %v2402 = vld [vmem:[%s6] sm:$0xf]
      %v2403 = vld [vmem:[%s6 + $0x4] sm:$0xf]
      %v2404 = vld [vmem:[%s6 + $0x8] sm:$0xf]
      %v2405 = vld [vmem:[%s6 + $0xc] sm:$0xf]
      %v2406 = vld [vmem:[%s6 + $0x10] sm:$0xf]
      %v2407 = vld [vmem:[%s6 + $0x14] sm:$0xf]
      %v2408 = vld [vmem:[%s6 + $0x18] sm:$0xf]
      %v2409 = vld [vmem:[%s6 + $0x1c] sm:$0xf]
      %v2410 = vld [vmem:[%s7] sm:$0x1]
      %v2412 = vlaneseq
      %v2413 = vshrl.u32 %v2412, 7
      %v2414 = vsub.s32 0, %v2413
      %v2415 = vrot.slane %v2410, %v2414
      %v2425 = vunpack.c.l.b16 %v2402
      %v2426 = vunpack.c.l.b16 %v2403
      %v2427 = vunpack.c.l.b16 %v2404
      %v2428 = vunpack.c.l.b16 %v2405
      %v2429 = vunpack.c.l.b16 %v2406
      %v2430 = vunpack.c.l.b16 %v2407
      %v2431 = vunpack.c.l.b16 %v2408
      %v2432 = vunpack.c.l.b16 %v2409
      %v2433 = vpack.c.b16 %v2426, %v2425
      %v2434 = vpack.c.b16 %v2428, %v2427
      %v2435 = vpack.c.b16 %v2430, %v2429
      %v2436 = vpack.c.b16 %v2432, %v2431
      %v2442 = vsel %vm633, %v2401, 0
      %2444 = vmatprep.subr.bf16.mxu0 0
      %2445 = vmatpush1.bf16.msra.mxu0 %v2433
      %2446 = vmatprep.subr.bf16.mxu0 0
      %2447 = vmatpush1.bf16.msra.mxu0 %v2434
      %2448 = vmatprep.subr.bf16.mxu0 0
      %2449 = vmatpush1.bf16.msra.mxu0 %v2435
      %2450 = vmatprep.subr.bf16.mxu0 0
      %2451 = vmatpush1.bf16.msra.mxu0 %v2436
      %2452 = vmatprep.subr.bf16.mxu0 0
      %2453 = vmatpush1.bf16.msra.mxu0 0
      %2454 = vmatprep.subr.bf16.mxu0 0
      %2455 = vmatpush1.bf16.msra.mxu0 0
      %2456 = vmatprep.subr.bf16.mxu0 0
      %2457 = vmatpush1.bf16.msra.mxu0 0
      %2458 = vmatprep.subr.bf16.mxu0 0
      %2459 = vmatpush1.bf16.msra.mxu0 0
      %2460 = vmatprep.subr.bf16.mxu0 0
      %2461 = vmatpush1.bf16.msra.mxu0 0
      %2462 = vmatprep.subr.bf16.mxu0 0
      %2463 = vmatpush1.bf16.msra.mxu0 0
      %2464 = vmatprep.subr.bf16.mxu0 0
      %2465 = vmatpush1.bf16.msra.mxu0 0
      %2466 = vmatprep.subr.bf16.mxu0 0
      %2467 = vmatpush1.bf16.msra.mxu0 0
      %2468 = vmatprep.subr.bf16.mxu0 0
      %2469 = vmatpush1.bf16.msra.mxu0 0
      %2470 = vmatprep.subr.bf16.mxu0 0
      %2471 = vmatpush1.bf16.msra.mxu0 0
      %2472 = vmatprep.subr.bf16.mxu0 0
      %2473 = vmatpush1.bf16.msra.mxu0 0
      %2474 = vmatprep.subr.bf16.mxu0 0
      %2475 = vmatpush1.bf16.msra.mxu0 0
      %2476 = vmatprep.mubr.bf16.mxu0 0
      %2477 = vmatmul.mubr.bf16.gmra.mrb[0].mxu0 %v2442
      %v2478 = vpop.f32.mrb[0].mxu0
      %v2479 = vadd.f32 %v2415, %v2478
      %v2480 = vpop.f32.mrb[0].mxu0
      %v2481 = vpop.f32.mrb[0].mxu0
      %v2482 = vpop.f32.mrb[0].mxu0
      %2483 = vdwg.mxu0
      %v2484 = vadd.f32 %v589, %v2479
      %v2485 = vsel %vm633, %v2484, 0.0
      %2486 = vadd.xlane.f32.xlu0 %v2485
      %v2487 = vpop.xlane.xlu0 %2486
      %v2488 = vrcp.pop 64.0
      %v2489 = vmul.f32 %v2487, %v2488
      %v2490 = vsub.f32 %v2484, %v2489
      %v2491 = vmul.f32 %v2490, %v2490
      %v2492 = vsel %vm633, %v2491, 0.0
      %2493 = vadd.xlane.f32.xlu0 %v2492
      %v2494 = vpop.xlane.xlu0 %2493
      %v2495 = vmul.f32 %v2494, %v2488
      %v2496 = vadd.f32 %v2495, 1e-05
      %v2497 = vrsqrt.pop %v2496
      %v2498 = vmul.f32 %v2490, %v2497
      %v2500 = vlaneseq
      %v2501 = vshrl.u32 %v2500, 7
      %v2502 = vsub.s32 0, %v2501
      %v2503 = vrot.slane %v591, %v2502
      %v2505 = vmul.f32 %v2498, %v2503
      %v2507 = vlaneseq
      %v2508 = vshrl.u32 %v2507, 7
      %v2509 = vsub.s32 0, %v2508
      %v2510 = vrot.slane %v592, %v2509
      %v2512 = vadd.f32 %v2505, %v2510
      %v2513 = vpack.c.bf16 %v2512, %v2512
      %v2514 = vld [vmem:[%s8] sm:$0xff]
      %v2515 = vld [vmem:[%s8 + $0x8] sm:$0xff]
      %v2516 = vld [vmem:[%s8 + $0x10] sm:$0xff]
      %v2517 = vld [vmem:[%s8 + $0x18] sm:$0xff]
      %v2518 = vld [vmem:[%s8 + $0x20] sm:$0xff]
      %v2519 = vld [vmem:[%s8 + $0x28] sm:$0xff]
      %v2520 = vld [vmem:[%s8 + $0x30] sm:$0xff]
      %v2521 = vld [vmem:[%s8 + $0x38] sm:$0xff]
      %v2522 = vld [vmem:[%s9] sm:$0x3]
      %v2524 = vlaneseq
      %v2525 = vshrl.u32 %v2524, 7
      %v2526 = vsub.s32 0, %v2525
      %v2527 = vrot.slane %v2522, %v2526
      %v2528 = vlaneseq
      %v2529 = vshrl.u32 %v2528, 7
      %v2530 = vsub.s32 1, %v2529
      %v2531 = vrot.slane %v2522, %v2530
      %v2542 = vunpack.c.l.b16 %v2514
      %v2543 = vunpack.c.h.b16 %v2514
      %v2544 = vunpack.c.l.b16 %v2515
      %v2545 = vunpack.c.h.b16 %v2515
      %v2546 = vunpack.c.l.b16 %v2516
      %v2547 = vunpack.c.h.b16 %v2516
      %v2548 = vunpack.c.l.b16 %v2517
      %v2549 = vunpack.c.h.b16 %v2517
      %v2550 = vunpack.c.l.b16 %v2518
      %v2551 = vunpack.c.h.b16 %v2518
      %v2552 = vunpack.c.l.b16 %v2519
      %v2553 = vunpack.c.h.b16 %v2519
      %v2554 = vunpack.c.l.b16 %v2520
      %v2555 = vunpack.c.h.b16 %v2520
      %v2556 = vunpack.c.l.b16 %v2521
      %v2557 = vunpack.c.h.b16 %v2521
      %v2558 = vpack.c.b16 %v2544, %v2542
      %v2559 = vpack.c.b16 %v2545, %v2543
      %v2560 = vpack.c.b16 %v2548, %v2546
      %v2561 = vpack.c.b16 %v2549, %v2547
      %v2562 = vpack.c.b16 %v2552, %v2550
      %v2563 = vpack.c.b16 %v2553, %v2551
      %v2564 = vpack.c.b16 %v2556, %v2554
      %v2565 = vpack.c.b16 %v2557, %v2555
      %v2575 = vsel %vm633, %v2513, 0
      %2577 = vmatprep.subr.bf16.mxu0 %v2559
      %2578 = vmatpush1.bf16.msra.mxu0 %v2558
      %2579 = vmatprep.subr.bf16.mxu0 %v2561
      %2580 = vmatpush1.bf16.msra.mxu0 %v2560
      %2581 = vmatprep.subr.bf16.mxu0 %v2563
      %2582 = vmatpush1.bf16.msra.mxu0 %v2562
      %2583 = vmatprep.subr.bf16.mxu0 %v2565
      %2584 = vmatpush1.bf16.msra.mxu0 %v2564
      %2585 = vmatprep.subr.bf16.mxu0 0
      %2586 = vmatpush1.bf16.msra.mxu0 0
      %2587 = vmatprep.subr.bf16.mxu0 0
      %2588 = vmatpush1.bf16.msra.mxu0 0
      %2589 = vmatprep.subr.bf16.mxu0 0
      %2590 = vmatpush1.bf16.msra.mxu0 0
      %2591 = vmatprep.subr.bf16.mxu0 0
      %2592 = vmatpush1.bf16.msra.mxu0 0
      %2593 = vmatprep.subr.bf16.mxu0 0
      %2594 = vmatpush1.bf16.msra.mxu0 0
      %2595 = vmatprep.subr.bf16.mxu0 0
      %2596 = vmatpush1.bf16.msra.mxu0 0
      %2597 = vmatprep.subr.bf16.mxu0 0
      %2598 = vmatpush1.bf16.msra.mxu0 0
      %2599 = vmatprep.subr.bf16.mxu0 0
      %2600 = vmatpush1.bf16.msra.mxu0 0
      %2601 = vmatprep.subr.bf16.mxu0 0
      %2602 = vmatpush1.bf16.msra.mxu0 0
      %2603 = vmatprep.subr.bf16.mxu0 0
      %2604 = vmatpush1.bf16.msra.mxu0 0
      %2605 = vmatprep.subr.bf16.mxu0 0
      %2606 = vmatpush1.bf16.msra.mxu0 0
      %2607 = vmatprep.subr.bf16.mxu0 0
      %2608 = vmatpush1.bf16.msra.mxu0 0
      %2609 = vmatprep.mubr.bf16.mxu0 0
      %2610 = vmatmul.mubr.bf16.gmra.mrb[0].mxu0 %v2575
      %v2611 = vpop.f32.mrb[0].mxu0
      %v2612 = vadd.f32 %v2527, %v2611
      %v2613 = vpop.f32.mrb[0].mxu0
      %v2614 = vadd.f32 %v2531, %v2613
      %v2615 = vpop.f32.mrb[0].mxu0
      %v2616 = vpop.f32.mrb[0].mxu0
      %2617 = vdwg.mxu0
      %2618 = vxpose.xlu0.b32.start [1/16] %v2612, 128
      %2619 = vxpose.xlu0.b32.cont [2/16] 0.0, 128
      %2620 = vxpose.xlu0.b32.cont [3/16] 0.0, 128
      %2621 = vxpose.xlu0.b32.cont [4/16] 0.0, 128
      %2622 = vxpose.xlu0.b32.cont [5/16] 0.0, 128
      %2623 = vxpose.xlu0.b32.cont [6/16] 0.0, 128
      %2624 = vxpose.xlu0.b32.cont [7/16] 0.0, 128
      %2625 = vxpose.xlu0.b32.cont [8/16] 0.0, 128
      %2626 = vxpose.xlu0.b32.cont [9/16] 0.0, 128
      %2627 = vxpose.xlu0.b32.cont [10/16] 0.0, 128
      %2628 = vxpose.xlu0.b32.cont [11/16] 0.0, 128
      %2629 = vxpose.xlu0.b32.cont [12/16] 0.0, 128
      %2630 = vxpose.xlu0.b32.cont [13/16] 0.0, 128
      %2631 = vxpose.xlu0.b32.cont [14/16] 0.0, 128
      %2632 = vxpose.xlu0.b32.cont [15/16] 0.0, 128
      %2633 = vxpose.xlu0.b32.end [16/16] 0.0, 128
      %v2634 = vpop.trf.xlu0
      %v2635 = vpop.trf.xlu0
      %v2636 = vpop.trf.xlu0
      %v2637 = vpop.trf.xlu0
      %v2638 = vpop.trf.xlu0
      %v2639 = vpop.trf.xlu0
      %v2640 = vpop.trf.xlu0
      %v2641 = vpop.trf.xlu0
      %v2642 = vpop.trf.xlu0
      %v2643 = vpop.trf.xlu0
      %v2644 = vpop.trf.xlu0
      %v2645 = vpop.trf.xlu0
      %v2646 = vpop.trf.xlu0
      %v2647 = vpop.trf.xlu0
      %v2648 = vpop.trf.xlu0
      %v2649 = vpop.trf.xlu0
      %2650 = vxpose.xlu0.b32.start [1/16] %v2614, 128
      %2651 = vxpose.xlu0.b32.cont [2/16] 0.0, 128
      %2652 = vxpose.xlu0.b32.cont [3/16] 0.0, 128
      %2653 = vxpose.xlu0.b32.cont [4/16] 0.0, 128
      %2654 = vxpose.xlu0.b32.cont [5/16] 0.0, 128
      %2655 = vxpose.xlu0.b32.cont [6/16] 0.0, 128
      %2656 = vxpose.xlu0.b32.cont [7/16] 0.0, 128
      %2657 = vxpose.xlu0.b32.cont [8/16] 0.0, 128
      %2658 = vxpose.xlu0.b32.cont [9/16] 0.0, 128
      %2659 = vxpose.xlu0.b32.cont [10/16] 0.0, 128
      %2660 = vxpose.xlu0.b32.cont [11/16] 0.0, 128
      %2661 = vxpose.xlu0.b32.cont [12/16] 0.0, 128
      %2662 = vxpose.xlu0.b32.cont [13/16] 0.0, 128
      %2663 = vxpose.xlu0.b32.cont [14/16] 0.0, 128
      %2664 = vxpose.xlu0.b32.cont [15/16] 0.0, 128
      %2665 = vxpose.xlu0.b32.end [16/16] 0.0, 128
      %v2666 = vpop.trf.xlu0
      %v2667 = vpop.trf.xlu0
      %v2668 = vpop.trf.xlu0
      %v2669 = vpop.trf.xlu0
      %v2670 = vpop.trf.xlu0
      %v2671 = vpop.trf.xlu0
      %v2672 = vpop.trf.xlu0
      %v2673 = vpop.trf.xlu0
      %v2674 = vpop.trf.xlu0
      %v2675 = vpop.trf.xlu0
      %v2676 = vpop.trf.xlu0
      %v2677 = vpop.trf.xlu0
      %v2678 = vpop.trf.xlu0
      %v2679 = vpop.trf.xlu0
      %v2680 = vpop.trf.xlu0
      %v2681 = vpop.trf.xlu0
      %v2682 = vmul.f32 %v2634, 0.35355338
      %v2683 = vmul.f32 %v2635, 0.35355338
      %v2684 = vmul.f32 %v2636, 0.35355338
      %v2685 = vmul.f32 %v2637, 0.35355338
      %v2686 = vmul.f32 %v2638, 0.35355338
      %v2687 = vmul.f32 %v2639, 0.35355338
      %v2688 = vmul.f32 %v2640, 0.35355338
      %v2689 = vmul.f32 %v2641, 0.35355338
      %v2690 = vlaneseq
      %v2691 = vshrl.u32 %v2690, 7
      %v2692 = vlaneseq
      %v2693 = vand.u32 %v2692, 127
      %vm2694 = vcmp.gt.s32.totalorder %v2693, %v2691
      %v2695 = vsel %vm2694, -1e+30, 0.0
      %2696 = vxpose.xlu0.b32.start [1/16] %v2682, 128
      %2697 = vxpose.xlu0.b32.cont [2/16] 0.0, 128
      %2698 = vxpose.xlu0.b32.cont [3/16] 0.0, 128
      %2699 = vxpose.xlu0.b32.cont [4/16] 0.0, 128
      %2700 = vxpose.xlu0.b32.cont [5/16] 0.0, 128
      %2701 = vxpose.xlu0.b32.cont [6/16] 0.0, 128
      %2702 = vxpose.xlu0.b32.cont [7/16] 0.0, 128
      %2703 = vxpose.xlu0.b32.cont [8/16] 0.0, 128
      %2704 = vxpose.xlu0.b32.cont [9/16] 0.0, 128
      %2705 = vxpose.xlu0.b32.cont [10/16] 0.0, 128
      %2706 = vxpose.xlu0.b32.cont [11/16] 0.0, 128
      %2707 = vxpose.xlu0.b32.cont [12/16] 0.0, 128
      %2708 = vxpose.xlu0.b32.cont [13/16] 0.0, 128
      %2709 = vxpose.xlu0.b32.cont [14/16] 0.0, 128
      %2710 = vxpose.xlu0.b32.cont [15/16] 0.0, 128
      %2711 = vxpose.xlu0.b32.end [16/16] 0.0, 128
      %v2712 = vpop.trf.xlu0
      %v2713 = vpop.trf.xlu0
      %v2714 = vpop.trf.xlu0
      %v2715 = vpop.trf.xlu0
      %v2716 = vpop.trf.xlu0
      %v2717 = vpop.trf.xlu0
      %v2718 = vpop.trf.xlu0
      %v2719 = vpop.trf.xlu0
      %v2720 = vpop.trf.xlu0
      %v2721 = vpop.trf.xlu0
      %v2722 = vpop.trf.xlu0
      %v2723 = vpop.trf.xlu0
      %v2724 = vpop.trf.xlu0
      %v2725 = vpop.trf.xlu0
      %v2726 = vpop.trf.xlu0
      %v2727 = vpop.trf.xlu0
      %v2729 = vsel %vm864, %v2712, 0
      %2731 = vmatprep.subr.mxu0 0.0
      %2732 = vmatpush1.msra.mxu0 %v2642
      %2733 = vmatprep.subr.mxu0 0.0
      %2734 = vmatpush1.msra.mxu0 0.0
      %2735 = vmatprep.subr.mxu0 0.0
      %2736 = vmatpush1.msra.mxu0 0.0
      %2737 = vmatprep.subr.mxu0 0.0
      %2738 = vmatpush1.msra.mxu0 0.0
      %2739 = vmatprep.subr.mxu0 0.0
      %2740 = vmatpush1.msra.mxu0 0.0
      %2741 = vmatprep.subr.mxu0 0.0
      %2742 = vmatpush1.msra.mxu0 0.0
      %2743 = vmatprep.subr.mxu0 0.0
      %2744 = vmatpush1.msra.mxu0 0.0
      %2745 = vmatprep.subr.mxu0 0.0
      %2746 = vmatpush1.msra.mxu0 0.0
      %2747 = vmatprep.subr.mxu0 0.0
      %2748 = vmatpush1.msra.mxu0 0.0
      %2749 = vmatprep.subr.mxu0 0.0
      %2750 = vmatpush1.msra.mxu0 0.0
      %2751 = vmatprep.subr.mxu0 0.0
      %2752 = vmatpush1.msra.mxu0 0.0
      %2753 = vmatprep.subr.mxu0 0.0
      %2754 = vmatpush1.msra.mxu0 0.0
      %2755 = vmatprep.subr.mxu0 0.0
      %2756 = vmatpush1.msra.mxu0 0.0
      %2757 = vmatprep.subr.mxu0 0.0
      %2758 = vmatpush1.msra.mxu0 0.0
      %2759 = vmatprep.subr.mxu0 0.0
      %2760 = vmatpush1.msra.mxu0 0.0
      %2761 = vmatprep.subr.mxu0 0.0
      %2762 = vmatpush1.msra.mxu0 0.0
      %2763 = vmatprep.subr.mxu0 0.0
      %2764 = vmatpush1.msra.mxu0 0.0
      %2765 = vmatprep.subr.mxu0 0.0
      %2766 = vmatpush1.msra.mxu0 0.0
      %2767 = vmatprep.subr.mxu0 0.0
      %2768 = vmatpush1.msra.mxu0 0.0
      %2769 = vmatprep.subr.mxu0 0.0
      %2770 = vmatpush1.msra.mxu0 0.0
      %2771 = vmatprep.subr.mxu0 0.0
      %2772 = vmatpush1.msra.mxu0 0.0
      %2773 = vmatprep.subr.mxu0 0.0
      %2774 = vmatpush1.msra.mxu0 0.0
      %2775 = vmatprep.subr.mxu0 0.0
      %2776 = vmatpush1.msra.mxu0 0.0
      %2777 = vmatprep.subr.mxu0 0.0
      %2778 = vmatpush1.msra.mxu0 0.0
      %2779 = vmatprep.subr.mxu0 0.0
      %2780 = vmatpush1.msra.mxu0 0.0
      %2781 = vmatprep.subr.mxu0 0.0
      %2782 = vmatpush1.msra.mxu0 0.0
      %2783 = vmatprep.subr.mxu0 0.0
      %2784 = vmatpush1.msra.mxu0 0.0
      %2785 = vmatprep.subr.mxu0 0.0
      %2786 = vmatpush1.msra.mxu0 0.0
      %2787 = vmatprep.subr.mxu0 0.0
      %2788 = vmatpush1.msra.mxu0 0.0
      %2789 = vmatprep.subr.mxu0 0.0
      %2790 = vmatpush1.msra.mxu0 0.0
      %2791 = vmatprep.subr.mxu0 0.0
      %2792 = vmatpush1.msra.mxu0 0.0
      %2793 = vmatprep.subr.mxu0 0.0
      %2794 = vmatpush1.msra.mxu0 0.0
      %2795 = vmatprep.mubr.f32.mxu0 0.0
      %2796 = vmatmul.mubr.f32.gmra.mrb[0].mxu0 %v2729
      %v2797 = vpop.f32.mrb[0].mxu0
      %v2798 = vadd.f32 %v2695, %v2797
      %v2799 = vpop.f32.mrb[0].mxu0
      %2800 = vdwg.mxu0
      %v2801 = vsel %vm864, %v2798, -inf
      %2802 = vmax.xlane.f32.xlu0 %v2801
      %v2803 = vpop.xlane.xlu0 %2802
      %v2804 = vsub.f32 %v2798, %v2803
      %v2805 = vmul.f32 %v2804, 1.442695
      %v2806 = vpow.pop %v2805
      %v2807 = vsel %vm864, %v2806, 0.0
      %2808 = vadd.xlane.f32.xlu0 %v2807
      %v2809 = vpop.xlane.xlu0 %2808
      %v2810 = vrcp.pop %v2809
      %v2811 = vmul.f32 %v2806, %v2810
      %v2813 = vsel %vm864, %v2666, 0
      %v2816 = vsel %vm864, %v2811, 0
      %2818 = vmatprep.subr.mxu0 0.0
      %2819 = vmatpush1.xpose.msra.mxu0 %v2816
      %2820 = vmatprep.subr.mxu0 0.0
      %2821 = vmatpush1.xpose.msra.mxu0 0.0
      %2822 = vmatprep.subr.mxu0 0.0
      %2823 = vmatpush1.xpose.msra.mxu0 0.0
      %2824 = vmatprep.subr.mxu0 0.0
      %2825 = vmatpush1.xpose.msra.mxu0 0.0
      %2826 = vmatprep.subr.mxu0 0.0
      %2827 = vmatpush1.xpose.msra.mxu0 0.0
      %2828 = vmatprep.subr.mxu0 0.0
      %2829 = vmatpush1.xpose.msra.mxu0 0.0
      %2830 = vmatprep.subr.mxu0 0.0
      %2831 = vmatpush1.xpose.msra.mxu0 0.0
      %2832 = vmatprep.subr.mxu0 0.0
      %2833 = vmatpush1.xpose.msra.mxu0 0.0
      %2834 = vmatprep.subr.mxu0 0.0
      %2835 = vmatpush1.xpose.msra.mxu0 0.0
      %2836 = vmatprep.subr.mxu0 0.0
      %2837 = vmatpush1.xpose.msra.mxu0 0.0
      %2838 = vmatprep.subr.mxu0 0.0
      %2839 = vmatpush1.xpose.msra.mxu0 0.0
      %2840 = vmatprep.subr.mxu0 0.0
      %2841 = vmatpush1.xpose.msra.mxu0 0.0
      %2842 = vmatprep.subr.mxu0 0.0
      %2843 = vmatpush1.xpose.msra.mxu0 0.0
      %2844 = vmatprep.subr.mxu0 0.0
      %2845 = vmatpush1.xpose.msra.mxu0 0.0
      %2846 = vmatprep.subr.mxu0 0.0
      %2847 = vmatpush1.xpose.msra.mxu0 0.0
      %2848 = vmatprep.subr.mxu0 0.0
      %2849 = vmatpush1.xpose.msra.mxu0 0.0
      %2850 = vmatprep.subr.mxu0 0.0
      %2851 = vmatpush1.xpose.msra.mxu0 0.0
      %2852 = vmatprep.subr.mxu0 0.0
      %2853 = vmatpush1.xpose.msra.mxu0 0.0
      %2854 = vmatprep.subr.mxu0 0.0
      %2855 = vmatpush1.xpose.msra.mxu0 0.0
      %2856 = vmatprep.subr.mxu0 0.0
      %2857 = vmatpush1.xpose.msra.mxu0 0.0
      %2858 = vmatprep.subr.mxu0 0.0
      %2859 = vmatpush1.xpose.msra.mxu0 0.0
      %2860 = vmatprep.subr.mxu0 0.0
      %2861 = vmatpush1.xpose.msra.mxu0 0.0
      %2862 = vmatprep.subr.mxu0 0.0
      %2863 = vmatpush1.xpose.msra.mxu0 0.0
      %2864 = vmatprep.subr.mxu0 0.0
      %2865 = vmatpush1.xpose.msra.mxu0 0.0
      %2866 = vmatprep.subr.mxu0 0.0
      %2867 = vmatpush1.xpose.msra.mxu0 0.0
      %2868 = vmatprep.subr.mxu0 0.0
      %2869 = vmatpush1.xpose.msra.mxu0 0.0
      %2870 = vmatprep.subr.mxu0 0.0
      %2871 = vmatpush1.xpose.msra.mxu0 0.0
      %2872 = vmatprep.subr.mxu0 0.0
      %2873 = vmatpush1.xpose.msra.mxu0 0.0
      %2874 = vmatprep.subr.mxu0 0.0
      %2875 = vmatpush1.xpose.msra.mxu0 0.0
      %2876 = vmatprep.subr.mxu0 0.0
      %2877 = vmatpush1.xpose.msra.mxu0 0.0
      %2878 = vmatprep.subr.mxu0 0.0
      %2879 = vmatpush1.xpose.msra.mxu0 0.0
      %2880 = vmatprep.subr.mxu0 0.0
      %2881 = vmatpush1.xpose.msra.mxu0 0.0
      %2882 = vmatprep.mubr.f32.mxu0 0.0
      %2883 = vmatmul.mubr.f32.gmra.mrb[0].mxu0 %v2813
      %v2884 = vpop.f32.mrb[0].mxu0
      %v2885 = vadd.f32 0.0, %v2884
      %v2886 = vpop.f32.mrb[0].mxu0
      %2887 = vdwg.mxu0
      %2888 = vxpose.xlu0.b32.start [1/16] %v2683, 128
      %2889 = vxpose.xlu0.b32.cont [2/16] 0.0, 128
      %2890 = vxpose.xlu0.b32.cont [3/16] 0.0, 128
      %2891 = vxpose.xlu0.b32.cont [4/16] 0.0, 128
      %2892 = vxpose.xlu0.b32.cont [5/16] 0.0, 128
      %2893 = vxpose.xlu0.b32.cont [6/16] 0.0, 128
      %2894 = vxpose.xlu0.b32.cont [7/16] 0.0, 128
      %2895 = vxpose.xlu0.b32.cont [8/16] 0.0, 128
      %2896 = vxpose.xlu0.b32.cont [9/16] 0.0, 128
      %2897 = vxpose.xlu0.b32.cont [10/16] 0.0, 128
      %2898 = vxpose.xlu0.b32.cont [11/16] 0.0, 128
      %2899 = vxpose.xlu0.b32.cont [12/16] 0.0, 128
      %2900 = vxpose.xlu0.b32.cont [13/16] 0.0, 128
      %2901 = vxpose.xlu0.b32.cont [14/16] 0.0, 128
      %2902 = vxpose.xlu0.b32.cont [15/16] 0.0, 128
      %2903 = vxpose.xlu0.b32.end [16/16] 0.0, 128
      %v2904 = vpop.trf.xlu0
      %v2905 = vpop.trf.xlu0
      %v2906 = vpop.trf.xlu0
      %v2907 = vpop.trf.xlu0
      %v2908 = vpop.trf.xlu0
      %v2909 = vpop.trf.xlu0
      %v2910 = vpop.trf.xlu0
      %v2911 = vpop.trf.xlu0
      %v2912 = vpop.trf.xlu0
      %v2913 = vpop.trf.xlu0
      %v2914 = vpop.trf.xlu0
      %v2915 = vpop.trf.xlu0
      %v2916 = vpop.trf.xlu0
      %v2917 = vpop.trf.xlu0
      %v2918 = vpop.trf.xlu0
      %v2919 = vpop.trf.xlu0
      %v2921 = vsel %vm864, %v2904, 0
      %2923 = vmatprep.subr.mxu0 0.0
      %2924 = vmatpush1.msra.mxu0 %v2643
      %2925 = vmatprep.subr.mxu0 0.0
      %2926 = vmatpush1.msra.mxu0 0.0
      %2927 = vmatprep.subr.mxu0 0.0
      %2928 = vmatpush1.msra.mxu0 0.0
      %2929 = vmatprep.subr.mxu0 0.0
      %2930 = vmatpush1.msra.mxu0 0.0
      %2931 = vmatprep.subr.mxu0 0.0
      %2932 = vmatpush1.msra.mxu0 0.0
      %2933 = vmatprep.subr.mxu0 0.0
      %2934 = vmatpush1.msra.mxu0 0.0
      %2935 = vmatprep.subr.mxu0 0.0
      %2936 = vmatpush1.msra.mxu0 0.0
      %2937 = vmatprep.subr.mxu0 0.0
      %2938 = vmatpush1.msra.mxu0 0.0
      %2939 = vmatprep.subr.mxu0 0.0
      %2940 = vmatpush1.msra.mxu0 0.0
      %2941 = vmatprep.subr.mxu0 0.0
      %2942 = vmatpush1.msra.mxu0 0.0
      %2943 = vmatprep.subr.mxu0 0.0
      %2944 = vmatpush1.msra.mxu0 0.0
      %2945 = vmatprep.subr.mxu0 0.0
      %2946 = vmatpush1.msra.mxu0 0.0
      %2947 = vmatprep.subr.mxu0 0.0
      %2948 = vmatpush1.msra.mxu0 0.0
      %2949 = vmatprep.subr.mxu0 0.0
      %2950 = vmatpush1.msra.mxu0 0.0
      %2951 = vmatprep.subr.mxu0 0.0
      %2952 = vmatpush1.msra.mxu0 0.0
      %2953 = vmatprep.subr.mxu0 0.0
      %2954 = vmatpush1.msra.mxu0 0.0
      %2955 = vmatprep.subr.mxu0 0.0
      %2956 = vmatpush1.msra.mxu0 0.0
      %2957 = vmatprep.subr.mxu0 0.0
      %2958 = vmatpush1.msra.mxu0 0.0
      %2959 = vmatprep.subr.mxu0 0.0
      %2960 = vmatpush1.msra.mxu0 0.0
      %2961 = vmatprep.subr.mxu0 0.0
      %2962 = vmatpush1.msra.mxu0 0.0
      %2963 = vmatprep.subr.mxu0 0.0
      %2964 = vmatpush1.msra.mxu0 0.0
      %2965 = vmatprep.subr.mxu0 0.0
      %2966 = vmatpush1.msra.mxu0 0.0
      %2967 = vmatprep.subr.mxu0 0.0
      %2968 = vmatpush1.msra.mxu0 0.0
      %2969 = vmatprep.subr.mxu0 0.0
      %2970 = vmatpush1.msra.mxu0 0.0
      %2971 = vmatprep.subr.mxu0 0.0
      %2972 = vmatpush1.msra.mxu0 0.0
      %2973 = vmatprep.subr.mxu0 0.0
      %2974 = vmatpush1.msra.mxu0 0.0
      %2975 = vmatprep.subr.mxu0 0.0
      %2976 = vmatpush1.msra.mxu0 0.0
      %2977 = vmatprep.subr.mxu0 0.0
      %2978 = vmatpush1.msra.mxu0 0.0
      %2979 = vmatprep.subr.mxu0 0.0
      %2980 = vmatpush1.msra.mxu0 0.0
      %2981 = vmatprep.subr.mxu0 0.0
      %2982 = vmatpush1.msra.mxu0 0.0
      %2983 = vmatprep.subr.mxu0 0.0
      %2984 = vmatpush1.msra.mxu0 0.0
      %2985 = vmatprep.subr.mxu0 0.0
      %2986 = vmatpush1.msra.mxu0 0.0
      %2987 = vmatprep.mubr.f32.mxu0 0.0
      %2988 = vmatmul.mubr.f32.gmra.mrb[0].mxu0 %v2921
      %v2989 = vpop.f32.mrb[0].mxu0
      %v2990 = vadd.f32 %v2695, %v2989
      %v2991 = vpop.f32.mrb[0].mxu0
      %2992 = vdwg.mxu0
      %v2993 = vsel %vm864, %v2990, -inf
      %2994 = vmax.xlane.f32.xlu0 %v2993
      %v2995 = vpop.xlane.xlu0 %2994
      %v2996 = vsub.f32 %v2990, %v2995
      %v2997 = vmul.f32 %v2996, 1.442695
      %v2998 = vpow.pop %v2997
      %v2999 = vsel %vm864, %v2998, 0.0
      %3000 = vadd.xlane.f32.xlu0 %v2999
      %v3001 = vpop.xlane.xlu0 %3000
      %v3002 = vrcp.pop %v3001
      %v3003 = vmul.f32 %v2998, %v3002
      %v3005 = vsel %vm864, %v2667, 0
      %v3008 = vsel %vm864, %v3003, 0
      %3010 = vmatprep.subr.mxu0 0.0
      %3011 = vmatpush1.xpose.msra.mxu0 %v3008
      %3012 = vmatprep.subr.mxu0 0.0
      %3013 = vmatpush1.xpose.msra.mxu0 0.0
      %3014 = vmatprep.subr.mxu0 0.0
      %3015 = vmatpush1.xpose.msra.mxu0 0.0
      %3016 = vmatprep.subr.mxu0 0.0
      %3017 = vmatpush1.xpose.msra.mxu0 0.0
      %3018 = vmatprep.subr.mxu0 0.0
      %3019 = vmatpush1.xpose.msra.mxu0 0.0
      %3020 = vmatprep.subr.mxu0 0.0
      %3021 = vmatpush1.xpose.msra.mxu0 0.0
      %3022 = vmatprep.subr.mxu0 0.0
      %3023 = vmatpush1.xpose.msra.mxu0 0.0
      %3024 = vmatprep.subr.mxu0 0.0
      %3025 = vmatpush1.xpose.msra.mxu0 0.0
      %3026 = vmatprep.subr.mxu0 0.0
      %3027 = vmatpush1.xpose.msra.mxu0 0.0
      %3028 = vmatprep.subr.mxu0 0.0
      %3029 = vmatpush1.xpose.msra.mxu0 0.0
      %3030 = vmatprep.subr.mxu0 0.0
      %3031 = vmatpush1.xpose.msra.mxu0 0.0
      %3032 = vmatprep.subr.mxu0 0.0
      %3033 = vmatpush1.xpose.msra.mxu0 0.0
      %3034 = vmatprep.subr.mxu0 0.0
      %3035 = vmatpush1.xpose.msra.mxu0 0.0
      %3036 = vmatprep.subr.mxu0 0.0
      %3037 = vmatpush1.xpose.msra.mxu0 0.0
      %3038 = vmatprep.subr.mxu0 0.0
      %3039 = vmatpush1.xpose.msra.mxu0 0.0
      %3040 = vmatprep.subr.mxu0 0.0
      %3041 = vmatpush1.xpose.msra.mxu0 0.0
      %3042 = vmatprep.subr.mxu0 0.0
      %3043 = vmatpush1.xpose.msra.mxu0 0.0
      %3044 = vmatprep.subr.mxu0 0.0
      %3045 = vmatpush1.xpose.msra.mxu0 0.0
      %3046 = vmatprep.subr.mxu0 0.0
      %3047 = vmatpush1.xpose.msra.mxu0 0.0
      %3048 = vmatprep.subr.mxu0 0.0
      %3049 = vmatpush1.xpose.msra.mxu0 0.0
      %3050 = vmatprep.subr.mxu0 0.0
      %3051 = vmatpush1.xpose.msra.mxu0 0.0
      %3052 = vmatprep.subr.mxu0 0.0
      %3053 = vmatpush1.xpose.msra.mxu0 0.0
      %3054 = vmatprep.subr.mxu0 0.0
      %3055 = vmatpush1.xpose.msra.mxu0 0.0
      %3056 = vmatprep.subr.mxu0 0.0
      %3057 = vmatpush1.xpose.msra.mxu0 0.0
      %3058 = vmatprep.subr.mxu0 0.0
      %3059 = vmatpush1.xpose.msra.mxu0 0.0
      %3060 = vmatprep.subr.mxu0 0.0
      %3061 = vmatpush1.xpose.msra.mxu0 0.0
      %3062 = vmatprep.subr.mxu0 0.0
      %3063 = vmatpush1.xpose.msra.mxu0 0.0
      %3064 = vmatprep.subr.mxu0 0.0
      %3065 = vmatpush1.xpose.msra.mxu0 0.0
      %3066 = vmatprep.subr.mxu0 0.0
      %3067 = vmatpush1.xpose.msra.mxu0 0.0
      %3068 = vmatprep.subr.mxu0 0.0
      %3069 = vmatpush1.xpose.msra.mxu0 0.0
      %3070 = vmatprep.subr.mxu0 0.0
      %3071 = vmatpush1.xpose.msra.mxu0 0.0
      %3072 = vmatprep.subr.mxu0 0.0
      %3073 = vmatpush1.xpose.msra.mxu0 0.0
      %3074 = vmatprep.mubr.f32.mxu0 0.0
      %3075 = vmatmul.mubr.f32.gmra.mrb[0].mxu0 %v3005
      %v3076 = vpop.f32.mrb[0].mxu0
      %v3077 = vadd.f32 0.0, %v3076
      %v3078 = vpop.f32.mrb[0].mxu0
      %3079 = vdwg.mxu0
      %3080 = vxpose.xlu0.b32.start [1/16] %v2684, 128
      %3081 = vxpose.xlu0.b32.cont [2/16] 0.0, 128
      %3082 = vxpose.xlu0.b32.cont [3/16] 0.0, 128
      %3083 = vxpose.xlu0.b32.cont [4/16] 0.0, 128
      %3084 = vxpose.xlu0.b32.cont [5/16] 0.0, 128
      %3085 = vxpose.xlu0.b32.cont [6/16] 0.0, 128
      %3086 = vxpose.xlu0.b32.cont [7/16] 0.0, 128
      %3087 = vxpose.xlu0.b32.cont [8/16] 0.0, 128
      %3088 = vxpose.xlu0.b32.cont [9/16] 0.0, 128
      %3089 = vxpose.xlu0.b32.cont [10/16] 0.0, 128
      %3090 = vxpose.xlu0.b32.cont [11/16] 0.0, 128
      %3091 = vxpose.xlu0.b32.cont [12/16] 0.0, 128
      %3092 = vxpose.xlu0.b32.cont [13/16] 0.0, 128
      %3093 = vxpose.xlu0.b32.cont [14/16] 0.0, 128
      %3094 = vxpose.xlu0.b32.cont [15/16] 0.0, 128
      %3095 = vxpose.xlu0.b32.end [16/16] 0.0, 128
      %v3096 = vpop.trf.xlu0
      %v3097 = vpop.trf.xlu0
      %v3098 = vpop.trf.xlu0
      %v3099 = vpop.trf.xlu0
      %v3100 = vpop.trf.xlu0
      %v3101 = vpop.trf.xlu0
      %v3102 = vpop.trf.xlu0
      %v3103 = vpop.trf.xlu0
      %v3104 = vpop.trf.xlu0
      %v3105 = vpop.trf.xlu0
      %v3106 = vpop.trf.xlu0
      %v3107 = vpop.trf.xlu0
      %v3108 = vpop.trf.xlu0
      %v3109 = vpop.trf.xlu0
      %v3110 = vpop.trf.xlu0
      %v3111 = vpop.trf.xlu0
      %v3113 = vsel %vm864, %v3096, 0
      %3115 = vmatprep.subr.mxu0 0.0
      %3116 = vmatpush1.msra.mxu0 %v2644
      %3117 = vmatprep.subr.mxu0 0.0
      %3118 = vmatpush1.msra.mxu0 0.0
      %3119 = vmatprep.subr.mxu0 0.0
      %3120 = vmatpush1.msra.mxu0 0.0
      %3121 = vmatprep.subr.mxu0 0.0
      %3122 = vmatpush1.msra.mxu0 0.0
      %3123 = vmatprep.subr.mxu0 0.0
      %3124 = vmatpush1.msra.mxu0 0.0
      %3125 = vmatprep.subr.mxu0 0.0
      %3126 = vmatpush1.msra.mxu0 0.0
      %3127 = vmatprep.subr.mxu0 0.0
      %3128 = vmatpush1.msra.mxu0 0.0
      %3129 = vmatprep.subr.mxu0 0.0
      %3130 = vmatpush1.msra.mxu0 0.0
      %3131 = vmatprep.subr.mxu0 0.0
      %3132 = vmatpush1.msra.mxu0 0.0
      %3133 = vmatprep.subr.mxu0 0.0
      %3134 = vmatpush1.msra.mxu0 0.0
      %3135 = vmatprep.subr.mxu0 0.0
      %3136 = vmatpush1.msra.mxu0 0.0
      %3137 = vmatprep.subr.mxu0 0.0
      %3138 = vmatpush1.msra.mxu0 0.0
      %3139 = vmatprep.subr.mxu0 0.0
      %3140 = vmatpush1.msra.mxu0 0.0
      %3141 = vmatprep.subr.mxu0 0.0
      %3142 = vmatpush1.msra.mxu0 0.0
      %3143 = vmatprep.subr.mxu0 0.0
      %3144 = vmatpush1.msra.mxu0 0.0
      %3145 = vmatprep.subr.mxu0 0.0
      %3146 = vmatpush1.msra.mxu0 0.0
      %3147 = vmatprep.subr.mxu0 0.0
      %3148 = vmatpush1.msra.mxu0 0.0
      %3149 = vmatprep.subr.mxu0 0.0
      %3150 = vmatpush1.msra.mxu0 0.0
      %3151 = vmatprep.subr.mxu0 0.0
      %3152 = vmatpush1.msra.mxu0 0.0
      %3153 = vmatprep.subr.mxu0 0.0
      %3154 = vmatpush1.msra.mxu0 0.0
      %3155 = vmatprep.subr.mxu0 0.0
      %3156 = vmatpush1.msra.mxu0 0.0
      %3157 = vmatprep.subr.mxu0 0.0
      %3158 = vmatpush1.msra.mxu0 0.0
      %3159 = vmatprep.subr.mxu0 0.0
      %3160 = vmatpush1.msra.mxu0 0.0
      %3161 = vmatprep.subr.mxu0 0.0
      %3162 = vmatpush1.msra.mxu0 0.0
      %3163 = vmatprep.subr.mxu0 0.0
      %3164 = vmatpush1.msra.mxu0 0.0
      %3165 = vmatprep.subr.mxu0 0.0
      %3166 = vmatpush1.msra.mxu0 0.0
      %3167 = vmatprep.subr.mxu0 0.0
      %3168 = vmatpush1.msra.mxu0 0.0
      %3169 = vmatprep.subr.mxu0 0.0
      %3170 = vmatpush1.msra.mxu0 0.0
      %3171 = vmatprep.subr.mxu0 0.0
      %3172 = vmatpush1.msra.mxu0 0.0
      %3173 = vmatprep.subr.mxu0 0.0
      %3174 = vmatpush1.msra.mxu0 0.0
      %3175 = vmatprep.subr.mxu0 0.0
      %3176 = vmatpush1.msra.mxu0 0.0
      %3177 = vmatprep.subr.mxu0 0.0
      %3178 = vmatpush1.msra.mxu0 0.0
      %3179 = vmatprep.mubr.f32.mxu0 0.0
      %3180 = vmatmul.mubr.f32.gmra.mrb[0].mxu0 %v3113
      %v3181 = vpop.f32.mrb[0].mxu0
      %v3182 = vadd.f32 %v2695, %v3181
      %v3183 = vpop.f32.mrb[0].mxu0
      %3184 = vdwg.mxu0
      %v3185 = vsel %vm864, %v3182, -inf
      %3186 = vmax.xlane.f32.xlu0 %v3185
      %v3187 = vpop.xlane.xlu0 %3186
      %v3188 = vsub.f32 %v3182, %v3187
      %v3189 = vmul.f32 %v3188, 1.442695
      %v3190 = vpow.pop %v3189
      %v3191 = vsel %vm864, %v3190, 0.0
      %3192 = vadd.xlane.f32.xlu0 %v3191
      %v3193 = vpop.xlane.xlu0 %3192
      %v3194 = vrcp.pop %v3193
      %v3195 = vmul.f32 %v3190, %v3194
      %v3197 = vsel %vm864, %v2668, 0
      %v3200 = vsel %vm864, %v3195, 0
      %3202 = vmatprep.subr.mxu0 0.0
      %3203 = vmatpush1.xpose.msra.mxu0 %v3200
      %3204 = vmatprep.subr.mxu0 0.0
      %3205 = vmatpush1.xpose.msra.mxu0 0.0
      %3206 = vmatprep.subr.mxu0 0.0
      %3207 = vmatpush1.xpose.msra.mxu0 0.0
      %3208 = vmatprep.subr.mxu0 0.0
      %3209 = vmatpush1.xpose.msra.mxu0 0.0
      %3210 = vmatprep.subr.mxu0 0.0
      %3211 = vmatpush1.xpose.msra.mxu0 0.0
      %3212 = vmatprep.subr.mxu0 0.0
      %3213 = vmatpush1.xpose.msra.mxu0 0.0
      %3214 = vmatprep.subr.mxu0 0.0
      %3215 = vmatpush1.xpose.msra.mxu0 0.0
      %3216 = vmatprep.subr.mxu0 0.0
      %3217 = vmatpush1.xpose.msra.mxu0 0.0
      %3218 = vmatprep.subr.mxu0 0.0
      %3219 = vmatpush1.xpose.msra.mxu0 0.0
      %3220 = vmatprep.subr.mxu0 0.0
      %3221 = vmatpush1.xpose.msra.mxu0 0.0
      %3222 = vmatprep.subr.mxu0 0.0
      %3223 = vmatpush1.xpose.msra.mxu0 0.0
      %3224 = vmatprep.subr.mxu0 0.0
      %3225 = vmatpush1.xpose.msra.mxu0 0.0
      %3226 = vmatprep.subr.mxu0 0.0
      %3227 = vmatpush1.xpose.msra.mxu0 0.0
      %3228 = vmatprep.subr.mxu0 0.0
      %3229 = vmatpush1.xpose.msra.mxu0 0.0
      %3230 = vmatprep.subr.mxu0 0.0
      %3231 = vmatpush1.xpose.msra.mxu0 0.0
      %3232 = vmatprep.subr.mxu0 0.0
      %3233 = vmatpush1.xpose.msra.mxu0 0.0
      %3234 = vmatprep.subr.mxu0 0.0
      %3235 = vmatpush1.xpose.msra.mxu0 0.0
      %3236 = vmatprep.subr.mxu0 0.0
      %3237 = vmatpush1.xpose.msra.mxu0 0.0
      %3238 = vmatprep.subr.mxu0 0.0
      %3239 = vmatpush1.xpose.msra.mxu0 0.0
      %3240 = vmatprep.subr.mxu0 0.0
      %3241 = vmatpush1.xpose.msra.mxu0 0.0
      %3242 = vmatprep.subr.mxu0 0.0
      %3243 = vmatpush1.xpose.msra.mxu0 0.0
      %3244 = vmatprep.subr.mxu0 0.0
      %3245 = vmatpush1.xpose.msra.mxu0 0.0
      %3246 = vmatprep.subr.mxu0 0.0
      %3247 = vmatpush1.xpose.msra.mxu0 0.0
      %3248 = vmatprep.subr.mxu0 0.0
      %3249 = vmatpush1.xpose.msra.mxu0 0.0
      %3250 = vmatprep.subr.mxu0 0.0
      %3251 = vmatpush1.xpose.msra.mxu0 0.0
      %3252 = vmatprep.subr.mxu0 0.0
      %3253 = vmatpush1.xpose.msra.mxu0 0.0
      %3254 = vmatprep.subr.mxu0 0.0
      %3255 = vmatpush1.xpose.msra.mxu0 0.0
      %3256 = vmatprep.subr.mxu0 0.0
      %3257 = vmatpush1.xpose.msra.mxu0 0.0
      %3258 = vmatprep.subr.mxu0 0.0
      %3259 = vmatpush1.xpose.msra.mxu0 0.0
      %3260 = vmatprep.subr.mxu0 0.0
      %3261 = vmatpush1.xpose.msra.mxu0 0.0
      %3262 = vmatprep.subr.mxu0 0.0
      %3263 = vmatpush1.xpose.msra.mxu0 0.0
      %3264 = vmatprep.subr.mxu0 0.0
      %3265 = vmatpush1.xpose.msra.mxu0 0.0
      %3266 = vmatprep.mubr.f32.mxu0 0.0
      %3267 = vmatmul.mubr.f32.gmra.mrb[0].mxu0 %v3197
      %v3268 = vpop.f32.mrb[0].mxu0
      %v3269 = vadd.f32 0.0, %v3268
      %v3270 = vpop.f32.mrb[0].mxu0
      %3271 = vdwg.mxu0
      %3272 = vxpose.xlu0.b32.start [1/16] %v2685, 128
      %3273 = vxpose.xlu0.b32.cont [2/16] 0.0, 128
      %3274 = vxpose.xlu0.b32.cont [3/16] 0.0, 128
      %3275 = vxpose.xlu0.b32.cont [4/16] 0.0, 128
      %3276 = vxpose.xlu0.b32.cont [5/16] 0.0, 128
      %3277 = vxpose.xlu0.b32.cont [6/16] 0.0, 128
      %3278 = vxpose.xlu0.b32.cont [7/16] 0.0, 128
      %3279 = vxpose.xlu0.b32.cont [8/16] 0.0, 128
      %3280 = vxpose.xlu0.b32.cont [9/16] 0.0, 128
      %3281 = vxpose.xlu0.b32.cont [10/16] 0.0, 128
      %3282 = vxpose.xlu0.b32.cont [11/16] 0.0, 128
      %3283 = vxpose.xlu0.b32.cont [12/16] 0.0, 128
      %3284 = vxpose.xlu0.b32.cont [13/16] 0.0, 128
      %3285 = vxpose.xlu0.b32.cont [14/16] 0.0, 128
      %3286 = vxpose.xlu0.b32.cont [15/16] 0.0, 128
      %3287 = vxpose.xlu0.b32.end [16/16] 0.0, 128
      %v3288 = vpop.trf.xlu0
      %v3289 = vpop.trf.xlu0
      %v3290 = vpop.trf.xlu0
      %v3291 = vpop.trf.xlu0
      %v3292 = vpop.trf.xlu0
      %v3293 = vpop.trf.xlu0
      %v3294 = vpop.trf.xlu0
      %v3295 = vpop.trf.xlu0
      %v3296 = vpop.trf.xlu0
      %v3297 = vpop.trf.xlu0
      %v3298 = vpop.trf.xlu0
      %v3299 = vpop.trf.xlu0
      %v3300 = vpop.trf.xlu0
      %v3301 = vpop.trf.xlu0
      %v3302 = vpop.trf.xlu0
      %v3303 = vpop.trf.xlu0
      %v3305 = vsel %vm864, %v3288, 0
      %3307 = vmatprep.subr.mxu0 0.0
      %3308 = vmatpush1.msra.mxu0 %v2645
      %3309 = vmatprep.subr.mxu0 0.0
      %3310 = vmatpush1.msra.mxu0 0.0
      %3311 = vmatprep.subr.mxu0 0.0
      %3312 = vmatpush1.msra.mxu0 0.0
      %3313 = vmatprep.subr.mxu0 0.0
      %3314 = vmatpush1.msra.mxu0 0.0
      %3315 = vmatprep.subr.mxu0 0.0
      %3316 = vmatpush1.msra.mxu0 0.0
      %3317 = vmatprep.subr.mxu0 0.0
      %3318 = vmatpush1.msra.mxu0 0.0
      %3319 = vmatprep.subr.mxu0 0.0
      %3320 = vmatpush1.msra.mxu0 0.0
      %3321 = vmatprep.subr.mxu0 0.0
      %3322 = vmatpush1.msra.mxu0 0.0
      %3323 = vmatprep.subr.mxu0 0.0
      %3324 = vmatpush1.msra.mxu0 0.0
      %3325 = vmatprep.subr.mxu0 0.0
      %3326 = vmatpush1.msra.mxu0 0.0
      %3327 = vmatprep.subr.mxu0 0.0
      %3328 = vmatpush1.msra.mxu0 0.0
      %3329 = vmatprep.subr.mxu0 0.0
      %3330 = vmatpush1.msra.mxu0 0.0
      %3331 = vmatprep.subr.mxu0 0.0
      %3332 = vmatpush1.msra.mxu0 0.0
      %3333 = vmatprep.subr.mxu0 0.0
      %3334 = vmatpush1.msra.mxu0 0.0
      %3335 = vmatprep.subr.mxu0 0.0
      %3336 = vmatpush1.msra.mxu0 0.0
      %3337 = vmatprep.subr.mxu0 0.0
      %3338 = vmatpush1.msra.mxu0 0.0
      %3339 = vmatprep.subr.mxu0 0.0
      %3340 = vmatpush1.msra.mxu0 0.0
      %3341 = vmatprep.subr.mxu0 0.0
      %3342 = vmatpush1.msra.mxu0 0.0
      %3343 = vmatprep.subr.mxu0 0.0
      %3344 = vmatpush1.msra.mxu0 0.0
      %3345 = vmatprep.subr.mxu0 0.0
      %3346 = vmatpush1.msra.mxu0 0.0
      %3347 = vmatprep.subr.mxu0 0.0
      %3348 = vmatpush1.msra.mxu0 0.0
      %3349 = vmatprep.subr.mxu0 0.0
      %3350 = vmatpush1.msra.mxu0 0.0
      %3351 = vmatprep.subr.mxu0 0.0
      %3352 = vmatpush1.msra.mxu0 0.0
      %3353 = vmatprep.subr.mxu0 0.0
      %3354 = vmatpush1.msra.mxu0 0.0
      %3355 = vmatprep.subr.mxu0 0.0
      %3356 = vmatpush1.msra.mxu0 0.0
      %3357 = vmatprep.subr.mxu0 0.0
      %3358 = vmatpush1.msra.mxu0 0.0
      %3359 = vmatprep.subr.mxu0 0.0
      %3360 = vmatpush1.msra.mxu0 0.0
      %3361 = vmatprep.subr.mxu0 0.0
      %3362 = vmatpush1.msra.mxu0 0.0
      %3363 = vmatprep.subr.mxu0 0.0
      %3364 = vmatpush1.msra.mxu0 0.0
      %3365 = vmatprep.subr.mxu0 0.0
      %3366 = vmatpush1.msra.mxu0 0.0
      %3367 = vmatprep.subr.mxu0 0.0
      %3368 = vmatpush1.msra.mxu0 0.0
      %3369 = vmatprep.subr.mxu0 0.0
      %3370 = vmatpush1.msra.mxu0 0.0
      %3371 = vmatprep.mubr.f32.mxu0 0.0
      %3372 = vmatmul.mubr.f32.gmra.mrb[0].mxu0 %v3305
      %v3373 = vpop.f32.mrb[0].mxu0
      %v3374 = vadd.f32 %v2695, %v3373
      %v3375 = vpop.f32.mrb[0].mxu0
      %3376 = vdwg.mxu0
      %v3377 = vsel %vm864, %v3374, -inf
      %3378 = vmax.xlane.f32.xlu0 %v3377
      %v3379 = vpop.xlane.xlu0 %3378
      %v3380 = vsub.f32 %v3374, %v3379
      %v3381 = vmul.f32 %v3380, 1.442695
      %v3382 = vpow.pop %v3381
      %v3383 = vsel %vm864, %v3382, 0.0
      %3384 = vadd.xlane.f32.xlu0 %v3383
      %v3385 = vpop.xlane.xlu0 %3384
      %v3386 = vrcp.pop %v3385
      %v3387 = vmul.f32 %v3382, %v3386
      %v3389 = vsel %vm864, %v2669, 0
      %v3392 = vsel %vm864, %v3387, 0
      %3394 = vmatprep.subr.mxu0 0.0
      %3395 = vmatpush1.xpose.msra.mxu0 %v3392
      %3396 = vmatprep.subr.mxu0 0.0
      %3397 = vmatpush1.xpose.msra.mxu0 0.0
      %3398 = vmatprep.subr.mxu0 0.0
      %3399 = vmatpush1.xpose.msra.mxu0 0.0
      %3400 = vmatprep.subr.mxu0 0.0
      %3401 = vmatpush1.xpose.msra.mxu0 0.0
      %3402 = vmatprep.subr.mxu0 0.0
      %3403 = vmatpush1.xpose.msra.mxu0 0.0
      %3404 = vmatprep.subr.mxu0 0.0
      %3405 = vmatpush1.xpose.msra.mxu0 0.0
      %3406 = vmatprep.subr.mxu0 0.0
      %3407 = vmatpush1.xpose.msra.mxu0 0.0
      %3408 = vmatprep.subr.mxu0 0.0
      %3409 = vmatpush1.xpose.msra.mxu0 0.0
      %3410 = vmatprep.subr.mxu0 0.0
      %3411 = vmatpush1.xpose.msra.mxu0 0.0
      %3412 = vmatprep.subr.mxu0 0.0
      %3413 = vmatpush1.xpose.msra.mxu0 0.0
      %3414 = vmatprep.subr.mxu0 0.0
      %3415 = vmatpush1.xpose.msra.mxu0 0.0
      %3416 = vmatprep.subr.mxu0 0.0
      %3417 = vmatpush1.xpose.msra.mxu0 0.0
      %3418 = vmatprep.subr.mxu0 0.0
      %3419 = vmatpush1.xpose.msra.mxu0 0.0
      %3420 = vmatprep.subr.mxu0 0.0
      %3421 = vmatpush1.xpose.msra.mxu0 0.0
      %3422 = vmatprep.subr.mxu0 0.0
      %3423 = vmatpush1.xpose.msra.mxu0 0.0
      %3424 = vmatprep.subr.mxu0 0.0
      %3425 = vmatpush1.xpose.msra.mxu0 0.0
      %3426 = vmatprep.subr.mxu0 0.0
      %3427 = vmatpush1.xpose.msra.mxu0 0.0
      %3428 = vmatprep.subr.mxu0 0.0
      %3429 = vmatpush1.xpose.msra.mxu0 0.0
      %3430 = vmatprep.subr.mxu0 0.0
      %3431 = vmatpush1.xpose.msra.mxu0 0.0
      %3432 = vmatprep.subr.mxu0 0.0
      %3433 = vmatpush1.xpose.msra.mxu0 0.0
      %3434 = vmatprep.subr.mxu0 0.0
      %3435 = vmatpush1.xpose.msra.mxu0 0.0
      %3436 = vmatprep.subr.mxu0 0.0
      %3437 = vmatpush1.xpose.msra.mxu0 0.0
      %3438 = vmatprep.subr.mxu0 0.0
      %3439 = vmatpush1.xpose.msra.mxu0 0.0
      %3440 = vmatprep.subr.mxu0 0.0
      %3441 = vmatpush1.xpose.msra.mxu0 0.0
      %3442 = vmatprep.subr.mxu0 0.0
      %3443 = vmatpush1.xpose.msra.mxu0 0.0
      %3444 = vmatprep.subr.mxu0 0.0
      %3445 = vmatpush1.xpose.msra.mxu0 0.0
      %3446 = vmatprep.subr.mxu0 0.0
      %3447 = vmatpush1.xpose.msra.mxu0 0.0
      %3448 = vmatprep.subr.mxu0 0.0
      %3449 = vmatpush1.xpose.msra.mxu0 0.0
      %3450 = vmatprep.subr.mxu0 0.0
      %3451 = vmatpush1.xpose.msra.mxu0 0.0
      %3452 = vmatprep.subr.mxu0 0.0
      %3453 = vmatpush1.xpose.msra.mxu0 0.0
      %3454 = vmatprep.subr.mxu0 0.0
      %3455 = vmatpush1.xpose.msra.mxu0 0.0
      %3456 = vmatprep.subr.mxu0 0.0
      %3457 = vmatpush1.xpose.msra.mxu0 0.0
      %3458 = vmatprep.mubr.f32.mxu0 0.0
      %3459 = vmatmul.mubr.f32.gmra.mrb[0].mxu0 %v3389
      %v3460 = vpop.f32.mrb[0].mxu0
      %v3461 = vadd.f32 0.0, %v3460
      %v3462 = vpop.f32.mrb[0].mxu0
      %3463 = vdwg.mxu0
      %3464 = vxpose.xlu0.b32.start [1/16] %v2686, 128
      %3465 = vxpose.xlu0.b32.cont [2/16] 0.0, 128
      %3466 = vxpose.xlu0.b32.cont [3/16] 0.0, 128
      %3467 = vxpose.xlu0.b32.cont [4/16] 0.0, 128
      %3468 = vxpose.xlu0.b32.cont [5/16] 0.0, 128
      %3469 = vxpose.xlu0.b32.cont [6/16] 0.0, 128
      %3470 = vxpose.xlu0.b32.cont [7/16] 0.0, 128
      %3471 = vxpose.xlu0.b32.cont [8/16] 0.0, 128
      %3472 = vxpose.xlu0.b32.cont [9/16] 0.0, 128
      %3473 = vxpose.xlu0.b32.cont [10/16] 0.0, 128
      %3474 = vxpose.xlu0.b32.cont [11/16] 0.0, 128
      %3475 = vxpose.xlu0.b32.cont [12/16] 0.0, 128
      %3476 = vxpose.xlu0.b32.cont [13/16] 0.0, 128
      %3477 = vxpose.xlu0.b32.cont [14/16] 0.0, 128
      %3478 = vxpose.xlu0.b32.cont [15/16] 0.0, 128
      %3479 = vxpose.xlu0.b32.end [16/16] 0.0, 128
      %v3480 = vpop.trf.xlu0
      %v3481 = vpop.trf.xlu0
      %v3482 = vpop.trf.xlu0
      %v3483 = vpop.trf.xlu0
      %v3484 = vpop.trf.xlu0
      %v3485 = vpop.trf.xlu0
      %v3486 = vpop.trf.xlu0
      %v3487 = vpop.trf.xlu0
      %v3488 = vpop.trf.xlu0
      %v3489 = vpop.trf.xlu0
      %v3490 = vpop.trf.xlu0
      %v3491 = vpop.trf.xlu0
      %v3492 = vpop.trf.xlu0
      %v3493 = vpop.trf.xlu0
      %v3494 = vpop.trf.xlu0
      %v3495 = vpop.trf.xlu0
      %v3497 = vsel %vm864, %v3480, 0
      %3499 = vmatprep.subr.mxu0 0.0
      %3500 = vmatpush1.msra.mxu0 %v2646
      %3501 = vmatprep.subr.mxu0 0.0
      %3502 = vmatpush1.msra.mxu0 0.0
      %3503 = vmatprep.subr.mxu0 0.0
      %3504 = vmatpush1.msra.mxu0 0.0
      %3505 = vmatprep.subr.mxu0 0.0
      %3506 = vmatpush1.msra.mxu0 0.0
      %3507 = vmatprep.subr.mxu0 0.0
      %3508 = vmatpush1.msra.mxu0 0.0
      %3509 = vmatprep.subr.mxu0 0.0
      %3510 = vmatpush1.msra.mxu0 0.0
      %3511 = vmatprep.subr.mxu0 0.0
      %3512 = vmatpush1.msra.mxu0 0.0
      %3513 = vmatprep.subr.mxu0 0.0
      %3514 = vmatpush1.msra.mxu0 0.0
      %3515 = vmatprep.subr.mxu0 0.0
      %3516 = vmatpush1.msra.mxu0 0.0
      %3517 = vmatprep.subr.mxu0 0.0
      %3518 = vmatpush1.msra.mxu0 0.0
      %3519 = vmatprep.subr.mxu0 0.0
      %3520 = vmatpush1.msra.mxu0 0.0
      %3521 = vmatprep.subr.mxu0 0.0
      %3522 = vmatpush1.msra.mxu0 0.0
      %3523 = vmatprep.subr.mxu0 0.0
      %3524 = vmatpush1.msra.mxu0 0.0
      %3525 = vmatprep.subr.mxu0 0.0
      %3526 = vmatpush1.msra.mxu0 0.0
      %3527 = vmatprep.subr.mxu0 0.0
      %3528 = vmatpush1.msra.mxu0 0.0
      %3529 = vmatprep.subr.mxu0 0.0
      %3530 = vmatpush1.msra.mxu0 0.0
      %3531 = vmatprep.subr.mxu0 0.0
      %3532 = vmatpush1.msra.mxu0 0.0
      %3533 = vmatprep.subr.mxu0 0.0
      %3534 = vmatpush1.msra.mxu0 0.0
      %3535 = vmatprep.subr.mxu0 0.0
      %3536 = vmatpush1.msra.mxu0 0.0
      %3537 = vmatprep.subr.mxu0 0.0
      %3538 = vmatpush1.msra.mxu0 0.0
      %3539 = vmatprep.subr.mxu0 0.0
      %3540 = vmatpush1.msra.mxu0 0.0
      %3541 = vmatprep.subr.mxu0 0.0
      %3542 = vmatpush1.msra.mxu0 0.0
      %3543 = vmatprep.subr.mxu0 0.0
      %3544 = vmatpush1.msra.mxu0 0.0
      %3545 = vmatprep.subr.mxu0 0.0
      %3546 = vmatpush1.msra.mxu0 0.0
      %3547 = vmatprep.subr.mxu0 0.0
      %3548 = vmatpush1.msra.mxu0 0.0
      %3549 = vmatprep.subr.mxu0 0.0
      %3550 = vmatpush1.msra.mxu0 0.0
      %3551 = vmatprep.subr.mxu0 0.0
      %3552 = vmatpush1.msra.mxu0 0.0
      %3553 = vmatprep.subr.mxu0 0.0
      %3554 = vmatpush1.msra.mxu0 0.0
      %3555 = vmatprep.subr.mxu0 0.0
      %3556 = vmatpush1.msra.mxu0 0.0
      %3557 = vmatprep.subr.mxu0 0.0
      %3558 = vmatpush1.msra.mxu0 0.0
      %3559 = vmatprep.subr.mxu0 0.0
      %3560 = vmatpush1.msra.mxu0 0.0
      %3561 = vmatprep.subr.mxu0 0.0
      %3562 = vmatpush1.msra.mxu0 0.0
      %3563 = vmatprep.mubr.f32.mxu0 0.0
      %3564 = vmatmul.mubr.f32.gmra.mrb[0].mxu0 %v3497
      %v3565 = vpop.f32.mrb[0].mxu0
      %v3566 = vadd.f32 %v2695, %v3565
      %v3567 = vpop.f32.mrb[0].mxu0
      %3568 = vdwg.mxu0
      %v3569 = vsel %vm864, %v3566, -inf
      %3570 = vmax.xlane.f32.xlu0 %v3569
      %v3571 = vpop.xlane.xlu0 %3570
      %v3572 = vsub.f32 %v3566, %v3571
      %v3573 = vmul.f32 %v3572, 1.442695
      %v3574 = vpow.pop %v3573
      %v3575 = vsel %vm864, %v3574, 0.0
      %3576 = vadd.xlane.f32.xlu0 %v3575
      %v3577 = vpop.xlane.xlu0 %3576
      %v3578 = vrcp.pop %v3577
      %v3579 = vmul.f32 %v3574, %v3578
      %v3581 = vsel %vm864, %v2670, 0
      %v3584 = vsel %vm864, %v3579, 0
      %3586 = vmatprep.subr.mxu0 0.0
      %3587 = vmatpush1.xpose.msra.mxu0 %v3584
      %3588 = vmatprep.subr.mxu0 0.0
      %3589 = vmatpush1.xpose.msra.mxu0 0.0
      %3590 = vmatprep.subr.mxu0 0.0
      %3591 = vmatpush1.xpose.msra.mxu0 0.0
      %3592 = vmatprep.subr.mxu0 0.0
      %3593 = vmatpush1.xpose.msra.mxu0 0.0
      %3594 = vmatprep.subr.mxu0 0.0
      %3595 = vmatpush1.xpose.msra.mxu0 0.0
      %3596 = vmatprep.subr.mxu0 0.0
      %3597 = vmatpush1.xpose.msra.mxu0 0.0
      %3598 = vmatprep.subr.mxu0 0.0
      %3599 = vmatpush1.xpose.msra.mxu0 0.0
      %3600 = vmatprep.subr.mxu0 0.0
      %3601 = vmatpush1.xpose.msra.mxu0 0.0
      %3602 = vmatprep.subr.mxu0 0.0
      %3603 = vmatpush1.xpose.msra.mxu0 0.0
      %3604 = vmatprep.subr.mxu0 0.0
      %3605 = vmatpush1.xpose.msra.mxu0 0.0
      %3606 = vmatprep.subr.mxu0 0.0
      %3607 = vmatpush1.xpose.msra.mxu0 0.0
      %3608 = vmatprep.subr.mxu0 0.0
      %3609 = vmatpush1.xpose.msra.mxu0 0.0
      %3610 = vmatprep.subr.mxu0 0.0
      %3611 = vmatpush1.xpose.msra.mxu0 0.0
      %3612 = vmatprep.subr.mxu0 0.0
      %3613 = vmatpush1.xpose.msra.mxu0 0.0
      %3614 = vmatprep.subr.mxu0 0.0
      %3615 = vmatpush1.xpose.msra.mxu0 0.0
      %3616 = vmatprep.subr.mxu0 0.0
      %3617 = vmatpush1.xpose.msra.mxu0 0.0
      %3618 = vmatprep.subr.mxu0 0.0
      %3619 = vmatpush1.xpose.msra.mxu0 0.0
      %3620 = vmatprep.subr.mxu0 0.0
      %3621 = vmatpush1.xpose.msra.mxu0 0.0
      %3622 = vmatprep.subr.mxu0 0.0
      %3623 = vmatpush1.xpose.msra.mxu0 0.0
      %3624 = vmatprep.subr.mxu0 0.0
      %3625 = vmatpush1.xpose.msra.mxu0 0.0
      %3626 = vmatprep.subr.mxu0 0.0
      %3627 = vmatpush1.xpose.msra.mxu0 0.0
      %3628 = vmatprep.subr.mxu0 0.0
      %3629 = vmatpush1.xpose.msra.mxu0 0.0
      %3630 = vmatprep.subr.mxu0 0.0
      %3631 = vmatpush1.xpose.msra.mxu0 0.0
      %3632 = vmatprep.subr.mxu0 0.0
      %3633 = vmatpush1.xpose.msra.mxu0 0.0
      %3634 = vmatprep.subr.mxu0 0.0
      %3635 = vmatpush1.xpose.msra.mxu0 0.0
      %3636 = vmatprep.subr.mxu0 0.0
      %3637 = vmatpush1.xpose.msra.mxu0 0.0
      %3638 = vmatprep.subr.mxu0 0.0
      %3639 = vmatpush1.xpose.msra.mxu0 0.0
      %3640 = vmatprep.subr.mxu0 0.0
      %3641 = vmatpush1.xpose.msra.mxu0 0.0
      %3642 = vmatprep.subr.mxu0 0.0
      %3643 = vmatpush1.xpose.msra.mxu0 0.0
      %3644 = vmatprep.subr.mxu0 0.0
      %3645 = vmatpush1.xpose.msra.mxu0 0.0
      %3646 = vmatprep.subr.mxu0 0.0
      %3647 = vmatpush1.xpose.msra.mxu0 0.0
      %3648 = vmatprep.subr.mxu0 0.0
      %3649 = vmatpush1.xpose.msra.mxu0 0.0
      %3650 = vmatprep.mubr.f32.mxu0 0.0
      %3651 = vmatmul.mubr.f32.gmra.mrb[0].mxu0 %v3581
      %v3652 = vpop.f32.mrb[0].mxu0
      %v3653 = vadd.f32 0.0, %v3652
      %v3654 = vpop.f32.mrb[0].mxu0
      %3655 = vdwg.mxu0
      %3656 = vxpose.xlu0.b32.start [1/16] %v2687, 128
      %3657 = vxpose.xlu0.b32.cont [2/16] 0.0, 128
      %3658 = vxpose.xlu0.b32.cont [3/16] 0.0, 128
      %3659 = vxpose.xlu0.b32.cont [4/16] 0.0, 128
      %3660 = vxpose.xlu0.b32.cont [5/16] 0.0, 128
      %3661 = vxpose.xlu0.b32.cont [6/16] 0.0, 128
      %3662 = vxpose.xlu0.b32.cont [7/16] 0.0, 128
      %3663 = vxpose.xlu0.b32.cont [8/16] 0.0, 128
      %3664 = vxpose.xlu0.b32.cont [9/16] 0.0, 128
      %3665 = vxpose.xlu0.b32.cont [10/16] 0.0, 128
      %3666 = vxpose.xlu0.b32.cont [11/16] 0.0, 128
      %3667 = vxpose.xlu0.b32.cont [12/16] 0.0, 128
      %3668 = vxpose.xlu0.b32.cont [13/16] 0.0, 128
      %3669 = vxpose.xlu0.b32.cont [14/16] 0.0, 128
      %3670 = vxpose.xlu0.b32.cont [15/16] 0.0, 128
      %3671 = vxpose.xlu0.b32.end [16/16] 0.0, 128
      %v3672 = vpop.trf.xlu0
      %v3673 = vpop.trf.xlu0
      %v3674 = vpop.trf.xlu0
      %v3675 = vpop.trf.xlu0
      %v3676 = vpop.trf.xlu0
      %v3677 = vpop.trf.xlu0
      %v3678 = vpop.trf.xlu0
      %v3679 = vpop.trf.xlu0
      %v3680 = vpop.trf.xlu0
      %v3681 = vpop.trf.xlu0
      %v3682 = vpop.trf.xlu0
      %v3683 = vpop.trf.xlu0
      %v3684 = vpop.trf.xlu0
      %v3685 = vpop.trf.xlu0
      %v3686 = vpop.trf.xlu0
      %v3687 = vpop.trf.xlu0
      %v3689 = vsel %vm864, %v3672, 0
      %3691 = vmatprep.subr.mxu0 0.0
      %3692 = vmatpush1.msra.mxu0 %v2647
      %3693 = vmatprep.subr.mxu0 0.0
      %3694 = vmatpush1.msra.mxu0 0.0
      %3695 = vmatprep.subr.mxu0 0.0
      %3696 = vmatpush1.msra.mxu0 0.0
      %3697 = vmatprep.subr.mxu0 0.0
      %3698 = vmatpush1.msra.mxu0 0.0
      %3699 = vmatprep.subr.mxu0 0.0
      %3700 = vmatpush1.msra.mxu0 0.0
      %3701 = vmatprep.subr.mxu0 0.0
      %3702 = vmatpush1.msra.mxu0 0.0
      %3703 = vmatprep.subr.mxu0 0.0
      %3704 = vmatpush1.msra.mxu0 0.0
      %3705 = vmatprep.subr.mxu0 0.0
      %3706 = vmatpush1.msra.mxu0 0.0
      %3707 = vmatprep.subr.mxu0 0.0
      %3708 = vmatpush1.msra.mxu0 0.0
      %3709 = vmatprep.subr.mxu0 0.0
      %3710 = vmatpush1.msra.mxu0 0.0
      %3711 = vmatprep.subr.mxu0 0.0
      %3712 = vmatpush1.msra.mxu0 0.0
      %3713 = vmatprep.subr.mxu0 0.0
      %3714 = vmatpush1.msra.mxu0 0.0
      %3715 = vmatprep.subr.mxu0 0.0
      %3716 = vmatpush1.msra.mxu0 0.0
      %3717 = vmatprep.subr.mxu0 0.0
      %3718 = vmatpush1.msra.mxu0 0.0
      %3719 = vmatprep.subr.mxu0 0.0
      %3720 = vmatpush1.msra.mxu0 0.0
      %3721 = vmatprep.subr.mxu0 0.0
      %3722 = vmatpush1.msra.mxu0 0.0
      %3723 = vmatprep.subr.mxu0 0.0
      %3724 = vmatpush1.msra.mxu0 0.0
      %3725 = vmatprep.subr.mxu0 0.0
      %3726 = vmatpush1.msra.mxu0 0.0
      %3727 = vmatprep.subr.mxu0 0.0
      %3728 = vmatpush1.msra.mxu0 0.0
      %3729 = vmatprep.subr.mxu0 0.0
      %3730 = vmatpush1.msra.mxu0 0.0
      %3731 = vmatprep.subr.mxu0 0.0
      %3732 = vmatpush1.msra.mxu0 0.0
      %3733 = vmatprep.subr.mxu0 0.0
      %3734 = vmatpush1.msra.mxu0 0.0
      %3735 = vmatprep.subr.mxu0 0.0
      %3736 = vmatpush1.msra.mxu0 0.0
      %3737 = vmatprep.subr.mxu0 0.0
      %3738 = vmatpush1.msra.mxu0 0.0
      %3739 = vmatprep.subr.mxu0 0.0
      %3740 = vmatpush1.msra.mxu0 0.0
      %3741 = vmatprep.subr.mxu0 0.0
      %3742 = vmatpush1.msra.mxu0 0.0
      %3743 = vmatprep.subr.mxu0 0.0
      %3744 = vmatpush1.msra.mxu0 0.0
      %3745 = vmatprep.subr.mxu0 0.0
      %3746 = vmatpush1.msra.mxu0 0.0
      %3747 = vmatprep.subr.mxu0 0.0
      %3748 = vmatpush1.msra.mxu0 0.0
      %3749 = vmatprep.subr.mxu0 0.0
      %3750 = vmatpush1.msra.mxu0 0.0
      %3751 = vmatprep.subr.mxu0 0.0
      %3752 = vmatpush1.msra.mxu0 0.0
      %3753 = vmatprep.subr.mxu0 0.0
      %3754 = vmatpush1.msra.mxu0 0.0
      %3755 = vmatprep.mubr.f32.mxu0 0.0
      %3756 = vmatmul.mubr.f32.gmra.mrb[0].mxu0 %v3689
      %v3757 = vpop.f32.mrb[0].mxu0
      %v3758 = vadd.f32 %v2695, %v3757
      %v3759 = vpop.f32.mrb[0].mxu0
      %3760 = vdwg.mxu0
      %v3761 = vsel %vm864, %v3758, -inf
      %3762 = vmax.xlane.f32.xlu0 %v3761
      %v3763 = vpop.xlane.xlu0 %3762
      %v3764 = vsub.f32 %v3758, %v3763
      %v3765 = vmul.f32 %v3764, 1.442695
      %v3766 = vpow.pop %v3765
      %v3767 = vsel %vm864, %v3766, 0.0
      %3768 = vadd.xlane.f32.xlu0 %v3767
      %v3769 = vpop.xlane.xlu0 %3768
      %v3770 = vrcp.pop %v3769
      %v3771 = vmul.f32 %v3766, %v3770
      %v3773 = vsel %vm864, %v2671, 0
      %v3776 = vsel %vm864, %v3771, 0
      %3778 = vmatprep.subr.mxu0 0.0
      %3779 = vmatpush1.xpose.msra.mxu0 %v3776
      %3780 = vmatprep.subr.mxu0 0.0
      %3781 = vmatpush1.xpose.msra.mxu0 0.0
      %3782 = vmatprep.subr.mxu0 0.0
      %3783 = vmatpush1.xpose.msra.mxu0 0.0
      %3784 = vmatprep.subr.mxu0 0.0
      %3785 = vmatpush1.xpose.msra.mxu0 0.0
      %3786 = vmatprep.subr.mxu0 0.0
      %3787 = vmatpush1.xpose.msra.mxu0 0.0
      %3788 = vmatprep.subr.mxu0 0.0
      %3789 = vmatpush1.xpose.msra.mxu0 0.0
      %3790 = vmatprep.subr.mxu0 0.0
      %3791 = vmatpush1.xpose.msra.mxu0 0.0
      %3792 = vmatprep.subr.mxu0 0.0
      %3793 = vmatpush1.xpose.msra.mxu0 0.0
      %3794 = vmatprep.subr.mxu0 0.0
      %3795 = vmatpush1.xpose.msra.mxu0 0.0
      %3796 = vmatprep.subr.mxu0 0.0
      %3797 = vmatpush1.xpose.msra.mxu0 0.0
      %3798 = vmatprep.subr.mxu0 0.0
      %3799 = vmatpush1.xpose.msra.mxu0 0.0
      %3800 = vmatprep.subr.mxu0 0.0
      %3801 = vmatpush1.xpose.msra.mxu0 0.0
      %3802 = vmatprep.subr.mxu0 0.0
      %3803 = vmatpush1.xpose.msra.mxu0 0.0
      %3804 = vmatprep.subr.mxu0 0.0
      %3805 = vmatpush1.xpose.msra.mxu0 0.0
      %3806 = vmatprep.subr.mxu0 0.0
      %3807 = vmatpush1.xpose.msra.mxu0 0.0
      %3808 = vmatprep.subr.mxu0 0.0
      %3809 = vmatpush1.xpose.msra.mxu0 0.0
      %3810 = vmatprep.subr.mxu0 0.0
      %3811 = vmatpush1.xpose.msra.mxu0 0.0
      %3812 = vmatprep.subr.mxu0 0.0
      %3813 = vmatpush1.xpose.msra.mxu0 0.0
      %3814 = vmatprep.subr.mxu0 0.0
      %3815 = vmatpush1.xpose.msra.mxu0 0.0
      %3816 = vmatprep.subr.mxu0 0.0
      %3817 = vmatpush1.xpose.msra.mxu0 0.0
      %3818 = vmatprep.subr.mxu0 0.0
      %3819 = vmatpush1.xpose.msra.mxu0 0.0
      %3820 = vmatprep.subr.mxu0 0.0
      %3821 = vmatpush1.xpose.msra.mxu0 0.0
      %3822 = vmatprep.subr.mxu0 0.0
      %3823 = vmatpush1.xpose.msra.mxu0 0.0
      %3824 = vmatprep.subr.mxu0 0.0
      %3825 = vmatpush1.xpose.msra.mxu0 0.0
      %3826 = vmatprep.subr.mxu0 0.0
      %3827 = vmatpush1.xpose.msra.mxu0 0.0
      %3828 = vmatprep.subr.mxu0 0.0
      %3829 = vmatpush1.xpose.msra.mxu0 0.0
      %3830 = vmatprep.subr.mxu0 0.0
      %3831 = vmatpush1.xpose.msra.mxu0 0.0
      %3832 = vmatprep.subr.mxu0 0.0
      %3833 = vmatpush1.xpose.msra.mxu0 0.0
      %3834 = vmatprep.subr.mxu0 0.0
      %3835 = vmatpush1.xpose.msra.mxu0 0.0
      %3836 = vmatprep.subr.mxu0 0.0
      %3837 = vmatpush1.xpose.msra.mxu0 0.0
      %3838 = vmatprep.subr.mxu0 0.0
      %3839 = vmatpush1.xpose.msra.mxu0 0.0
      %3840 = vmatprep.subr.mxu0 0.0
      %3841 = vmatpush1.xpose.msra.mxu0 0.0
      %3842 = vmatprep.mubr.f32.mxu0 0.0
      %3843 = vmatmul.mubr.f32.gmra.mrb[0].mxu0 %v3773
      %v3844 = vpop.f32.mrb[0].mxu0
      %v3845 = vadd.f32 0.0, %v3844
      %v3846 = vpop.f32.mrb[0].mxu0
      %3847 = vdwg.mxu0
      %3848 = vxpose.xlu0.b32.start [1/16] %v2688, 128
      %3849 = vxpose.xlu0.b32.cont [2/16] 0.0, 128
      %3850 = vxpose.xlu0.b32.cont [3/16] 0.0, 128
      %3851 = vxpose.xlu0.b32.cont [4/16] 0.0, 128
      %3852 = vxpose.xlu0.b32.cont [5/16] 0.0, 128
      %3853 = vxpose.xlu0.b32.cont [6/16] 0.0, 128
      %3854 = vxpose.xlu0.b32.cont [7/16] 0.0, 128
      %3855 = vxpose.xlu0.b32.cont [8/16] 0.0, 128
      %3856 = vxpose.xlu0.b32.cont [9/16] 0.0, 128
      %3857 = vxpose.xlu0.b32.cont [10/16] 0.0, 128
      %3858 = vxpose.xlu0.b32.cont [11/16] 0.0, 128
      %3859 = vxpose.xlu0.b32.cont [12/16] 0.0, 128
      %3860 = vxpose.xlu0.b32.cont [13/16] 0.0, 128
      %3861 = vxpose.xlu0.b32.cont [14/16] 0.0, 128
      %3862 = vxpose.xlu0.b32.cont [15/16] 0.0, 128
      %3863 = vxpose.xlu0.b32.end [16/16] 0.0, 128
      %v3864 = vpop.trf.xlu0
      %v3865 = vpop.trf.xlu0
      %v3866 = vpop.trf.xlu0
      %v3867 = vpop.trf.xlu0
      %v3868 = vpop.trf.xlu0
      %v3869 = vpop.trf.xlu0
      %v3870 = vpop.trf.xlu0
      %v3871 = vpop.trf.xlu0
      %v3872 = vpop.trf.xlu0
      %v3873 = vpop.trf.xlu0
      %v3874 = vpop.trf.xlu0
      %v3875 = vpop.trf.xlu0
      %v3876 = vpop.trf.xlu0
      %v3877 = vpop.trf.xlu0
      %v3878 = vpop.trf.xlu0
      %v3879 = vpop.trf.xlu0
      %v3881 = vsel %vm864, %v3864, 0
      %3883 = vmatprep.subr.mxu0 0.0
      %3884 = vmatpush1.msra.mxu0 %v2648
      %3885 = vmatprep.subr.mxu0 0.0
      %3886 = vmatpush1.msra.mxu0 0.0
      %3887 = vmatprep.subr.mxu0 0.0
      %3888 = vmatpush1.msra.mxu0 0.0
      %3889 = vmatprep.subr.mxu0 0.0
      %3890 = vmatpush1.msra.mxu0 0.0
      %3891 = vmatprep.subr.mxu0 0.0
      %3892 = vmatpush1.msra.mxu0 0.0
      %3893 = vmatprep.subr.mxu0 0.0
      %3894 = vmatpush1.msra.mxu0 0.0
      %3895 = vmatprep.subr.mxu0 0.0
      %3896 = vmatpush1.msra.mxu0 0.0
      %3897 = vmatprep.subr.mxu0 0.0
      %3898 = vmatpush1.msra.mxu0 0.0
      %3899 = vmatprep.subr.mxu0 0.0
      %3900 = vmatpush1.msra.mxu0 0.0
      %3901 = vmatprep.subr.mxu0 0.0
      %3902 = vmatpush1.msra.mxu0 0.0
      %3903 = vmatprep.subr.mxu0 0.0
      %3904 = vmatpush1.msra.mxu0 0.0
      %3905 = vmatprep.subr.mxu0 0.0
      %3906 = vmatpush1.msra.mxu0 0.0
      %3907 = vmatprep.subr.mxu0 0.0
      %3908 = vmatpush1.msra.mxu0 0.0
      %3909 = vmatprep.subr.mxu0 0.0
      %3910 = vmatpush1.msra.mxu0 0.0
      %3911 = vmatprep.subr.mxu0 0.0
      %3912 = vmatpush1.msra.mxu0 0.0
      %3913 = vmatprep.subr.mxu0 0.0
      %3914 = vmatpush1.msra.mxu0 0.0
      %3915 = vmatprep.subr.mxu0 0.0
      %3916 = vmatpush1.msra.mxu0 0.0
      %3917 = vmatprep.subr.mxu0 0.0
      %3918 = vmatpush1.msra.mxu0 0.0
      %3919 = vmatprep.subr.mxu0 0.0
      %3920 = vmatpush1.msra.mxu0 0.0
      %3921 = vmatprep.subr.mxu0 0.0
      %3922 = vmatpush1.msra.mxu0 0.0
      %3923 = vmatprep.subr.mxu0 0.0
      %3924 = vmatpush1.msra.mxu0 0.0
      %3925 = vmatprep.subr.mxu0 0.0
      %3926 = vmatpush1.msra.mxu0 0.0
      %3927 = vmatprep.subr.mxu0 0.0
      %3928 = vmatpush1.msra.mxu0 0.0
      %3929 = vmatprep.subr.mxu0 0.0
      %3930 = vmatpush1.msra.mxu0 0.0
      %3931 = vmatprep.subr.mxu0 0.0
      %3932 = vmatpush1.msra.mxu0 0.0
      %3933 = vmatprep.subr.mxu0 0.0
      %3934 = vmatpush1.msra.mxu0 0.0
      %3935 = vmatprep.subr.mxu0 0.0
      %3936 = vmatpush1.msra.mxu0 0.0
      %3937 = vmatprep.subr.mxu0 0.0
      %3938 = vmatpush1.msra.mxu0 0.0
      %3939 = vmatprep.subr.mxu0 0.0
      %3940 = vmatpush1.msra.mxu0 0.0
      %3941 = vmatprep.subr.mxu0 0.0
      %3942 = vmatpush1.msra.mxu0 0.0
      %3943 = vmatprep.subr.mxu0 0.0
      %3944 = vmatpush1.msra.mxu0 0.0
      %3945 = vmatprep.subr.mxu0 0.0
      %3946 = vmatpush1.msra.mxu0 0.0
      %3947 = vmatprep.mubr.f32.mxu0 0.0
      %3948 = vmatmul.mubr.f32.gmra.mrb[0].mxu0 %v3881
      %v3949 = vpop.f32.mrb[0].mxu0
      %v3950 = vadd.f32 %v2695, %v3949
      %v3951 = vpop.f32.mrb[0].mxu0
      %3952 = vdwg.mxu0
      %v3953 = vsel %vm864, %v3950, -inf
      %3954 = vmax.xlane.f32.xlu0 %v3953
      %v3955 = vpop.xlane.xlu0 %3954
      %v3956 = vsub.f32 %v3950, %v3955
      %v3957 = vmul.f32 %v3956, 1.442695
      %v3958 = vpow.pop %v3957
      %v3959 = vsel %vm864, %v3958, 0.0
      %3960 = vadd.xlane.f32.xlu0 %v3959
      %v3961 = vpop.xlane.xlu0 %3960
      %v3962 = vrcp.pop %v3961
      %v3963 = vmul.f32 %v3958, %v3962
      %v3965 = vsel %vm864, %v2672, 0
      %v3968 = vsel %vm864, %v3963, 0
      %3970 = vmatprep.subr.mxu0 0.0
      %3971 = vmatpush1.xpose.msra.mxu0 %v3968
      %3972 = vmatprep.subr.mxu0 0.0
      %3973 = vmatpush1.xpose.msra.mxu0 0.0
      %3974 = vmatprep.subr.mxu0 0.0
      %3975 = vmatpush1.xpose.msra.mxu0 0.0
      %3976 = vmatprep.subr.mxu0 0.0
      %3977 = vmatpush1.xpose.msra.mxu0 0.0
      %3978 = vmatprep.subr.mxu0 0.0
      %3979 = vmatpush1.xpose.msra.mxu0 0.0
      %3980 = vmatprep.subr.mxu0 0.0
      %3981 = vmatpush1.xpose.msra.mxu0 0.0
      %3982 = vmatprep.subr.mxu0 0.0
      %3983 = vmatpush1.xpose.msra.mxu0 0.0
      %3984 = vmatprep.subr.mxu0 0.0
      %3985 = vmatpush1.xpose.msra.mxu0 0.0
      %3986 = vmatprep.subr.mxu0 0.0
      %3987 = vmatpush1.xpose.msra.mxu0 0.0
      %3988 = vmatprep.subr.mxu0 0.0
      %3989 = vmatpush1.xpose.msra.mxu0 0.0
      %3990 = vmatprep.subr.mxu0 0.0
      %3991 = vmatpush1.xpose.msra.mxu0 0.0
      %3992 = vmatprep.subr.mxu0 0.0
      %3993 = vmatpush1.xpose.msra.mxu0 0.0
      %3994 = vmatprep.subr.mxu0 0.0
      %3995 = vmatpush1.xpose.msra.mxu0 0.0
      %3996 = vmatprep.subr.mxu0 0.0
      %3997 = vmatpush1.xpose.msra.mxu0 0.0
      %3998 = vmatprep.subr.mxu0 0.0
      %3999 = vmatpush1.xpose.msra.mxu0 0.0
      %4000 = vmatprep.subr.mxu0 0.0
      %4001 = vmatpush1.xpose.msra.mxu0 0.0
      %4002 = vmatprep.subr.mxu0 0.0
      %4003 = vmatpush1.xpose.msra.mxu0 0.0
      %4004 = vmatprep.subr.mxu0 0.0
      %4005 = vmatpush1.xpose.msra.mxu0 0.0
      %4006 = vmatprep.subr.mxu0 0.0
      %4007 = vmatpush1.xpose.msra.mxu0 0.0
      %4008 = vmatprep.subr.mxu0 0.0
      %4009 = vmatpush1.xpose.msra.mxu0 0.0
      %4010 = vmatprep.subr.mxu0 0.0
      %4011 = vmatpush1.xpose.msra.mxu0 0.0
      %4012 = vmatprep.subr.mxu0 0.0
      %4013 = vmatpush1.xpose.msra.mxu0 0.0
      %4014 = vmatprep.subr.mxu0 0.0
      %4015 = vmatpush1.xpose.msra.mxu0 0.0
      %4016 = vmatprep.subr.mxu0 0.0
      %4017 = vmatpush1.xpose.msra.mxu0 0.0
      %4018 = vmatprep.subr.mxu0 0.0
      %4019 = vmatpush1.xpose.msra.mxu0 0.0
      %4020 = vmatprep.subr.mxu0 0.0
      %4021 = vmatpush1.xpose.msra.mxu0 0.0
      %4022 = vmatprep.subr.mxu0 0.0
      %4023 = vmatpush1.xpose.msra.mxu0 0.0
      %4024 = vmatprep.subr.mxu0 0.0
      %4025 = vmatpush1.xpose.msra.mxu0 0.0
      %4026 = vmatprep.subr.mxu0 0.0
      %4027 = vmatpush1.xpose.msra.mxu0 0.0
      %4028 = vmatprep.subr.mxu0 0.0
      %4029 = vmatpush1.xpose.msra.mxu0 0.0
      %4030 = vmatprep.subr.mxu0 0.0
      %4031 = vmatpush1.xpose.msra.mxu0 0.0
      %4032 = vmatprep.subr.mxu0 0.0
      %4033 = vmatpush1.xpose.msra.mxu0 0.0
      %4034 = vmatprep.mubr.f32.mxu0 0.0
      %4035 = vmatmul.mubr.f32.gmra.mrb[0].mxu0 %v3965
      %v4036 = vpop.f32.mrb[0].mxu0
      %v4037 = vadd.f32 0.0, %v4036
      %v4038 = vpop.f32.mrb[0].mxu0
      %4039 = vdwg.mxu0
      %4040 = vxpose.xlu0.b32.start [1/16] %v2689, 128
      %4041 = vxpose.xlu0.b32.cont [2/16] 0.0, 128
      %4042 = vxpose.xlu0.b32.cont [3/16] 0.0, 128
      %4043 = vxpose.xlu0.b32.cont [4/16] 0.0, 128
      %4044 = vxpose.xlu0.b32.cont [5/16] 0.0, 128
      %4045 = vxpose.xlu0.b32.cont [6/16] 0.0, 128
      %4046 = vxpose.xlu0.b32.cont [7/16] 0.0, 128
      %4047 = vxpose.xlu0.b32.cont [8/16] 0.0, 128
      %4048 = vxpose.xlu0.b32.cont [9/16] 0.0, 128
      %4049 = vxpose.xlu0.b32.cont [10/16] 0.0, 128
      %4050 = vxpose.xlu0.b32.cont [11/16] 0.0, 128
      %4051 = vxpose.xlu0.b32.cont [12/16] 0.0, 128
      %4052 = vxpose.xlu0.b32.cont [13/16] 0.0, 128
      %4053 = vxpose.xlu0.b32.cont [14/16] 0.0, 128
      %4054 = vxpose.xlu0.b32.cont [15/16] 0.0, 128
      %4055 = vxpose.xlu0.b32.end [16/16] 0.0, 128
      %v4056 = vpop.trf.xlu0
      %v4057 = vpop.trf.xlu0
      %v4058 = vpop.trf.xlu0
      %v4059 = vpop.trf.xlu0
      %v4060 = vpop.trf.xlu0
      %v4061 = vpop.trf.xlu0
      %v4062 = vpop.trf.xlu0
      %v4063 = vpop.trf.xlu0
      %v4064 = vpop.trf.xlu0
      %v4065 = vpop.trf.xlu0
      %v4066 = vpop.trf.xlu0
      %v4067 = vpop.trf.xlu0
      %v4068 = vpop.trf.xlu0
      %v4069 = vpop.trf.xlu0
      %v4070 = vpop.trf.xlu0
      %v4071 = vpop.trf.xlu0
      %v4073 = vsel %vm864, %v4056, 0
      %4075 = vmatprep.subr.mxu0 0.0
      %4076 = vmatpush1.msra.mxu0 %v2649
      %4077 = vmatprep.subr.mxu0 0.0
      %4078 = vmatpush1.msra.mxu0 0.0
      %4079 = vmatprep.subr.mxu0 0.0
      %4080 = vmatpush1.msra.mxu0 0.0
      %4081 = vmatprep.subr.mxu0 0.0
      %4082 = vmatpush1.msra.mxu0 0.0
      %4083 = vmatprep.subr.mxu0 0.0
      %4084 = vmatpush1.msra.mxu0 0.0
      %4085 = vmatprep.subr.mxu0 0.0
      %4086 = vmatpush1.msra.mxu0 0.0
      %4087 = vmatprep.subr.mxu0 0.0
      %4088 = vmatpush1.msra.mxu0 0.0
      %4089 = vmatprep.subr.mxu0 0.0
      %4090 = vmatpush1.msra.mxu0 0.0
      %4091 = vmatprep.subr.mxu0 0.0
      %4092 = vmatpush1.msra.mxu0 0.0
      %4093 = vmatprep.subr.mxu0 0.0
      %4094 = vmatpush1.msra.mxu0 0.0
      %4095 = vmatprep.subr.mxu0 0.0
      %4096 = vmatpush1.msra.mxu0 0.0
      %4097 = vmatprep.subr.mxu0 0.0
      %4098 = vmatpush1.msra.mxu0 0.0
      %4099 = vmatprep.subr.mxu0 0.0
      %4100 = vmatpush1.msra.mxu0 0.0
      %4101 = vmatprep.subr.mxu0 0.0
      %4102 = vmatpush1.msra.mxu0 0.0
      %4103 = vmatprep.subr.mxu0 0.0
      %4104 = vmatpush1.msra.mxu0 0.0
      %4105 = vmatprep.subr.mxu0 0.0
      %4106 = vmatpush1.msra.mxu0 0.0
      %4107 = vmatprep.subr.mxu0 0.0
      %4108 = vmatpush1.msra.mxu0 0.0
      %4109 = vmatprep.subr.mxu0 0.0
      %4110 = vmatpush1.msra.mxu0 0.0
      %4111 = vmatprep.subr.mxu0 0.0
      %4112 = vmatpush1.msra.mxu0 0.0
      %4113 = vmatprep.subr.mxu0 0.0
      %4114 = vmatpush1.msra.mxu0 0.0
      %4115 = vmatprep.subr.mxu0 0.0
      %4116 = vmatpush1.msra.mxu0 0.0
      %4117 = vmatprep.subr.mxu0 0.0
      %4118 = vmatpush1.msra.mxu0 0.0
      %4119 = vmatprep.subr.mxu0 0.0
      %4120 = vmatpush1.msra.mxu0 0.0
      %4121 = vmatprep.subr.mxu0 0.0
      %4122 = vmatpush1.msra.mxu0 0.0
      %4123 = vmatprep.subr.mxu0 0.0
      %4124 = vmatpush1.msra.mxu0 0.0
      %4125 = vmatprep.subr.mxu0 0.0
      %4126 = vmatpush1.msra.mxu0 0.0
      %4127 = vmatprep.subr.mxu0 0.0
      %4128 = vmatpush1.msra.mxu0 0.0
      %4129 = vmatprep.subr.mxu0 0.0
      %4130 = vmatpush1.msra.mxu0 0.0
      %4131 = vmatprep.subr.mxu0 0.0
      %4132 = vmatpush1.msra.mxu0 0.0
      %4133 = vmatprep.subr.mxu0 0.0
      %4134 = vmatpush1.msra.mxu0 0.0
      %4135 = vmatprep.subr.mxu0 0.0
      %4136 = vmatpush1.msra.mxu0 0.0
      %4137 = vmatprep.subr.mxu0 0.0
      %4138 = vmatpush1.msra.mxu0 0.0
      %4139 = vmatprep.mubr.f32.mxu0 0.0
      %4140 = vmatmul.mubr.f32.gmra.mrb[0].mxu0 %v4073
      %v4141 = vpop.f32.mrb[0].mxu0
      %v4142 = vadd.f32 %v2695, %v4141
      %v4143 = vpop.f32.mrb[0].mxu0
      %4144 = vdwg.mxu0
      %v4145 = vsel %vm864, %v4142, -inf
      %4146 = vmax.xlane.f32.xlu0 %v4145
      %v4147 = vpop.xlane.xlu0 %4146
      %v4148 = vsub.f32 %v4142, %v4147
      %v4149 = vmul.f32 %v4148, 1.442695
      %v4150 = vpow.pop %v4149
      %v4151 = vsel %vm864, %v4150, 0.0
      %4152 = vadd.xlane.f32.xlu0 %v4151
      %v4153 = vpop.xlane.xlu0 %4152
      %v4154 = vrcp.pop %v4153
      %v4155 = vmul.f32 %v4150, %v4154
      %v4157 = vsel %vm864, %v2673, 0
      %v4160 = vsel %vm864, %v4155, 0
      %4162 = vmatprep.subr.mxu0 0.0
      %4163 = vmatpush1.xpose.msra.mxu0 %v4160
      %4164 = vmatprep.subr.mxu0 0.0
      %4165 = vmatpush1.xpose.msra.mxu0 0.0
      %4166 = vmatprep.subr.mxu0 0.0
      %4167 = vmatpush1.xpose.msra.mxu0 0.0
      %4168 = vmatprep.subr.mxu0 0.0
      %4169 = vmatpush1.xpose.msra.mxu0 0.0
      %4170 = vmatprep.subr.mxu0 0.0
      %4171 = vmatpush1.xpose.msra.mxu0 0.0
      %4172 = vmatprep.subr.mxu0 0.0
      %4173 = vmatpush1.xpose.msra.mxu0 0.0
      %4174 = vmatprep.subr.mxu0 0.0
      %4175 = vmatpush1.xpose.msra.mxu0 0.0
      %4176 = vmatprep.subr.mxu0 0.0
      %4177 = vmatpush1.xpose.msra.mxu0 0.0
      %4178 = vmatprep.subr.mxu0 0.0
      %4179 = vmatpush1.xpose.msra.mxu0 0.0
      %4180 = vmatprep.subr.mxu0 0.0
      %4181 = vmatpush1.xpose.msra.mxu0 0.0
      %4182 = vmatprep.subr.mxu0 0.0
      %4183 = vmatpush1.xpose.msra.mxu0 0.0
      %4184 = vmatprep.subr.mxu0 0.0
      %4185 = vmatpush1.xpose.msra.mxu0 0.0
      %4186 = vmatprep.subr.mxu0 0.0
      %4187 = vmatpush1.xpose.msra.mxu0 0.0
      %4188 = vmatprep.subr.mxu0 0.0
      %4189 = vmatpush1.xpose.msra.mxu0 0.0
      %4190 = vmatprep.subr.mxu0 0.0
      %4191 = vmatpush1.xpose.msra.mxu0 0.0
      %4192 = vmatprep.subr.mxu0 0.0
      %4193 = vmatpush1.xpose.msra.mxu0 0.0
      %4194 = vmatprep.subr.mxu0 0.0
      %4195 = vmatpush1.xpose.msra.mxu0 0.0
      %4196 = vmatprep.subr.mxu0 0.0
      %4197 = vmatpush1.xpose.msra.mxu0 0.0
      %4198 = vmatprep.subr.mxu0 0.0
      %4199 = vmatpush1.xpose.msra.mxu0 0.0
      %4200 = vmatprep.subr.mxu0 0.0
      %4201 = vmatpush1.xpose.msra.mxu0 0.0
      %4202 = vmatprep.subr.mxu0 0.0
      %4203 = vmatpush1.xpose.msra.mxu0 0.0
      %4204 = vmatprep.subr.mxu0 0.0
      %4205 = vmatpush1.xpose.msra.mxu0 0.0
      %4206 = vmatprep.subr.mxu0 0.0
      %4207 = vmatpush1.xpose.msra.mxu0 0.0
      %4208 = vmatprep.subr.mxu0 0.0
      %4209 = vmatpush1.xpose.msra.mxu0 0.0
      %4210 = vmatprep.subr.mxu0 0.0
      %4211 = vmatpush1.xpose.msra.mxu0 0.0
      %4212 = vmatprep.subr.mxu0 0.0
      %4213 = vmatpush1.xpose.msra.mxu0 0.0
      %4214 = vmatprep.subr.mxu0 0.0
      %4215 = vmatpush1.xpose.msra.mxu0 0.0
      %4216 = vmatprep.subr.mxu0 0.0
      %4217 = vmatpush1.xpose.msra.mxu0 0.0
      %4218 = vmatprep.subr.mxu0 0.0
      %4219 = vmatpush1.xpose.msra.mxu0 0.0
      %4220 = vmatprep.subr.mxu0 0.0
      %4221 = vmatpush1.xpose.msra.mxu0 0.0
      %4222 = vmatprep.subr.mxu0 0.0
      %4223 = vmatpush1.xpose.msra.mxu0 0.0
      %4224 = vmatprep.subr.mxu0 0.0
      %4225 = vmatpush1.xpose.msra.mxu0 0.0
      %4226 = vmatprep.mubr.f32.mxu0 0.0
      %4227 = vmatmul.mubr.f32.gmra.mrb[0].mxu0 %v4157
      %v4228 = vpop.f32.mrb[0].mxu0
      %v4229 = vadd.f32 0.0, %v4228
      %v4230 = vpop.f32.mrb[0].mxu0
      %4231 = vdwg.mxu0
      %4232 = vxpose.xlu0.b32.start [1/16] %v2885, 128
      %4233 = vxpose.xlu0.b32.cont [2/16] %v3077, 128
      %4234 = vxpose.xlu0.b32.cont [3/16] %v3269, 128
      %4235 = vxpose.xlu0.b32.cont [4/16] %v3461, 128
      %4236 = vxpose.xlu0.b32.cont [5/16] %v3653, 128
      %4237 = vxpose.xlu0.b32.cont [6/16] %v3845, 128
      %4238 = vxpose.xlu0.b32.cont [7/16] %v4037, 128
      %4239 = vxpose.xlu0.b32.cont [8/16] %v4229, 128
      %4240 = vxpose.xlu0.b32.cont [9/16] 0.0, 128
      %4241 = vxpose.xlu0.b32.cont [10/16] 0.0, 128
      %4242 = vxpose.xlu0.b32.cont [11/16] 0.0, 128
      %4243 = vxpose.xlu0.b32.cont [12/16] 0.0, 128
      %4244 = vxpose.xlu0.b32.cont [13/16] 0.0, 128
      %4245 = vxpose.xlu0.b32.cont [14/16] 0.0, 128
      %4246 = vxpose.xlu0.b32.cont [15/16] 0.0, 128
      %4247 = vxpose.xlu0.b32.end [16/16] 0.0, 128
      %v4248 = vpop.trf.xlu0
      %v4249 = vpop.trf.xlu0
      %v4250 = vpop.trf.xlu0
      %v4251 = vpop.trf.xlu0
      %v4252 = vpop.trf.xlu0
      %v4253 = vpop.trf.xlu0
      %v4254 = vpop.trf.xlu0
      %v4255 = vpop.trf.xlu0
      %v4256 = vpop.trf.xlu0
      %v4257 = vpop.trf.xlu0
      %v4258 = vpop.trf.xlu0
      %v4259 = vpop.trf.xlu0
      %v4260 = vpop.trf.xlu0
      %v4261 = vpop.trf.xlu0
      %v4262 = vpop.trf.xlu0
      %v4263 = vpop.trf.xlu0
      %v4264 = vpack.c.bf16 %v4248, %v4248
      %v4265 = vld [vmem:[%s10] sm:$0xf]
      %v4266 = vld [vmem:[%s10 + $0x4] sm:$0xf]
      %v4267 = vld [vmem:[%s10 + $0x8] sm:$0xf]
      %v4268 = vld [vmem:[%s10 + $0xc] sm:$0xf]
      %v4269 = vld [vmem:[%s10 + $0x10] sm:$0xf]
      %v4270 = vld [vmem:[%s10 + $0x14] sm:$0xf]
      %v4271 = vld [vmem:[%s10 + $0x18] sm:$0xf]
      %v4272 = vld [vmem:[%s10 + $0x1c] sm:$0xf]
      %v4273 = vld [vmem:[%s11] sm:$0x1]
      %v4275 = vlaneseq
      %v4276 = vshrl.u32 %v4275, 7
      %v4277 = vsub.s32 0, %v4276
      %v4278 = vrot.slane %v4273, %v4277
      %v4288 = vunpack.c.l.b16 %v4265
      %v4289 = vunpack.c.l.b16 %v4266
      %v4290 = vunpack.c.l.b16 %v4267
      %v4291 = vunpack.c.l.b16 %v4268
      %v4292 = vunpack.c.l.b16 %v4269
      %v4293 = vunpack.c.l.b16 %v4270
      %v4294 = vunpack.c.l.b16 %v4271
      %v4295 = vunpack.c.l.b16 %v4272
      %v4296 = vpack.c.b16 %v4289, %v4288
      %v4297 = vpack.c.b16 %v4291, %v4290
      %v4298 = vpack.c.b16 %v4293, %v4292
      %v4299 = vpack.c.b16 %v4295, %v4294
      %v4305 = vsel %vm633, %v4264, 0
      %4307 = vmatprep.subr.bf16.mxu0 0
      %4308 = vmatpush1.bf16.msra.mxu0 %v4296
      %4309 = vmatprep.subr.bf16.mxu0 0
      %4310 = vmatpush1.bf16.msra.mxu0 %v4297
      %4311 = vmatprep.subr.bf16.mxu0 0
      %4312 = vmatpush1.bf16.msra.mxu0 %v4298
      %4313 = vmatprep.subr.bf16.mxu0 0
      %4314 = vmatpush1.bf16.msra.mxu0 %v4299
      %4315 = vmatprep.subr.bf16.mxu0 0
      %4316 = vmatpush1.bf16.msra.mxu0 0
      %4317 = vmatprep.subr.bf16.mxu0 0
      %4318 = vmatpush1.bf16.msra.mxu0 0
      %4319 = vmatprep.subr.bf16.mxu0 0
      %4320 = vmatpush1.bf16.msra.mxu0 0
      %4321 = vmatprep.subr.bf16.mxu0 0
      %4322 = vmatpush1.bf16.msra.mxu0 0
      %4323 = vmatprep.subr.bf16.mxu0 0
      %4324 = vmatpush1.bf16.msra.mxu0 0
      %4325 = vmatprep.subr.bf16.mxu0 0
      %4326 = vmatpush1.bf16.msra.mxu0 0
      %4327 = vmatprep.subr.bf16.mxu0 0
      %4328 = vmatpush1.bf16.msra.mxu0 0
      %4329 = vmatprep.subr.bf16.mxu0 0
      %4330 = vmatpush1.bf16.msra.mxu0 0
      %4331 = vmatprep.subr.bf16.mxu0 0
      %4332 = vmatpush1.bf16.msra.mxu0 0
      %4333 = vmatprep.subr.bf16.mxu0 0
      %4334 = vmatpush1.bf16.msra.mxu0 0
      %4335 = vmatprep.subr.bf16.mxu0 0
      %4336 = vmatpush1.bf16.msra.mxu0 0
      %4337 = vmatprep.subr.bf16.mxu0 0
      %4338 = vmatpush1.bf16.msra.mxu0 0
      %4339 = vmatprep.mubr.bf16.mxu0 0
      %4340 = vmatmul.mubr.bf16.gmra.mrb[0].mxu0 %v4305
      %v4341 = vpop.f32.mrb[0].mxu0
      %v4342 = vadd.f32 %v4278, %v4341
      %v4343 = vpop.f32.mrb[0].mxu0
      %v4344 = vpop.f32.mrb[0].mxu0
      %v4345 = vpop.f32.mrb[0].mxu0
      %4346 = vdwg.mxu0
      %v4347 = vadd.f32 %v2512, %v4342
      %v4348 = vsel %vm633, %v4347, 0.0
      %4349 = vadd.xlane.f32.xlu0 %v4348
      %v4350 = vpop.xlane.xlu0 %4349
      %v4351 = vmul.f32 %v4350, %v2488
      %v4352 = vsub.f32 %v4347, %v4351
      %v4353 = vmul.f32 %v4352, %v4352
      %v4354 = vsel %vm633, %v4353, 0.0
      %4355 = vadd.xlane.f32.xlu0 %v4354
      %v4356 = vpop.xlane.xlu0 %4355
      %v4357 = vmul.f32 %v4356, %v2488
      %v4358 = vadd.f32 %v4357, 1e-05
      %v4359 = vrsqrt.pop %v4358
      %v4360 = vmul.f32 %v4352, %v4359
      %v4361 = vmul.f32 %v4360, %v2503
      %v4362 = vadd.f32 %v4361, %v2510
      %v4363 = vpack.c.bf16 %v4362, %v4362
      %v4364 = vld [vmem:[%s12] sm:$0xf]
      %v4365 = vld [vmem:[%s12 + $0x4] sm:$0xf]
      %v4366 = vld [vmem:[%s12 + $0x8] sm:$0xf]
      %v4367 = vld [vmem:[%s12 + $0xc] sm:$0xf]
      %v4368 = vld [vmem:[%s12 + $0x10] sm:$0xf]
      %v4369 = vld [vmem:[%s12 + $0x14] sm:$0xf]
      %v4370 = vld [vmem:[%s12 + $0x18] sm:$0xf]
      %v4371 = vld [vmem:[%s12 + $0x1c] sm:$0xf]
      %v4372 = vld [vmem:[%s13] sm:$0x1]
      %v4374 = vlaneseq
      %v4375 = vshrl.u32 %v4374, 7
      %v4376 = vsub.s32 0, %v4375
      %v4377 = vrot.slane %v4372, %v4376
      %v4387 = vunpack.c.l.b16 %v4364
      %v4388 = vunpack.c.l.b16 %v4365
      %v4389 = vunpack.c.l.b16 %v4366
      %v4390 = vunpack.c.l.b16 %v4367
      %v4391 = vunpack.c.l.b16 %v4368
      %v4392 = vunpack.c.l.b16 %v4369
      %v4393 = vunpack.c.l.b16 %v4370
      %v4394 = vunpack.c.l.b16 %v4371
      %v4395 = vpack.c.b16 %v4388, %v4387
      %v4396 = vpack.c.b16 %v4390, %v4389
      %v4397 = vpack.c.b16 %v4392, %v4391
      %v4398 = vpack.c.b16 %v4394, %v4393
      %v4404 = vsel %vm633, %v4363, 0
      %4406 = vmatprep.subr.bf16.mxu0 0
      %4407 = vmatpush1.bf16.msra.mxu0 %v4395
      %4408 = vmatprep.subr.bf16.mxu0 0
      %4409 = vmatpush1.bf16.msra.mxu0 %v4396
      %4410 = vmatprep.subr.bf16.mxu0 0
      %4411 = vmatpush1.bf16.msra.mxu0 %v4397
      %4412 = vmatprep.subr.bf16.mxu0 0
      %4413 = vmatpush1.bf16.msra.mxu0 %v4398
      %4414 = vmatprep.subr.bf16.mxu0 0
      %4415 = vmatpush1.bf16.msra.mxu0 0
      %4416 = vmatprep.subr.bf16.mxu0 0
      %4417 = vmatpush1.bf16.msra.mxu0 0
      %4418 = vmatprep.subr.bf16.mxu0 0
      %4419 = vmatpush1.bf16.msra.mxu0 0
      %4420 = vmatprep.subr.bf16.mxu0 0
      %4421 = vmatpush1.bf16.msra.mxu0 0
      %4422 = vmatprep.subr.bf16.mxu0 0
      %4423 = vmatpush1.bf16.msra.mxu0 0
      %4424 = vmatprep.subr.bf16.mxu0 0
      %4425 = vmatpush1.bf16.msra.mxu0 0
      %4426 = vmatprep.subr.bf16.mxu0 0
      %4427 = vmatpush1.bf16.msra.mxu0 0
      %4428 = vmatprep.subr.bf16.mxu0 0
      %4429 = vmatpush1.bf16.msra.mxu0 0
      %4430 = vmatprep.subr.bf16.mxu0 0
      %4431 = vmatpush1.bf16.msra.mxu0 0
      %4432 = vmatprep.subr.bf16.mxu0 0
      %4433 = vmatpush1.bf16.msra.mxu0 0
      %4434 = vmatprep.subr.bf16.mxu0 0
      %4435 = vmatpush1.bf16.msra.mxu0 0
      %4436 = vmatprep.subr.bf16.mxu0 0
      %4437 = vmatpush1.bf16.msra.mxu0 0
      %4438 = vmatprep.mubr.bf16.mxu0 0
      %4439 = vmatmul.mubr.bf16.gmra.mrb[0].mxu0 %v4404
      %v4440 = vpop.f32.mrb[0].mxu0
      %v4441 = vadd.f32 %v4377, %v4440
      %v4442 = vpop.f32.mrb[0].mxu0
      %v4443 = vpop.f32.mrb[0].mxu0
      %v4444 = vpop.f32.mrb[0].mxu0
      %4445 = vdwg.mxu0
      %v4446 = vmax.f32 %v4441, 0.0
      %v4447 = vpack.c.bf16 %v4446, %v4446
      %v4448 = vld [vmem:[%s14] sm:$0xf]
      %v4449 = vld [vmem:[%s14 + $0x4] sm:$0xf]
      %v4450 = vld [vmem:[%s14 + $0x8] sm:$0xf]
      %v4451 = vld [vmem:[%s14 + $0xc] sm:$0xf]
      %v4452 = vld [vmem:[%s14 + $0x10] sm:$0xf]
      %v4453 = vld [vmem:[%s14 + $0x14] sm:$0xf]
      %v4454 = vld [vmem:[%s14 + $0x18] sm:$0xf]
      %v4455 = vld [vmem:[%s14 + $0x1c] sm:$0xf]
      %v4456 = vld [vmem:[%s14 + $0x20] sm:$0xf]
      %v4457 = vld [vmem:[%s14 + $0x24] sm:$0xf]
      %v4458 = vld [vmem:[%s14 + $0x28] sm:$0xf]
      %v4459 = vld [vmem:[%s14 + $0x2c] sm:$0xf]
      %v4460 = vld [vmem:[%s14 + $0x30] sm:$0xf]
      %v4461 = vld [vmem:[%s14 + $0x34] sm:$0xf]
      %v4462 = vld [vmem:[%s14 + $0x38] sm:$0xf]
      %v4463 = vld [vmem:[%s14 + $0x3c] sm:$0xf]
      %v4464 = vld [vmem:[%s15] sm:$0x1]
      %v4466 = vlaneseq
      %v4467 = vshrl.u32 %v4466, 7
      %v4468 = vsub.s32 0, %v4467
      %v4469 = vrot.slane %v4464, %v4468
      %v4487 = vunpack.c.l.b16 %v4448
      %v4488 = vunpack.c.l.b16 %v4449
      %v4489 = vunpack.c.l.b16 %v4450
      %v4490 = vunpack.c.l.b16 %v4451
      %v4491 = vunpack.c.l.b16 %v4452
      %v4492 = vunpack.c.l.b16 %v4453
      %v4493 = vunpack.c.l.b16 %v4454
      %v4494 = vunpack.c.l.b16 %v4455
      %v4495 = vunpack.c.l.b16 %v4456
      %v4496 = vunpack.c.l.b16 %v4457
      %v4497 = vunpack.c.l.b16 %v4458
      %v4498 = vunpack.c.l.b16 %v4459
      %v4499 = vunpack.c.l.b16 %v4460
      %v4500 = vunpack.c.l.b16 %v4461
      %v4501 = vunpack.c.l.b16 %v4462
      %v4502 = vunpack.c.l.b16 %v4463
      %v4503 = vpack.c.b16 %v4488, %v4487
      %v4504 = vpack.c.b16 %v4490, %v4489
      %v4505 = vpack.c.b16 %v4492, %v4491
      %v4506 = vpack.c.b16 %v4494, %v4493
      %v4507 = vpack.c.b16 %v4496, %v4495
      %v4508 = vpack.c.b16 %v4498, %v4497
      %v4509 = vpack.c.b16 %v4500, %v4499
      %v4510 = vpack.c.b16 %v4502, %v4501
      %4519 = vmatprep.subr.bf16.mxu0 0
      %4520 = vmatpush1.bf16.msra.mxu0 %v4503
      %4521 = vmatprep.subr.bf16.mxu0 0
      %4522 = vmatpush1.bf16.msra.mxu0 %v4504
      %4523 = vmatprep.subr.bf16.mxu0 0
      %4524 = vmatpush1.bf16.msra.mxu0 %v4505
      %4525 = vmatprep.subr.bf16.mxu0 0
      %4526 = vmatpush1.bf16.msra.mxu0 %v4506
      %4527 = vmatprep.subr.bf16.mxu0 0
      %4528 = vmatpush1.bf16.msra.mxu0 %v4507
      %4529 = vmatprep.subr.bf16.mxu0 0
      %4530 = vmatpush1.bf16.msra.mxu0 %v4508
      %4531 = vmatprep.subr.bf16.mxu0 0
      %4532 = vmatpush1.bf16.msra.mxu0 %v4509
      %4533 = vmatprep.subr.bf16.mxu0 0
      %4534 = vmatpush1.bf16.msra.mxu0 %v4510
      %4535 = vmatprep.subr.bf16.mxu0 0
      %4536 = vmatpush1.bf16.msra.mxu0 0
      %4537 = vmatprep.subr.bf16.mxu0 0
      %4538 = vmatpush1.bf16.msra.mxu0 0
      %4539 = vmatprep.subr.bf16.mxu0 0
      %4540 = vmatpush1.bf16.msra.mxu0 0
      %4541 = vmatprep.subr.bf16.mxu0 0
      %4542 = vmatpush1.bf16.msra.mxu0 0
      %4543 = vmatprep.subr.bf16.mxu0 0
      %4544 = vmatpush1.bf16.msra.mxu0 0
      %4545 = vmatprep.subr.bf16.mxu0 0
      %4546 = vmatpush1.bf16.msra.mxu0 0
      %4547 = vmatprep.subr.bf16.mxu0 0
      %4548 = vmatpush1.bf16.msra.mxu0 0
      %4549 = vmatprep.subr.bf16.mxu0 0
      %4550 = vmatpush1.bf16.msra.mxu0 0
      %4551 = vmatprep.mubr.bf16.mxu0 0
      %4552 = vmatmul.mubr.bf16.gmra.mrb[0].mxu0 %v4447
      %v4553 = vpop.f32.mrb[0].mxu0
      %v4554 = vadd.f32 %v4469, %v4553
      %v4555 = vpop.f32.mrb[0].mxu0
      %v4556 = vpop.f32.mrb[0].mxu0
      %v4557 = vpop.f32.mrb[0].mxu0
      %4558 = vdwg.mxu0
      %v4559 = vmax.f32 %v4554, 0.0
      %v4560 = vadd.f32 %v4362, %v4559
      %v4561 = vsel %vm633, %v4560, 0.0
      %4562 = vadd.xlane.f32.xlu0 %v4561
      %v4563 = vpop.xlane.xlu0 %4562
      %v4564 = vmul.f32 %v4563, %v2488
      %v4565 = vsub.f32 %v4560, %v4564
      %v4566 = vmul.f32 %v4565, %v4565
      %v4567 = vsel %vm633, %v4566, 0.0
      %4568 = vadd.xlane.f32.xlu0 %v4567
      %v4569 = vpop.xlane.xlu0 %4568
      %v4570 = vmul.f32 %v4569, %v2488
      %v4571 = vadd.f32 %v4570, 1e-05
      %v4572 = vrsqrt.pop %v4571
      %v4573 = vmul.f32 %v4565, %v4572
      %v4574 = vmul.f32 %v4573, %v2503
      %v4575 = vadd.f32 %v4574, %v2510
      %4576 = vst.msk [vmem:[%s587] sm:$0xff] %vm633, %v4575
      %p4577 = scmp.lt.s32.totalorder %s29, 1
      %s4578 = scalar_select %p4577, %s29, 1
      %s4579 = smul.addr %s4578, 8
      %s4580 = scalar_lea.vmem %s18, %s4579
      // Predicated region
      $region93: #{transformer_forward.7} parent=91 // pred_check
        %p4581 = pneg %p435
      $region94: #{transformer_forward.7} parent=91 // pred_check_branch
        %4583 = sbr.rel (%p4581) target = $region96
      $region95: #{transformer_forward.7} parent=91 // pred_region
        _
      $region96: #{transformer_forward.7} parent=91 // pred_fallthru
        _
    $region92: #{transformer_forward.7} parent=5 // pred_fallthru
      _
    %p4584 = scmp.le.s32.totalorder 2, %s24
    // Predicated region
    $region97: #{transformer_forward.7} parent=5 // pred_check
      %p4585 = pneg %p4584
    $region98: #{transformer_forward.7} parent=5 // pred_check_branch
      %4587 = sbr.rel (%p4585) target = $region100
    $region99: #{transformer_forward.7} parent=5 // pred_region
      %s4588 = ssub.s32 %s24, 2
      // Predicated region
      $region101: #{transformer_forward.7} parent=99 // pred_check
        %p4589 = pneg %p441
      $region102: #{transformer_forward.7} parent=99 // pred_check_branch
        %4591 = sbr.rel (%p4589) target = $region104
      $region103: #{transformer_forward.7} parent=99 // pred_region
        %p4592 = scmp.lt.s32.totalorder %s30, 1
        %s4593 = scalar_select %p4592, %s30, 1
        %s4594 = smul.addr %s4593, 8
        %s4595 = scalar_lea.vmem %s18, %s4594
      $region104: #{transformer_forward.7} parent=99 // pred_fallthru
        _
    $region100: #{transformer_forward.7} parent=5 // pred_fallthru
      _
  $region6: #{transformer_forward.7} parent=0 // loop_footer
    %s28 = sadd.s32 1, %s24
  $region7: #{transformer_forward.7} parent=0 // loop_footer_branch
    %23 = sbr.rel target = $region3
  $region8: #{transformer_forward.7} parent=0 // loop_exit
    _

</llo_original>
